<compile_context>
chip_gen: v7x
topology: tpu7x:2x2x1
jax: 0.10.0
libtpu: 0.0.40
codegen_flags: <defaults>
</compile_context>

<pallas_src>
import math

import jax
import jax.numpy as jnp
from jax import lax
from jax.experimental import pallas as pl
from jax.experimental.pallas import tpu as pltpu

# ----------------------------- small synthetic config -----------------------------
BATCH = 2
HIDDEN = 32            # config.hidden_size
NUM_HEADS = 4          # config.transformer['num_heads']
HEAD_DIM = HIDDEN // NUM_HEADS
MLP_DIM = 64           # config.transformer['mlp_dim']
NUM_LAYERS = 2         # config.transformer['num_layers']
IN_CHANNELS = 8        # stands in for the 2048-channel ResNet50 feature map
FEAT_HW = 4            # feature-map spatial size -> N = 16 patches
N_TOKENS = FEAT_HW * FEAT_HW
SEQ = N_TOKENS + 1     # CLS + patches = 17
SEQ_PAD = 24           # padded to a multiple of 8 sublanes (f32)
N_PATCHES_PARAM = 32   # position-embedding table has N_PATCHES_PARAM + 1 rows
EPS = 1e-6             # LayerNorm eps
NEG_INF = -1e30
DTYPE = jnp.float32


# ----------------------------- in-kernel helpers -----------------------------------
def _layernorm(x, g, b):
    # torch.nn.LayerNorm: biased variance over last dim, eps inside sqrt.
    mu = jnp.mean(x, axis=-1, keepdims=True)
    var = jnp.mean(jnp.square(x - mu), axis=-1, keepdims=True)
    return (x - mu) * lax.rsqrt(var + EPS) * g + b


def _gelu(x):
    # exact (erf-based) GELU, matching torch.nn.functional.gelu default.
    return 0.5 * x * (1.0 + lax.erf(x * (1.0 / math.sqrt(2.0))))


# ----------------------------- fused forward kernel --------------------------------
def _vit_kernel(tok_ref, wp_ref, bp_ref, clspos_ref,
                vecs_ref, wqkv_ref, bqkv_ref, wo_ref, w1_ref, b1_ref, w2_ref,
                encln_ref, wh_ref, bh_ref,
                out_ref, x_scr, ctx_scr):
    """Single invocation: embed (1x1 conv), L encoder blocks, final LayerNorm + head.

    Ref shapes:
      tok_ref   (B, N, C)         wqkv_ref (L, H, 3H)     w1_ref (L, H, MLP)
      wp_ref    (C, H)            bqkv_ref (L, 1, 3H)     b1_ref (L, 1, MLP)
      bp_ref    (1, H)            wo_ref   (L, H, H)      w2_ref (L, MLP, H)
      clspos_ref(2, H)            vecs_ref (L, 8, H)      encln_ref (2, H)
      wh_ref    (H, 1)            bh_ref   (1, 1)         out_ref (B, 1)
      x_scr     (B*SEQ_PAD, H)    ctx_scr  (B*SEQ_PAD, H)   f32 VMEM scratch
    """
    scale = 1.0 / math.sqrt(HEAD_DIM)

    # key-padding mask: padded key columns get a large negative score pre-softmax.
    # Built once for the whole kernel (no per-layer iota/where).
    col = lax.broadcasted_iota(jnp.int32, (1, SEQ_PAD), 1)
    key_mask = jnp.where(col < SEQ, jnp.float32(0.0), jnp.float32(NEG_INF))

    # ---------------- embeddings (1x1 conv == per-token matmul) ----------------
    # Original quirk reproduced: position_embeddings[:, seq_len, :] is a single (1, H)
    # row broadcast-added to every token (CLS included).
    pos = clspos_ref[1:2, :]                                   # (1, H)
    cls_row = clspos_ref[0:1, :] + pos                         # (1, H)
    bp_pos = bp_ref[...] + pos                                 # fold pos into conv bias
    toks = tok_ref[...].reshape(BATCH * N_TOKENS, IN_CHANNELS)
    emb_all = (jnp.dot(toks, wp_ref[...], preferred_element_type=jnp.float32)
               + bp_pos)                                       # (B*N, H)  one matmul
    pad = jnp.zeros((SEQ_PAD - SEQ, HIDDEN), jnp.float32)
    for b in range(BATCH):                                     # static unroll, B=2
        blk = jnp.concatenate(
            [cls_row, emb_all[b * N_TOKENS:(b + 1) * N_TOKENS, :], pad], axis=0)
        x_scr[b * SEQ_PAD:(b + 1) * SEQ_PAD, :] = blk
    # (Dropouts are inference-mode identities.)

    # ---------------- encoder blocks (static unroll over layers, L=2) ----------------
    # Padded rows 17..23 accumulate finite junk through the residual stream but are
    # provably never read (keys masked, head reads only the CLS row).
    x = x_scr[...]                                             # (B*SEQ_PAD, H)
    for l in range(NUM_LAYERS):
        vecs = vecs_ref[l]                                     # (8, H) packed vectors
        ln1g, ln1b = vecs[0:1], vecs[1:2]
        ln2g, ln2b = vecs[2:3], vecs[3:4]
        bo, b2 = vecs[4:5], vecs[5:6]

        # --- attention sub-block (pre-norm) ---
        xn = _layernorm(x, ln1g, ln1b)
        # Single fused QKV projection for the whole (B*SEQ_PAD, H) activation.
        qkv = (jnp.dot(xn, wqkv_ref[l], preferred_element_type=jnp.float32)
               + bqkv_ref[l])                                  # (B*SEQ_PAD, 3H)
        for b in range(BATCH):                                 # only S=QK^T and P@V here
            r0 = b * SEQ_PAD
            for h in range(NUM_HEADS):
                c0 = h * HEAD_DIM
                qh = qkv[r0:r0 + SEQ_PAD, c0:c0 + HEAD_DIM]
                kh = qkv[r0:r0 + SEQ_PAD, HIDDEN + c0:HIDDEN + c0 + HEAD_DIM]
                vh = qkv[r0:r0 + SEQ_PAD, 2 * HIDDEN + c0:2 * HIDDEN + c0 + HEAD_DIM]
                s = lax.dot_general(qh, kh, (((1,), (1,)), ((), ())),
                                    preferred_element_type=jnp.float32) * scale
                s = s + key_mask                               # mask padded keys
                s = s - jnp.max(s, axis=-1, keepdims=True)
                p = jnp.exp(s)
                p = p * pl.reciprocal(jnp.sum(p, axis=-1, keepdims=True), approx=True)
                ctx = jnp.dot(p, vh, preferred_element_type=jnp.float32)   # (SEQ_PAD, HD)
                # drop each head's context into its lane slice (== torch's head concat)
                ctx_scr[r0:r0 + SEQ_PAD, c0:c0 + HEAD_DIM] = ctx
        # One full-width output projection per layer.
        x = x + (jnp.dot(ctx_scr[...], wo_ref[l], preferred_element_type=jnp.float32)
                 + bo)                                         # residual

        # --- MLP sub-block (pre-norm) ---
        xn2 = _layernorm(x, ln2g, ln2b)
        y = _gelu(jnp.dot(xn2, w1_ref[l], preferred_element_type=jnp.float32)
                  + b1_ref[l])
        y = jnp.dot(y, w2_ref[l], preferred_element_type=jnp.float32) + b2
        x = x + y                                              # residual

    x_scr[...] = x

    # ---------------- encoder_norm + head on the CLS token ----------------
    cls_rows = x_scr[pl.ds(0, BATCH, stride=SEQ_PAD), :]       # (B, H) strided read
    cls_n = _layernorm(cls_rows, encln_ref[0:1, :], encln_ref[1:2, :])
    out_ref[...] = (jnp.dot(cls_n, wh_ref[...], preferred_element_type=jnp.float32)
                    + bh_ref[...]).astype(out_ref.dtype)


# ----------------------------- pallas_call wrapper ----------------------------------
def vit_forward(x_feat, params):
    """x_feat: (B, C, Hs, Ws) NCHW feature map (stand-in for the ResNet50 output)."""
    B, C, Hs, Ws = x_feat.shape
    tokens = jnp.transpose(x_feat.reshape(B, C, Hs * Ws), (0, 2, 1))      # (B, N, C)
    S = tokens.shape[1] + 1
    # position_embeddings[:, seq_len, :] -> single (1, H) row (original indexing quirk).
    pos_row = params['pos'][0, S, :][None, :]                             # (1, H)
    clspos = jnp.concatenate([params['cls'][0], pos_row], axis=0)         # (2, H)

    return pl.pallas_call(
        _vit_kernel,
        out_shape=jax.ShapeDtypeStruct((B, 1), DTYPE),
        # No grid: whole-array blocks, everything VMEM-resident for this toy config.
        scratch_shapes=[pltpu.VMEM((B * SEQ_PAD, HIDDEN), jnp.float32),   # activation
                        pltpu.VMEM((B * SEQ_PAD, HIDDEN), jnp.float32)],  # head contexts
    )(tokens, params['wp'], params['bp'], clspos,
      params['vecs'], params['wqkv'], params['bqkv'], params['wo'],
      params['w1'], params['b1'], params['w2'],
      params['encln'], params['head_w'], params['head_b'])


# ----------------------------- parameters ------------------------------------------
def init_params(key):
    keys = jax.random.split(key, 6)

    def rn(k, shape, scale):
        return (scale * jax.random.normal(k, shape, DTYPE)).astype(DTYPE)

    params = {
        # Conv2d(IN_CHANNELS, HIDDEN, 1) weight (out,in,1,1) stored pre-transposed (in,out).
        'wp': rn(keys[0], (IN_CHANNELS, HIDDEN), 1.0 / math.sqrt(IN_CHANNELS)),
        'bp': rn(keys[1], (1, HIDDEN), 0.02),
        'cls': rn(keys[2], (1, 1, HIDDEN), 0.02),
        'pos': rn(keys[3], (1, N_PATCHES_PARAM + 1, HIDDEN), 0.02),
        'head_w': rn(keys[4], (HIDDEN, 1), 1.0 / math.sqrt(HIDDEN)),
        'head_b': jnp.zeros((1, 1), DTYPE),
        # encoder_norm: row 0 = gamma, row 1 = beta.
        'encln': jnp.concatenate([jnp.ones((1, HIDDEN), DTYPE),
                                  jnp.zeros((1, HIDDEN), DTYPE)], axis=0),
    }

    sh = 1.0 / math.sqrt(HIDDEN)
    sm = 1.0 / math.sqrt(MLP_DIM)
    lkeys = jax.random.split(keys[5], NUM_LAYERS)
    wqkv, bqkv, wo, w1, b1, w2, vecs = [], [], [], [], [], [], []
    for l in range(NUM_LAYERS):
        lk = jax.random.split(lkeys[l], 5)
        # Fused q/k/v weight: columns [0:H]=Wq^T, [H:2H]=Wk^T, [2H:3H]=Wv^T.
        wqkv.append(rn(lk[0], (HIDDEN, 3 * HIDDEN), sh))
        bqkv.append(jnp.zeros((1, 3 * HIDDEN), DTYPE))
        # Full output projection W_out^T (head folding == concat + Linear).
        wo.append(rn(lk[1], (HIDDEN, HIDDEN), sh))
        w1.append(rn(lk[2], (HIDDEN, MLP_DIM), sh))
        b1.append(rn(lk[3], (1, MLP_DIM), 1e-6))
        w2.append(rn(lk[4], (MLP_DIM, HIDDEN), sm))
        # packed (1,H) vectors: [ln1g, ln1b, ln2g, ln2b, b_out, b_fc2, pad, pad]
        v = jnp.zeros((8, HIDDEN), DTYPE).at[0].set(1.0).at[2].set(1.0)
        vecs.append(v)

    params['wqkv'] = jnp.stack(wqkv)     # (L, H, 3H)
    params['bqkv'] = jnp.stack(bqkv)     # (L, 1, 3H)
    params['wo'] = jnp.stack(wo)         # (L, H, H)
    params['w1'] = jnp.stack(w1)         # (L, H, MLP)
    params['b1'] = jnp.stack(b1)         # (L, 1, MLP)
    params['w2'] = jnp.stack(w2)         # (L, MLP, H)
    params['vecs'] = jnp.stack(vecs)     # (L, 8, H)
    return params


# ----------------------------- main -------------------------------------------------
if __name__ == "__main__":
    key = jax.random.PRNGKey(0)
    pkey, xkey = jax.random.split(key)
    params = init_params(pkey)

    x = jax.random.normal(xkey, (BATCH, IN_CHANNELS, FEAT_HW, FEAT_HW), DTYPE)

    out = jax.jit(lambda xx: vit_forward(xx, params))(x)
    out = jax.block_until_ready(out)

    assert out.shape == (BATCH, 1), out.shape
    assert bool(jnp.all(jnp.isfinite(out)))
    print("KERNEL_OK")
</pallas_src>

<mosaic_0001>
module attributes {stable_mosaic.version = 11 : i64} {
  func.func @_vit_kernel(%arg0: memref<2x16x8xf32, #tpu.memory_space<vmem>>, %arg1: memref<8x32xf32, #tpu.memory_space<vmem>>, %arg2: memref<1x32xf32, #tpu.memory_space<vmem>>, %arg3: memref<2x32xf32, #tpu.memory_space<vmem>>, %arg4: memref<2x8x32xf32, #tpu.memory_space<vmem>>, %arg5: memref<2x32x96xf32, #tpu.memory_space<vmem>>, %arg6: memref<2x1x96xf32, #tpu.memory_space<vmem>>, %arg7: memref<2x32x32xf32, #tpu.memory_space<vmem>>, %arg8: memref<2x32x64xf32, #tpu.memory_space<vmem>>, %arg9: memref<2x1x64xf32, #tpu.memory_space<vmem>>, %arg10: memref<2x64x32xf32, #tpu.memory_space<vmem>>, %arg11: memref<2x32xf32, #tpu.memory_space<vmem>>, %arg12: memref<32x1xf32, #tpu.memory_space<vmem>>, %arg13: memref<1x1xf32, #tpu.memory_space<vmem>>, %arg14: memref<2x1xf32, #tpu.memory_space<vmem>>, %arg15: memref<48x32xf32, #tpu.memory_space<vmem>>, %arg16: memref<48x32xf32, #tpu.memory_space<vmem>>) attributes {dimension_semantics = [], scalar_prefetch = 0 : i64, scratch_operands = 2 : i64, tpu.core_type = #tpu.core_type<tc>} {
    %0 = tpu.iota {dimensions = array<i32: 1>} : vector<1x24xi32>
    %c17_i32 = arith.constant 17 : i32
    %1 = vector.broadcast %c17_i32 : i32 to vector<1x24xi32>
    %2 = arith.cmpi slt, %0, %1 : vector<1x24xi32>
    %cst = arith.constant 0.000000e+00 : f32
    %cst_0 = arith.constant -1.000000e+30 : f32
    %3 = vector.broadcast %cst : f32 to vector<1x24xf32>
    %4 = vector.broadcast %cst_0 : f32 to vector<1x24xf32>
    %5 = arith.select %2, %3, %4 : vector<1x24xi1>, vector<1x24xf32>
    %c1 = arith.constant 1 : index
    %c0 = arith.constant 0 : index
    %6 = vector.load %arg3[%c1, %c0] : memref<2x32xf32, #tpu.memory_space<vmem>>, vector<1x32xf32>
    %c0_1 = arith.constant 0 : index
    %c0_2 = arith.constant 0 : index
    %7 = vector.load %arg3[%c0_1, %c0_2] : memref<2x32xf32, #tpu.memory_space<vmem>>, vector<1x32xf32>
    %8 = arith.addf %7, %6 : vector<1x32xf32>
    %c0_3 = arith.constant 0 : index
    %c0_4 = arith.constant 0 : index
    %9 = vector.load %arg2[%c0_3, %c0_4] : memref<1x32xf32, #tpu.memory_space<vmem>>, vector<1x32xf32>
    %10 = arith.addf %9, %6 : vector<1x32xf32>
    %c0_5 = arith.constant 0 : index
    %c0_6 = arith.constant 0 : index
    %c0_7 = arith.constant 0 : index
    %11 = vector.load %arg0[%c0_5, %c0_6, %c0_7] : memref<2x16x8xf32, #tpu.memory_space<vmem>>, vector<2x16x8xf32>
    %12 = vector.shape_cast %11 : vector<2x16x8xf32> to vector<32x8xf32>
    %c0_8 = arith.constant 0 : index
    %c0_9 = arith.constant 0 : index
    %13 = vector.load %arg1[%c0_8, %c0_9] : memref<8x32xf32, #tpu.memory_space<vmem>>, vector<8x32xf32>
    %cst_10 = arith.constant dense<0.000000e+00> : vector<32x32xf32>
    %14 = tpu.matmul %12, %13, %cst_10 {dimension_numbers = #tpu.dot_dimension_numbers<[1], [0], [0], [1], [0, 0, 1, 1], [], []>} : vector<32x8xf32>, vector<8x32xf32>, vector<32x32xf32> -> vector<32x32xf32>
    %15 = vector.broadcast %10 : vector<1x32xf32> to vector<32x32xf32>
    %16 = arith.addf %14, %15 : vector<32x32xf32>
    %cst_11 = arith.constant 0.000000e+00 : f32
    %17 = vector.broadcast %cst_11 : f32 to vector<7x32xf32>
    %18 = vector.extract_strided_slice %16 {offsets = [0, 0], sizes = [16, 32], strides = [1, 1]} : vector<32x32xf32> to vector<16x32xf32>
    %19 = tpu.concatenate %8, %18, %17 in 0 : vector<1x32xf32>, vector<16x32xf32>, vector<7x32xf32> -> vector<24x32xf32>
    %c0_12 = arith.constant 0 : index
    %c0_13 = arith.constant 0 : index
    %20 = vector.load %arg15[%c0_12, %c0_13] : memref<48x32xf32, #tpu.memory_space<vmem>>, vector<24x32xf32>
    tpu.vector_store %arg15[%c0_12, %c0_13], %19 {strides = array<i32>} : memref<48x32xf32, #tpu.memory_space<vmem>>, vector<24x32xf32>,
    %21 = vector.extract_strided_slice %16 {offsets = [16, 0], sizes = [16, 32], strides = [1, 1]} : vector<32x32xf32> to vector<16x32xf32>
    %22 = tpu.concatenate %8, %21, %17 in 0 : vector<1x32xf32>, vector<16x32xf32>, vector<7x32xf32> -> vector<24x32xf32>
    %c24 = arith.constant 24 : index
    %c0_14 = arith.constant 0 : index
    %23 = vector.load %arg15[%c24, %c0_14] : memref<48x32xf32, #tpu.memory_space<vmem>>, vector<24x32xf32>
    tpu.vector_store %arg15[%c24, %c0_14], %22 {strides = array<i32>} : memref<48x32xf32, #tpu.memory_space<vmem>>, vector<24x32xf32>,
    %c0_15 = arith.constant 0 : index
    %c0_16 = arith.constant 0 : index
    %24 = vector.load %arg15[%c0_15, %c0_16] : memref<48x32xf32, #tpu.memory_space<vmem>>, vector<48x32xf32>
    %c0_17 = arith.constant 0 : index
    %c0_18 = arith.constant 0 : index
    %c0_19 = arith.constant 0 : index
    %25 = vector.load %arg4[%c0_17, %c0_18, %c0_19] : memref<2x8x32xf32, #tpu.memory_space<vmem>>, vector<1x8x32xf32>
    %26 = vector.shape_cast %25 : vector<1x8x32xf32> to vector<8x32xf32>
    %27 = vector.extract_strided_slice %26 {offsets = [0, 0], sizes = [1, 32], strides = [1, 1]} : vector<8x32xf32> to vector<1x32xf32>
    %28 = vector.extract_strided_slice %26 {offsets = [1, 0], sizes = [1, 32], strides = [1, 1]} : vector<8x32xf32> to vector<1x32xf32>
    %29 = vector.extract_strided_slice %26 {offsets = [2, 0], sizes = [1, 32], strides = [1, 1]} : vector<8x32xf32> to vector<1x32xf32>
    %30 = vector.extract_strided_slice %26 {offsets = [3, 0], sizes = [1, 32], strides = [1, 1]} : vector<8x32xf32> to vector<1x32xf32>
    %31 = vector.extract_strided_slice %26 {offsets = [4, 0], sizes = [1, 32], strides = [1, 1]} : vector<8x32xf32> to vector<1x32xf32>
    %32 = vector.extract_strided_slice %26 {offsets = [5, 0], sizes = [1, 32], strides = [1, 1]} : vector<8x32xf32> to vector<1x32xf32>
    %cst_20 = arith.constant dense<0.000000e+00> : vector<48xf32>
    %33 = vector.multi_reduction <add>, %24, %cst_20 [1] : vector<48x32xf32> to vector<48xf32>
    %34 = vector.shape_cast %33 : vector<48xf32> to vector<48x1xf32>
    %cst_21 = arith.constant 3.200000e+01 : f32
    %35 = vector.broadcast %cst_21 : f32 to vector<48x1xf32>
    %36 = arith.divf %34, %35 : vector<48x1xf32>
    %37 = vector.broadcast %36 : vector<48x1xf32> to vector<48x32xf32>
    %38 = arith.subf %24, %37 : vector<48x32xf32>
    %39 = arith.mulf %38, %38 : vector<48x32xf32>
    %cst_22 = arith.constant dense<0.000000e+00> : vector<48xf32>
    %40 = vector.multi_reduction <add>, %39, %cst_22 [1] : vector<48x32xf32> to vector<48xf32>
    %41 = vector.shape_cast %40 : vector<48xf32> to vector<48x1xf32>
    %cst_23 = arith.constant 3.200000e+01 : f32
    %42 = vector.broadcast %cst_23 : f32 to vector<48x1xf32>
    %43 = arith.divf %41, %42 : vector<48x1xf32>
    %44 = vector.broadcast %36 : vector<48x1xf32> to vector<48x32xf32>
    %45 = arith.subf %24, %44 : vector<48x32xf32>
    %cst_24 = arith.constant 9.99999997E-7 : f32
    %46 = vector.broadcast %cst_24 : f32 to vector<48x1xf32>
    %47 = arith.addf %43, %46 : vector<48x1xf32>
    %48 = math.rsqrt %47 : vector<48x1xf32>
    %49 = vector.broadcast %48 : vector<48x1xf32> to vector<48x32xf32>
    %50 = arith.mulf %45, %49 : vector<48x32xf32>
    %51 = vector.broadcast %27 : vector<1x32xf32> to vector<48x32xf32>
    %52 = arith.mulf %50, %51 : vector<48x32xf32>
    %53 = vector.broadcast %28 : vector<1x32xf32> to vector<48x32xf32>
    %54 = arith.addf %52, %53 : vector<48x32xf32>
    %c0_25 = arith.constant 0 : index
    %c0_26 = arith.constant 0 : index
    %c0_27 = arith.constant 0 : index
    %55 = vector.load %arg5[%c0_25, %c0_26, %c0_27] : memref<2x32x96xf32, #tpu.memory_space<vmem>>, vector<1x32x96xf32>
    %56 = vector.shape_cast %55 : vector<1x32x96xf32> to vector<32x96xf32>
    %cst_28 = arith.constant dense<0.000000e+00> : vector<48x96xf32>
    %57 = tpu.matmul %54, %56, %cst_28 {dimension_numbers = #tpu.dot_dimension_numbers<[1], [0], [0], [1], [0, 0, 1, 1], [], []>} : vector<48x32xf32>, vector<32x96xf32>, vector<48x96xf32> -> vector<48x96xf32>
    %c0_29 = arith.constant 0 : index
    %c0_30 = arith.constant 0 : index
    %c0_31 = arith.constant 0 : index
    %58 = vector.load %arg6[%c0_29, %c0_30, %c0_31] : memref<2x1x96xf32, #tpu.memory_space<vmem>>, vector<1x1x96xf32>
    %59 = vector.shape_cast %58 : vector<1x1x96xf32> to vector<1x96xf32>
    %60 = vector.broadcast %59 : vector<1x96xf32> to vector<48x96xf32>
    %61 = arith.addf %57, %60 : vector<48x96xf32>
    %62 = vector.extract_strided_slice %61 {offsets = [0, 0], sizes = [24, 8], strides = [1, 1]} : vector<48x96xf32> to vector<24x8xf32>
    %63 = vector.extract_strided_slice %61 {offsets = [0, 32], sizes = [24, 8], strides = [1, 1]} : vector<48x96xf32> to vector<24x8xf32>
    %64 = vector.extract_strided_slice %61 {offsets = [0, 64], sizes = [24, 8], strides = [1, 1]} : vector<48x96xf32> to vector<24x8xf32>
    %cst_32 = arith.constant dense<0.000000e+00> : vector<24x24xf32>
    %65 = tpu.matmul %62, %63, %cst_32 {dimension_numbers = #tpu.dot_dimension_numbers<[1], [1], [0], [0], [0, 0, 1, 0], [], []>} : vector<24x8xf32>, vector<24x8xf32>, vector<24x24xf32> -> vector<24x24xf32>
    %cst_33 = arith.constant 0.353553385 : f32
    %66 = vector.broadcast %cst_33 : f32 to vector<24x24xf32>
    %67 = arith.mulf %65, %66 : vector<24x24xf32>
    %68 = vector.broadcast %5 : vector<1x24xf32> to vector<24x24xf32>
    %69 = arith.addf %67, %68 : vector<24x24xf32>
    %cst_34 = arith.constant dense<0xFF800000> : vector<24xf32>
    %70 = vector.multi_reduction <maximumf>, %69, %cst_34 [1] : vector<24x24xf32> to vector<24xf32>
    %71 = vector.shape_cast %70 : vector<24xf32> to vector<24x1xf32>
    %72 = vector.broadcast %71 : vector<24x1xf32> to vector<24x24xf32>
    %73 = arith.subf %69, %72 : vector<24x24xf32>
    %74 = math.exp %73 : vector<24x24xf32>
    %cst_35 = arith.constant dense<0.000000e+00> : vector<24xf32>
    %75 = vector.multi_reduction <add>, %74, %cst_35 [1] : vector<24x24xf32> to vector<24xf32>
    %76 = vector.shape_cast %75 : vector<24xf32> to vector<24x1xf32>
    %77 = tpu.reciprocal %76 {approx = true} : vector<24x1xf32> -> vector<24x1xf32>
    %78 = vector.broadcast %77 : vector<24x1xf32> to vector<24x24xf32>
    %79 = arith.mulf %74, %78 : vector<24x24xf32>
    %cst_36 = arith.constant dense<0.000000e+00> : vector<24x8xf32>
    %80 = tpu.matmul %79, %64, %cst_36 {dimension_numbers = #tpu.dot_dimension_numbers<[1], [0], [0], [1], [0, 0, 1, 1], [], []>} : vector<24x24xf32>, vector<24x8xf32>, vector<24x8xf32> -> vector<24x8xf32>
    %c0_37 = arith.constant 0 : index
    %c0_38 = arith.constant 0 : index
    %81 = vector.load %arg16[%c0_37, %c0_38] : memref<48x32xf32, #tpu.memory_space<vmem>>, vector<24x8xf32>
    tpu.vector_store %arg16[%c0_37, %c0_38], %80 {strides = array<i32>} : memref<48x32xf32, #tpu.memory_space<vmem>>, vector<24x8xf32>,
    %82 = vector.extract_strided_slice %61 {offsets = [0, 8], sizes = [24, 8], strides = [1, 1]} : vector<48x96xf32> to vector<24x8xf32>
    %83 = vector.extract_strided_slice %61 {offsets = [0, 40], sizes = [24, 8], strides = [1, 1]} : vector<48x96xf32> to vector<24x8xf32>
    %84 = vector.extract_strided_slice %61 {offsets = [0, 72], sizes = [24, 8], strides = [1, 1]} : vector<48x96xf32> to vector<24x8xf32>
    %cst_39 = arith.constant dense<0.000000e+00> : vector<24x24xf32>
    %85 = tpu.matmul %82, %83, %cst_39 {dimension_numbers = #tpu.dot_dimension_numbers<[1], [1], [0], [0], [0, 0, 1, 0], [], []>} : vector<24x8xf32>, vector<24x8xf32>, vector<24x24xf32> -> vector<24x24xf32>
    %cst_40 = arith.constant 0.353553385 : f32
    %86 = vector.broadcast %cst_40 : f32 to vector<24x24xf32>
    %87 = arith.mulf %85, %86 : vector<24x24xf32>
    %88 = vector.broadcast %5 : vector<1x24xf32> to vector<24x24xf32>
    %89 = arith.addf %87, %88 : vector<24x24xf32>
    %cst_41 = arith.constant dense<0xFF800000> : vector<24xf32>
    %90 = vector.multi_reduction <maximumf>, %89, %cst_41 [1] : vector<24x24xf32> to vector<24xf32>
    %91 = vector.shape_cast %90 : vector<24xf32> to vector<24x1xf32>
    %92 = vector.broadcast %91 : vector<24x1xf32> to vector<24x24xf32>
    %93 = arith.subf %89, %92 : vector<24x24xf32>
    %94 = math.exp %93 : vector<24x24xf32>
    %cst_42 = arith.constant dense<0.000000e+00> : vector<24xf32>
    %95 = vector.multi_reduction <add>, %94, %cst_42 [1] : vector<24x24xf32> to vector<24xf32>
    %96 = vector.shape_cast %95 : vector<24xf32> to vector<24x1xf32>
    %97 = tpu.reciprocal %96 {approx = true} : vector<24x1xf32> -> vector<24x1xf32>
    %98 = vector.broadcast %97 : vector<24x1xf32> to vector<24x24xf32>
    %99 = arith.mulf %94, %98 : vector<24x24xf32>
    %cst_43 = arith.constant dense<0.000000e+00> : vector<24x8xf32>
    %100 = tpu.matmul %99, %84, %cst_43 {dimension_numbers = #tpu.dot_dimension_numbers<[1], [0], [0], [1], [0, 0, 1, 1], [], []>} : vector<24x24xf32>, vector<24x8xf32>, vector<24x8xf32> -> vector<24x8xf32>
    %c0_44 = arith.constant 0 : index
    %c8 = arith.constant 8 : index
    %101 = vector.load %arg16[%c0_44, %c8] : memref<48x32xf32, #tpu.memory_space<vmem>>, vector<24x8xf32>
    tpu.vector_store %arg16[%c0_44, %c8], %100 {strides = array<i32>} : memref<48x32xf32, #tpu.memory_space<vmem>>, vector<24x8xf32>,
    %102 = vector.extract_strided_slice %61 {offsets = [0, 16], sizes = [24, 8], strides = [1, 1]} : vector<48x96xf32> to vector<24x8xf32>
    %103 = vector.extract_strided_slice %61 {offsets = [0, 48], sizes = [24, 8], strides = [1, 1]} : vector<48x96xf32> to vector<24x8xf32>
    %104 = vector.extract_strided_slice %61 {offsets = [0, 80], sizes = [24, 8], strides = [1, 1]} : vector<48x96xf32> to vector<24x8xf32>
    %cst_45 = arith.constant dense<0.000000e+00> : vector<24x24xf32>
    %105 = tpu.matmul %102, %103, %cst_45 {dimension_numbers = #tpu.dot_dimension_numbers<[1], [1], [0], [0], [0, 0, 1, 0], [], []>} : vector<24x8xf32>, vector<24x8xf32>, vector<24x24xf32> -> vector<24x24xf32>
    %cst_46 = arith.constant 0.353553385 : f32
    %106 = vector.broadcast %cst_46 : f32 to vector<24x24xf32>
    %107 = arith.mulf %105, %106 : vector<24x24xf32>
    %108 = vector.broadcast %5 : vector<1x24xf32> to vector<24x24xf32>
    %109 = arith.addf %107, %108 : vector<24x24xf32>
    %cst_47 = arith.constant dense<0xFF800000> : vector<24xf32>
    %110 = vector.multi_reduction <maximumf>, %109, %cst_47 [1] : vector<24x24xf32> to vector<24xf32>
    %111 = vector.shape_cast %110 : vector<24xf32> to vector<24x1xf32>
    %112 = vector.broadcast %111 : vector<24x1xf32> to vector<24x24xf32>
    %113 = arith.subf %109, %112 : vector<24x24xf32>
    %114 = math.exp %113 : vector<24x24xf32>
    %cst_48 = arith.constant dense<0.000000e+00> : vector<24xf32>
    %115 = vector.multi_reduction <add>, %114, %cst_48 [1] : vector<24x24xf32> to vector<24xf32>
    %116 = vector.shape_cast %115 : vector<24xf32> to vector<24x1xf32>
    %117 = tpu.reciprocal %116 {approx = true} : vector<24x1xf32> -> vector<24x1xf32>
    %118 = vector.broadcast %117 : vector<24x1xf32> to vector<24x24xf32>
    %119 = arith.mulf %114, %118 : vector<24x24xf32>
    %cst_49 = arith.constant dense<0.000000e+00> : vector<24x8xf32>
    %120 = tpu.matmul %119, %104, %cst_49 {dimension_numbers = #tpu.dot_dimension_numbers<[1], [0], [0], [1], [0, 0, 1, 1], [], []>} : vector<24x24xf32>, vector<24x8xf32>, vector<24x8xf32> -> vector<24x8xf32>
    %c0_50 = arith.constant 0 : index
    %c16 = arith.constant 16 : index
    %121 = vector.load %arg16[%c0_50, %c16] : memref<48x32xf32, #tpu.memory_space<vmem>>, vector<24x8xf32>
    tpu.vector_store %arg16[%c0_50, %c16], %120 {strides = array<i32>} : memref<48x32xf32, #tpu.memory_space<vmem>>, vector<24x8xf32>,
    %122 = vector.extract_strided_slice %61 {offsets = [0, 24], sizes = [24, 8], strides = [1, 1]} : vector<48x96xf32> to vector<24x8xf32>
    %123 = vector.extract_strided_slice %61 {offsets = [0, 56], sizes = [24, 8], strides = [1, 1]} : vector<48x96xf32> to vector<24x8xf32>
    %124 = vector.extract_strided_slice %61 {offsets = [0, 88], sizes = [24, 8], strides = [1, 1]} : vector<48x96xf32> to vector<24x8xf32>
    %cst_51 = arith.constant dense<0.000000e+00> : vector<24x24xf32>
    %125 = tpu.matmul %122, %123, %cst_51 {dimension_numbers = #tpu.dot_dimension_numbers<[1], [1], [0], [0], [0, 0, 1, 0], [], []>} : vector<24x8xf32>, vector<24x8xf32>, vector<24x24xf32> -> vector<24x24xf32>
    %cst_52 = arith.constant 0.353553385 : f32
    %126 = vector.broadcast %cst_52 : f32 to vector<24x24xf32>
    %127 = arith.mulf %125, %126 : vector<24x24xf32>
    %128 = vector.broadcast %5 : vector<1x24xf32> to vector<24x24xf32>
    %129 = arith.addf %127, %128 : vector<24x24xf32>
    %cst_53 = arith.constant dense<0xFF800000> : vector<24xf32>
    %130 = vector.multi_reduction <maximumf>, %129, %cst_53 [1] : vector<24x24xf32> to vector<24xf32>
    %131 = vector.shape_cast %130 : vector<24xf32> to vector<24x1xf32>
    %132 = vector.broadcast %131 : vector<24x1xf32> to vector<24x24xf32>
    %133 = arith.subf %129, %132 : vector<24x24xf32>
    %134 = math.exp %133 : vector<24x24xf32>
    %cst_54 = arith.constant dense<0.000000e+00> : vector<24xf32>
    %135 = vector.multi_reduction <add>, %134, %cst_54 [1] : vector<24x24xf32> to vector<24xf32>
    %136 = vector.shape_cast %135 : vector<24xf32> to vector<24x1xf32>
    %137 = tpu.reciprocal %136 {approx = true} : vector<24x1xf32> -> vector<24x1xf32>
    %138 = vector.broadcast %137 : vector<24x1xf32> to vector<24x24xf32>
    %139 = arith.mulf %134, %138 : vector<24x24xf32>
    %cst_55 = arith.constant dense<0.000000e+00> : vector<24x8xf32>
    %140 = tpu.matmul %139, %124, %cst_55 {dimension_numbers = #tpu.dot_dimension_numbers<[1], [0], [0], [1], [0, 0, 1, 1], [], []>} : vector<24x24xf32>, vector<24x8xf32>, vector<24x8xf32> -> vector<24x8xf32>
    %c0_56 = arith.constant 0 : index
    %c24_57 = arith.constant 24 : index
    %141 = vector.load %arg16[%c0_56, %c24_57] : memref<48x32xf32, #tpu.memory_space<vmem>>, vector<24x8xf32>
    tpu.vector_store %arg16[%c0_56, %c24_57], %140 {strides = array<i32>} : memref<48x32xf32, #tpu.memory_space<vmem>>, vector<24x8xf32>,
    %142 = vector.extract_strided_slice %61 {offsets = [24, 0], sizes = [24, 8], strides = [1, 1]} : vector<48x96xf32> to vector<24x8xf32>
    %143 = vector.extract_strided_slice %61 {offsets = [24, 32], sizes = [24, 8], strides = [1, 1]} : vector<48x96xf32> to vector<24x8xf32>
    %144 = vector.extract_strided_slice %61 {offsets = [24, 64], sizes = [24, 8], strides = [1, 1]} : vector<48x96xf32> to vector<24x8xf32>
    %cst_58 = arith.constant dense<0.000000e+00> : vector<24x24xf32>
    %145 = tpu.matmul %142, %143, %cst_58 {dimension_numbers = #tpu.dot_dimension_numbers<[1], [1], [0], [0], [0, 0, 1, 0], [], []>} : vector<24x8xf32>, vector<24x8xf32>, vector<24x24xf32> -> vector<24x24xf32>
    %cst_59 = arith.constant 0.353553385 : f32
    %146 = vector.broadcast %cst_59 : f32 to vector<24x24xf32>
    %147 = arith.mulf %145, %146 : vector<24x24xf32>
    %148 = vector.broadcast %5 : vector<1x24xf32> to vector<24x24xf32>
    %149 = arith.addf %147, %148 : vector<24x24xf32>
    %cst_60 = arith.constant dense<0xFF800000> : vector<24xf32>
    %150 = vector.multi_reduction <maximumf>, %149, %cst_60 [1] : vector<24x24xf32> to vector<24xf32>
    %151 = vector.shape_cast %150 : vector<24xf32> to vector<24x1xf32>
    %152 = vector.broadcast %151 : vector<24x1xf32> to vector<24x24xf32>
    %153 = arith.subf %149, %152 : vector<24x24xf32>
    %154 = math.exp %153 : vector<24x24xf32>
    %cst_61 = arith.constant dense<0.000000e+00> : vector<24xf32>
    %155 = vector.multi_reduction <add>, %154, %cst_61 [1] : vector<24x24xf32> to vector<24xf32>
    %156 = vector.shape_cast %155 : vector<24xf32> to vector<24x1xf32>
    %157 = tpu.reciprocal %156 {approx = true} : vector<24x1xf32> -> vector<24x1xf32>
    %158 = vector.broadcast %157 : vector<24x1xf32> to vector<24x24xf32>
    %159 = arith.mulf %154, %158 : vector<24x24xf32>
    %cst_62 = arith.constant dense<0.000000e+00> : vector<24x8xf32>
    %160 = tpu.matmul %159, %144, %cst_62 {dimension_numbers = #tpu.dot_dimension_numbers<[1], [0], [0], [1], [0, 0, 1, 1], [], []>} : vector<24x24xf32>, vector<24x8xf32>, vector<24x8xf32> -> vector<24x8xf32>
    %c24_63 = arith.constant 24 : index
    %c0_64 = arith.constant 0 : index
    %161 = vector.load %arg16[%c24_63, %c0_64] : memref<48x32xf32, #tpu.memory_space<vmem>>, vector<24x8xf32>
    tpu.vector_store %arg16[%c24_63, %c0_64], %160 {strides = array<i32>} : memref<48x32xf32, #tpu.memory_space<vmem>>, vector<24x8xf32>,
    %162 = vector.extract_strided_slice %61 {offsets = [24, 8], sizes = [24, 8], strides = [1, 1]} : vector<48x96xf32> to vector<24x8xf32>
    %163 = vector.extract_strided_slice %61 {offsets = [24, 40], sizes = [24, 8], strides = [1, 1]} : vector<48x96xf32> to vector<24x8xf32>
    %164 = vector.extract_strided_slice %61 {offsets = [24, 72], sizes = [24, 8], strides = [1, 1]} : vector<48x96xf32> to vector<24x8xf32>
    %cst_65 = arith.constant dense<0.000000e+00> : vector<24x24xf32>
    %165 = tpu.matmul %162, %163, %cst_65 {dimension_numbers = #tpu.dot_dimension_numbers<[1], [1], [0], [0], [0, 0, 1, 0], [], []>} : vector<24x8xf32>, vector<24x8xf32>, vector<24x24xf32> -> vector<24x24xf32>
    %cst_66 = arith.constant 0.353553385 : f32
    %166 = vector.broadcast %cst_66 : f32 to vector<24x24xf32>
    %167 = arith.mulf %165, %166 : vector<24x24xf32>
    %168 = vector.broadcast %5 : vector<1x24xf32> to vector<24x24xf32>
    %169 = arith.addf %167, %168 : vector<24x24xf32>
    %cst_67 = arith.constant dense<0xFF800000> : vector<24xf32>
    %170 = vector.multi_reduction <maximumf>, %169, %cst_67 [1] : vector<24x24xf32> to vector<24xf32>
    %171 = vector.shape_cast %170 : vector<24xf32> to vector<24x1xf32>
    %172 = vector.broadcast %171 : vector<24x1xf32> to vector<24x24xf32>
    %173 = arith.subf %169, %172 : vector<24x24xf32>
    %174 = math.exp %173 : vector<24x24xf32>
    %cst_68 = arith.constant dense<0.000000e+00> : vector<24xf32>
    %175 = vector.multi_reduction <add>, %174, %cst_68 [1] : vector<24x24xf32> to vector<24xf32>
    %176 = vector.shape_cast %175 : vector<24xf32> to vector<24x1xf32>
    %177 = tpu.reciprocal %176 {approx = true} : vector<24x1xf32> -> vector<24x1xf32>
    %178 = vector.broadcast %177 : vector<24x1xf32> to vector<24x24xf32>
    %179 = arith.mulf %174, %178 : vector<24x24xf32>
    %cst_69 = arith.constant dense<0.000000e+00> : vector<24x8xf32>
    %180 = tpu.matmul %179, %164, %cst_69 {dimension_numbers = #tpu.dot_dimension_numbers<[1], [0], [0], [1], [0, 0, 1, 1], [], []>} : vector<24x24xf32>, vector<24x8xf32>, vector<24x8xf32> -> vector<24x8xf32>
    %c24_70 = arith.constant 24 : index
    %c8_71 = arith.constant 8 : index
    %181 = vector.load %arg16[%c24_70, %c8_71] : memref<48x32xf32, #tpu.memory_space<vmem>>, vector<24x8xf32>
    tpu.vector_store %arg16[%c24_70, %c8_71], %180 {strides = array<i32>} : memref<48x32xf32, #tpu.memory_space<vmem>>, vector<24x8xf32>,
    %182 = vector.extract_strided_slice %61 {offsets = [24, 16], sizes = [24, 8], strides = [1, 1]} : vector<48x96xf32> to vector<24x8xf32>
    %183 = vector.extract_strided_slice %61 {offsets = [24, 48], sizes = [24, 8], strides = [1, 1]} : vector<48x96xf32> to vector<24x8xf32>
    %184 = vector.extract_strided_slice %61 {offsets = [24, 80], sizes = [24, 8], strides = [1, 1]} : vector<48x96xf32> to vector<24x8xf32>
    %cst_72 = arith.constant dense<0.000000e+00> : vector<24x24xf32>
    %185 = tpu.matmul %182, %183, %cst_72 {dimension_numbers = #tpu.dot_dimension_numbers<[1], [1], [0], [0], [0, 0, 1, 0], [], []>} : vector<24x8xf32>, vector<24x8xf32>, vector<24x24xf32> -> vector<24x24xf32>
    %cst_73 = arith.constant 0.353553385 : f32
    %186 = vector.broadcast %cst_73 : f32 to vector<24x24xf32>
    %187 = arith.mulf %185, %186 : vector<24x24xf32>
    %188 = vector.broadcast %5 : vector<1x24xf32> to vector<24x24xf32>
    %189 = arith.addf %187, %188 : vector<24x24xf32>
    %cst_74 = arith.constant dense<0xFF800000> : vector<24xf32>
    %190 = vector.multi_reduction <maximumf>, %189, %cst_74 [1] : vector<24x24xf32> to vector<24xf32>
    %191 = vector.shape_cast %190 : vector<24xf32> to vector<24x1xf32>
    %192 = vector.broadcast %191 : vector<24x1xf32> to vector<24x24xf32>
    %193 = arith.subf %189, %192 : vector<24x24xf32>
    %194 = math.exp %193 : vector<24x24xf32>
    %cst_75 = arith.constant dense<0.000000e+00> : vector<24xf32>
    %195 = vector.multi_reduction <add>, %194, %cst_75 [1] : vector<24x24xf32> to vector<24xf32>
    %196 = vector.shape_cast %195 : vector<24xf32> to vector<24x1xf32>
    %197 = tpu.reciprocal %196 {approx = true} : vector<24x1xf32> -> vector<24x1xf32>
    %198 = vector.broadcast %197 : vector<24x1xf32> to vector<24x24xf32>
    %199 = arith.mulf %194, %198 : vector<24x24xf32>
    %cst_76 = arith.constant dense<0.000000e+00> : vector<24x8xf32>
    %200 = tpu.matmul %199, %184, %cst_76 {dimension_numbers = #tpu.dot_dimension_numbers<[1], [0], [0], [1], [0, 0, 1, 1], [], []>} : vector<24x24xf32>, vector<24x8xf32>, vector<24x8xf32> -> vector<24x8xf32>
    %c24_77 = arith.constant 24 : index
    %c16_78 = arith.constant 16 : index
    %201 = vector.load %arg16[%c24_77, %c16_78] : memref<48x32xf32, #tpu.memory_space<vmem>>, vector<24x8xf32>
    tpu.vector_store %arg16[%c24_77, %c16_78], %200 {strides = array<i32>} : memref<48x32xf32, #tpu.memory_space<vmem>>, vector<24x8xf32>,
    %202 = vector.extract_strided_slice %61 {offsets = [24, 24], sizes = [24, 8], strides = [1, 1]} : vector<48x96xf32> to vector<24x8xf32>
    %203 = vector.extract_strided_slice %61 {offsets = [24, 56], sizes = [24, 8], strides = [1, 1]} : vector<48x96xf32> to vector<24x8xf32>
    %204 = vector.extract_strided_slice %61 {offsets = [24, 88], sizes = [24, 8], strides = [1, 1]} : vector<48x96xf32> to vector<24x8xf32>
    %cst_79 = arith.constant dense<0.000000e+00> : vector<24x24xf32>
    %205 = tpu.matmul %202, %203, %cst_79 {dimension_numbers = #tpu.dot_dimension_numbers<[1], [1], [0], [0], [0, 0, 1, 0], [], []>} : vector<24x8xf32>, vector<24x8xf32>, vector<24x24xf32> -> vector<24x24xf32>
    %cst_80 = arith.constant 0.353553385 : f32
    %206 = vector.broadcast %cst_80 : f32 to vector<24x24xf32>
    %207 = arith.mulf %205, %206 : vector<24x24xf32>
    %208 = vector.broadcast %5 : vector<1x24xf32> to vector<24x24xf32>
    %209 = arith.addf %207, %208 : vector<24x24xf32>
    %cst_81 = arith.constant dense<0xFF800000> : vector<24xf32>
    %210 = vector.multi_reduction <maximumf>, %209, %cst_81 [1] : vector<24x24xf32> to vector<24xf32>
    %211 = vector.shape_cast %210 : vector<24xf32> to vector<24x1xf32>
    %212 = vector.broadcast %211 : vector<24x1xf32> to vector<24x24xf32>
    %213 = arith.subf %209, %212 : vector<24x24xf32>
    %214 = math.exp %213 : vector<24x24xf32>
    %cst_82 = arith.constant dense<0.000000e+00> : vector<24xf32>
    %215 = vector.multi_reduction <add>, %214, %cst_82 [1] : vector<24x24xf32> to vector<24xf32>
    %216 = vector.shape_cast %215 : vector<24xf32> to vector<24x1xf32>
    %217 = tpu.reciprocal %216 {approx = true} : vector<24x1xf32> -> vector<24x1xf32>
    %218 = vector.broadcast %217 : vector<24x1xf32> to vector<24x24xf32>
    %219 = arith.mulf %214, %218 : vector<24x24xf32>
    %cst_83 = arith.constant dense<0.000000e+00> : vector<24x8xf32>
    %220 = tpu.matmul %219, %204, %cst_83 {dimension_numbers = #tpu.dot_dimension_numbers<[1], [0], [0], [1], [0, 0, 1, 1], [], []>} : vector<24x24xf32>, vector<24x8xf32>, vector<24x8xf32> -> vector<24x8xf32>
    %c24_84 = arith.constant 24 : index
    %c24_85 = arith.constant 24 : index
    %221 = vector.load %arg16[%c24_84, %c24_85] : memref<48x32xf32, #tpu.memory_space<vmem>>, vector<24x8xf32>
    tpu.vector_store %arg16[%c24_84, %c24_85], %220 {strides = array<i32>} : memref<48x32xf32, #tpu.memory_space<vmem>>, vector<24x8xf32>,
    %c0_86 = arith.constant 0 : index
    %c0_87 = arith.constant 0 : index
    %222 = vector.load %arg16[%c0_86, %c0_87] : memref<48x32xf32, #tpu.memory_space<vmem>>, vector<48x32xf32>
    %c0_88 = arith.constant 0 : index
    %c0_89 = arith.constant 0 : index
    %c0_90 = arith.constant 0 : index
    %223 = vector.load %arg7[%c0_88, %c0_89, %c0_90] : memref<2x32x32xf32, #tpu.memory_space<vmem>>, vector<1x32x32xf32>
    %224 = vector.shape_cast %223 : vector<1x32x32xf32> to vector<32x32xf32>
    %cst_91 = arith.constant dense<0.000000e+00> : vector<48x32xf32>
    %225 = tpu.matmul %222, %224, %cst_91 {dimension_numbers = #tpu.dot_dimension_numbers<[1], [0], [0], [1], [0, 0, 1, 1], [], []>} : vector<48x32xf32>, vector<32x32xf32>, vector<48x32xf32> -> vector<48x32xf32>
    %226 = vector.broadcast %31 : vector<1x32xf32> to vector<48x32xf32>
    %227 = arith.addf %225, %226 : vector<48x32xf32>
    %228 = arith.addf %24, %227 : vector<48x32xf32>
    %cst_92 = arith.constant dense<0.000000e+00> : vector<48xf32>
    %229 = vector.multi_reduction <add>, %228, %cst_92 [1] : vector<48x32xf32> to vector<48xf32>
    %230 = vector.shape_cast %229 : vector<48xf32> to vector<48x1xf32>
    %cst_93 = arith.constant 3.200000e+01 : f32
    %231 = vector.broadcast %cst_93 : f32 to vector<48x1xf32>
    %232 = arith.divf %230, %231 : vector<48x1xf32>
    %233 = vector.broadcast %232 : vector<48x1xf32> to vector<48x32xf32>
    %234 = arith.subf %228, %233 : vector<48x32xf32>
    %235 = arith.mulf %234, %234 : vector<48x32xf32>
    %cst_94 = arith.constant dense<0.000000e+00> : vector<48xf32>
    %236 = vector.multi_reduction <add>, %235, %cst_94 [1] : vector<48x32xf32> to vector<48xf32>
    %237 = vector.shape_cast %236 : vector<48xf32> to vector<48x1xf32>
    %cst_95 = arith.constant 3.200000e+01 : f32
    %238 = vector.broadcast %cst_95 : f32 to vector<48x1xf32>
    %239 = arith.divf %237, %238 : vector<48x1xf32>
    %240 = vector.broadcast %232 : vector<48x1xf32> to vector<48x32xf32>
    %241 = arith.subf %228, %240 : vector<48x32xf32>
    %cst_96 = arith.constant 9.99999997E-7 : f32
    %242 = vector.broadcast %cst_96 : f32 to vector<48x1xf32>
    %243 = arith.addf %239, %242 : vector<48x1xf32>
    %244 = math.rsqrt %243 : vector<48x1xf32>
    %245 = vector.broadcast %244 : vector<48x1xf32> to vector<48x32xf32>
    %246 = arith.mulf %241, %245 : vector<48x32xf32>
    %247 = vector.broadcast %29 : vector<1x32xf32> to vector<48x32xf32>
    %248 = arith.mulf %246, %247 : vector<48x32xf32>
    %249 = vector.broadcast %30 : vector<1x32xf32> to vector<48x32xf32>
    %250 = arith.addf %248, %249 : vector<48x32xf32>
    %c0_97 = arith.constant 0 : index
    %c0_98 = arith.constant 0 : index
    %c0_99 = arith.constant 0 : index
    %251 = vector.load %arg8[%c0_97, %c0_98, %c0_99] : memref<2x32x64xf32, #tpu.memory_space<vmem>>, vector<1x32x64xf32>
    %252 = vector.shape_cast %251 : vector<1x32x64xf32> to vector<32x64xf32>
    %cst_100 = arith.constant dense<0.000000e+00> : vector<48x64xf32>
    %253 = tpu.matmul %250, %252, %cst_100 {dimension_numbers = #tpu.dot_dimension_numbers<[1], [0], [0], [1], [0, 0, 1, 1], [], []>} : vector<48x32xf32>, vector<32x64xf32>, vector<48x64xf32> -> vector<48x64xf32>
    %c0_101 = arith.constant 0 : index
    %c0_102 = arith.constant 0 : index
    %c0_103 = arith.constant 0 : index
    %254 = vector.load %arg9[%c0_101, %c0_102, %c0_103] : memref<2x1x64xf32, #tpu.memory_space<vmem>>, vector<1x1x64xf32>
    %255 = vector.shape_cast %254 : vector<1x1x64xf32> to vector<1x64xf32>
    %256 = vector.broadcast %255 : vector<1x64xf32> to vector<48x64xf32>
    %257 = arith.addf %253, %256 : vector<48x64xf32>
    %cst_104 = arith.constant 5.000000e-01 : f32
    %258 = vector.broadcast %cst_104 : f32 to vector<48x64xf32>
    %259 = arith.mulf %258, %257 : vector<48x64xf32>
    %cst_105 = arith.constant 0.707106769 : f32
    %260 = vector.broadcast %cst_105 : f32 to vector<48x64xf32>
    %261 = arith.mulf %257, %260 : vector<48x64xf32>
    %262 = math.erf %261 : vector<48x64xf32>
    %cst_106 = arith.constant 1.000000e+00 : f32
    %263 = vector.broadcast %cst_106 : f32 to vector<48x64xf32>
    %264 = arith.addf %263, %262 : vector<48x64xf32>
    %265 = arith.mulf %259, %264 : vector<48x64xf32>
    %c0_107 = arith.constant 0 : index
    %c0_108 = arith.constant 0 : index
    %c0_109 = arith.constant 0 : index
    %266 = vector.load %arg10[%c0_107, %c0_108, %c0_109] : memref<2x64x32xf32, #tpu.memory_space<vmem>>, vector<1x64x32xf32>
    %267 = vector.shape_cast %266 : vector<1x64x32xf32> to vector<64x32xf32>
    %cst_110 = arith.constant dense<0.000000e+00> : vector<48x32xf32>
    %268 = tpu.matmul %265, %267, %cst_110 {dimension_numbers = #tpu.dot_dimension_numbers<[1], [0], [0], [1], [0, 0, 1, 1], [], []>} : vector<48x64xf32>, vector<64x32xf32>, vector<48x32xf32> -> vector<48x32xf32>
    %269 = vector.broadcast %32 : vector<1x32xf32> to vector<48x32xf32>
    %270 = arith.addf %268, %269 : vector<48x32xf32>
    %271 = arith.addf %228, %270 : vector<48x32xf32>
    %c1_111 = arith.constant 1 : index
    %c0_112 = arith.constant 0 : index
    %c0_113 = arith.constant 0 : index
    %272 = vector.load %arg4[%c1_111, %c0_112, %c0_113] : memref<2x8x32xf32, #tpu.memory_space<vmem>>, vector<1x8x32xf32>
    %273 = vector.shape_cast %272 : vector<1x8x32xf32> to vector<8x32xf32>
    %274 = vector.extract_strided_slice %273 {offsets = [0, 0], sizes = [1, 32], strides = [1, 1]} : vector<8x32xf32> to vector<1x32xf32>
    %275 = vector.extract_strided_slice %273 {offsets = [1, 0], sizes = [1, 32], strides = [1, 1]} : vector<8x32xf32> to vector<1x32xf32>
    %276 = vector.extract_strided_slice %273 {offsets = [2, 0], sizes = [1, 32], strides = [1, 1]} : vector<8x32xf32> to vector<1x32xf32>
    %277 = vector.extract_strided_slice %273 {offsets = [3, 0], sizes = [1, 32], strides = [1, 1]} : vector<8x32xf32> to vector<1x32xf32>
    %278 = vector.extract_strided_slice %273 {offsets = [4, 0], sizes = [1, 32], strides = [1, 1]} : vector<8x32xf32> to vector<1x32xf32>
    %279 = vector.extract_strided_slice %273 {offsets = [5, 0], sizes = [1, 32], strides = [1, 1]} : vector<8x32xf32> to vector<1x32xf32>
    %cst_114 = arith.constant dense<0.000000e+00> : vector<48xf32>
    %280 = vector.multi_reduction <add>, %271, %cst_114 [1] : vector<48x32xf32> to vector<48xf32>
    %281 = vector.shape_cast %280 : vector<48xf32> to vector<48x1xf32>
    %cst_115 = arith.constant 3.200000e+01 : f32
    %282 = vector.broadcast %cst_115 : f32 to vector<48x1xf32>
    %283 = arith.divf %281, %282 : vector<48x1xf32>
    %284 = vector.broadcast %283 : vector<48x1xf32> to vector<48x32xf32>
    %285 = arith.subf %271, %284 : vector<48x32xf32>
    %286 = arith.mulf %285, %285 : vector<48x32xf32>
    %cst_116 = arith.constant dense<0.000000e+00> : vector<48xf32>
    %287 = vector.multi_reduction <add>, %286, %cst_116 [1] : vector<48x32xf32> to vector<48xf32>
    %288 = vector.shape_cast %287 : vector<48xf32> to vector<48x1xf32>
    %cst_117 = arith.constant 3.200000e+01 : f32
    %289 = vector.broadcast %cst_117 : f32 to vector<48x1xf32>
    %290 = arith.divf %288, %289 : vector<48x1xf32>
    %291 = vector.broadcast %283 : vector<48x1xf32> to vector<48x32xf32>
    %292 = arith.subf %271, %291 : vector<48x32xf32>
    %cst_118 = arith.constant 9.99999997E-7 : f32
    %293 = vector.broadcast %cst_118 : f32 to vector<48x1xf32>
    %294 = arith.addf %290, %293 : vector<48x1xf32>
    %295 = math.rsqrt %294 : vector<48x1xf32>
    %296 = vector.broadcast %295 : vector<48x1xf32> to vector<48x32xf32>
    %297 = arith.mulf %292, %296 : vector<48x32xf32>
    %298 = vector.broadcast %274 : vector<1x32xf32> to vector<48x32xf32>
    %299 = arith.mulf %297, %298 : vector<48x32xf32>
    %300 = vector.broadcast %275 : vector<1x32xf32> to vector<48x32xf32>
    %301 = arith.addf %299, %300 : vector<48x32xf32>
    %c1_119 = arith.constant 1 : index
    %c0_120 = arith.constant 0 : index
    %c0_121 = arith.constant 0 : index
    %302 = vector.load %arg5[%c1_119, %c0_120, %c0_121] : memref<2x32x96xf32, #tpu.memory_space<vmem>>, vector<1x32x96xf32>
    %303 = vector.shape_cast %302 : vector<1x32x96xf32> to vector<32x96xf32>
    %cst_122 = arith.constant dense<0.000000e+00> : vector<48x96xf32>
    %304 = tpu.matmul %301, %303, %cst_122 {dimension_numbers = #tpu.dot_dimension_numbers<[1], [0], [0], [1], [0, 0, 1, 1], [], []>} : vector<48x32xf32>, vector<32x96xf32>, vector<48x96xf32> -> vector<48x96xf32>
    %c1_123 = arith.constant 1 : index
    %c0_124 = arith.constant 0 : index
    %c0_125 = arith.constant 0 : index
    %305 = vector.load %arg6[%c1_123, %c0_124, %c0_125] : memref<2x1x96xf32, #tpu.memory_space<vmem>>, vector<1x1x96xf32>
    %306 = vector.shape_cast %305 : vector<1x1x96xf32> to vector<1x96xf32>
    %307 = vector.broadcast %306 : vector<1x96xf32> to vector<48x96xf32>
    %308 = arith.addf %304, %307 : vector<48x96xf32>
    %309 = vector.extract_strided_slice %308 {offsets = [0, 0], sizes = [24, 8], strides = [1, 1]} : vector<48x96xf32> to vector<24x8xf32>
    %310 = vector.extract_strided_slice %308 {offsets = [0, 32], sizes = [24, 8], strides = [1, 1]} : vector<48x96xf32> to vector<24x8xf32>
    %311 = vector.extract_strided_slice %308 {offsets = [0, 64], sizes = [24, 8], strides = [1, 1]} : vector<48x96xf32> to vector<24x8xf32>
    %cst_126 = arith.constant dense<0.000000e+00> : vector<24x24xf32>
    %312 = tpu.matmul %309, %310, %cst_126 {dimension_numbers = #tpu.dot_dimension_numbers<[1], [1], [0], [0], [0, 0, 1, 0], [], []>} : vector<24x8xf32>, vector<24x8xf32>, vector<24x24xf32> -> vector<24x24xf32>
    %cst_127 = arith.constant 0.353553385 : f32
    %313 = vector.broadcast %cst_127 : f32 to vector<24x24xf32>
    %314 = arith.mulf %312, %313 : vector<24x24xf32>
    %315 = vector.broadcast %5 : vector<1x24xf32> to vector<24x24xf32>
    %316 = arith.addf %314, %315 : vector<24x24xf32>
    %cst_128 = arith.constant dense<0xFF800000> : vector<24xf32>
    %317 = vector.multi_reduction <maximumf>, %316, %cst_128 [1] : vector<24x24xf32> to vector<24xf32>
    %318 = vector.shape_cast %317 : vector<24xf32> to vector<24x1xf32>
    %319 = vector.broadcast %318 : vector<24x1xf32> to vector<24x24xf32>
    %320 = arith.subf %316, %319 : vector<24x24xf32>
    %321 = math.exp %320 : vector<24x24xf32>
    %cst_129 = arith.constant dense<0.000000e+00> : vector<24xf32>
    %322 = vector.multi_reduction <add>, %321, %cst_129 [1] : vector<24x24xf32> to vector<24xf32>
    %323 = vector.shape_cast %322 : vector<24xf32> to vector<24x1xf32>
    %324 = tpu.reciprocal %323 {approx = true} : vector<24x1xf32> -> vector<24x1xf32>
    %325 = vector.broadcast %324 : vector<24x1xf32> to vector<24x24xf32>
    %326 = arith.mulf %321, %325 : vector<24x24xf32>
    %cst_130 = arith.constant dense<0.000000e+00> : vector<24x8xf32>
    %327 = tpu.matmul %326, %311, %cst_130 {dimension_numbers = #tpu.dot_dimension_numbers<[1], [0], [0], [1], [0, 0, 1, 1], [], []>} : vector<24x24xf32>, vector<24x8xf32>, vector<24x8xf32> -> vector<24x8xf32>
    %c0_131 = arith.constant 0 : index
    %c0_132 = arith.constant 0 : index
    %328 = vector.load %arg16[%c0_131, %c0_132] : memref<48x32xf32, #tpu.memory_space<vmem>>, vector<24x8xf32>
    tpu.vector_store %arg16[%c0_131, %c0_132], %327 {strides = array<i32>} : memref<48x32xf32, #tpu.memory_space<vmem>>, vector<24x8xf32>,
    %329 = vector.extract_strided_slice %308 {offsets = [0, 8], sizes = [24, 8], strides = [1, 1]} : vector<48x96xf32> to vector<24x8xf32>
    %330 = vector.extract_strided_slice %308 {offsets = [0, 40], sizes = [24, 8], strides = [1, 1]} : vector<48x96xf32> to vector<24x8xf32>
    %331 = vector.extract_strided_slice %308 {offsets = [0, 72], sizes = [24, 8], strides = [1, 1]} : vector<48x96xf32> to vector<24x8xf32>
    %cst_133 = arith.constant dense<0.000000e+00> : vector<24x24xf32>
    %332 = tpu.matmul %329, %330, %cst_133 {dimension_numbers = #tpu.dot_dimension_numbers<[1], [1], [0], [0], [0, 0, 1, 0], [], []>} : vector<24x8xf32>, vector<24x8xf32>, vector<24x24xf32> -> vector<24x24xf32>
    %cst_134 = arith.constant 0.353553385 : f32
    %333 = vector.broadcast %cst_134 : f32 to vector<24x24xf32>
    %334 = arith.mulf %332, %333 : vector<24x24xf32>
    %335 = vector.broadcast %5 : vector<1x24xf32> to vector<24x24xf32>
    %336 = arith.addf %334, %335 : vector<24x24xf32>
    %cst_135 = arith.constant dense<0xFF800000> : vector<24xf32>
    %337 = vector.multi_reduction <maximumf>, %336, %cst_135 [1] : vector<24x24xf32> to vector<24xf32>
    %338 = vector.shape_cast %337 : vector<24xf32> to vector<24x1xf32>
    %339 = vector.broadcast %338 : vector<24x1xf32> to vector<24x24xf32>
    %340 = arith.subf %336, %339 : vector<24x24xf32>
    %341 = math.exp %340 : vector<24x24xf32>
    %cst_136 = arith.constant dense<0.000000e+00> : vector<24xf32>
    %342 = vector.multi_reduction <add>, %341, %cst_136 [1] : vector<24x24xf32> to vector<24xf32>
    %343 = vector.shape_cast %342 : vector<24xf32> to vector<24x1xf32>
    %344 = tpu.reciprocal %343 {approx = true} : vector<24x1xf32> -> vector<24x1xf32>
    %345 = vector.broadcast %344 : vector<24x1xf32> to vector<24x24xf32>
    %346 = arith.mulf %341, %345 : vector<24x24xf32>
    %cst_137 = arith.constant dense<0.000000e+00> : vector<24x8xf32>
    %347 = tpu.matmul %346, %331, %cst_137 {dimension_numbers = #tpu.dot_dimension_numbers<[1], [0], [0], [1], [0, 0, 1, 1], [], []>} : vector<24x24xf32>, vector<24x8xf32>, vector<24x8xf32> -> vector<24x8xf32>
    %c0_138 = arith.constant 0 : index
    %c8_139 = arith.constant 8 : index
    %348 = vector.load %arg16[%c0_138, %c8_139] : memref<48x32xf32, #tpu.memory_space<vmem>>, vector<24x8xf32>
    tpu.vector_store %arg16[%c0_138, %c8_139], %347 {strides = array<i32>} : memref<48x32xf32, #tpu.memory_space<vmem>>, vector<24x8xf32>,
    %349 = vector.extract_strided_slice %308 {offsets = [0, 16], sizes = [24, 8], strides = [1, 1]} : vector<48x96xf32> to vector<24x8xf32>
    %350 = vector.extract_strided_slice %308 {offsets = [0, 48], sizes = [24, 8], strides = [1, 1]} : vector<48x96xf32> to vector<24x8xf32>
    %351 = vector.extract_strided_slice %308 {offsets = [0, 80], sizes = [24, 8], strides = [1, 1]} : vector<48x96xf32> to vector<24x8xf32>
    %cst_140 = arith.constant dense<0.000000e+00> : vector<24x24xf32>
    %352 = tpu.matmul %349, %350, %cst_140 {dimension_numbers = #tpu.dot_dimension_numbers<[1], [1], [0], [0], [0, 0, 1, 0], [], []>} : vector<24x8xf32>, vector<24x8xf32>, vector<24x24xf32> -> vector<24x24xf32>
    %cst_141 = arith.constant 0.353553385 : f32
    %353 = vector.broadcast %cst_141 : f32 to vector<24x24xf32>
    %354 = arith.mulf %352, %353 : vector<24x24xf32>
    %355 = vector.broadcast %5 : vector<1x24xf32> to vector<24x24xf32>
    %356 = arith.addf %354, %355 : vector<24x24xf32>
    %cst_142 = arith.constant dense<0xFF800000> : vector<24xf32>
    %357 = vector.multi_reduction <maximumf>, %356, %cst_142 [1] : vector<24x24xf32> to vector<24xf32>
    %358 = vector.shape_cast %357 : vector<24xf32> to vector<24x1xf32>
    %359 = vector.broadcast %358 : vector<24x1xf32> to vector<24x24xf32>
    %360 = arith.subf %356, %359 : vector<24x24xf32>
    %361 = math.exp %360 : vector<24x24xf32>
    %cst_143 = arith.constant dense<0.000000e+00> : vector<24xf32>
    %362 = vector.multi_reduction <add>, %361, %cst_143 [1] : vector<24x24xf32> to vector<24xf32>
    %363 = vector.shape_cast %362 : vector<24xf32> to vector<24x1xf32>
    %364 = tpu.reciprocal %363 {approx = true} : vector<24x1xf32> -> vector<24x1xf32>
    %365 = vector.broadcast %364 : vector<24x1xf32> to vector<24x24xf32>
    %366 = arith.mulf %361, %365 : vector<24x24xf32>
    %cst_144 = arith.constant dense<0.000000e+00> : vector<24x8xf32>
    %367 = tpu.matmul %366, %351, %cst_144 {dimension_numbers = #tpu.dot_dimension_numbers<[1], [0], [0], [1], [0, 0, 1, 1], [], []>} : vector<24x24xf32>, vector<24x8xf32>, vector<24x8xf32> -> vector<24x8xf32>
    %c0_145 = arith.constant 0 : index
    %c16_146 = arith.constant 16 : index
    %368 = vector.load %arg16[%c0_145, %c16_146] : memref<48x32xf32, #tpu.memory_space<vmem>>, vector<24x8xf32>
    tpu.vector_store %arg16[%c0_145, %c16_146], %367 {strides = array<i32>} : memref<48x32xf32, #tpu.memory_space<vmem>>, vector<24x8xf32>,
    %369 = vector.extract_strided_slice %308 {offsets = [0, 24], sizes = [24, 8], strides = [1, 1]} : vector<48x96xf32> to vector<24x8xf32>
    %370 = vector.extract_strided_slice %308 {offsets = [0, 56], sizes = [24, 8], strides = [1, 1]} : vector<48x96xf32> to vector<24x8xf32>
    %371 = vector.extract_strided_slice %308 {offsets = [0, 88], sizes = [24, 8], strides = [1, 1]} : vector<48x96xf32> to vector<24x8xf32>
    %cst_147 = arith.constant dense<0.000000e+00> : vector<24x24xf32>
    %372 = tpu.matmul %369, %370, %cst_147 {dimension_numbers = #tpu.dot_dimension_numbers<[1], [1], [0], [0], [0, 0, 1, 0], [], []>} : vector<24x8xf32>, vector<24x8xf32>, vector<24x24xf32> -> vector<24x24xf32>
    %cst_148 = arith.constant 0.353553385 : f32
    %373 = vector.broadcast %cst_148 : f32 to vector<24x24xf32>
    %374 = arith.mulf %372, %373 : vector<24x24xf32>
    %375 = vector.broadcast %5 : vector<1x24xf32> to vector<24x24xf32>
    %376 = arith.addf %374, %375 : vector<24x24xf32>
    %cst_149 = arith.constant dense<0xFF800000> : vector<24xf32>
    %377 = vector.multi_reduction <maximumf>, %376, %cst_149 [1] : vector<24x24xf32> to vector<24xf32>
    %378 = vector.shape_cast %377 : vector<24xf32> to vector<24x1xf32>
    %379 = vector.broadcast %378 : vector<24x1xf32> to vector<24x24xf32>
    %380 = arith.subf %376, %379 : vector<24x24xf32>
    %381 = math.exp %380 : vector<24x24xf32>
    %cst_150 = arith.constant dense<0.000000e+00> : vector<24xf32>
    %382 = vector.multi_reduction <add>, %381, %cst_150 [1] : vector<24x24xf32> to vector<24xf32>
    %383 = vector.shape_cast %382 : vector<24xf32> to vector<24x1xf32>
    %384 = tpu.reciprocal %383 {approx = true} : vector<24x1xf32> -> vector<24x1xf32>
    %385 = vector.broadcast %384 : vector<24x1xf32> to vector<24x24xf32>
    %386 = arith.mulf %381, %385 : vector<24x24xf32>
    %cst_151 = arith.constant dense<0.000000e+00> : vector<24x8xf32>
    %387 = tpu.matmul %386, %371, %cst_151 {dimension_numbers = #tpu.dot_dimension_numbers<[1], [0], [0], [1], [0, 0, 1, 1], [], []>} : vector<24x24xf32>, vector<24x8xf32>, vector<24x8xf32> -> vector<24x8xf32>
    %c0_152 = arith.constant 0 : index
    %c24_153 = arith.constant 24 : index
    %388 = vector.load %arg16[%c0_152, %c24_153] : memref<48x32xf32, #tpu.memory_space<vmem>>, vector<24x8xf32>
    tpu.vector_store %arg16[%c0_152, %c24_153], %387 {strides = array<i32>} : memref<48x32xf32, #tpu.memory_space<vmem>>, vector<24x8xf32>,
    %389 = vector.extract_strided_slice %308 {offsets = [24, 0], sizes = [24, 8], strides = [1, 1]} : vector<48x96xf32> to vector<24x8xf32>
    %390 = vector.extract_strided_slice %308 {offsets = [24, 32], sizes = [24, 8], strides = [1, 1]} : vector<48x96xf32> to vector<24x8xf32>
    %391 = vector.extract_strided_slice %308 {offsets = [24, 64], sizes = [24, 8], strides = [1, 1]} : vector<48x96xf32> to vector<24x8xf32>
    %cst_154 = arith.constant dense<0.000000e+00> : vector<24x24xf32>
    %392 = tpu.matmul %389, %390, %cst_154 {dimension_numbers = #tpu.dot_dimension_numbers<[1], [1], [0], [0], [0, 0, 1, 0], [], []>} : vector<24x8xf32>, vector<24x8xf32>, vector<24x24xf32> -> vector<24x24xf32>
    %cst_155 = arith.constant 0.353553385 : f32
    %393 = vector.broadcast %cst_155 : f32 to vector<24x24xf32>
    %394 = arith.mulf %392, %393 : vector<24x24xf32>
    %395 = vector.broadcast %5 : vector<1x24xf32> to vector<24x24xf32>
    %396 = arith.addf %394, %395 : vector<24x24xf32>
    %cst_156 = arith.constant dense<0xFF800000> : vector<24xf32>
    %397 = vector.multi_reduction <maximumf>, %396, %cst_156 [1] : vector<24x24xf32> to vector<24xf32>
    %398 = vector.shape_cast %397 : vector<24xf32> to vector<24x1xf32>
    %399 = vector.broadcast %398 : vector<24x1xf32> to vector<24x24xf32>
    %400 = arith.subf %396, %399 : vector<24x24xf32>
    %401 = math.exp %400 : vector<24x24xf32>
    %cst_157 = arith.constant dense<0.000000e+00> : vector<24xf32>
    %402 = vector.multi_reduction <add>, %401, %cst_157 [1] : vector<24x24xf32> to vector<24xf32>
    %403 = vector.shape_cast %402 : vector<24xf32> to vector<24x1xf32>
    %404 = tpu.reciprocal %403 {approx = true} : vector<24x1xf32> -> vector<24x1xf32>
    %405 = vector.broadcast %404 : vector<24x1xf32> to vector<24x24xf32>
    %406 = arith.mulf %401, %405 : vector<24x24xf32>
    %cst_158 = arith.constant dense<0.000000e+00> : vector<24x8xf32>
    %407 = tpu.matmul %406, %391, %cst_158 {dimension_numbers = #tpu.dot_dimension_numbers<[1], [0], [0], [1], [0, 0, 1, 1], [], []>} : vector<24x24xf32>, vector<24x8xf32>, vector<24x8xf32> -> vector<24x8xf32>
    %c24_159 = arith.constant 24 : index
    %c0_160 = arith.constant 0 : index
    %408 = vector.load %arg16[%c24_159, %c0_160] : memref<48x32xf32, #tpu.memory_space<vmem>>, vector<24x8xf32>
    tpu.vector_store %arg16[%c24_159, %c0_160], %407 {strides = array<i32>} : memref<48x32xf32, #tpu.memory_space<vmem>>, vector<24x8xf32>,
    %409 = vector.extract_strided_slice %308 {offsets = [24, 8], sizes = [24, 8], strides = [1, 1]} : vector<48x96xf32> to vector<24x8xf32>
    %410 = vector.extract_strided_slice %308 {offsets = [24, 40], sizes = [24, 8], strides = [1, 1]} : vector<48x96xf32> to vector<24x8xf32>
    %411 = vector.extract_strided_slice %308 {offsets = [24, 72], sizes = [24, 8], strides = [1, 1]} : vector<48x96xf32> to vector<24x8xf32>
    %cst_161 = arith.constant dense<0.000000e+00> : vector<24x24xf32>
    %412 = tpu.matmul %409, %410, %cst_161 {dimension_numbers = #tpu.dot_dimension_numbers<[1], [1], [0], [0], [0, 0, 1, 0], [], []>} : vector<24x8xf32>, vector<24x8xf32>, vector<24x24xf32> -> vector<24x24xf32>
    %cst_162 = arith.constant 0.353553385 : f32
    %413 = vector.broadcast %cst_162 : f32 to vector<24x24xf32>
    %414 = arith.mulf %412, %413 : vector<24x24xf32>
    %415 = vector.broadcast %5 : vector<1x24xf32> to vector<24x24xf32>
    %416 = arith.addf %414, %415 : vector<24x24xf32>
    %cst_163 = arith.constant dense<0xFF800000> : vector<24xf32>
    %417 = vector.multi_reduction <maximumf>, %416, %cst_163 [1] : vector<24x24xf32> to vector<24xf32>
    %418 = vector.shape_cast %417 : vector<24xf32> to vector<24x1xf32>
    %419 = vector.broadcast %418 : vector<24x1xf32> to vector<24x24xf32>
    %420 = arith.subf %416, %419 : vector<24x24xf32>
    %421 = math.exp %420 : vector<24x24xf32>
    %cst_164 = arith.constant dense<0.000000e+00> : vector<24xf32>
    %422 = vector.multi_reduction <add>, %421, %cst_164 [1] : vector<24x24xf32> to vector<24xf32>
    %423 = vector.shape_cast %422 : vector<24xf32> to vector<24x1xf32>
    %424 = tpu.reciprocal %423 {approx = true} : vector<24x1xf32> -> vector<24x1xf32>
    %425 = vector.broadcast %424 : vector<24x1xf32> to vector<24x24xf32>
    %426 = arith.mulf %421, %425 : vector<24x24xf32>
    %cst_165 = arith.constant dense<0.000000e+00> : vector<24x8xf32>
    %427 = tpu.matmul %426, %411, %cst_165 {dimension_numbers = #tpu.dot_dimension_numbers<[1], [0], [0], [1], [0, 0, 1, 1], [], []>} : vector<24x24xf32>, vector<24x8xf32>, vector<24x8xf32> -> vector<24x8xf32>
    %c24_166 = arith.constant 24 : index
    %c8_167 = arith.constant 8 : index
    %428 = vector.load %arg16[%c24_166, %c8_167] : memref<48x32xf32, #tpu.memory_space<vmem>>, vector<24x8xf32>
    tpu.vector_store %arg16[%c24_166, %c8_167], %427 {strides = array<i32>} : memref<48x32xf32, #tpu.memory_space<vmem>>, vector<24x8xf32>,
    %429 = vector.extract_strided_slice %308 {offsets = [24, 16], sizes = [24, 8], strides = [1, 1]} : vector<48x96xf32> to vector<24x8xf32>
    %430 = vector.extract_strided_slice %308 {offsets = [24, 48], sizes = [24, 8], strides = [1, 1]} : vector<48x96xf32> to vector<24x8xf32>
    %431 = vector.extract_strided_slice %308 {offsets = [24, 80], sizes = [24, 8], strides = [1, 1]} : vector<48x96xf32> to vector<24x8xf32>
    %cst_168 = arith.constant dense<0.000000e+00> : vector<24x24xf32>
    %432 = tpu.matmul %429, %430, %cst_168 {dimension_numbers = #tpu.dot_dimension_numbers<[1], [1], [0], [0], [0, 0, 1, 0], [], []>} : vector<24x8xf32>, vector<24x8xf32>, vector<24x24xf32> -> vector<24x24xf32>
    %cst_169 = arith.constant 0.353553385 : f32
    %433 = vector.broadcast %cst_169 : f32 to vector<24x24xf32>
    %434 = arith.mulf %432, %433 : vector<24x24xf32>
    %435 = vector.broadcast %5 : vector<1x24xf32> to vector<24x24xf32>
    %436 = arith.addf %434, %435 : vector<24x24xf32>
    %cst_170 = arith.constant dense<0xFF800000> : vector<24xf32>
    %437 = vector.multi_reduction <maximumf>, %436, %cst_170 [1] : vector<24x24xf32> to vector<24xf32>
    %438 = vector.shape_cast %437 : vector<24xf32> to vector<24x1xf32>
    %439 = vector.broadcast %438 : vector<24x1xf32> to vector<24x24xf32>
    %440 = arith.subf %436, %439 : vector<24x24xf32>
    %441 = math.exp %440 : vector<24x24xf32>
    %cst_171 = arith.constant dense<0.000000e+00> : vector<24xf32>
    %442 = vector.multi_reduction <add>, %441, %cst_171 [1] : vector<24x24xf32> to vector<24xf32>
    %443 = vector.shape_cast %442 : vector<24xf32> to vector<24x1xf32>
    %444 = tpu.reciprocal %443 {approx = true} : vector<24x1xf32> -> vector<24x1xf32>
    %445 = vector.broadcast %444 : vector<24x1xf32> to vector<24x24xf32>
    %446 = arith.mulf %441, %445 : vector<24x24xf32>
    %cst_172 = arith.constant dense<0.000000e+00> : vector<24x8xf32>
    %447 = tpu.matmul %446, %431, %cst_172 {dimension_numbers = #tpu.dot_dimension_numbers<[1], [0], [0], [1], [0, 0, 1, 1], [], []>} : vector<24x24xf32>, vector<24x8xf32>, vector<24x8xf32> -> vector<24x8xf32>
    %c24_173 = arith.constant 24 : index
    %c16_174 = arith.constant 16 : index
    %448 = vector.load %arg16[%c24_173, %c16_174] : memref<48x32xf32, #tpu.memory_space<vmem>>, vector<24x8xf32>
    tpu.vector_store %arg16[%c24_173, %c16_174], %447 {strides = array<i32>} : memref<48x32xf32, #tpu.memory_space<vmem>>, vector<24x8xf32>,
    %449 = vector.extract_strided_slice %308 {offsets = [24, 24], sizes = [24, 8], strides = [1, 1]} : vector<48x96xf32> to vector<24x8xf32>
    %450 = vector.extract_strided_slice %308 {offsets = [24, 56], sizes = [24, 8], strides = [1, 1]} : vector<48x96xf32> to vector<24x8xf32>
    %451 = vector.extract_strided_slice %308 {offsets = [24, 88], sizes = [24, 8], strides = [1, 1]} : vector<48x96xf32> to vector<24x8xf32>
    %cst_175 = arith.constant dense<0.000000e+00> : vector<24x24xf32>
    %452 = tpu.matmul %449, %450, %cst_175 {dimension_numbers = #tpu.dot_dimension_numbers<[1], [1], [0], [0], [0, 0, 1, 0], [], []>} : vector<24x8xf32>, vector<24x8xf32>, vector<24x24xf32> -> vector<24x24xf32>
    %cst_176 = arith.constant 0.353553385 : f32
    %453 = vector.broadcast %cst_176 : f32 to vector<24x24xf32>
    %454 = arith.mulf %452, %453 : vector<24x24xf32>
    %455 = vector.broadcast %5 : vector<1x24xf32> to vector<24x24xf32>
    %456 = arith.addf %454, %455 : vector<24x24xf32>
    %cst_177 = arith.constant dense<0xFF800000> : vector<24xf32>
    %457 = vector.multi_reduction <maximumf>, %456, %cst_177 [1] : vector<24x24xf32> to vector<24xf32>
    %458 = vector.shape_cast %457 : vector<24xf32> to vector<24x1xf32>
    %459 = vector.broadcast %458 : vector<24x1xf32> to vector<24x24xf32>
    %460 = arith.subf %456, %459 : vector<24x24xf32>
    %461 = math.exp %460 : vector<24x24xf32>
    %cst_178 = arith.constant dense<0.000000e+00> : vector<24xf32>
    %462 = vector.multi_reduction <add>, %461, %cst_178 [1] : vector<24x24xf32> to vector<24xf32>
    %463 = vector.shape_cast %462 : vector<24xf32> to vector<24x1xf32>
    %464 = tpu.reciprocal %463 {approx = true} : vector<24x1xf32> -> vector<24x1xf32>
    %465 = vector.broadcast %464 : vector<24x1xf32> to vector<24x24xf32>
    %466 = arith.mulf %461, %465 : vector<24x24xf32>
    %cst_179 = arith.constant dense<0.000000e+00> : vector<24x8xf32>
    %467 = tpu.matmul %466, %451, %cst_179 {dimension_numbers = #tpu.dot_dimension_numbers<[1], [0], [0], [1], [0, 0, 1, 1], [], []>} : vector<24x24xf32>, vector<24x8xf32>, vector<24x8xf32> -> vector<24x8xf32>
    %c24_180 = arith.constant 24 : index
    %c24_181 = arith.constant 24 : index
    %468 = vector.load %arg16[%c24_180, %c24_181] : memref<48x32xf32, #tpu.memory_space<vmem>>, vector<24x8xf32>
    tpu.vector_store %arg16[%c24_180, %c24_181], %467 {strides = array<i32>} : memref<48x32xf32, #tpu.memory_space<vmem>>, vector<24x8xf32>,
    %c0_182 = arith.constant 0 : index
    %c0_183 = arith.constant 0 : index
    %469 = vector.load %arg16[%c0_182, %c0_183] : memref<48x32xf32, #tpu.memory_space<vmem>>, vector<48x32xf32>
    %c1_184 = arith.constant 1 : index
    %c0_185 = arith.constant 0 : index
    %c0_186 = arith.constant 0 : index
    %470 = vector.load %arg7[%c1_184, %c0_185, %c0_186] : memref<2x32x32xf32, #tpu.memory_space<vmem>>, vector<1x32x32xf32>
    %471 = vector.shape_cast %470 : vector<1x32x32xf32> to vector<32x32xf32>
    %cst_187 = arith.constant dense<0.000000e+00> : vector<48x32xf32>
    %472 = tpu.matmul %469, %471, %cst_187 {dimension_numbers = #tpu.dot_dimension_numbers<[1], [0], [0], [1], [0, 0, 1, 1], [], []>} : vector<48x32xf32>, vector<32x32xf32>, vector<48x32xf32> -> vector<48x32xf32>
    %473 = vector.broadcast %278 : vector<1x32xf32> to vector<48x32xf32>
    %474 = arith.addf %472, %473 : vector<48x32xf32>
    %475 = arith.addf %271, %474 : vector<48x32xf32>
    %cst_188 = arith.constant dense<0.000000e+00> : vector<48xf32>
    %476 = vector.multi_reduction <add>, %475, %cst_188 [1] : vector<48x32xf32> to vector<48xf32>
    %477 = vector.shape_cast %476 : vector<48xf32> to vector<48x1xf32>
    %cst_189 = arith.constant 3.200000e+01 : f32
    %478 = vector.broadcast %cst_189 : f32 to vector<48x1xf32>
    %479 = arith.divf %477, %478 : vector<48x1xf32>
    %480 = vector.broadcast %479 : vector<48x1xf32> to vector<48x32xf32>
    %481 = arith.subf %475, %480 : vector<48x32xf32>
    %482 = arith.mulf %481, %481 : vector<48x32xf32>
    %cst_190 = arith.constant dense<0.000000e+00> : vector<48xf32>
    %483 = vector.multi_reduction <add>, %482, %cst_190 [1] : vector<48x32xf32> to vector<48xf32>
    %484 = vector.shape_cast %483 : vector<48xf32> to vector<48x1xf32>
    %cst_191 = arith.constant 3.200000e+01 : f32
    %485 = vector.broadcast %cst_191 : f32 to vector<48x1xf32>
    %486 = arith.divf %484, %485 : vector<48x1xf32>
    %487 = vector.broadcast %479 : vector<48x1xf32> to vector<48x32xf32>
    %488 = arith.subf %475, %487 : vector<48x32xf32>
    %cst_192 = arith.constant 9.99999997E-7 : f32
    %489 = vector.broadcast %cst_192 : f32 to vector<48x1xf32>
    %490 = arith.addf %486, %489 : vector<48x1xf32>
    %491 = math.rsqrt %490 : vector<48x1xf32>
    %492 = vector.broadcast %491 : vector<48x1xf32> to vector<48x32xf32>
    %493 = arith.mulf %488, %492 : vector<48x32xf32>
    %494 = vector.broadcast %276 : vector<1x32xf32> to vector<48x32xf32>
    %495 = arith.mulf %493, %494 : vector<48x32xf32>
    %496 = vector.broadcast %277 : vector<1x32xf32> to vector<48x32xf32>
    %497 = arith.addf %495, %496 : vector<48x32xf32>
    %c1_193 = arith.constant 1 : index
    %c0_194 = arith.constant 0 : index
    %c0_195 = arith.constant 0 : index
    %498 = vector.load %arg8[%c1_193, %c0_194, %c0_195] : memref<2x32x64xf32, #tpu.memory_space<vmem>>, vector<1x32x64xf32>
    %499 = vector.shape_cast %498 : vector<1x32x64xf32> to vector<32x64xf32>
    %cst_196 = arith.constant dense<0.000000e+00> : vector<48x64xf32>
    %500 = tpu.matmul %497, %499, %cst_196 {dimension_numbers = #tpu.dot_dimension_numbers<[1], [0], [0], [1], [0, 0, 1, 1], [], []>} : vector<48x32xf32>, vector<32x64xf32>, vector<48x64xf32> -> vector<48x64xf32>
    %c1_197 = arith.constant 1 : index
    %c0_198 = arith.constant 0 : index
    %c0_199 = arith.constant 0 : index
    %501 = vector.load %arg9[%c1_197, %c0_198, %c0_199] : memref<2x1x64xf32, #tpu.memory_space<vmem>>, vector<1x1x64xf32>
    %502 = vector.shape_cast %501 : vector<1x1x64xf32> to vector<1x64xf32>
    %503 = vector.broadcast %502 : vector<1x64xf32> to vector<48x64xf32>
    %504 = arith.addf %500, %503 : vector<48x64xf32>
    %cst_200 = arith.constant 5.000000e-01 : f32
    %505 = vector.broadcast %cst_200 : f32 to vector<48x64xf32>
    %506 = arith.mulf %505, %504 : vector<48x64xf32>
    %cst_201 = arith.constant 0.707106769 : f32
    %507 = vector.broadcast %cst_201 : f32 to vector<48x64xf32>
    %508 = arith.mulf %504, %507 : vector<48x64xf32>
    %509 = math.erf %508 : vector<48x64xf32>
    %cst_202 = arith.constant 1.000000e+00 : f32
    %510 = vector.broadcast %cst_202 : f32 to vector<48x64xf32>
    %511 = arith.addf %510, %509 : vector<48x64xf32>
    %512 = arith.mulf %506, %511 : vector<48x64xf32>
    %c1_203 = arith.constant 1 : index
    %c0_204 = arith.constant 0 : index
    %c0_205 = arith.constant 0 : index
    %513 = vector.load %arg10[%c1_203, %c0_204, %c0_205] : memref<2x64x32xf32, #tpu.memory_space<vmem>>, vector<1x64x32xf32>
    %514 = vector.shape_cast %513 : vector<1x64x32xf32> to vector<64x32xf32>
    %cst_206 = arith.constant dense<0.000000e+00> : vector<48x32xf32>
    %515 = tpu.matmul %512, %514, %cst_206 {dimension_numbers = #tpu.dot_dimension_numbers<[1], [0], [0], [1], [0, 0, 1, 1], [], []>} : vector<48x64xf32>, vector<64x32xf32>, vector<48x32xf32> -> vector<48x32xf32>
    %516 = vector.broadcast %279 : vector<1x32xf32> to vector<48x32xf32>
    %517 = arith.addf %515, %516 : vector<48x32xf32>
    %518 = arith.addf %475, %517 : vector<48x32xf32>
    %c0_207 = arith.constant 0 : index
    %c0_208 = arith.constant 0 : index
    %519 = vector.load %arg15[%c0_207, %c0_208] : memref<48x32xf32, #tpu.memory_space<vmem>>, vector<48x32xf32>
    tpu.vector_store %arg15[%c0_207, %c0_208], %518 {strides = array<i32>} : memref<48x32xf32, #tpu.memory_space<vmem>>, vector<48x32xf32>,
    %c0_209 = arith.constant 0 : index
    %c0_210 = arith.constant 0 : index
    %520 = tpu.strided_load %arg15[%c0_209, %c0_210] {strides = array<i32: 24, 1>} : memref<48x32xf32, #tpu.memory_space<vmem>>, vector<2x32xf32>
    %c0_211 = arith.constant 0 : index
    %c0_212 = arith.constant 0 : index
    %521 = vector.load %arg11[%c0_211, %c0_212] : memref<2x32xf32, #tpu.memory_space<vmem>>, vector<1x32xf32>
    %c1_213 = arith.constant 1 : index
    %c0_214 = arith.constant 0 : index
    %522 = vector.load %arg11[%c1_213, %c0_214] : memref<2x32xf32, #tpu.memory_space<vmem>>, vector<1x32xf32>
    %cst_215 = arith.constant dense<0.000000e+00> : vector<2xf32>
    %523 = vector.multi_reduction <add>, %520, %cst_215 [1] : vector<2x32xf32> to vector<2xf32>
    %524 = vector.shape_cast %523 : vector<2xf32> to vector<2x1xf32>
    %cst_216 = arith.constant 3.200000e+01 : f32
    %525 = vector.broadcast %cst_216 : f32 to vector<2x1xf32>
    %526 = arith.divf %524, %525 : vector<2x1xf32>
    %527 = vector.broadcast %526 : vector<2x1xf32> to vector<2x32xf32>
    %528 = arith.subf %520, %527 : vector<2x32xf32>
    %529 = arith.mulf %528, %528 : vector<2x32xf32>
    %cst_217 = arith.constant dense<0.000000e+00> : vector<2xf32>
    %530 = vector.multi_reduction <add>, %529, %cst_217 [1] : vector<2x32xf32> to vector<2xf32>
    %531 = vector.shape_cast %530 : vector<2xf32> to vector<2x1xf32>
    %cst_218 = arith.constant 3.200000e+01 : f32
    %532 = vector.broadcast %cst_218 : f32 to vector<2x1xf32>
    %533 = arith.divf %531, %532 : vector<2x1xf32>
    %534 = vector.broadcast %526 : vector<2x1xf32> to vector<2x32xf32>
    %535 = arith.subf %520, %534 : vector<2x32xf32>
    %cst_219 = arith.constant 9.99999997E-7 : f32
    %536 = vector.broadcast %cst_219 : f32 to vector<2x1xf32>
    %537 = arith.addf %533, %536 : vector<2x1xf32>
    %538 = math.rsqrt %537 : vector<2x1xf32>
    %539 = vector.broadcast %538 : vector<2x1xf32> to vector<2x32xf32>
    %540 = arith.mulf %535, %539 : vector<2x32xf32>
    %541 = vector.broadcast %521 : vector<1x32xf32> to vector<2x32xf32>
    %542 = arith.mulf %540, %541 : vector<2x32xf32>
    %543 = vector.broadcast %522 : vector<1x32xf32> to vector<2x32xf32>
    %544 = arith.addf %542, %543 : vector<2x32xf32>
    %c0_220 = arith.constant 0 : index
    %c0_221 = arith.constant 0 : index
    %545 = vector.load %arg12[%c0_220, %c0_221] : memref<32x1xf32, #tpu.memory_space<vmem>>, vector<32x1xf32>
    %cst_222 = arith.constant dense<0.000000e+00> : vector<2x1xf32>
    %546 = tpu.matmul %544, %545, %cst_222 {dimension_numbers = #tpu.dot_dimension_numbers<[1], [0], [0], [1], [0, 0, 1, 1], [], []>} : vector<2x32xf32>, vector<32x1xf32>, vector<2x1xf32> -> vector<2x1xf32>
    %c0_223 = arith.constant 0 : index
    %c0_224 = arith.constant 0 : index
    %547 = vector.load %arg13[%c0_223, %c0_224] : memref<1x1xf32, #tpu.memory_space<vmem>>, vector<1x1xf32>
    %548 = vector.broadcast %547 : vector<1x1xf32> to vector<2x1xf32>
    %549 = arith.addf %546, %548 : vector<2x1xf32>
    %c0_225 = arith.constant 0 : index
    %c0_226 = arith.constant 0 : index
    %550 = vector.load %arg14[%c0_225, %c0_226] : memref<2x1xf32, #tpu.memory_space<vmem>>, vector<2x1xf32>
    tpu.vector_store %arg14[%c0_225, %c0_226], %549 {strides = array<i32>} : memref<2x1xf32, #tpu.memory_space<vmem>>, vector<2x1xf32>,
    return
  }
}

</mosaic_0001>

<llo_original>
// kernel: _lambda_.1
$region0: #{_lambda_.1}
  #allocation0 [shape = 'u32[]', space=smem, size = 0x4, offset = 0x4, fixed_abs, tag = 'smem constant byte address 0x4 - core index']
  #allocation1 [shape = 'u32[144,128]{1,0:T(1,128)}', space=vmem, size = 0x12000, scoped, tag = 'internal scratch']
  #allocation2 [shape = 'f32[48,32]{1,0:T(8,128)}', space=vmem, size = 0x6000, scoped, tag = 'scratch operand']
  #allocation3 [shape = 'f32[48,32]{1,0:T(8,128)}', space=vmem, size = 0x6000, scoped, tag = 'scratch operand']
  #allocation4 [shape = 'f32[1,1]{1,0:T(1,128)S(1)}', space=vmem, size = 0x200, scoped, tag = 'scoped memory for _lambda_.1']
  %s0 = inlined_call_operand.hbm [shape: f32[2,16,8], index: 0, kind: input, shape index: {}]
  %s1 = inlined_call_operand.hbm [shape: f32[8,32], index: 1, kind: input, shape index: {}]
  %s2 = inlined_call_operand.vmem [shape: f32[1,32], index: 2, kind: input, shape index: {}]
  %s3 = inlined_call_operand.hbm [shape: f32[2,32], index: 3, kind: input, shape index: {}]
  %s4 = inlined_call_operand.vmem [shape: f32[2,8,32], index: 4, kind: input, shape index: {}]
  %s5 = inlined_call_operand.hbm [shape: f32[2,32,96], index: 5, kind: input, shape index: {}]
  %s6 = inlined_call_operand.vmem [shape: f32[2,1,96], index: 6, kind: input, shape index: {}]
  %s7 = inlined_call_operand.hbm [shape: f32[2,32,32], index: 7, kind: input, shape index: {}]
  %s8 = inlined_call_operand.hbm [shape: f32[2,32,64], index: 8, kind: input, shape index: {}]
  %s9 = inlined_call_operand.vmem [shape: f32[2,1,64], index: 9, kind: input, shape index: {}]
  %s10 = inlined_call_operand.hbm [shape: f32[2,64,32], index: 10, kind: input, shape index: {}]
  %s11 = inlined_call_operand.vmem [shape: f32[2,32], index: 11, kind: input, shape index: {}]
  %s12 = inlined_call_operand.vmem [shape: f32[32,1], index: 12, kind: input, shape index: {}]
  %s13 = inlined_call_operand.<no memory space> [shape: f32[1,1], index: 13, kind: input, shape index: {}]
  %s14 = inlined_call_operand.vmem [shape: f32[2,1], index: 14, kind: output, shape index: {}]
  %s15 = sld [smem:[#allocation0]]
  $region94: #{_lambda_.1} parent=0
    _
  %s17 = ssub.s32 1, %s15
  %s18 = scalar_select 0, %s17, %s15
  %v19 = vstv %s13
  %20 = vst [vmem:[#allocation4] sm:$0x1] %v19
  $region1: #{_lambda_.1} parent=0
    #allocation5 [shape = 'u8[16384]{0}', space=vmem, size = 0x4000, scoped, tag = 'input window, operand 0, single buffered']
    #allocation6 [shape = 's32[1]{0}', space=sflag, size = 0x4, scoped, tag = 'scoped memory for _lambda_.1']
    #allocation7 [shape = 'u8[4096]{0}', space=vmem, size = 0x1000, scoped, tag = 'input window, operand 1, single buffered']
    #allocation8 [shape = 's32[1]{0}', space=sflag, size = 0x4, scoped, tag = 'scoped memory for _lambda_.1']
    #allocation9 [shape = 'u8[1024]{0}', space=vmem, size = 0x400, scoped, tag = 'input window, operand 3, single buffered']
    #allocation10 [shape = 'u8[32768]{0}', space=vmem, size = 0x8000, scoped, tag = 'input window, operand 5, single buffered']
    #allocation11 [shape = 's32[1]{0}', space=sflag, size = 0x4, scoped, tag = 'scoped memory for _lambda_.1']
    #allocation12 [shape = 'u8[32768]{0}', space=vmem, size = 0x8000, scoped, tag = 'input window, operand 7, single buffered']
    #allocation13 [shape = 'u8[32768]{0}', space=vmem, size = 0x8000, scoped, tag = 'input window, operand 8, single buffered']
    #allocation14 [shape = 's32[1]{0}', space=sflag, size = 0x4, scoped, tag = 'scoped memory for _lambda_.1']
    #allocation15 [shape = 'u8[65536]{0}', space=vmem, size = 0x10000, scoped, tag = 'input window, operand 10, single buffered']
    %21 = vsyncpa [#allocation6], 0
    %22 = vsyncpa [#allocation8], 0
    %23 = vsyncpa [#allocation11], 0
    %24 = vsyncpa [#allocation14], 0
    // Predicated region
    $region2: #{_lambda_.1} parent=1 // pred_check
      _
    $region3: #{_lambda_.1} parent=1 // pred_check_branch
      %26 = sbr.rel (0) target = $region5
    $region4: #{_lambda_.1} parent=1 // pred_region
      %s28 = ssub.s32 512, 512
      %29 = vsyncadd [#allocation6], %s28
      %s30 = sshll.u32 [#allocation5], 4
      %s31 = int_to_ptr.vmem [resolvable:$true] %s30
      %36 = dma.hbm_to_vmem [thread:$0]  %s0, 512, %s31, [#allocation6], 128, 128, 8
    $region5: #{_lambda_.1} parent=1 // pred_fallthru
      _
    // Predicated region
    $region6: #{_lambda_.1} parent=1 // pred_check
      _
    $region7: #{_lambda_.1} parent=1 // pred_check_branch
      %38 = sbr.rel (0) target = $region9
    $region8: #{_lambda_.1} parent=1 // pred_region
      %s40 = ssub.s32 128, 128
      %41 = vsyncadd [#allocation8], %s40
      %s43 = sshll.u32 [#allocation7], 4
      %s44 = int_to_ptr.vmem [resolvable:$true] %s43
      %46 = dma.hbm_to_vmem [thread:$0]  %s1, 128, %s44, [#allocation8]
    $region9: #{_lambda_.1} parent=1 // pred_fallthru
      _
    // Predicated region
    $region10: #{_lambda_.1} parent=1 // pred_check
      _
    $region11: #{_lambda_.1} parent=1 // pred_check_branch
      %48 = sbr.rel (0) target = $region13
    $region12: #{_lambda_.1} parent=1 // pred_region
      _
    $region13: #{_lambda_.1} parent=1 // pred_fallthru
      _
    // Predicated region
    $region14: #{_lambda_.1} parent=1 // pred_check
      _
    $region15: #{_lambda_.1} parent=1 // pred_check_branch
      %50 = sbr.rel (0) target = $region17
    $region16: #{_lambda_.1} parent=1 // pred_region
      %s52 = ssub.s32 32, 32
      %53 = vsyncadd [#allocation8], %s52
      %s55 = sshll.u32 [#allocation9], 4
      %s56 = int_to_ptr.vmem [resolvable:$true] %s55
      %58 = dma.hbm_to_vmem [thread:$0]  %s3, 32, %s56, [#allocation8]
    $region17: #{_lambda_.1} parent=1 // pred_fallthru
      _
    // Predicated region
    $region18: #{_lambda_.1} parent=1 // pred_check
      _
    $region19: #{_lambda_.1} parent=1 // pred_check_branch
      %60 = sbr.rel (0) target = $region21
    $region20: #{_lambda_.1} parent=1 // pred_region
      _
    $region21: #{_lambda_.1} parent=1 // pred_fallthru
      _
    // Predicated region
    $region22: #{_lambda_.1} parent=1 // pred_check
      _
    $region23: #{_lambda_.1} parent=1 // pred_check_branch
      %62 = sbr.rel (0) target = $region25
    $region24: #{_lambda_.1} parent=1 // pred_region
      %s64 = ssub.s32 1024, 1024
      %65 = vsyncadd [#allocation11], %s64
      %s66 = sshll.u32 [#allocation10], 4
      %s67 = int_to_ptr.vmem [resolvable:$true] %s66
      %72 = dma.hbm_to_vmem [thread:$0]  %s5, 1024, %s67, [#allocation11], 128, 128, 8
    $region25: #{_lambda_.1} parent=1 // pred_fallthru
      _
    // Predicated region
    $region26: #{_lambda_.1} parent=1 // pred_check
      _
    $region27: #{_lambda_.1} parent=1 // pred_check_branch
      %74 = sbr.rel (0) target = $region29
    $region28: #{_lambda_.1} parent=1 // pred_region
      _
    $region29: #{_lambda_.1} parent=1 // pred_fallthru
      _
    // Predicated region
    $region30: #{_lambda_.1} parent=1 // pred_check
      _
    $region31: #{_lambda_.1} parent=1 // pred_check_branch
      %76 = sbr.rel (0) target = $region33
    $region32: #{_lambda_.1} parent=1 // pred_region
      %s78 = ssub.s32 1024, 1024
      %79 = vsyncadd [#allocation11], %s78
      %s80 = sshll.u32 [#allocation12], 4
      %s81 = int_to_ptr.vmem [resolvable:$true] %s80
      %86 = dma.hbm_to_vmem [thread:$0]  %s7, 1024, %s81, [#allocation11], 128, 128, 8
    $region33: #{_lambda_.1} parent=1 // pred_fallthru
      _
    // Predicated region
    $region34: #{_lambda_.1} parent=1 // pred_check
      _
    $region35: #{_lambda_.1} parent=1 // pred_check_branch
      %88 = sbr.rel (0) target = $region37
    $region36: #{_lambda_.1} parent=1 // pred_region
      %s90 = ssub.s32 1024, 1024
      %91 = vsyncadd [#allocation14], %s90
      %s92 = sshll.u32 [#allocation13], 4
      %s93 = int_to_ptr.vmem [resolvable:$true] %s92
      %98 = dma.hbm_to_vmem [thread:$0]  %s8, 1024, %s93, [#allocation14], 128, 128, 8
    $region37: #{_lambda_.1} parent=1 // pred_fallthru
      _
    // Predicated region
    $region38: #{_lambda_.1} parent=1 // pred_check
      _
    $region39: #{_lambda_.1} parent=1 // pred_check_branch
      %100 = sbr.rel (0) target = $region41
    $region40: #{_lambda_.1} parent=1 // pred_region
      _
    $region41: #{_lambda_.1} parent=1 // pred_fallthru
      _
    // Predicated region
    $region42: #{_lambda_.1} parent=1 // pred_check
      _
    $region43: #{_lambda_.1} parent=1 // pred_check_branch
      %102 = sbr.rel (0) target = $region45
    $region44: #{_lambda_.1} parent=1 // pred_region
      %s104 = ssub.s32 2048, 2048
      %105 = vsyncadd [#allocation14], %s104
      %s106 = sshll.u32 [#allocation15], 4
      %s107 = int_to_ptr.vmem [resolvable:$true] %s106
      %112 = dma.hbm_to_vmem [thread:$0]  %s10, 2048, %s107, [#allocation14], 128, 128, 8
    $region45: #{_lambda_.1} parent=1 // pred_fallthru
      _
    // Predicated region
    $region46: #{_lambda_.1} parent=1 // pred_check
      _
    $region47: #{_lambda_.1} parent=1 // pred_check_branch
      %114 = sbr.rel (0) target = $region49
    $region48: #{_lambda_.1} parent=1 // pred_region
      _
    $region49: #{_lambda_.1} parent=1 // pred_fallthru
      _
    // Predicated region
    $region50: #{_lambda_.1} parent=1 // pred_check
      _
    $region51: #{_lambda_.1} parent=1 // pred_check_branch
      %116 = sbr.rel (0) target = $region53
    $region52: #{_lambda_.1} parent=1 // pred_region
      _
    $region53: #{_lambda_.1} parent=1 // pred_fallthru
      _
    // Predicated region
    $region54: #{_lambda_.1} parent=1 // pred_check
      _
    $region55: #{_lambda_.1} parent=1 // pred_check_branch
      %118 = sbr.rel (0) target = $region57
    $region56: #{_lambda_.1} parent=1 // pred_region
      _
    $region57: #{_lambda_.1} parent=1 // pred_fallthru
      _
    // Predicated region
    $region58: #{_lambda_.1} parent=1 // pred_check
      _
    $region59: #{_lambda_.1} parent=1 // pred_check_branch
      %120 = sbr.rel (0) target = $region61
    $region60: #{_lambda_.1} parent=1 // pred_region
      %121 = dma.done [#allocation6], 512
    $region61: #{_lambda_.1} parent=1 // pred_fallthru
      _
    // Predicated region
    $region62: #{_lambda_.1} parent=1 // pred_check
      _
    $region63: #{_lambda_.1} parent=1 // pred_check_branch
      %123 = sbr.rel (0) target = $region65
    $region64: #{_lambda_.1} parent=1 // pred_region
      %124 = dma.done [#allocation8], 128
    $region65: #{_lambda_.1} parent=1 // pred_fallthru
      _
    // Predicated region
    $region66: #{_lambda_.1} parent=1 // pred_check
      _
    $region67: #{_lambda_.1} parent=1 // pred_check_branch
      %126 = sbr.rel (0) target = $region69
    $region68: #{_lambda_.1} parent=1 // pred_region
      %127 = dma.done [#allocation8], 32
    $region69: #{_lambda_.1} parent=1 // pred_fallthru
      _
    // Predicated region
    $region70: #{_lambda_.1} parent=1 // pred_check
      _
    $region71: #{_lambda_.1} parent=1 // pred_check_branch
      %129 = sbr.rel (0) target = $region73
    $region72: #{_lambda_.1} parent=1 // pred_region
      %130 = dma.done [#allocation11], 1024
    $region73: #{_lambda_.1} parent=1 // pred_fallthru
      _
    // Predicated region
    $region74: #{_lambda_.1} parent=1 // pred_check
      _
    $region75: #{_lambda_.1} parent=1 // pred_check_branch
      %132 = sbr.rel (0) target = $region77
    $region76: #{_lambda_.1} parent=1 // pred_region
      %133 = dma.done [#allocation11], 1024
    $region77: #{_lambda_.1} parent=1 // pred_fallthru
      _
    // Predicated region
    $region78: #{_lambda_.1} parent=1 // pred_check
      _
    $region79: #{_lambda_.1} parent=1 // pred_check_branch
      %135 = sbr.rel (0) target = $region81
    $region80: #{_lambda_.1} parent=1 // pred_region
      %136 = dma.done [#allocation14], 1024
    $region81: #{_lambda_.1} parent=1 // pred_fallthru
      _
    // Predicated region
    $region82: #{_lambda_.1} parent=1 // pred_check
      _
    $region83: #{_lambda_.1} parent=1 // pred_check_branch
      %138 = sbr.rel (0) target = $region85
    $region84: #{_lambda_.1} parent=1 // pred_region
      %139 = dma.done [#allocation14], 2048
    $region85: #{_lambda_.1} parent=1 // pred_fallthru
      _
    %v140 = vlaneseq
    %v141 = vand.u32 %v140, 127
    %vm142 = vcmp.lt.s32.totalorder %v141, 17
    %v143 = vsel %vm142, 0.0, -1e+30
    %v144 = vld [vmem:[#allocation9 + $0x1] sm:$0x1]
    %v145 = vld [vmem:[#allocation9] sm:$0x1]
    %v146 = vadd.f32 %v145, %v144
    %v147 = vld [vmem:[%s2] sm:$0x1]
    %v148 = vadd.f32 %v147, %v144
    %v149 = vld [vmem:[#allocation5] sm:$0xff]
    %v150 = vld [vmem:[#allocation5 + $0x8] sm:$0xff]
    %v151 = vld [vmem:[#allocation5 + $0x10] sm:$0xff]
    %v152 = vld [vmem:[#allocation5 + $0x18] sm:$0xff]
    %v153 = vld [vmem:[#allocation7] sm:$0xff]
    %v155 = vlaneseq
    %v156 = vshrl.u32 %v155, 7
    %v157 = vsub.s32 0, %v156
    %v158 = vrot.slane %v148, %v157
    %vm160 = vcmask 64512
    %v162 = vsel %vm160, %v149, 0
    %v165 = vsel %vm160, %v150, 0
    %v168 = vsel %vm160, %v151, 0
    %v171 = vsel %vm160, %v152, 0
    %173 = vmatprep.subr.mxu0 0.0
    %174 = vmatpush1.msra.mxu0 %v153
    %175 = vmatprep.subr.mxu0 0.0
    %176 = vmatpush1.msra.mxu0 0.0
    %177 = vmatprep.subr.mxu0 0.0
    %178 = vmatpush1.msra.mxu0 0.0
    %179 = vmatprep.subr.mxu0 0.0
    %180 = vmatpush1.msra.mxu0 0.0
    %181 = vmatprep.subr.mxu0 0.0
    %182 = vmatpush1.msra.mxu0 0.0
    %183 = vmatprep.subr.mxu0 0.0
    %184 = vmatpush1.msra.mxu0 0.0
    %185 = vmatprep.subr.mxu0 0.0
    %186 = vmatpush1.msra.mxu0 0.0
    %187 = vmatprep.subr.mxu0 0.0
    %188 = vmatpush1.msra.mxu0 0.0
    %189 = vmatprep.subr.mxu0 0.0
    %190 = vmatpush1.msra.mxu0 0.0
    %191 = vmatprep.subr.mxu0 0.0
    %192 = vmatpush1.msra.mxu0 0.0
    %193 = vmatprep.subr.mxu0 0.0
    %194 = vmatpush1.msra.mxu0 0.0
    %195 = vmatprep.subr.mxu0 0.0
    %196 = vmatpush1.msra.mxu0 0.0
    %197 = vmatprep.subr.mxu0 0.0
    %198 = vmatpush1.msra.mxu0 0.0
    %199 = vmatprep.subr.mxu0 0.0
    %200 = vmatpush1.msra.mxu0 0.0
    %201 = vmatprep.subr.mxu0 0.0
    %202 = vmatpush1.msra.mxu0 0.0
    %203 = vmatprep.subr.mxu0 0.0
    %204 = vmatpush1.msra.mxu0 0.0
    %205 = vmatprep.subr.mxu0 0.0
    %206 = vmatpush1.msra.mxu0 0.0
    %207 = vmatprep.subr.mxu0 0.0
    %208 = vmatpush1.msra.mxu0 0.0
    %209 = vmatprep.subr.mxu0 0.0
    %210 = vmatpush1.msra.mxu0 0.0
    %211 = vmatprep.subr.mxu0 0.0
    %212 = vmatpush1.msra.mxu0 0.0
    %213 = vmatprep.subr.mxu0 0.0
    %214 = vmatpush1.msra.mxu0 0.0
    %215 = vmatprep.subr.mxu0 0.0
    %216 = vmatpush1.msra.mxu0 0.0
    %217 = vmatprep.subr.mxu0 0.0
    %218 = vmatpush1.msra.mxu0 0.0
    %219 = vmatprep.subr.mxu0 0.0
    %220 = vmatpush1.msra.mxu0 0.0
    %221 = vmatprep.subr.mxu0 0.0
    %222 = vmatpush1.msra.mxu0 0.0
    %223 = vmatprep.subr.mxu0 0.0
    %224 = vmatpush1.msra.mxu0 0.0
    %225 = vmatprep.subr.mxu0 0.0
    %226 = vmatpush1.msra.mxu0 0.0
    %227 = vmatprep.subr.mxu0 0.0
    %228 = vmatpush1.msra.mxu0 0.0
    %229 = vmatprep.subr.mxu0 0.0
    %230 = vmatpush1.msra.mxu0 0.0
    %231 = vmatprep.subr.mxu0 0.0
    %232 = vmatpush1.msra.mxu0 0.0
    %233 = vmatprep.subr.mxu0 0.0
    %234 = vmatpush1.msra.mxu0 0.0
    %235 = vmatprep.subr.mxu0 0.0
    %236 = vmatpush1.msra.mxu0 0.0
    %237 = vmatprep.mubr.f32.mxu0 0.0
    %238 = vmatmul.mubr.f32.gmra.mrb[0].mxu0 %v162
    %v239 = vpop.f32.mrb[0].mxu0
    %v240 = vadd.f32 %v158, %v239
    %v241 = vpop.f32.mrb[0].mxu0
    %242 = vmatprep.mubr.f32.mxu0 0.0
    %243 = vmatmul.mubr.f32.gmra.mrb[0].mxu0 %v165
    %v244 = vpop.f32.mrb[0].mxu0
    %v245 = vadd.f32 %v158, %v244
    %v246 = vpop.f32.mrb[0].mxu0
    %247 = vmatprep.mubr.f32.mxu0 0.0
    %248 = vmatmul.mubr.f32.gmra.mrb[0].mxu0 %v168
    %v249 = vpop.f32.mrb[0].mxu0
    %v250 = vadd.f32 %v158, %v249
    %v251 = vpop.f32.mrb[0].mxu0
    %252 = vmatprep.mubr.f32.mxu0 0.0
    %253 = vmatmul.mubr.f32.gmra.mrb[0].mxu0 %v171
    %v254 = vpop.f32.mrb[0].mxu0
    %v255 = vadd.f32 %v158, %v254
    %v256 = vpop.f32.mrb[0].mxu0
    %257 = vdwg.mxu0
    %vm260 = vcmask 1040384
    %v261 = vrot.slane %v240, 7
    %v262 = vrot.slane %v245, 7
    %v263 = vsel %vm260, %v261, %v262
    %v267 = vsel %vm260, %v146, %v261
    %v268 = vsel %vm260, %v262, 0.0
    %vm269 = vcmask 261120
    %270 = vst.msk [vmem:[#allocation2] sm:$0xff] %vm269, %v267
    %271 = vst.msk [vmem:[#allocation2 + $0x8] sm:$0xff] %vm269, %v263
    %272 = vst.msk [vmem:[#allocation2 + $0x10] sm:$0xff] %vm269, %v268
    %v275 = vrot.slane %v250, 7
    %v276 = vrot.slane %v255, 7
    %v277 = vsel %vm260, %v275, %v276
    %v281 = vsel %vm260, %v146, %v275
    %v282 = vsel %vm260, %v276, 0.0
    %283 = vst.msk [vmem:[#allocation2 + $0x18] sm:$0xff] %vm269, %v281
    %284 = vst.msk [vmem:[#allocation2 + $0x20] sm:$0xff] %vm269, %v277
    %285 = vst.msk [vmem:[#allocation2 + $0x28] sm:$0xff] %vm269, %v282
    %v286 = vld [vmem:[#allocation2] sm:$0xff]
    %v287 = vld [vmem:[#allocation2 + $0x8] sm:$0xff]
    %v288 = vld [vmem:[#allocation2 + $0x10] sm:$0xff]
    %v289 = vld [vmem:[#allocation2 + $0x18] sm:$0xff]
    %v290 = vld [vmem:[#allocation2 + $0x20] sm:$0xff]
    %v291 = vld [vmem:[#allocation2 + $0x28] sm:$0xff]
    %v292 = vld [vmem:[%s4] sm:$0xff]
    %v293 = vsel %vm269, %v286, 0.0
    %294 = vadd.xlane.f32.xlu0 %v293
    %v295 = vpop.xlane.xlu0 %294
    %v296 = vsel %vm269, %v287, 0.0
    %297 = vadd.xlane.f32.xlu0 %v296
    %v298 = vpop.xlane.xlu0 %297
    %v299 = vsel %vm269, %v288, 0.0
    %300 = vadd.xlane.f32.xlu0 %v299
    %v301 = vpop.xlane.xlu0 %300
    %v302 = vsel %vm269, %v289, 0.0
    %303 = vadd.xlane.f32.xlu0 %v302
    %v304 = vpop.xlane.xlu0 %303
    %v305 = vsel %vm269, %v290, 0.0
    %306 = vadd.xlane.f32.xlu0 %v305
    %v307 = vpop.xlane.xlu0 %306
    %v308 = vsel %vm269, %v291, 0.0
    %309 = vadd.xlane.f32.xlu0 %v308
    %v310 = vpop.xlane.xlu0 %309
    %v311 = vrcp.pop 32.0
    %v312 = vmul.f32 %v295, %v311
    %v313 = vmul.f32 %v298, %v311
    %v314 = vmul.f32 %v301, %v311
    %v315 = vmul.f32 %v304, %v311
    %v316 = vmul.f32 %v307, %v311
    %v317 = vmul.f32 %v310, %v311
    %v318 = vsub.f32 %v286, %v312
    %v319 = vsub.f32 %v287, %v313
    %v320 = vsub.f32 %v288, %v314
    %v321 = vsub.f32 %v289, %v315
    %v322 = vsub.f32 %v290, %v316
    %v323 = vsub.f32 %v291, %v317
    %v324 = vmul.f32 %v318, %v318
    %v325 = vmul.f32 %v319, %v319
    %v326 = vmul.f32 %v320, %v320
    %v327 = vmul.f32 %v321, %v321
    %v328 = vmul.f32 %v322, %v322
    %v329 = vmul.f32 %v323, %v323
    %v330 = vsel %vm269, %v324, 0.0
    %331 = vadd.xlane.f32.xlu0 %v330
    %v332 = vpop.xlane.xlu0 %331
    %v333 = vsel %vm269, %v325, 0.0
    %334 = vadd.xlane.f32.xlu0 %v333
    %v335 = vpop.xlane.xlu0 %334
    %v336 = vsel %vm269, %v326, 0.0
    %337 = vadd.xlane.f32.xlu0 %v336
    %v338 = vpop.xlane.xlu0 %337
    %v339 = vsel %vm269, %v327, 0.0
    %340 = vadd.xlane.f32.xlu0 %v339
    %v341 = vpop.xlane.xlu0 %340
    %v342 = vsel %vm269, %v328, 0.0
    %343 = vadd.xlane.f32.xlu0 %v342
    %v344 = vpop.xlane.xlu0 %343
    %v345 = vsel %vm269, %v329, 0.0
    %346 = vadd.xlane.f32.xlu0 %v345
    %v347 = vpop.xlane.xlu0 %346
    %v348 = vmul.f32 %v332, %v311
    %v349 = vmul.f32 %v335, %v311
    %v350 = vmul.f32 %v338, %v311
    %v351 = vmul.f32 %v341, %v311
    %v352 = vmul.f32 %v344, %v311
    %v353 = vmul.f32 %v347, %v311
    %v354 = vadd.f32 %v348, 1e-06
    %v355 = vadd.f32 %v349, 1e-06
    %v356 = vadd.f32 %v350, 1e-06
    %v357 = vadd.f32 %v351, 1e-06
    %v358 = vadd.f32 %v352, 1e-06
    %v359 = vadd.f32 %v353, 1e-06
    %v360 = vrsqrt.pop %v354
    %v361 = vrsqrt.pop %v355
    %v362 = vrsqrt.pop %v356
    %v363 = vrsqrt.pop %v357
    %v364 = vrsqrt.pop %v358
    %v365 = vrsqrt.pop %v359
    %v366 = vmul.f32 %v318, %v360
    %v367 = vmul.f32 %v319, %v361
    %v368 = vmul.f32 %v320, %v362
    %v369 = vmul.f32 %v321, %v363
    %v370 = vmul.f32 %v322, %v364
    %v371 = vmul.f32 %v323, %v365
    %v372 = vlaneseq
    %v373 = vshrl.u32 %v372, 7
    %v374 = vsub.s32 0, %v373
    %v375 = vrot.slane %v292, %v374
    %v376 = vmul.f32 %v366, %v375
    %v377 = vmul.f32 %v367, %v375
    %v378 = vmul.f32 %v368, %v375
    %v379 = vmul.f32 %v369, %v375
    %v380 = vmul.f32 %v370, %v375
    %v381 = vmul.f32 %v371, %v375
    %v382 = vlaneseq
    %v383 = vshrl.u32 %v382, 7
    %v384 = vsub.s32 1, %v383
    %v385 = vrot.slane %v292, %v384
    %v386 = vadd.f32 %v376, %v385
    %v387 = vadd.f32 %v377, %v385
    %v388 = vadd.f32 %v378, %v385
    %v389 = vadd.f32 %v379, %v385
    %v390 = vadd.f32 %v380, %v385
    %v391 = vadd.f32 %v381, %v385
    %v392 = vld [vmem:[#allocation10] sm:$0xff]
    %v393 = vld [vmem:[#allocation10 + $0x8] sm:$0xff]
    %v394 = vld [vmem:[#allocation10 + $0x10] sm:$0xff]
    %v395 = vld [vmem:[#allocation10 + $0x18] sm:$0xff]
    %v396 = vld [vmem:[%s6] sm:$0x1]
    %v398 = vlaneseq
    %v399 = vshrl.u32 %v398, 7
    %v400 = vsub.s32 0, %v399
    %v401 = vrot.slane %v396, %v400
    %v404 = vsel %vm269, %v386, 0
    %v407 = vsel %vm269, %v387, 0
    %v410 = vsel %vm269, %v388, 0
    %v413 = vsel %vm269, %v389, 0
    %v416 = vsel %vm269, %v390, 0
    %v419 = vsel %vm269, %v391, 0
    %421 = vmatprep.subr.mxu0 0.0
    %422 = vmatpush1.msra.mxu0 %v392
    %423 = vmatprep.subr.mxu0 0.0
    %424 = vmatpush1.msra.mxu0 %v393
    %425 = vmatprep.subr.mxu0 0.0
    %426 = vmatpush1.msra.mxu0 %v394
    %427 = vmatprep.subr.mxu0 0.0
    %428 = vmatpush1.msra.mxu0 %v395
    %429 = vmatprep.subr.mxu0 0.0
    %430 = vmatpush1.msra.mxu0 0.0
    %431 = vmatprep.subr.mxu0 0.0
    %432 = vmatpush1.msra.mxu0 0.0
    %433 = vmatprep.subr.mxu0 0.0
    %434 = vmatpush1.msra.mxu0 0.0
    %435 = vmatprep.subr.mxu0 0.0
    %436 = vmatpush1.msra.mxu0 0.0
    %437 = vmatprep.subr.mxu0 0.0
    %438 = vmatpush1.msra.mxu0 0.0
    %439 = vmatprep.subr.mxu0 0.0
    %440 = vmatpush1.msra.mxu0 0.0
    %441 = vmatprep.subr.mxu0 0.0
    %442 = vmatpush1.msra.mxu0 0.0
    %443 = vmatprep.subr.mxu0 0.0
    %444 = vmatpush1.msra.mxu0 0.0
    %445 = vmatprep.subr.mxu0 0.0
    %446 = vmatpush1.msra.mxu0 0.0
    %447 = vmatprep.subr.mxu0 0.0
    %448 = vmatpush1.msra.mxu0 0.0
    %449 = vmatprep.subr.mxu0 0.0
    %450 = vmatpush1.msra.mxu0 0.0
    %451 = vmatprep.subr.mxu0 0.0
    %452 = vmatpush1.msra.mxu0 0.0
    %453 = vmatprep.subr.mxu0 0.0
    %454 = vmatpush1.msra.mxu0 0.0
    %455 = vmatprep.subr.mxu0 0.0
    %456 = vmatpush1.msra.mxu0 0.0
    %457 = vmatprep.subr.mxu0 0.0
    %458 = vmatpush1.msra.mxu0 0.0
    %459 = vmatprep.subr.mxu0 0.0
    %460 = vmatpush1.msra.mxu0 0.0
    %461 = vmatprep.subr.mxu0 0.0
    %462 = vmatpush1.msra.mxu0 0.0
    %463 = vmatprep.subr.mxu0 0.0
    %464 = vmatpush1.msra.mxu0 0.0
    %465 = vmatprep.subr.mxu0 0.0
    %466 = vmatpush1.msra.mxu0 0.0
    %467 = vmatprep.subr.mxu0 0.0
    %468 = vmatpush1.msra.mxu0 0.0
    %469 = vmatprep.subr.mxu0 0.0
    %470 = vmatpush1.msra.mxu0 0.0
    %471 = vmatprep.subr.mxu0 0.0
    %472 = vmatpush1.msra.mxu0 0.0
    %473 = vmatprep.subr.mxu0 0.0
    %474 = vmatpush1.msra.mxu0 0.0
    %475 = vmatprep.subr.mxu0 0.0
    %476 = vmatpush1.msra.mxu0 0.0
    %477 = vmatprep.subr.mxu0 0.0
    %478 = vmatpush1.msra.mxu0 0.0
    %479 = vmatprep.subr.mxu0 0.0
    %480 = vmatpush1.msra.mxu0 0.0
    %481 = vmatprep.subr.mxu0 0.0
    %482 = vmatpush1.msra.mxu0 0.0
    %483 = vmatprep.subr.mxu0 0.0
    %484 = vmatpush1.msra.mxu0 0.0
    %485 = vmatprep.mubr.f32.mxu0 0.0
    %486 = vmatmul.mubr.f32.gmra.mrb[0].mxu0 %v404
    %v487 = vpop.f32.mrb[0].mxu0
    %v488 = vadd.f32 %v401, %v487
    %v489 = vpop.f32.mrb[0].mxu0
    %490 = vmatprep.mubr.f32.mxu0 0.0
    %491 = vmatmul.mubr.f32.gmra.mrb[0].mxu0 %v407
    %v492 = vpop.f32.mrb[0].mxu0
    %v493 = vadd.f32 %v401, %v492
    %v494 = vpop.f32.mrb[0].mxu0
    %495 = vmatprep.mubr.f32.mxu0 0.0
    %496 = vmatmul.mubr.f32.gmra.mrb[0].mxu0 %v410
    %v497 = vpop.f32.mrb[0].mxu0
    %v498 = vadd.f32 %v401, %v497
    %v499 = vpop.f32.mrb[0].mxu0
    %500 = vmatprep.mubr.f32.mxu0 0.0
    %501 = vmatmul.mubr.f32.gmra.mrb[0].mxu0 %v413
    %v502 = vpop.f32.mrb[0].mxu0
    %v503 = vadd.f32 %v401, %v502
    %v504 = vpop.f32.mrb[0].mxu0
    %505 = vmatprep.mubr.f32.mxu0 0.0
    %506 = vmatmul.mubr.f32.gmra.mrb[0].mxu0 %v416
    %v507 = vpop.f32.mrb[0].mxu0
    %v508 = vadd.f32 %v401, %v507
    %v509 = vpop.f32.mrb[0].mxu0
    %510 = vmatprep.mubr.f32.mxu0 0.0
    %511 = vmatmul.mubr.f32.gmra.mrb[0].mxu0 %v419
    %v512 = vpop.f32.mrb[0].mxu0
    %v513 = vadd.f32 %v401, %v512
    %v514 = vpop.f32.mrb[0].mxu0
    %515 = vdwg.mxu0
    %519 = vrot.lane.b32.xlu0 %v488, 96
    %v520 = vpop.permute.xlu0 %519
    %521 = vrot.lane.b32.xlu0 %v493, 96
    %v522 = vpop.permute.xlu0 %521
    %523 = vrot.lane.b32.xlu0 %v498, 96
    %v524 = vpop.permute.xlu0 %523
    %v525 = vsel %vm160, %v488, 0
    %v527 = vsel %vm160, %v493, 0
    %v529 = vsel %vm160, %v498, 0
    %v531 = vsel %vm160, %v520, 0
    %v533 = vsel %vm160, %v522, 0
    %v535 = vsel %vm160, %v524, 0
    %537 = vmatprep.subr.mxu0 0.0
    %538 = vmatpush1.xpose.msra.mxu0 %v531
    %539 = vmatprep.subr.mxu0 0.0
    %540 = vmatpush1.xpose.msra.mxu0 %v533
    %541 = vmatprep.subr.mxu0 0.0
    %542 = vmatpush1.xpose.msra.mxu0 %v535
    %543 = vmatprep.subr.mxu0 0.0
    %544 = vmatpush1.xpose.msra.mxu0 0.0
    %545 = vmatprep.subr.mxu0 0.0
    %546 = vmatpush1.xpose.msra.mxu0 0.0
    %547 = vmatprep.subr.mxu0 0.0
    %548 = vmatpush1.xpose.msra.mxu0 0.0
    %549 = vmatprep.subr.mxu0 0.0
    %550 = vmatpush1.xpose.msra.mxu0 0.0
    %551 = vmatprep.subr.mxu0 0.0
    %552 = vmatpush1.xpose.msra.mxu0 0.0
    %553 = vmatprep.subr.mxu0 0.0
    %554 = vmatpush1.xpose.msra.mxu0 0.0
    %555 = vmatprep.subr.mxu0 0.0
    %556 = vmatpush1.xpose.msra.mxu0 0.0
    %557 = vmatprep.subr.mxu0 0.0
    %558 = vmatpush1.xpose.msra.mxu0 0.0
    %559 = vmatprep.subr.mxu0 0.0
    %560 = vmatpush1.xpose.msra.mxu0 0.0
    %561 = vmatprep.subr.mxu0 0.0
    %562 = vmatpush1.xpose.msra.mxu0 0.0
    %563 = vmatprep.subr.mxu0 0.0
    %564 = vmatpush1.xpose.msra.mxu0 0.0
    %565 = vmatprep.subr.mxu0 0.0
    %566 = vmatpush1.xpose.msra.mxu0 0.0
    %567 = vmatprep.subr.mxu0 0.0
    %568 = vmatpush1.xpose.msra.mxu0 0.0
    %569 = vmatprep.subr.mxu0 0.0
    %570 = vmatpush1.xpose.msra.mxu0 0.0
    %571 = vmatprep.subr.mxu0 0.0
    %572 = vmatpush1.xpose.msra.mxu0 0.0
    %573 = vmatprep.subr.mxu0 0.0
    %574 = vmatpush1.xpose.msra.mxu0 0.0
    %575 = vmatprep.subr.mxu0 0.0
    %576 = vmatpush1.xpose.msra.mxu0 0.0
    %577 = vmatprep.subr.mxu0 0.0
    %578 = vmatpush1.xpose.msra.mxu0 0.0
    %579 = vmatprep.subr.mxu0 0.0
    %580 = vmatpush1.xpose.msra.mxu0 0.0
    %581 = vmatprep.subr.mxu0 0.0
    %582 = vmatpush1.xpose.msra.mxu0 0.0
    %583 = vmatprep.subr.mxu0 0.0
    %584 = vmatpush1.xpose.msra.mxu0 0.0
    %585 = vmatprep.subr.mxu0 0.0
    %586 = vmatpush1.xpose.msra.mxu0 0.0
    %587 = vmatprep.subr.mxu0 0.0
    %588 = vmatpush1.xpose.msra.mxu0 0.0
    %589 = vmatprep.subr.mxu0 0.0
    %590 = vmatpush1.xpose.msra.mxu0 0.0
    %591 = vmatprep.subr.mxu0 0.0
    %592 = vmatpush1.xpose.msra.mxu0 0.0
    %593 = vmatprep.subr.mxu0 0.0
    %594 = vmatpush1.xpose.msra.mxu0 0.0
    %595 = vmatprep.subr.mxu0 0.0
    %596 = vmatpush1.xpose.msra.mxu0 0.0
    %597 = vmatprep.subr.mxu0 0.0
    %598 = vmatpush1.xpose.msra.mxu0 0.0
    %599 = vmatprep.subr.mxu0 0.0
    %600 = vmatpush1.xpose.msra.mxu0 0.0
    %601 = vmatprep.mubr.f32.mxu0 0.0
    %602 = vmatmul.mubr.f32.gmra.mrb[0].mxu0 %v525
    %v603 = vpop.f32.mrb[0].mxu0
    %v604 = vadd.f32 0.0, %v603
    %v605 = vpop.f32.mrb[0].mxu0
    %606 = vmatprep.mubr.f32.mxu0 0.0
    %607 = vmatmul.mubr.f32.gmra.mrb[0].mxu0 %v527
    %v608 = vpop.f32.mrb[0].mxu0
    %v609 = vadd.f32 0.0, %v608
    %v610 = vpop.f32.mrb[0].mxu0
    %611 = vmatprep.mubr.f32.mxu0 0.0
    %612 = vmatmul.mubr.f32.gmra.mrb[0].mxu0 %v529
    %v613 = vpop.f32.mrb[0].mxu0
    %v614 = vadd.f32 0.0, %v613
    %v615 = vpop.f32.mrb[0].mxu0
    %616 = vdwg.mxu0
    %v617 = vmul.f32 %v604, 0.35355338
    %v618 = vmul.f32 %v609, 0.35355338
    %v619 = vmul.f32 %v614, 0.35355338
    %v620 = vadd.f32 %v617, %v143
    %v621 = vadd.f32 %v618, %v143
    %v622 = vadd.f32 %v619, %v143
    %vm623 = vcmask 195584
    %v624 = vsel %vm623, %v620, -inf
    %625 = vmax.xlane.f32.xlu0 %v624
    %v626 = vpop.xlane.xlu0 %625
    %v627 = vsel %vm623, %v621, -inf
    %628 = vmax.xlane.f32.xlu0 %v627
    %v629 = vpop.xlane.xlu0 %628
    %v630 = vsel %vm623, %v622, -inf
    %631 = vmax.xlane.f32.xlu0 %v630
    %v632 = vpop.xlane.xlu0 %631
    %v633 = vsub.f32 %v620, %v626
    %v634 = vsub.f32 %v621, %v629
    %v635 = vsub.f32 %v622, %v632
    %v636 = vmul.f32 %v633, 1.442695
    %v637 = vpow.pop %v636
    %v638 = vmul.f32 %v634, 1.442695
    %v639 = vpow.pop %v638
    %v640 = vmul.f32 %v635, 1.442695
    %v641 = vpow.pop %v640
    %v642 = vsel %vm623, %v637, 0.0
    %643 = vadd.xlane.f32.xlu0 %v642
    %v644 = vpop.xlane.xlu0 %643
    %v645 = vsel %vm623, %v639, 0.0
    %646 = vadd.xlane.f32.xlu0 %v645
    %v647 = vpop.xlane.xlu0 %646
    %v648 = vsel %vm623, %v641, 0.0
    %649 = vadd.xlane.f32.xlu0 %v648
    %v650 = vpop.xlane.xlu0 %649
    %v651 = vrcp.pop %v644
    %v652 = vrcp.pop %v647
    %v653 = vrcp.pop %v650
    %v654 = vmul.f32 %v637, %v651
    %v655 = vmul.f32 %v639, %v652
    %v656 = vmul.f32 %v641, %v653
    %657 = vrot.lane.b32.xlu0 %v488, 64
    %v658 = vpop.permute.xlu0 %657
    %659 = vrot.lane.b32.xlu0 %v493, 64
    %v660 = vpop.permute.xlu0 %659
    %661 = vrot.lane.b32.xlu0 %v498, 64
    %v662 = vpop.permute.xlu0 %661
    %v667 = vsel %vm623, %v654, 0
    %v670 = vsel %vm623, %v655, 0
    %v673 = vsel %vm623, %v656, 0
    %675 = vmatprep.subr.mxu0 0.0
    %676 = vmatpush1.msra.mxu0 %v658
    %677 = vmatprep.subr.mxu0 0.0
    %678 = vmatpush1.msra.mxu0 %v660
    %679 = vmatprep.subr.mxu0 0.0
    %680 = vmatpush1.msra.mxu0 %v662
    %681 = vmatprep.subr.mxu0 0.0
    %682 = vmatpush1.msra.mxu0 0.0
    %683 = vmatprep.subr.mxu0 0.0
    %684 = vmatpush1.msra.mxu0 0.0
    %685 = vmatprep.subr.mxu0 0.0
    %686 = vmatpush1.msra.mxu0 0.0
    %687 = vmatprep.subr.mxu0 0.0
    %688 = vmatpush1.msra.mxu0 0.0
    %689 = vmatprep.subr.mxu0 0.0
    %690 = vmatpush1.msra.mxu0 0.0
    %691 = vmatprep.subr.mxu0 0.0
    %692 = vmatpush1.msra.mxu0 0.0
    %693 = vmatprep.subr.mxu0 0.0
    %694 = vmatpush1.msra.mxu0 0.0
    %695 = vmatprep.subr.mxu0 0.0
    %696 = vmatpush1.msra.mxu0 0.0
    %697 = vmatprep.subr.mxu0 0.0
    %698 = vmatpush1.msra.mxu0 0.0
    %699 = vmatprep.subr.mxu0 0.0
    %700 = vmatpush1.msra.mxu0 0.0
    %701 = vmatprep.subr.mxu0 0.0
    %702 = vmatpush1.msra.mxu0 0.0
    %703 = vmatprep.subr.mxu0 0.0
    %704 = vmatpush1.msra.mxu0 0.0
    %705 = vmatprep.subr.mxu0 0.0
    %706 = vmatpush1.msra.mxu0 0.0
    %707 = vmatprep.subr.mxu0 0.0
    %708 = vmatpush1.msra.mxu0 0.0
    %709 = vmatprep.subr.mxu0 0.0
    %710 = vmatpush1.msra.mxu0 0.0
    %711 = vmatprep.subr.mxu0 0.0
    %712 = vmatpush1.msra.mxu0 0.0
    %713 = vmatprep.subr.mxu0 0.0
    %714 = vmatpush1.msra.mxu0 0.0
    %715 = vmatprep.subr.mxu0 0.0
    %716 = vmatpush1.msra.mxu0 0.0
    %717 = vmatprep.subr.mxu0 0.0
    %718 = vmatpush1.msra.mxu0 0.0
    %719 = vmatprep.subr.mxu0 0.0
    %720 = vmatpush1.msra.mxu0 0.0
    %721 = vmatprep.subr.mxu0 0.0
    %722 = vmatpush1.msra.mxu0 0.0
    %723 = vmatprep.subr.mxu0 0.0
    %724 = vmatpush1.msra.mxu0 0.0
    %725 = vmatprep.subr.mxu0 0.0
    %726 = vmatpush1.msra.mxu0 0.0
    %727 = vmatprep.subr.mxu0 0.0
    %728 = vmatpush1.msra.mxu0 0.0
    %729 = vmatprep.subr.mxu0 0.0
    %730 = vmatpush1.msra.mxu0 0.0
    %731 = vmatprep.subr.mxu0 0.0
    %732 = vmatpush1.msra.mxu0 0.0
    %733 = vmatprep.subr.mxu0 0.0
    %734 = vmatpush1.msra.mxu0 0.0
    %735 = vmatprep.subr.mxu0 0.0
    %736 = vmatpush1.msra.mxu0 0.0
    %737 = vmatprep.subr.mxu0 0.0
    %738 = vmatpush1.msra.mxu0 0.0
    %739 = vmatprep.mubr.f32.mxu0 0.0
    %740 = vmatmul.mubr.f32.gmra.mrb[0].mxu0 %v667
    %v741 = vpop.f32.mrb[0].mxu0
    %v742 = vadd.f32 0.0, %v741
    %v743 = vpop.f32.mrb[0].mxu0
    %744 = vmatprep.mubr.f32.mxu0 0.0
    %745 = vmatmul.mubr.f32.gmra.mrb[0].mxu0 %v670
    %v746 = vpop.f32.mrb[0].mxu0
    %v747 = vadd.f32 0.0, %v746
    %v748 = vpop.f32.mrb[0].mxu0
    %749 = vmatprep.mubr.f32.mxu0 0.0
    %750 = vmatmul.mubr.f32.gmra.mrb[0].mxu0 %v673
    %v751 = vpop.f32.mrb[0].mxu0
    %v752 = vadd.f32 0.0, %v751
    %v753 = vpop.f32.mrb[0].mxu0
    %754 = vdwg.mxu0
    %755 = vst.msk [vmem:[#allocation3] sm:$0xff] %vm160, %v742
    %756 = vst.msk [vmem:[#allocation3 + $0x8] sm:$0xff] %vm160, %v747
    %757 = vst.msk [vmem:[#allocation3 + $0x10] sm:$0xff] %vm160, %v752
    %758 = vrot.lane.b32.xlu0 %v488, 120
    %v759 = vpop.permute.xlu0 %758
    %760 = vrot.lane.b32.xlu0 %v493, 120
    %v761 = vpop.permute.xlu0 %760
    %762 = vrot.lane.b32.xlu0 %v498, 120
    %v763 = vpop.permute.xlu0 %762
    %764 = vrot.lane.b32.xlu0 %v488, 88
    %v765 = vpop.permute.xlu0 %764
    %766 = vrot.lane.b32.xlu0 %v493, 88
    %v767 = vpop.permute.xlu0 %766
    %768 = vrot.lane.b32.xlu0 %v498, 88
    %v769 = vpop.permute.xlu0 %768
    %v770 = vsel %vm160, %v759, 0
    %v772 = vsel %vm160, %v761, 0
    %v774 = vsel %vm160, %v763, 0
    %v776 = vsel %vm160, %v765, 0
    %v778 = vsel %vm160, %v767, 0
    %v780 = vsel %vm160, %v769, 0
    %782 = vmatprep.subr.mxu0 0.0
    %783 = vmatpush1.xpose.msra.mxu0 %v776
    %784 = vmatprep.subr.mxu0 0.0
    %785 = vmatpush1.xpose.msra.mxu0 %v778
    %786 = vmatprep.subr.mxu0 0.0
    %787 = vmatpush1.xpose.msra.mxu0 %v780
    %788 = vmatprep.subr.mxu0 0.0
    %789 = vmatpush1.xpose.msra.mxu0 0.0
    %790 = vmatprep.subr.mxu0 0.0
    %791 = vmatpush1.xpose.msra.mxu0 0.0
    %792 = vmatprep.subr.mxu0 0.0
    %793 = vmatpush1.xpose.msra.mxu0 0.0
    %794 = vmatprep.subr.mxu0 0.0
    %795 = vmatpush1.xpose.msra.mxu0 0.0
    %796 = vmatprep.subr.mxu0 0.0
    %797 = vmatpush1.xpose.msra.mxu0 0.0
    %798 = vmatprep.subr.mxu0 0.0
    %799 = vmatpush1.xpose.msra.mxu0 0.0
    %800 = vmatprep.subr.mxu0 0.0
    %801 = vmatpush1.xpose.msra.mxu0 0.0
    %802 = vmatprep.subr.mxu0 0.0
    %803 = vmatpush1.xpose.msra.mxu0 0.0
    %804 = vmatprep.subr.mxu0 0.0
    %805 = vmatpush1.xpose.msra.mxu0 0.0
    %806 = vmatprep.subr.mxu0 0.0
    %807 = vmatpush1.xpose.msra.mxu0 0.0
    %808 = vmatprep.subr.mxu0 0.0
    %809 = vmatpush1.xpose.msra.mxu0 0.0
    %810 = vmatprep.subr.mxu0 0.0
    %811 = vmatpush1.xpose.msra.mxu0 0.0
    %812 = vmatprep.subr.mxu0 0.0
    %813 = vmatpush1.xpose.msra.mxu0 0.0
    %814 = vmatprep.subr.mxu0 0.0
    %815 = vmatpush1.xpose.msra.mxu0 0.0
    %816 = vmatprep.subr.mxu0 0.0
    %817 = vmatpush1.xpose.msra.mxu0 0.0
    %818 = vmatprep.subr.mxu0 0.0
    %819 = vmatpush1.xpose.msra.mxu0 0.0
    %820 = vmatprep.subr.mxu0 0.0
    %821 = vmatpush1.xpose.msra.mxu0 0.0
    %822 = vmatprep.subr.mxu0 0.0
    %823 = vmatpush1.xpose.msra.mxu0 0.0
    %824 = vmatprep.subr.mxu0 0.0
    %825 = vmatpush1.xpose.msra.mxu0 0.0
    %826 = vmatprep.subr.mxu0 0.0
    %827 = vmatpush1.xpose.msra.mxu0 0.0
    %828 = vmatprep.subr.mxu0 0.0
    %829 = vmatpush1.xpose.msra.mxu0 0.0
    %830 = vmatprep.subr.mxu0 0.0
    %831 = vmatpush1.xpose.msra.mxu0 0.0
    %832 = vmatprep.subr.mxu0 0.0
    %833 = vmatpush1.xpose.msra.mxu0 0.0
    %834 = vmatprep.subr.mxu0 0.0
    %835 = vmatpush1.xpose.msra.mxu0 0.0
    %836 = vmatprep.subr.mxu0 0.0
    %837 = vmatpush1.xpose.msra.mxu0 0.0
    %838 = vmatprep.subr.mxu0 0.0
    %839 = vmatpush1.xpose.msra.mxu0 0.0
    %840 = vmatprep.subr.mxu0 0.0
    %841 = vmatpush1.xpose.msra.mxu0 0.0
    %842 = vmatprep.subr.mxu0 0.0
    %843 = vmatpush1.xpose.msra.mxu0 0.0
    %844 = vmatprep.subr.mxu0 0.0
    %845 = vmatpush1.xpose.msra.mxu0 0.0
    %846 = vmatprep.mubr.f32.mxu0 0.0
    %847 = vmatmul.mubr.f32.gmra.mrb[0].mxu0 %v770
    %v848 = vpop.f32.mrb[0].mxu0
    %v849 = vadd.f32 0.0, %v848
    %v850 = vpop.f32.mrb[0].mxu0
    %851 = vmatprep.mubr.f32.mxu0 0.0
    %852 = vmatmul.mubr.f32.gmra.mrb[0].mxu0 %v772
    %v853 = vpop.f32.mrb[0].mxu0
    %v854 = vadd.f32 0.0, %v853
    %v855 = vpop.f32.mrb[0].mxu0
    %856 = vmatprep.mubr.f32.mxu0 0.0
    %857 = vmatmul.mubr.f32.gmra.mrb[0].mxu0 %v774
    %v858 = vpop.f32.mrb[0].mxu0
    %v859 = vadd.f32 0.0, %v858
    %v860 = vpop.f32.mrb[0].mxu0
    %861 = vdwg.mxu0
    %v862 = vmul.f32 %v849, 0.35355338
    %v863 = vmul.f32 %v854, 0.35355338
    %v864 = vmul.f32 %v859, 0.35355338
    %v865 = vadd.f32 %v862, %v143
    %v866 = vadd.f32 %v863, %v143
    %v867 = vadd.f32 %v864, %v143
    %v868 = vsel %vm623, %v865, -inf
    %869 = vmax.xlane.f32.xlu0 %v868
    %v870 = vpop.xlane.xlu0 %869
    %v871 = vsel %vm623, %v866, -inf
    %872 = vmax.xlane.f32.xlu0 %v871
    %v873 = vpop.xlane.xlu0 %872
    %v874 = vsel %vm623, %v867, -inf
    %875 = vmax.xlane.f32.xlu0 %v874
    %v876 = vpop.xlane.xlu0 %875
    %v877 = vsub.f32 %v865, %v870
    %v878 = vsub.f32 %v866, %v873
    %v879 = vsub.f32 %v867, %v876
    %v880 = vmul.f32 %v877, 1.442695
    %v881 = vpow.pop %v880
    %v882 = vmul.f32 %v878, 1.442695
    %v883 = vpow.pop %v882
    %v884 = vmul.f32 %v879, 1.442695
    %v885 = vpow.pop %v884
    %v886 = vsel %vm623, %v881, 0.0
    %887 = vadd.xlane.f32.xlu0 %v886
    %v888 = vpop.xlane.xlu0 %887
    %v889 = vsel %vm623, %v883, 0.0
    %890 = vadd.xlane.f32.xlu0 %v889
    %v891 = vpop.xlane.xlu0 %890
    %v892 = vsel %vm623, %v885, 0.0
    %893 = vadd.xlane.f32.xlu0 %v892
    %v894 = vpop.xlane.xlu0 %893
    %v895 = vrcp.pop %v888
    %v896 = vrcp.pop %v891
    %v897 = vrcp.pop %v894
    %v898 = vmul.f32 %v881, %v895
    %v899 = vmul.f32 %v883, %v896
    %v900 = vmul.f32 %v885, %v897
    %901 = vrot.lane.b32.xlu0 %v488, 56
    %v902 = vpop.permute.xlu0 %901
    %903 = vrot.lane.b32.xlu0 %v493, 56
    %v904 = vpop.permute.xlu0 %903
    %905 = vrot.lane.b32.xlu0 %v498, 56
    %v906 = vpop.permute.xlu0 %905
    %v911 = vsel %vm623, %v898, 0
    %v914 = vsel %vm623, %v899, 0
    %v917 = vsel %vm623, %v900, 0
    %919 = vmatprep.subr.mxu0 0.0
    %920 = vmatpush1.msra.mxu0 %v902
    %921 = vmatprep.subr.mxu0 0.0
    %922 = vmatpush1.msra.mxu0 %v904
    %923 = vmatprep.subr.mxu0 0.0
    %924 = vmatpush1.msra.mxu0 %v906
    %925 = vmatprep.subr.mxu0 0.0
    %926 = vmatpush1.msra.mxu0 0.0
    %927 = vmatprep.subr.mxu0 0.0
    %928 = vmatpush1.msra.mxu0 0.0
    %929 = vmatprep.subr.mxu0 0.0
    %930 = vmatpush1.msra.mxu0 0.0
    %931 = vmatprep.subr.mxu0 0.0
    %932 = vmatpush1.msra.mxu0 0.0
    %933 = vmatprep.subr.mxu0 0.0
    %934 = vmatpush1.msra.mxu0 0.0
    %935 = vmatprep.subr.mxu0 0.0
    %936 = vmatpush1.msra.mxu0 0.0
    %937 = vmatprep.subr.mxu0 0.0
    %938 = vmatpush1.msra.mxu0 0.0
    %939 = vmatprep.subr.mxu0 0.0
    %940 = vmatpush1.msra.mxu0 0.0
    %941 = vmatprep.subr.mxu0 0.0
    %942 = vmatpush1.msra.mxu0 0.0
    %943 = vmatprep.subr.mxu0 0.0
    %944 = vmatpush1.msra.mxu0 0.0
    %945 = vmatprep.subr.mxu0 0.0
    %946 = vmatpush1.msra.mxu0 0.0
    %947 = vmatprep.subr.mxu0 0.0
    %948 = vmatpush1.msra.mxu0 0.0
    %949 = vmatprep.subr.mxu0 0.0
    %950 = vmatpush1.msra.mxu0 0.0
    %951 = vmatprep.subr.mxu0 0.0
    %952 = vmatpush1.msra.mxu0 0.0
    %953 = vmatprep.subr.mxu0 0.0
    %954 = vmatpush1.msra.mxu0 0.0
    %955 = vmatprep.subr.mxu0 0.0
    %956 = vmatpush1.msra.mxu0 0.0
    %957 = vmatprep.subr.mxu0 0.0
    %958 = vmatpush1.msra.mxu0 0.0
    %959 = vmatprep.subr.mxu0 0.0
    %960 = vmatpush1.msra.mxu0 0.0
    %961 = vmatprep.subr.mxu0 0.0
    %962 = vmatpush1.msra.mxu0 0.0
    %963 = vmatprep.subr.mxu0 0.0
    %964 = vmatpush1.msra.mxu0 0.0
    %965 = vmatprep.subr.mxu0 0.0
    %966 = vmatpush1.msra.mxu0 0.0
    %967 = vmatprep.subr.mxu0 0.0
    %968 = vmatpush1.msra.mxu0 0.0
    %969 = vmatprep.subr.mxu0 0.0
    %970 = vmatpush1.msra.mxu0 0.0
    %971 = vmatprep.subr.mxu0 0.0
    %972 = vmatpush1.msra.mxu0 0.0
    %973 = vmatprep.subr.mxu0 0.0
    %974 = vmatpush1.msra.mxu0 0.0
    %975 = vmatprep.subr.mxu0 0.0
    %976 = vmatpush1.msra.mxu0 0.0
    %977 = vmatprep.subr.mxu0 0.0
    %978 = vmatpush1.msra.mxu0 0.0
    %979 = vmatprep.subr.mxu0 0.0
    %980 = vmatpush1.msra.mxu0 0.0
    %981 = vmatprep.subr.mxu0 0.0
    %982 = vmatpush1.msra.mxu0 0.0
    %983 = vmatprep.mubr.f32.mxu0 0.0
    %984 = vmatmul.mubr.f32.gmra.mrb[0].mxu0 %v911
    %v985 = vpop.f32.mrb[0].mxu0
    %v986 = vadd.f32 0.0, %v985
    %v987 = vpop.f32.mrb[0].mxu0
    %988 = vmatprep.mubr.f32.mxu0 0.0
    %989 = vmatmul.mubr.f32.gmra.mrb[0].mxu0 %v914
    %v990 = vpop.f32.mrb[0].mxu0
    %v991 = vadd.f32 0.0, %v990
    %v992 = vpop.f32.mrb[0].mxu0
    %993 = vmatprep.mubr.f32.mxu0 0.0
    %994 = vmatmul.mubr.f32.gmra.mrb[0].mxu0 %v917
    %v995 = vpop.f32.mrb[0].mxu0
    %v996 = vadd.f32 0.0, %v995
    %v997 = vpop.f32.mrb[0].mxu0
    %998 = vdwg.mxu0
    %1002 = vrot.lane.b32.xlu0 %v986, 8
    %v1003 = vpop.permute.xlu0 %1002
    %1004 = vrot.lane.b32.xlu0 %v991, 8
    %v1005 = vpop.permute.xlu0 %1004
    %1006 = vrot.lane.b32.xlu0 %v996, 8
    %v1007 = vpop.permute.xlu0 %1006
    %vm1011 = vcmask 130112
    %1012 = vst.msk [vmem:[#allocation3] sm:$0xff] %vm1011, %v1003
    %1013 = vst.msk [vmem:[#allocation3 + $0x8] sm:$0xff] %vm1011, %v1005
    %1014 = vst.msk [vmem:[#allocation3 + $0x10] sm:$0xff] %vm1011, %v1007
    %1015 = vrot.lane.b32.xlu0 %v488, 112
    %v1016 = vpop.permute.xlu0 %1015
    %1017 = vrot.lane.b32.xlu0 %v493, 112
    %v1018 = vpop.permute.xlu0 %1017
    %1019 = vrot.lane.b32.xlu0 %v498, 112
    %v1020 = vpop.permute.xlu0 %1019
    %1021 = vrot.lane.b32.xlu0 %v488, 80
    %v1022 = vpop.permute.xlu0 %1021
    %1023 = vrot.lane.b32.xlu0 %v493, 80
    %v1024 = vpop.permute.xlu0 %1023
    %1025 = vrot.lane.b32.xlu0 %v498, 80
    %v1026 = vpop.permute.xlu0 %1025
    %v1027 = vsel %vm160, %v1016, 0
    %v1029 = vsel %vm160, %v1018, 0
    %v1031 = vsel %vm160, %v1020, 0
    %v1033 = vsel %vm160, %v1022, 0
    %v1035 = vsel %vm160, %v1024, 0
    %v1037 = vsel %vm160, %v1026, 0
    %1039 = vmatprep.subr.mxu0 0.0
    %1040 = vmatpush1.xpose.msra.mxu0 %v1033
    %1041 = vmatprep.subr.mxu0 0.0
    %1042 = vmatpush1.xpose.msra.mxu0 %v1035
    %1043 = vmatprep.subr.mxu0 0.0
    %1044 = vmatpush1.xpose.msra.mxu0 %v1037
    %1045 = vmatprep.subr.mxu0 0.0
    %1046 = vmatpush1.xpose.msra.mxu0 0.0
    %1047 = vmatprep.subr.mxu0 0.0
    %1048 = vmatpush1.xpose.msra.mxu0 0.0
    %1049 = vmatprep.subr.mxu0 0.0
    %1050 = vmatpush1.xpose.msra.mxu0 0.0
    %1051 = vmatprep.subr.mxu0 0.0
    %1052 = vmatpush1.xpose.msra.mxu0 0.0
    %1053 = vmatprep.subr.mxu0 0.0
    %1054 = vmatpush1.xpose.msra.mxu0 0.0
    %1055 = vmatprep.subr.mxu0 0.0
    %1056 = vmatpush1.xpose.msra.mxu0 0.0
    %1057 = vmatprep.subr.mxu0 0.0
    %1058 = vmatpush1.xpose.msra.mxu0 0.0
    %1059 = vmatprep.subr.mxu0 0.0
    %1060 = vmatpush1.xpose.msra.mxu0 0.0
    %1061 = vmatprep.subr.mxu0 0.0
    %1062 = vmatpush1.xpose.msra.mxu0 0.0
    %1063 = vmatprep.subr.mxu0 0.0
    %1064 = vmatpush1.xpose.msra.mxu0 0.0
    %1065 = vmatprep.subr.mxu0 0.0
    %1066 = vmatpush1.xpose.msra.mxu0 0.0
    %1067 = vmatprep.subr.mxu0 0.0
    %1068 = vmatpush1.xpose.msra.mxu0 0.0
    %1069 = vmatprep.subr.mxu0 0.0
    %1070 = vmatpush1.xpose.msra.mxu0 0.0
    %1071 = vmatprep.subr.mxu0 0.0
    %1072 = vmatpush1.xpose.msra.mxu0 0.0
    %1073 = vmatprep.subr.mxu0 0.0
    %1074 = vmatpush1.xpose.msra.mxu0 0.0
    %1075 = vmatprep.subr.mxu0 0.0
    %1076 = vmatpush1.xpose.msra.mxu0 0.0
    %1077 = vmatprep.subr.mxu0 0.0
    %1078 = vmatpush1.xpose.msra.mxu0 0.0
    %1079 = vmatprep.subr.mxu0 0.0
    %1080 = vmatpush1.xpose.msra.mxu0 0.0
    %1081 = vmatprep.subr.mxu0 0.0
    %1082 = vmatpush1.xpose.msra.mxu0 0.0
    %1083 = vmatprep.subr.mxu0 0.0
    %1084 = vmatpush1.xpose.msra.mxu0 0.0
    %1085 = vmatprep.subr.mxu0 0.0
    %1086 = vmatpush1.xpose.msra.mxu0 0.0
    %1087 = vmatprep.subr.mxu0 0.0
    %1088 = vmatpush1.xpose.msra.mxu0 0.0
    %1089 = vmatprep.subr.mxu0 0.0
    %1090 = vmatpush1.xpose.msra.mxu0 0.0
    %1091 = vmatprep.subr.mxu0 0.0
    %1092 = vmatpush1.xpose.msra.mxu0 0.0
    %1093 = vmatprep.subr.mxu0 0.0
    %1094 = vmatpush1.xpose.msra.mxu0 0.0
    %1095 = vmatprep.subr.mxu0 0.0
    %1096 = vmatpush1.xpose.msra.mxu0 0.0
    %1097 = vmatprep.subr.mxu0 0.0
    %1098 = vmatpush1.xpose.msra.mxu0 0.0
    %1099 = vmatprep.subr.mxu0 0.0
    %1100 = vmatpush1.xpose.msra.mxu0 0.0
    %1101 = vmatprep.subr.mxu0 0.0
    %1102 = vmatpush1.xpose.msra.mxu0 0.0
    %1103 = vmatprep.mubr.f32.mxu0 0.0
    %1104 = vmatmul.mubr.f32.gmra.mrb[0].mxu0 %v1027
    %v1105 = vpop.f32.mrb[0].mxu0
    %v1106 = vadd.f32 0.0, %v1105
    %v1107 = vpop.f32.mrb[0].mxu0
    %1108 = vmatprep.mubr.f32.mxu0 0.0
    %1109 = vmatmul.mubr.f32.gmra.mrb[0].mxu0 %v1029
    %v1110 = vpop.f32.mrb[0].mxu0
    %v1111 = vadd.f32 0.0, %v1110
    %v1112 = vpop.f32.mrb[0].mxu0
    %1113 = vmatprep.mubr.f32.mxu0 0.0
    %1114 = vmatmul.mubr.f32.gmra.mrb[0].mxu0 %v1031
    %v1115 = vpop.f32.mrb[0].mxu0
    %v1116 = vadd.f32 0.0, %v1115
    %v1117 = vpop.f32.mrb[0].mxu0
    %1118 = vdwg.mxu0
    %v1119 = vmul.f32 %v1106, 0.35355338
    %v1120 = vmul.f32 %v1111, 0.35355338
    %v1121 = vmul.f32 %v1116, 0.35355338
    %v1122 = vadd.f32 %v1119, %v143
    %v1123 = vadd.f32 %v1120, %v143
    %v1124 = vadd.f32 %v1121, %v143
    %v1125 = vsel %vm623, %v1122, -inf
    %1126 = vmax.xlane.f32.xlu0 %v1125
    %v1127 = vpop.xlane.xlu0 %1126
    %v1128 = vsel %vm623, %v1123, -inf
    %1129 = vmax.xlane.f32.xlu0 %v1128
    %v1130 = vpop.xlane.xlu0 %1129
    %v1131 = vsel %vm623, %v1124, -inf
    %1132 = vmax.xlane.f32.xlu0 %v1131
    %v1133 = vpop.xlane.xlu0 %1132
    %v1134 = vsub.f32 %v1122, %v1127
    %v1135 = vsub.f32 %v1123, %v1130
    %v1136 = vsub.f32 %v1124, %v1133
    %v1137 = vmul.f32 %v1134, 1.442695
    %v1138 = vpow.pop %v1137
    %v1139 = vmul.f32 %v1135, 1.442695
    %v1140 = vpow.pop %v1139
    %v1141 = vmul.f32 %v1136, 1.442695
    %v1142 = vpow.pop %v1141
    %v1143 = vsel %vm623, %v1138, 0.0
    %1144 = vadd.xlane.f32.xlu0 %v1143
    %v1145 = vpop.xlane.xlu0 %1144
    %v1146 = vsel %vm623, %v1140, 0.0
    %1147 = vadd.xlane.f32.xlu0 %v1146
    %v1148 = vpop.xlane.xlu0 %1147
    %v1149 = vsel %vm623, %v1142, 0.0
    %1150 = vadd.xlane.f32.xlu0 %v1149
    %v1151 = vpop.xlane.xlu0 %1150
    %v1152 = vrcp.pop %v1145
    %v1153 = vrcp.pop %v1148
    %v1154 = vrcp.pop %v1151
    %v1155 = vmul.f32 %v1138, %v1152
    %v1156 = vmul.f32 %v1140, %v1153
    %v1157 = vmul.f32 %v1142, %v1154
    %1158 = vrot.lane.b32.xlu0 %v488, 48
    %v1159 = vpop.permute.xlu0 %1158
    %1160 = vrot.lane.b32.xlu0 %v493, 48
    %v1161 = vpop.permute.xlu0 %1160
    %1162 = vrot.lane.b32.xlu0 %v498, 48
    %v1163 = vpop.permute.xlu0 %1162
    %v1168 = vsel %vm623, %v1155, 0
    %v1171 = vsel %vm623, %v1156, 0
    %v1174 = vsel %vm623, %v1157, 0
    %1176 = vmatprep.subr.mxu0 0.0
    %1177 = vmatpush1.msra.mxu0 %v1159
    %1178 = vmatprep.subr.mxu0 0.0
    %1179 = vmatpush1.msra.mxu0 %v1161
    %1180 = vmatprep.subr.mxu0 0.0
    %1181 = vmatpush1.msra.mxu0 %v1163
    %1182 = vmatprep.subr.mxu0 0.0
    %1183 = vmatpush1.msra.mxu0 0.0
    %1184 = vmatprep.subr.mxu0 0.0
    %1185 = vmatpush1.msra.mxu0 0.0
    %1186 = vmatprep.subr.mxu0 0.0
    %1187 = vmatpush1.msra.mxu0 0.0
    %1188 = vmatprep.subr.mxu0 0.0
    %1189 = vmatpush1.msra.mxu0 0.0
    %1190 = vmatprep.subr.mxu0 0.0
    %1191 = vmatpush1.msra.mxu0 0.0
    %1192 = vmatprep.subr.mxu0 0.0
    %1193 = vmatpush1.msra.mxu0 0.0
    %1194 = vmatprep.subr.mxu0 0.0
    %1195 = vmatpush1.msra.mxu0 0.0
    %1196 = vmatprep.subr.mxu0 0.0
    %1197 = vmatpush1.msra.mxu0 0.0
    %1198 = vmatprep.subr.mxu0 0.0
    %1199 = vmatpush1.msra.mxu0 0.0
    %1200 = vmatprep.subr.mxu0 0.0
    %1201 = vmatpush1.msra.mxu0 0.0
    %1202 = vmatprep.subr.mxu0 0.0
    %1203 = vmatpush1.msra.mxu0 0.0
    %1204 = vmatprep.subr.mxu0 0.0
    %1205 = vmatpush1.msra.mxu0 0.0
    %1206 = vmatprep.subr.mxu0 0.0
    %1207 = vmatpush1.msra.mxu0 0.0
    %1208 = vmatprep.subr.mxu0 0.0
    %1209 = vmatpush1.msra.mxu0 0.0
    %1210 = vmatprep.subr.mxu0 0.0
    %1211 = vmatpush1.msra.mxu0 0.0
    %1212 = vmatprep.subr.mxu0 0.0
    %1213 = vmatpush1.msra.mxu0 0.0
    %1214 = vmatprep.subr.mxu0 0.0
    %1215 = vmatpush1.msra.mxu0 0.0
    %1216 = vmatprep.subr.mxu0 0.0
    %1217 = vmatpush1.msra.mxu0 0.0
    %1218 = vmatprep.subr.mxu0 0.0
    %1219 = vmatpush1.msra.mxu0 0.0
    %1220 = vmatprep.subr.mxu0 0.0
    %1221 = vmatpush1.msra.mxu0 0.0
    %1222 = vmatprep.subr.mxu0 0.0
    %1223 = vmatpush1.msra.mxu0 0.0
    %1224 = vmatprep.subr.mxu0 0.0
    %1225 = vmatpush1.msra.mxu0 0.0
    %1226 = vmatprep.subr.mxu0 0.0
    %1227 = vmatpush1.msra.mxu0 0.0
    %1228 = vmatprep.subr.mxu0 0.0
    %1229 = vmatpush1.msra.mxu0 0.0
    %1230 = vmatprep.subr.mxu0 0.0
    %1231 = vmatpush1.msra.mxu0 0.0
    %1232 = vmatprep.subr.mxu0 0.0
    %1233 = vmatpush1.msra.mxu0 0.0
    %1234 = vmatprep.subr.mxu0 0.0
    %1235 = vmatpush1.msra.mxu0 0.0
    %1236 = vmatprep.subr.mxu0 0.0
    %1237 = vmatpush1.msra.mxu0 0.0
    %1238 = vmatprep.subr.mxu0 0.0
    %1239 = vmatpush1.msra.mxu0 0.0
    %1240 = vmatprep.mubr.f32.mxu0 0.0
    %1241 = vmatmul.mubr.f32.gmra.mrb[0].mxu0 %v1168
    %v1242 = vpop.f32.mrb[0].mxu0
    %v1243 = vadd.f32 0.0, %v1242
    %v1244 = vpop.f32.mrb[0].mxu0
    %1245 = vmatprep.mubr.f32.mxu0 0.0
    %1246 = vmatmul.mubr.f32.gmra.mrb[0].mxu0 %v1171
    %v1247 = vpop.f32.mrb[0].mxu0
    %v1248 = vadd.f32 0.0, %v1247
    %v1249 = vpop.f32.mrb[0].mxu0
    %1250 = vmatprep.mubr.f32.mxu0 0.0
    %1251 = vmatmul.mubr.f32.gmra.mrb[0].mxu0 %v1174
    %v1252 = vpop.f32.mrb[0].mxu0
    %v1253 = vadd.f32 0.0, %v1252
    %v1254 = vpop.f32.mrb[0].mxu0
    %1255 = vdwg.mxu0
    %1259 = vrot.lane.b32.xlu0 %v1243, 16
    %v1260 = vpop.permute.xlu0 %1259
    %1261 = vrot.lane.b32.xlu0 %v1248, 16
    %v1262 = vpop.permute.xlu0 %1261
    %1263 = vrot.lane.b32.xlu0 %v1253, 16
    %v1264 = vpop.permute.xlu0 %1263
    %vm1268 = vcmask 195712
    %1269 = vst.msk [vmem:[#allocation3] sm:$0xff] %vm1268, %v1260
    %1270 = vst.msk [vmem:[#allocation3 + $0x8] sm:$0xff] %vm1268, %v1262
    %1271 = vst.msk [vmem:[#allocation3 + $0x10] sm:$0xff] %vm1268, %v1264
    %1272 = vrot.lane.b32.xlu0 %v488, 104
    %v1273 = vpop.permute.xlu0 %1272
    %1274 = vrot.lane.b32.xlu0 %v493, 104
    %v1275 = vpop.permute.xlu0 %1274
    %1276 = vrot.lane.b32.xlu0 %v498, 104
    %v1277 = vpop.permute.xlu0 %1276
    %1278 = vrot.lane.b32.xlu0 %v488, 72
    %v1279 = vpop.permute.xlu0 %1278
    %1280 = vrot.lane.b32.xlu0 %v493, 72
    %v1281 = vpop.permute.xlu0 %1280
    %1282 = vrot.lane.b32.xlu0 %v498, 72
    %v1283 = vpop.permute.xlu0 %1282
    %v1284 = vsel %vm160, %v1273, 0
    %v1286 = vsel %vm160, %v1275, 0
    %v1288 = vsel %vm160, %v1277, 0
    %v1290 = vsel %vm160, %v1279, 0
    %v1292 = vsel %vm160, %v1281, 0
    %v1294 = vsel %vm160, %v1283, 0
    %1296 = vmatprep.subr.mxu0 0.0
    %1297 = vmatpush1.xpose.msra.mxu0 %v1290
    %1298 = vmatprep.subr.mxu0 0.0
    %1299 = vmatpush1.xpose.msra.mxu0 %v1292
    %1300 = vmatprep.subr.mxu0 0.0
    %1301 = vmatpush1.xpose.msra.mxu0 %v1294
    %1302 = vmatprep.subr.mxu0 0.0
    %1303 = vmatpush1.xpose.msra.mxu0 0.0
    %1304 = vmatprep.subr.mxu0 0.0
    %1305 = vmatpush1.xpose.msra.mxu0 0.0
    %1306 = vmatprep.subr.mxu0 0.0
    %1307 = vmatpush1.xpose.msra.mxu0 0.0
    %1308 = vmatprep.subr.mxu0 0.0
    %1309 = vmatpush1.xpose.msra.mxu0 0.0
    %1310 = vmatprep.subr.mxu0 0.0
    %1311 = vmatpush1.xpose.msra.mxu0 0.0
    %1312 = vmatprep.subr.mxu0 0.0
    %1313 = vmatpush1.xpose.msra.mxu0 0.0
    %1314 = vmatprep.subr.mxu0 0.0
    %1315 = vmatpush1.xpose.msra.mxu0 0.0
    %1316 = vmatprep.subr.mxu0 0.0
    %1317 = vmatpush1.xpose.msra.mxu0 0.0
    %1318 = vmatprep.subr.mxu0 0.0
    %1319 = vmatpush1.xpose.msra.mxu0 0.0
    %1320 = vmatprep.subr.mxu0 0.0
    %1321 = vmatpush1.xpose.msra.mxu0 0.0
    %1322 = vmatprep.subr.mxu0 0.0
    %1323 = vmatpush1.xpose.msra.mxu0 0.0
    %1324 = vmatprep.subr.mxu0 0.0
    %1325 = vmatpush1.xpose.msra.mxu0 0.0
    %1326 = vmatprep.subr.mxu0 0.0
    %1327 = vmatpush1.xpose.msra.mxu0 0.0
    %1328 = vmatprep.subr.mxu0 0.0
    %1329 = vmatpush1.xpose.msra.mxu0 0.0
    %1330 = vmatprep.subr.mxu0 0.0
    %1331 = vmatpush1.xpose.msra.mxu0 0.0
    %1332 = vmatprep.subr.mxu0 0.0
    %1333 = vmatpush1.xpose.msra.mxu0 0.0
    %1334 = vmatprep.subr.mxu0 0.0
    %1335 = vmatpush1.xpose.msra.mxu0 0.0
    %1336 = vmatprep.subr.mxu0 0.0
    %1337 = vmatpush1.xpose.msra.mxu0 0.0
    %1338 = vmatprep.subr.mxu0 0.0
    %1339 = vmatpush1.xpose.msra.mxu0 0.0
    %1340 = vmatprep.subr.mxu0 0.0
    %1341 = vmatpush1.xpose.msra.mxu0 0.0
    %1342 = vmatprep.subr.mxu0 0.0
    %1343 = vmatpush1.xpose.msra.mxu0 0.0
    %1344 = vmatprep.subr.mxu0 0.0
    %1345 = vmatpush1.xpose.msra.mxu0 0.0
    %1346 = vmatprep.subr.mxu0 0.0
    %1347 = vmatpush1.xpose.msra.mxu0 0.0
    %1348 = vmatprep.subr.mxu0 0.0
    %1349 = vmatpush1.xpose.msra.mxu0 0.0
    %1350 = vmatprep.subr.mxu0 0.0
    %1351 = vmatpush1.xpose.msra.mxu0 0.0
    %1352 = vmatprep.subr.mxu0 0.0
    %1353 = vmatpush1.xpose.msra.mxu0 0.0
    %1354 = vmatprep.subr.mxu0 0.0
    %1355 = vmatpush1.xpose.msra.mxu0 0.0
    %1356 = vmatprep.subr.mxu0 0.0
    %1357 = vmatpush1.xpose.msra.mxu0 0.0
    %1358 = vmatprep.subr.mxu0 0.0
    %1359 = vmatpush1.xpose.msra.mxu0 0.0
    %1360 = vmatprep.mubr.f32.mxu0 0.0
    %1361 = vmatmul.mubr.f32.gmra.mrb[0].mxu0 %v1284
    %v1362 = vpop.f32.mrb[0].mxu0
    %v1363 = vadd.f32 0.0, %v1362
    %v1364 = vpop.f32.mrb[0].mxu0
    %1365 = vmatprep.mubr.f32.mxu0 0.0
    %1366 = vmatmul.mubr.f32.gmra.mrb[0].mxu0 %v1286
    %v1367 = vpop.f32.mrb[0].mxu0
    %v1368 = vadd.f32 0.0, %v1367
    %v1369 = vpop.f32.mrb[0].mxu0
    %1370 = vmatprep.mubr.f32.mxu0 0.0
    %1371 = vmatmul.mubr.f32.gmra.mrb[0].mxu0 %v1288
    %v1372 = vpop.f32.mrb[0].mxu0
    %v1373 = vadd.f32 0.0, %v1372
    %v1374 = vpop.f32.mrb[0].mxu0
    %1375 = vdwg.mxu0
    %v1376 = vmul.f32 %v1363, 0.35355338
    %v1377 = vmul.f32 %v1368, 0.35355338
    %v1378 = vmul.f32 %v1373, 0.35355338
    %v1379 = vadd.f32 %v1376, %v143
    %v1380 = vadd.f32 %v1377, %v143
    %v1381 = vadd.f32 %v1378, %v143
    %v1382 = vsel %vm623, %v1379, -inf
    %1383 = vmax.xlane.f32.xlu0 %v1382
    %v1384 = vpop.xlane.xlu0 %1383
    %v1385 = vsel %vm623, %v1380, -inf
    %1386 = vmax.xlane.f32.xlu0 %v1385
    %v1387 = vpop.xlane.xlu0 %1386
    %v1388 = vsel %vm623, %v1381, -inf
    %1389 = vmax.xlane.f32.xlu0 %v1388
    %v1390 = vpop.xlane.xlu0 %1389
    %v1391 = vsub.f32 %v1379, %v1384
    %v1392 = vsub.f32 %v1380, %v1387
    %v1393 = vsub.f32 %v1381, %v1390
    %v1394 = vmul.f32 %v1391, 1.442695
    %v1395 = vpow.pop %v1394
    %v1396 = vmul.f32 %v1392, 1.442695
    %v1397 = vpow.pop %v1396
    %v1398 = vmul.f32 %v1393, 1.442695
    %v1399 = vpow.pop %v1398
    %v1400 = vsel %vm623, %v1395, 0.0
    %1401 = vadd.xlane.f32.xlu0 %v1400
    %v1402 = vpop.xlane.xlu0 %1401
    %v1403 = vsel %vm623, %v1397, 0.0
    %1404 = vadd.xlane.f32.xlu0 %v1403
    %v1405 = vpop.xlane.xlu0 %1404
    %v1406 = vsel %vm623, %v1399, 0.0
    %1407 = vadd.xlane.f32.xlu0 %v1406
    %v1408 = vpop.xlane.xlu0 %1407
    %v1409 = vrcp.pop %v1402
    %v1410 = vrcp.pop %v1405
    %v1411 = vrcp.pop %v1408
    %v1412 = vmul.f32 %v1395, %v1409
    %v1413 = vmul.f32 %v1397, %v1410
    %v1414 = vmul.f32 %v1399, %v1411
    %1415 = vrot.lane.b32.xlu0 %v488, 40
    %v1416 = vpop.permute.xlu0 %1415
    %1417 = vrot.lane.b32.xlu0 %v493, 40
    %v1418 = vpop.permute.xlu0 %1417
    %1419 = vrot.lane.b32.xlu0 %v498, 40
    %v1420 = vpop.permute.xlu0 %1419
    %v1425 = vsel %vm623, %v1412, 0
    %v1428 = vsel %vm623, %v1413, 0
    %v1431 = vsel %vm623, %v1414, 0
    %1433 = vmatprep.subr.mxu0 0.0
    %1434 = vmatpush1.msra.mxu0 %v1416
    %1435 = vmatprep.subr.mxu0 0.0
    %1436 = vmatpush1.msra.mxu0 %v1418
    %1437 = vmatprep.subr.mxu0 0.0
    %1438 = vmatpush1.msra.mxu0 %v1420
    %1439 = vmatprep.subr.mxu0 0.0
    %1440 = vmatpush1.msra.mxu0 0.0
    %1441 = vmatprep.subr.mxu0 0.0
    %1442 = vmatpush1.msra.mxu0 0.0
    %1443 = vmatprep.subr.mxu0 0.0
    %1444 = vmatpush1.msra.mxu0 0.0
    %1445 = vmatprep.subr.mxu0 0.0
    %1446 = vmatpush1.msra.mxu0 0.0
    %1447 = vmatprep.subr.mxu0 0.0
    %1448 = vmatpush1.msra.mxu0 0.0
    %1449 = vmatprep.subr.mxu0 0.0
    %1450 = vmatpush1.msra.mxu0 0.0
    %1451 = vmatprep.subr.mxu0 0.0
    %1452 = vmatpush1.msra.mxu0 0.0
    %1453 = vmatprep.subr.mxu0 0.0
    %1454 = vmatpush1.msra.mxu0 0.0
    %1455 = vmatprep.subr.mxu0 0.0
    %1456 = vmatpush1.msra.mxu0 0.0
    %1457 = vmatprep.subr.mxu0 0.0
    %1458 = vmatpush1.msra.mxu0 0.0
    %1459 = vmatprep.subr.mxu0 0.0
    %1460 = vmatpush1.msra.mxu0 0.0
    %1461 = vmatprep.subr.mxu0 0.0
    %1462 = vmatpush1.msra.mxu0 0.0
    %1463 = vmatprep.subr.mxu0 0.0
    %1464 = vmatpush1.msra.mxu0 0.0
    %1465 = vmatprep.subr.mxu0 0.0
    %1466 = vmatpush1.msra.mxu0 0.0
    %1467 = vmatprep.subr.mxu0 0.0
    %1468 = vmatpush1.msra.mxu0 0.0
    %1469 = vmatprep.subr.mxu0 0.0
    %1470 = vmatpush1.msra.mxu0 0.0
    %1471 = vmatprep.subr.mxu0 0.0
    %1472 = vmatpush1.msra.mxu0 0.0
    %1473 = vmatprep.subr.mxu0 0.0
    %1474 = vmatpush1.msra.mxu0 0.0
    %1475 = vmatprep.subr.mxu0 0.0
    %1476 = vmatpush1.msra.mxu0 0.0
    %1477 = vmatprep.subr.mxu0 0.0
    %1478 = vmatpush1.msra.mxu0 0.0
    %1479 = vmatprep.subr.mxu0 0.0
    %1480 = vmatpush1.msra.mxu0 0.0
    %1481 = vmatprep.subr.mxu0 0.0
    %1482 = vmatpush1.msra.mxu0 0.0
    %1483 = vmatprep.subr.mxu0 0.0
    %1484 = vmatpush1.msra.mxu0 0.0
    %1485 = vmatprep.subr.mxu0 0.0
    %1486 = vmatpush1.msra.mxu0 0.0
    %1487 = vmatprep.subr.mxu0 0.0
    %1488 = vmatpush1.msra.mxu0 0.0
    %1489 = vmatprep.subr.mxu0 0.0
    %1490 = vmatpush1.msra.mxu0 0.0
    %1491 = vmatprep.subr.mxu0 0.0
    %1492 = vmatpush1.msra.mxu0 0.0
    %1493 = vmatprep.subr.mxu0 0.0
    %1494 = vmatpush1.msra.mxu0 0.0
    %1495 = vmatprep.subr.mxu0 0.0
    %1496 = vmatpush1.msra.mxu0 0.0
    %1497 = vmatprep.mubr.f32.mxu0 0.0
    %1498 = vmatmul.mubr.f32.gmra.mrb[0].mxu0 %v1425
    %v1499 = vpop.f32.mrb[0].mxu0
    %v1500 = vadd.f32 0.0, %v1499
    %v1501 = vpop.f32.mrb[0].mxu0
    %1502 = vmatprep.mubr.f32.mxu0 0.0
    %1503 = vmatmul.mubr.f32.gmra.mrb[0].mxu0 %v1428
    %v1504 = vpop.f32.mrb[0].mxu0
    %v1505 = vadd.f32 0.0, %v1504
    %v1506 = vpop.f32.mrb[0].mxu0
    %1507 = vmatprep.mubr.f32.mxu0 0.0
    %1508 = vmatmul.mubr.f32.gmra.mrb[0].mxu0 %v1431
    %v1509 = vpop.f32.mrb[0].mxu0
    %v1510 = vadd.f32 0.0, %v1509
    %v1511 = vpop.f32.mrb[0].mxu0
    %1512 = vdwg.mxu0
    %1516 = vrot.lane.b32.xlu0 %v1500, 24
    %v1517 = vpop.permute.xlu0 %1516
    %1518 = vrot.lane.b32.xlu0 %v1505, 24
    %v1519 = vpop.permute.xlu0 %1518
    %1520 = vrot.lane.b32.xlu0 %v1510, 24
    %v1521 = vpop.permute.xlu0 %1520
    %vm1525 = vcmask 261312
    %1526 = vst.msk [vmem:[#allocation3] sm:$0xff] %vm1525, %v1517
    %1527 = vst.msk [vmem:[#allocation3 + $0x8] sm:$0xff] %vm1525, %v1519
    %1528 = vst.msk [vmem:[#allocation3 + $0x10] sm:$0xff] %vm1525, %v1521
    %1532 = vrot.lane.b32.xlu0 %v503, 96
    %v1533 = vpop.permute.xlu0 %1532
    %1534 = vrot.lane.b32.xlu0 %v508, 96
    %v1535 = vpop.permute.xlu0 %1534
    %1536 = vrot.lane.b32.xlu0 %v513, 96
    %v1537 = vpop.permute.xlu0 %1536
    %v1538 = vsel %vm160, %v503, 0
    %v1540 = vsel %vm160, %v508, 0
    %v1542 = vsel %vm160, %v513, 0
    %v1544 = vsel %vm160, %v1533, 0
    %v1546 = vsel %vm160, %v1535, 0
    %v1548 = vsel %vm160, %v1537, 0
    %1550 = vmatprep.subr.mxu0 0.0
    %1551 = vmatpush1.xpose.msra.mxu0 %v1544
    %1552 = vmatprep.subr.mxu0 0.0
    %1553 = vmatpush1.xpose.msra.mxu0 %v1546
    %1554 = vmatprep.subr.mxu0 0.0
    %1555 = vmatpush1.xpose.msra.mxu0 %v1548
    %1556 = vmatprep.subr.mxu0 0.0
    %1557 = vmatpush1.xpose.msra.mxu0 0.0
    %1558 = vmatprep.subr.mxu0 0.0
    %1559 = vmatpush1.xpose.msra.mxu0 0.0
    %1560 = vmatprep.subr.mxu0 0.0
    %1561 = vmatpush1.xpose.msra.mxu0 0.0
    %1562 = vmatprep.subr.mxu0 0.0
    %1563 = vmatpush1.xpose.msra.mxu0 0.0
    %1564 = vmatprep.subr.mxu0 0.0
    %1565 = vmatpush1.xpose.msra.mxu0 0.0
    %1566 = vmatprep.subr.mxu0 0.0
    %1567 = vmatpush1.xpose.msra.mxu0 0.0
    %1568 = vmatprep.subr.mxu0 0.0
    %1569 = vmatpush1.xpose.msra.mxu0 0.0
    %1570 = vmatprep.subr.mxu0 0.0
    %1571 = vmatpush1.xpose.msra.mxu0 0.0
    %1572 = vmatprep.subr.mxu0 0.0
    %1573 = vmatpush1.xpose.msra.mxu0 0.0
    %1574 = vmatprep.subr.mxu0 0.0
    %1575 = vmatpush1.xpose.msra.mxu0 0.0
    %1576 = vmatprep.subr.mxu0 0.0
    %1577 = vmatpush1.xpose.msra.mxu0 0.0
    %1578 = vmatprep.subr.mxu0 0.0
    %1579 = vmatpush1.xpose.msra.mxu0 0.0
    %1580 = vmatprep.subr.mxu0 0.0
    %1581 = vmatpush1.xpose.msra.mxu0 0.0
    %1582 = vmatprep.subr.mxu0 0.0
    %1583 = vmatpush1.xpose.msra.mxu0 0.0
    %1584 = vmatprep.subr.mxu0 0.0
    %1585 = vmatpush1.xpose.msra.mxu0 0.0
    %1586 = vmatprep.subr.mxu0 0.0
    %1587 = vmatpush1.xpose.msra.mxu0 0.0
    %1588 = vmatprep.subr.mxu0 0.0
    %1589 = vmatpush1.xpose.msra.mxu0 0.0
    %1590 = vmatprep.subr.mxu0 0.0
    %1591 = vmatpush1.xpose.msra.mxu0 0.0
    %1592 = vmatprep.subr.mxu0 0.0
    %1593 = vmatpush1.xpose.msra.mxu0 0.0
    %1594 = vmatprep.subr.mxu0 0.0
    %1595 = vmatpush1.xpose.msra.mxu0 0.0
    %1596 = vmatprep.subr.mxu0 0.0
    %1597 = vmatpush1.xpose.msra.mxu0 0.0
    %1598 = vmatprep.subr.mxu0 0.0
    %1599 = vmatpush1.xpose.msra.mxu0 0.0
    %1600 = vmatprep.subr.mxu0 0.0
    %1601 = vmatpush1.xpose.msra.mxu0 0.0
    %1602 = vmatprep.subr.mxu0 0.0
    %1603 = vmatpush1.xpose.msra.mxu0 0.0
    %1604 = vmatprep.subr.mxu0 0.0
    %1605 = vmatpush1.xpose.msra.mxu0 0.0
    %1606 = vmatprep.subr.mxu0 0.0
    %1607 = vmatpush1.xpose.msra.mxu0 0.0
    %1608 = vmatprep.subr.mxu0 0.0
    %1609 = vmatpush1.xpose.msra.mxu0 0.0
    %1610 = vmatprep.subr.mxu0 0.0
    %1611 = vmatpush1.xpose.msra.mxu0 0.0
    %1612 = vmatprep.subr.mxu0 0.0
    %1613 = vmatpush1.xpose.msra.mxu0 0.0
    %1614 = vmatprep.mubr.f32.mxu0 0.0
    %1615 = vmatmul.mubr.f32.gmra.mrb[0].mxu0 %v1538
    %v1616 = vpop.f32.mrb[0].mxu0
    %v1617 = vadd.f32 0.0, %v1616
    %v1618 = vpop.f32.mrb[0].mxu0
    %1619 = vmatprep.mubr.f32.mxu0 0.0
    %1620 = vmatmul.mubr.f32.gmra.mrb[0].mxu0 %v1540
    %v1621 = vpop.f32.mrb[0].mxu0
    %v1622 = vadd.f32 0.0, %v1621
    %v1623 = vpop.f32.mrb[0].mxu0
    %1624 = vmatprep.mubr.f32.mxu0 0.0
    %1625 = vmatmul.mubr.f32.gmra.mrb[0].mxu0 %v1542
    %v1626 = vpop.f32.mrb[0].mxu0
    %v1627 = vadd.f32 0.0, %v1626
    %v1628 = vpop.f32.mrb[0].mxu0
    %1629 = vdwg.mxu0
    %v1630 = vmul.f32 %v1617, 0.35355338
    %v1631 = vmul.f32 %v1622, 0.35355338
    %v1632 = vmul.f32 %v1627, 0.35355338
    %v1633 = vadd.f32 %v1630, %v143
    %v1634 = vadd.f32 %v1631, %v143
    %v1635 = vadd.f32 %v1632, %v143
    %v1636 = vsel %vm623, %v1633, -inf
    %1637 = vmax.xlane.f32.xlu0 %v1636
    %v1638 = vpop.xlane.xlu0 %1637
    %v1639 = vsel %vm623, %v1634, -inf
    %1640 = vmax.xlane.f32.xlu0 %v1639
    %v1641 = vpop.xlane.xlu0 %1640
    %v1642 = vsel %vm623, %v1635, -inf
    %1643 = vmax.xlane.f32.xlu0 %v1642
    %v1644 = vpop.xlane.xlu0 %1643
    %v1645 = vsub.f32 %v1633, %v1638
    %v1646 = vsub.f32 %v1634, %v1641
    %v1647 = vsub.f32 %v1635, %v1644
    %v1648 = vmul.f32 %v1645, 1.442695
    %v1649 = vpow.pop %v1648
    %v1650 = vmul.f32 %v1646, 1.442695
    %v1651 = vpow.pop %v1650
    %v1652 = vmul.f32 %v1647, 1.442695
    %v1653 = vpow.pop %v1652
    %v1654 = vsel %vm623, %v1649, 0.0
    %1655 = vadd.xlane.f32.xlu0 %v1654
    %v1656 = vpop.xlane.xlu0 %1655
    %v1657 = vsel %vm623, %v1651, 0.0
    %1658 = vadd.xlane.f32.xlu0 %v1657
    %v1659 = vpop.xlane.xlu0 %1658
    %v1660 = vsel %vm623, %v1653, 0.0
    %1661 = vadd.xlane.f32.xlu0 %v1660
    %v1662 = vpop.xlane.xlu0 %1661
    %v1663 = vrcp.pop %v1656
    %v1664 = vrcp.pop %v1659
    %v1665 = vrcp.pop %v1662
    %v1666 = vmul.f32 %v1649, %v1663
    %v1667 = vmul.f32 %v1651, %v1664
    %v1668 = vmul.f32 %v1653, %v1665
    %1669 = vrot.lane.b32.xlu0 %v503, 64
    %v1670 = vpop.permute.xlu0 %1669
    %1671 = vrot.lane.b32.xlu0 %v508, 64
    %v1672 = vpop.permute.xlu0 %1671
    %1673 = vrot.lane.b32.xlu0 %v513, 64
    %v1674 = vpop.permute.xlu0 %1673
    %v1679 = vsel %vm623, %v1666, 0
    %v1682 = vsel %vm623, %v1667, 0
    %v1685 = vsel %vm623, %v1668, 0
    %1687 = vmatprep.subr.mxu0 0.0
    %1688 = vmatpush1.msra.mxu0 %v1670
    %1689 = vmatprep.subr.mxu0 0.0
    %1690 = vmatpush1.msra.mxu0 %v1672
    %1691 = vmatprep.subr.mxu0 0.0
    %1692 = vmatpush1.msra.mxu0 %v1674
    %1693 = vmatprep.subr.mxu0 0.0
    %1694 = vmatpush1.msra.mxu0 0.0
    %1695 = vmatprep.subr.mxu0 0.0
    %1696 = vmatpush1.msra.mxu0 0.0
    %1697 = vmatprep.subr.mxu0 0.0
    %1698 = vmatpush1.msra.mxu0 0.0
    %1699 = vmatprep.subr.mxu0 0.0
    %1700 = vmatpush1.msra.mxu0 0.0
    %1701 = vmatprep.subr.mxu0 0.0
    %1702 = vmatpush1.msra.mxu0 0.0
    %1703 = vmatprep.subr.mxu0 0.0
    %1704 = vmatpush1.msra.mxu0 0.0
    %1705 = vmatprep.subr.mxu0 0.0
    %1706 = vmatpush1.msra.mxu0 0.0
    %1707 = vmatprep.subr.mxu0 0.0
    %1708 = vmatpush1.msra.mxu0 0.0
    %1709 = vmatprep.subr.mxu0 0.0
    %1710 = vmatpush1.msra.mxu0 0.0
    %1711 = vmatprep.subr.mxu0 0.0
    %1712 = vmatpush1.msra.mxu0 0.0
    %1713 = vmatprep.subr.mxu0 0.0
    %1714 = vmatpush1.msra.mxu0 0.0
    %1715 = vmatprep.subr.mxu0 0.0
    %1716 = vmatpush1.msra.mxu0 0.0
    %1717 = vmatprep.subr.mxu0 0.0
    %1718 = vmatpush1.msra.mxu0 0.0
    %1719 = vmatprep.subr.mxu0 0.0
    %1720 = vmatpush1.msra.mxu0 0.0
    %1721 = vmatprep.subr.mxu0 0.0
    %1722 = vmatpush1.msra.mxu0 0.0
    %1723 = vmatprep.subr.mxu0 0.0
    %1724 = vmatpush1.msra.mxu0 0.0
    %1725 = vmatprep.subr.mxu0 0.0
    %1726 = vmatpush1.msra.mxu0 0.0
    %1727 = vmatprep.subr.mxu0 0.0
    %1728 = vmatpush1.msra.mxu0 0.0
    %1729 = vmatprep.subr.mxu0 0.0
    %1730 = vmatpush1.msra.mxu0 0.0
    %1731 = vmatprep.subr.mxu0 0.0
    %1732 = vmatpush1.msra.mxu0 0.0
    %1733 = vmatprep.subr.mxu0 0.0
    %1734 = vmatpush1.msra.mxu0 0.0
    %1735 = vmatprep.subr.mxu0 0.0
    %1736 = vmatpush1.msra.mxu0 0.0
    %1737 = vmatprep.subr.mxu0 0.0
    %1738 = vmatpush1.msra.mxu0 0.0
    %1739 = vmatprep.subr.mxu0 0.0
    %1740 = vmatpush1.msra.mxu0 0.0
    %1741 = vmatprep.subr.mxu0 0.0
    %1742 = vmatpush1.msra.mxu0 0.0
    %1743 = vmatprep.subr.mxu0 0.0
    %1744 = vmatpush1.msra.mxu0 0.0
    %1745 = vmatprep.subr.mxu0 0.0
    %1746 = vmatpush1.msra.mxu0 0.0
    %1747 = vmatprep.subr.mxu0 0.0
    %1748 = vmatpush1.msra.mxu0 0.0
    %1749 = vmatprep.subr.mxu0 0.0
    %1750 = vmatpush1.msra.mxu0 0.0
    %1751 = vmatprep.mubr.f32.mxu0 0.0
    %1752 = vmatmul.mubr.f32.gmra.mrb[0].mxu0 %v1679
    %v1753 = vpop.f32.mrb[0].mxu0
    %v1754 = vadd.f32 0.0, %v1753
    %v1755 = vpop.f32.mrb[0].mxu0
    %1756 = vmatprep.mubr.f32.mxu0 0.0
    %1757 = vmatmul.mubr.f32.gmra.mrb[0].mxu0 %v1682
    %v1758 = vpop.f32.mrb[0].mxu0
    %v1759 = vadd.f32 0.0, %v1758
    %v1760 = vpop.f32.mrb[0].mxu0
    %1761 = vmatprep.mubr.f32.mxu0 0.0
    %1762 = vmatmul.mubr.f32.gmra.mrb[0].mxu0 %v1685
    %v1763 = vpop.f32.mrb[0].mxu0
    %v1764 = vadd.f32 0.0, %v1763
    %v1765 = vpop.f32.mrb[0].mxu0
    %1766 = vdwg.mxu0
    %1767 = vst.msk [vmem:[#allocation3 + $0x18] sm:$0xff] %vm160, %v1754
    %1768 = vst.msk [vmem:[#allocation3 + $0x20] sm:$0xff] %vm160, %v1759
    %1769 = vst.msk [vmem:[#allocation3 + $0x28] sm:$0xff] %vm160, %v1764
    %1770 = vrot.lane.b32.xlu0 %v503, 120
    %v1771 = vpop.permute.xlu0 %1770
    %1772 = vrot.lane.b32.xlu0 %v508, 120
    %v1773 = vpop.permute.xlu0 %1772
    %1774 = vrot.lane.b32.xlu0 %v513, 120
    %v1775 = vpop.permute.xlu0 %1774
    %1776 = vrot.lane.b32.xlu0 %v503, 88
    %v1777 = vpop.permute.xlu0 %1776
    %1778 = vrot.lane.b32.xlu0 %v508, 88
    %v1779 = vpop.permute.xlu0 %1778
    %1780 = vrot.lane.b32.xlu0 %v513, 88
    %v1781 = vpop.permute.xlu0 %1780
    %v1782 = vsel %vm160, %v1771, 0
    %v1784 = vsel %vm160, %v1773, 0
    %v1786 = vsel %vm160, %v1775, 0
    %v1788 = vsel %vm160, %v1777, 0
    %v1790 = vsel %vm160, %v1779, 0
    %v1792 = vsel %vm160, %v1781, 0
    %1794 = vmatprep.subr.mxu0 0.0
    %1795 = vmatpush1.xpose.msra.mxu0 %v1788
    %1796 = vmatprep.subr.mxu0 0.0
    %1797 = vmatpush1.xpose.msra.mxu0 %v1790
    %1798 = vmatprep.subr.mxu0 0.0
    %1799 = vmatpush1.xpose.msra.mxu0 %v1792
    %1800 = vmatprep.subr.mxu0 0.0
    %1801 = vmatpush1.xpose.msra.mxu0 0.0
    %1802 = vmatprep.subr.mxu0 0.0
    %1803 = vmatpush1.xpose.msra.mxu0 0.0
    %1804 = vmatprep.subr.mxu0 0.0
    %1805 = vmatpush1.xpose.msra.mxu0 0.0
    %1806 = vmatprep.subr.mxu0 0.0
    %1807 = vmatpush1.xpose.msra.mxu0 0.0
    %1808 = vmatprep.subr.mxu0 0.0
    %1809 = vmatpush1.xpose.msra.mxu0 0.0
    %1810 = vmatprep.subr.mxu0 0.0
    %1811 = vmatpush1.xpose.msra.mxu0 0.0
    %1812 = vmatprep.subr.mxu0 0.0
    %1813 = vmatpush1.xpose.msra.mxu0 0.0
    %1814 = vmatprep.subr.mxu0 0.0
    %1815 = vmatpush1.xpose.msra.mxu0 0.0
    %1816 = vmatprep.subr.mxu0 0.0
    %1817 = vmatpush1.xpose.msra.mxu0 0.0
    %1818 = vmatprep.subr.mxu0 0.0
    %1819 = vmatpush1.xpose.msra.mxu0 0.0
    %1820 = vmatprep.subr.mxu0 0.0
    %1821 = vmatpush1.xpose.msra.mxu0 0.0
    %1822 = vmatprep.subr.mxu0 0.0
    %1823 = vmatpush1.xpose.msra.mxu0 0.0
    %1824 = vmatprep.subr.mxu0 0.0
    %1825 = vmatpush1.xpose.msra.mxu0 0.0
    %1826 = vmatprep.subr.mxu0 0.0
    %1827 = vmatpush1.xpose.msra.mxu0 0.0
    %1828 = vmatprep.subr.mxu0 0.0
    %1829 = vmatpush1.xpose.msra.mxu0 0.0
    %1830 = vmatprep.subr.mxu0 0.0
    %1831 = vmatpush1.xpose.msra.mxu0 0.0
    %1832 = vmatprep.subr.mxu0 0.0
    %1833 = vmatpush1.xpose.msra.mxu0 0.0
    %1834 = vmatprep.subr.mxu0 0.0
    %1835 = vmatpush1.xpose.msra.mxu0 0.0
    %1836 = vmatprep.subr.mxu0 0.0
    %1837 = vmatpush1.xpose.msra.mxu0 0.0
    %1838 = vmatprep.subr.mxu0 0.0
    %1839 = vmatpush1.xpose.msra.mxu0 0.0
    %1840 = vmatprep.subr.mxu0 0.0
    %1841 = vmatpush1.xpose.msra.mxu0 0.0
    %1842 = vmatprep.subr.mxu0 0.0
    %1843 = vmatpush1.xpose.msra.mxu0 0.0
    %1844 = vmatprep.subr.mxu0 0.0
    %1845 = vmatpush1.xpose.msra.mxu0 0.0
    %1846 = vmatprep.subr.mxu0 0.0
    %1847 = vmatpush1.xpose.msra.mxu0 0.0
    %1848 = vmatprep.subr.mxu0 0.0
    %1849 = vmatpush1.xpose.msra.mxu0 0.0
    %1850 = vmatprep.subr.mxu0 0.0
    %1851 = vmatpush1.xpose.msra.mxu0 0.0
    %1852 = vmatprep.subr.mxu0 0.0
    %1853 = vmatpush1.xpose.msra.mxu0 0.0
    %1854 = vmatprep.subr.mxu0 0.0
    %1855 = vmatpush1.xpose.msra.mxu0 0.0
    %1856 = vmatprep.subr.mxu0 0.0
    %1857 = vmatpush1.xpose.msra.mxu0 0.0
    %1858 = vmatprep.mubr.f32.mxu0 0.0
    %1859 = vmatmul.mubr.f32.gmra.mrb[0].mxu0 %v1782
    %v1860 = vpop.f32.mrb[0].mxu0
    %v1861 = vadd.f32 0.0, %v1860
    %v1862 = vpop.f32.mrb[0].mxu0
    %1863 = vmatprep.mubr.f32.mxu0 0.0
    %1864 = vmatmul.mubr.f32.gmra.mrb[0].mxu0 %v1784
    %v1865 = vpop.f32.mrb[0].mxu0
    %v1866 = vadd.f32 0.0, %v1865
    %v1867 = vpop.f32.mrb[0].mxu0
    %1868 = vmatprep.mubr.f32.mxu0 0.0
    %1869 = vmatmul.mubr.f32.gmra.mrb[0].mxu0 %v1786
    %v1870 = vpop.f32.mrb[0].mxu0
    %v1871 = vadd.f32 0.0, %v1870
    %v1872 = vpop.f32.mrb[0].mxu0
    %1873 = vdwg.mxu0
    %v1874 = vmul.f32 %v1861, 0.35355338
    %v1875 = vmul.f32 %v1866, 0.35355338
    %v1876 = vmul.f32 %v1871, 0.35355338
    %v1877 = vadd.f32 %v1874, %v143
    %v1878 = vadd.f32 %v1875, %v143
    %v1879 = vadd.f32 %v1876, %v143
    %v1880 = vsel %vm623, %v1877, -inf
    %1881 = vmax.xlane.f32.xlu0 %v1880
    %v1882 = vpop.xlane.xlu0 %1881
    %v1883 = vsel %vm623, %v1878, -inf
    %1884 = vmax.xlane.f32.xlu0 %v1883
    %v1885 = vpop.xlane.xlu0 %1884
    %v1886 = vsel %vm623, %v1879, -inf
    %1887 = vmax.xlane.f32.xlu0 %v1886
    %v1888 = vpop.xlane.xlu0 %1887
    %v1889 = vsub.f32 %v1877, %v1882
    %v1890 = vsub.f32 %v1878, %v1885
    %v1891 = vsub.f32 %v1879, %v1888
    %v1892 = vmul.f32 %v1889, 1.442695
    %v1893 = vpow.pop %v1892
    %v1894 = vmul.f32 %v1890, 1.442695
    %v1895 = vpow.pop %v1894
    %v1896 = vmul.f32 %v1891, 1.442695
    %v1897 = vpow.pop %v1896
    %v1898 = vsel %vm623, %v1893, 0.0
    %1899 = vadd.xlane.f32.xlu0 %v1898
    %v1900 = vpop.xlane.xlu0 %1899
    %v1901 = vsel %vm623, %v1895, 0.0
    %1902 = vadd.xlane.f32.xlu0 %v1901
    %v1903 = vpop.xlane.xlu0 %1902
    %v1904 = vsel %vm623, %v1897, 0.0
    %1905 = vadd.xlane.f32.xlu0 %v1904
    %v1906 = vpop.xlane.xlu0 %1905
    %v1907 = vrcp.pop %v1900
    %v1908 = vrcp.pop %v1903
    %v1909 = vrcp.pop %v1906
    %v1910 = vmul.f32 %v1893, %v1907
    %v1911 = vmul.f32 %v1895, %v1908
    %v1912 = vmul.f32 %v1897, %v1909
    %1913 = vrot.lane.b32.xlu0 %v503, 56
    %v1914 = vpop.permute.xlu0 %1913
    %1915 = vrot.lane.b32.xlu0 %v508, 56
    %v1916 = vpop.permute.xlu0 %1915
    %1917 = vrot.lane.b32.xlu0 %v513, 56
    %v1918 = vpop.permute.xlu0 %1917
    %v1923 = vsel %vm623, %v1910, 0
    %v1926 = vsel %vm623, %v1911, 0
    %v1929 = vsel %vm623, %v1912, 0
    %1931 = vmatprep.subr.mxu0 0.0
    %1932 = vmatpush1.msra.mxu0 %v1914
    %1933 = vmatprep.subr.mxu0 0.0
    %1934 = vmatpush1.msra.mxu0 %v1916
    %1935 = vmatprep.subr.mxu0 0.0
    %1936 = vmatpush1.msra.mxu0 %v1918
    %1937 = vmatprep.subr.mxu0 0.0
    %1938 = vmatpush1.msra.mxu0 0.0
    %1939 = vmatprep.subr.mxu0 0.0
    %1940 = vmatpush1.msra.mxu0 0.0
    %1941 = vmatprep.subr.mxu0 0.0
    %1942 = vmatpush1.msra.mxu0 0.0
    %1943 = vmatprep.subr.mxu0 0.0
    %1944 = vmatpush1.msra.mxu0 0.0
    %1945 = vmatprep.subr.mxu0 0.0
    %1946 = vmatpush1.msra.mxu0 0.0
    %1947 = vmatprep.subr.mxu0 0.0
    %1948 = vmatpush1.msra.mxu0 0.0
    %1949 = vmatprep.subr.mxu0 0.0
    %1950 = vmatpush1.msra.mxu0 0.0
    %1951 = vmatprep.subr.mxu0 0.0
    %1952 = vmatpush1.msra.mxu0 0.0
    %1953 = vmatprep.subr.mxu0 0.0
    %1954 = vmatpush1.msra.mxu0 0.0
    %1955 = vmatprep.subr.mxu0 0.0
    %1956 = vmatpush1.msra.mxu0 0.0
    %1957 = vmatprep.subr.mxu0 0.0
    %1958 = vmatpush1.msra.mxu0 0.0
    %1959 = vmatprep.subr.mxu0 0.0
    %1960 = vmatpush1.msra.mxu0 0.0
    %1961 = vmatprep.subr.mxu0 0.0
    %1962 = vmatpush1.msra.mxu0 0.0
    %1963 = vmatprep.subr.mxu0 0.0
    %1964 = vmatpush1.msra.mxu0 0.0
    %1965 = vmatprep.subr.mxu0 0.0
    %1966 = vmatpush1.msra.mxu0 0.0
    %1967 = vmatprep.subr.mxu0 0.0
    %1968 = vmatpush1.msra.mxu0 0.0
    %1969 = vmatprep.subr.mxu0 0.0
    %1970 = vmatpush1.msra.mxu0 0.0
    %1971 = vmatprep.subr.mxu0 0.0
    %1972 = vmatpush1.msra.mxu0 0.0
    %1973 = vmatprep.subr.mxu0 0.0
    %1974 = vmatpush1.msra.mxu0 0.0
    %1975 = vmatprep.subr.mxu0 0.0
    %1976 = vmatpush1.msra.mxu0 0.0
    %1977 = vmatprep.subr.mxu0 0.0
    %1978 = vmatpush1.msra.mxu0 0.0
    %1979 = vmatprep.subr.mxu0 0.0
    %1980 = vmatpush1.msra.mxu0 0.0
    %1981 = vmatprep.subr.mxu0 0.0
    %1982 = vmatpush1.msra.mxu0 0.0
    %1983 = vmatprep.subr.mxu0 0.0
    %1984 = vmatpush1.msra.mxu0 0.0
    %1985 = vmatprep.subr.mxu0 0.0
    %1986 = vmatpush1.msra.mxu0 0.0
    %1987 = vmatprep.subr.mxu0 0.0
    %1988 = vmatpush1.msra.mxu0 0.0
    %1989 = vmatprep.subr.mxu0 0.0
    %1990 = vmatpush1.msra.mxu0 0.0
    %1991 = vmatprep.subr.mxu0 0.0
    %1992 = vmatpush1.msra.mxu0 0.0
    %1993 = vmatprep.subr.mxu0 0.0
    %1994 = vmatpush1.msra.mxu0 0.0
    %1995 = vmatprep.mubr.f32.mxu0 0.0
    %1996 = vmatmul.mubr.f32.gmra.mrb[0].mxu0 %v1923
    %v1997 = vpop.f32.mrb[0].mxu0
    %v1998 = vadd.f32 0.0, %v1997
    %v1999 = vpop.f32.mrb[0].mxu0
    %2000 = vmatprep.mubr.f32.mxu0 0.0
    %2001 = vmatmul.mubr.f32.gmra.mrb[0].mxu0 %v1926
    %v2002 = vpop.f32.mrb[0].mxu0
    %v2003 = vadd.f32 0.0, %v2002
    %v2004 = vpop.f32.mrb[0].mxu0
    %2005 = vmatprep.mubr.f32.mxu0 0.0
    %2006 = vmatmul.mubr.f32.gmra.mrb[0].mxu0 %v1929
    %v2007 = vpop.f32.mrb[0].mxu0
    %v2008 = vadd.f32 0.0, %v2007
    %v2009 = vpop.f32.mrb[0].mxu0
    %2010 = vdwg.mxu0
    %2014 = vrot.lane.b32.xlu0 %v1998, 8
    %v2015 = vpop.permute.xlu0 %2014
    %2016 = vrot.lane.b32.xlu0 %v2003, 8
    %v2017 = vpop.permute.xlu0 %2016
    %2018 = vrot.lane.b32.xlu0 %v2008, 8
    %v2019 = vpop.permute.xlu0 %2018
    %2023 = vst.msk [vmem:[#allocation3 + $0x18] sm:$0xff] %vm1011, %v2015
    %2024 = vst.msk [vmem:[#allocation3 + $0x20] sm:$0xff] %vm1011, %v2017
    %2025 = vst.msk [vmem:[#allocation3 + $0x28] sm:$0xff] %vm1011, %v2019
    %2026 = vrot.lane.b32.xlu0 %v503, 112
    %v2027 = vpop.permute.xlu0 %2026
    %2028 = vrot.lane.b32.xlu0 %v508, 112
    %v2029 = vpop.permute.xlu0 %2028
    %2030 = vrot.lane.b32.xlu0 %v513, 112
    %v2031 = vpop.permute.xlu0 %2030
    %2032 = vrot.lane.b32.xlu0 %v503, 80
    %v2033 = vpop.permute.xlu0 %2032
    %2034 = vrot.lane.b32.xlu0 %v508, 80
    %v2035 = vpop.permute.xlu0 %2034
    %2036 = vrot.lane.b32.xlu0 %v513, 80
    %v2037 = vpop.permute.xlu0 %2036
    %v2038 = vsel %vm160, %v2027, 0
    %v2040 = vsel %vm160, %v2029, 0
    %v2042 = vsel %vm160, %v2031, 0
    %v2044 = vsel %vm160, %v2033, 0
    %v2046 = vsel %vm160, %v2035, 0
    %v2048 = vsel %vm160, %v2037, 0
    %2050 = vmatprep.subr.mxu0 0.0
    %2051 = vmatpush1.xpose.msra.mxu0 %v2044
    %2052 = vmatprep.subr.mxu0 0.0
    %2053 = vmatpush1.xpose.msra.mxu0 %v2046
    %2054 = vmatprep.subr.mxu0 0.0
    %2055 = vmatpush1.xpose.msra.mxu0 %v2048
    %2056 = vmatprep.subr.mxu0 0.0
    %2057 = vmatpush1.xpose.msra.mxu0 0.0
    %2058 = vmatprep.subr.mxu0 0.0
    %2059 = vmatpush1.xpose.msra.mxu0 0.0
    %2060 = vmatprep.subr.mxu0 0.0
    %2061 = vmatpush1.xpose.msra.mxu0 0.0
    %2062 = vmatprep.subr.mxu0 0.0
    %2063 = vmatpush1.xpose.msra.mxu0 0.0
    %2064 = vmatprep.subr.mxu0 0.0
    %2065 = vmatpush1.xpose.msra.mxu0 0.0
    %2066 = vmatprep.subr.mxu0 0.0
    %2067 = vmatpush1.xpose.msra.mxu0 0.0
    %2068 = vmatprep.subr.mxu0 0.0
    %2069 = vmatpush1.xpose.msra.mxu0 0.0
    %2070 = vmatprep.subr.mxu0 0.0
    %2071 = vmatpush1.xpose.msra.mxu0 0.0
    %2072 = vmatprep.subr.mxu0 0.0
    %2073 = vmatpush1.xpose.msra.mxu0 0.0
    %2074 = vmatprep.subr.mxu0 0.0
    %2075 = vmatpush1.xpose.msra.mxu0 0.0
    %2076 = vmatprep.subr.mxu0 0.0
    %2077 = vmatpush1.xpose.msra.mxu0 0.0
    %2078 = vmatprep.subr.mxu0 0.0
    %2079 = vmatpush1.xpose.msra.mxu0 0.0
    %2080 = vmatprep.subr.mxu0 0.0
    %2081 = vmatpush1.xpose.msra.mxu0 0.0
    %2082 = vmatprep.subr.mxu0 0.0
    %2083 = vmatpush1.xpose.msra.mxu0 0.0
    %2084 = vmatprep.subr.mxu0 0.0
    %2085 = vmatpush1.xpose.msra.mxu0 0.0
    %2086 = vmatprep.subr.mxu0 0.0
    %2087 = vmatpush1.xpose.msra.mxu0 0.0
    %2088 = vmatprep.subr.mxu0 0.0
    %2089 = vmatpush1.xpose.msra.mxu0 0.0
    %2090 = vmatprep.subr.mxu0 0.0
    %2091 = vmatpush1.xpose.msra.mxu0 0.0
    %2092 = vmatprep.subr.mxu0 0.0
    %2093 = vmatpush1.xpose.msra.mxu0 0.0
    %2094 = vmatprep.subr.mxu0 0.0
    %2095 = vmatpush1.xpose.msra.mxu0 0.0
    %2096 = vmatprep.subr.mxu0 0.0
    %2097 = vmatpush1.xpose.msra.mxu0 0.0
    %2098 = vmatprep.subr.mxu0 0.0
    %2099 = vmatpush1.xpose.msra.mxu0 0.0
    %2100 = vmatprep.subr.mxu0 0.0
    %2101 = vmatpush1.xpose.msra.mxu0 0.0
    %2102 = vmatprep.subr.mxu0 0.0
    %2103 = vmatpush1.xpose.msra.mxu0 0.0
    %2104 = vmatprep.subr.mxu0 0.0
    %2105 = vmatpush1.xpose.msra.mxu0 0.0
    %2106 = vmatprep.subr.mxu0 0.0
    %2107 = vmatpush1.xpose.msra.mxu0 0.0
    %2108 = vmatprep.subr.mxu0 0.0
    %2109 = vmatpush1.xpose.msra.mxu0 0.0
    %2110 = vmatprep.subr.mxu0 0.0
    %2111 = vmatpush1.xpose.msra.mxu0 0.0
    %2112 = vmatprep.subr.mxu0 0.0
    %2113 = vmatpush1.xpose.msra.mxu0 0.0
    %2114 = vmatprep.mubr.f32.mxu0 0.0
    %2115 = vmatmul.mubr.f32.gmra.mrb[0].mxu0 %v2038
    %v2116 = vpop.f32.mrb[0].mxu0
    %v2117 = vadd.f32 0.0, %v2116
    %v2118 = vpop.f32.mrb[0].mxu0
    %2119 = vmatprep.mubr.f32.mxu0 0.0
    %2120 = vmatmul.mubr.f32.gmra.mrb[0].mxu0 %v2040
    %v2121 = vpop.f32.mrb[0].mxu0
    %v2122 = vadd.f32 0.0, %v2121
    %v2123 = vpop.f32.mrb[0].mxu0
    %2124 = vmatprep.mubr.f32.mxu0 0.0
    %2125 = vmatmul.mubr.f32.gmra.mrb[0].mxu0 %v2042
    %v2126 = vpop.f32.mrb[0].mxu0
    %v2127 = vadd.f32 0.0, %v2126
    %v2128 = vpop.f32.mrb[0].mxu0
    %2129 = vdwg.mxu0
    %v2130 = vmul.f32 %v2117, 0.35355338
    %v2131 = vmul.f32 %v2122, 0.35355338
    %v2132 = vmul.f32 %v2127, 0.35355338
    %v2133 = vadd.f32 %v2130, %v143
    %v2134 = vadd.f32 %v2131, %v143
    %v2135 = vadd.f32 %v2132, %v143
    %v2136 = vsel %vm623, %v2133, -inf
    %2137 = vmax.xlane.f32.xlu0 %v2136
    %v2138 = vpop.xlane.xlu0 %2137
    %v2139 = vsel %vm623, %v2134, -inf
    %2140 = vmax.xlane.f32.xlu0 %v2139
    %v2141 = vpop.xlane.xlu0 %2140
    %v2142 = vsel %vm623, %v2135, -inf
    %2143 = vmax.xlane.f32.xlu0 %v2142
    %v2144 = vpop.xlane.xlu0 %2143
    %v2145 = vsub.f32 %v2133, %v2138
    %v2146 = vsub.f32 %v2134, %v2141
    %v2147 = vsub.f32 %v2135, %v2144
    %v2148 = vmul.f32 %v2145, 1.442695
    %v2149 = vpow.pop %v2148
    %v2150 = vmul.f32 %v2146, 1.442695
    %v2151 = vpow.pop %v2150
    %v2152 = vmul.f32 %v2147, 1.442695
    %v2153 = vpow.pop %v2152
    %v2154 = vsel %vm623, %v2149, 0.0
    %2155 = vadd.xlane.f32.xlu0 %v2154
    %v2156 = vpop.xlane.xlu0 %2155
    %v2157 = vsel %vm623, %v2151, 0.0
    %2158 = vadd.xlane.f32.xlu0 %v2157
    %v2159 = vpop.xlane.xlu0 %2158
    %v2160 = vsel %vm623, %v2153, 0.0
    %2161 = vadd.xlane.f32.xlu0 %v2160
    %v2162 = vpop.xlane.xlu0 %2161
    %v2163 = vrcp.pop %v2156
    %v2164 = vrcp.pop %v2159
    %v2165 = vrcp.pop %v2162
    %v2166 = vmul.f32 %v2149, %v2163
    %v2167 = vmul.f32 %v2151, %v2164
    %v2168 = vmul.f32 %v2153, %v2165
    %2169 = vrot.lane.b32.xlu0 %v503, 48
    %v2170 = vpop.permute.xlu0 %2169
    %2171 = vrot.lane.b32.xlu0 %v508, 48
    %v2172 = vpop.permute.xlu0 %2171
    %2173 = vrot.lane.b32.xlu0 %v513, 48
    %v2174 = vpop.permute.xlu0 %2173
    %v2179 = vsel %vm623, %v2166, 0
    %v2182 = vsel %vm623, %v2167, 0
    %v2185 = vsel %vm623, %v2168, 0
    %2187 = vmatprep.subr.mxu0 0.0
    %2188 = vmatpush1.msra.mxu0 %v2170
    %2189 = vmatprep.subr.mxu0 0.0
    %2190 = vmatpush1.msra.mxu0 %v2172
    %2191 = vmatprep.subr.mxu0 0.0
    %2192 = vmatpush1.msra.mxu0 %v2174
    %2193 = vmatprep.subr.mxu0 0.0
    %2194 = vmatpush1.msra.mxu0 0.0
    %2195 = vmatprep.subr.mxu0 0.0
    %2196 = vmatpush1.msra.mxu0 0.0
    %2197 = vmatprep.subr.mxu0 0.0
    %2198 = vmatpush1.msra.mxu0 0.0
    %2199 = vmatprep.subr.mxu0 0.0
    %2200 = vmatpush1.msra.mxu0 0.0
    %2201 = vmatprep.subr.mxu0 0.0
    %2202 = vmatpush1.msra.mxu0 0.0
    %2203 = vmatprep.subr.mxu0 0.0
    %2204 = vmatpush1.msra.mxu0 0.0
    %2205 = vmatprep.subr.mxu0 0.0
    %2206 = vmatpush1.msra.mxu0 0.0
    %2207 = vmatprep.subr.mxu0 0.0
    %2208 = vmatpush1.msra.mxu0 0.0
    %2209 = vmatprep.subr.mxu0 0.0
    %2210 = vmatpush1.msra.mxu0 0.0
    %2211 = vmatprep.subr.mxu0 0.0
    %2212 = vmatpush1.msra.mxu0 0.0
    %2213 = vmatprep.subr.mxu0 0.0
    %2214 = vmatpush1.msra.mxu0 0.0
    %2215 = vmatprep.subr.mxu0 0.0
    %2216 = vmatpush1.msra.mxu0 0.0
    %2217 = vmatprep.subr.mxu0 0.0
    %2218 = vmatpush1.msra.mxu0 0.0
    %2219 = vmatprep.subr.mxu0 0.0
    %2220 = vmatpush1.msra.mxu0 0.0
    %2221 = vmatprep.subr.mxu0 0.0
    %2222 = vmatpush1.msra.mxu0 0.0
    %2223 = vmatprep.subr.mxu0 0.0
    %2224 = vmatpush1.msra.mxu0 0.0
    %2225 = vmatprep.subr.mxu0 0.0
    %2226 = vmatpush1.msra.mxu0 0.0
    %2227 = vmatprep.subr.mxu0 0.0
    %2228 = vmatpush1.msra.mxu0 0.0
    %2229 = vmatprep.subr.mxu0 0.0
    %2230 = vmatpush1.msra.mxu0 0.0
    %2231 = vmatprep.subr.mxu0 0.0
    %2232 = vmatpush1.msra.mxu0 0.0
    %2233 = vmatprep.subr.mxu0 0.0
    %2234 = vmatpush1.msra.mxu0 0.0
    %2235 = vmatprep.subr.mxu0 0.0
    %2236 = vmatpush1.msra.mxu0 0.0
    %2237 = vmatprep.subr.mxu0 0.0
    %2238 = vmatpush1.msra.mxu0 0.0
    %2239 = vmatprep.subr.mxu0 0.0
    %2240 = vmatpush1.msra.mxu0 0.0
    %2241 = vmatprep.subr.mxu0 0.0
    %2242 = vmatpush1.msra.mxu0 0.0
    %2243 = vmatprep.subr.mxu0 0.0
    %2244 = vmatpush1.msra.mxu0 0.0
    %2245 = vmatprep.subr.mxu0 0.0
    %2246 = vmatpush1.msra.mxu0 0.0
    %2247 = vmatprep.subr.mxu0 0.0
    %2248 = vmatpush1.msra.mxu0 0.0
    %2249 = vmatprep.subr.mxu0 0.0
    %2250 = vmatpush1.msra.mxu0 0.0
    %2251 = vmatprep.mubr.f32.mxu0 0.0
    %2252 = vmatmul.mubr.f32.gmra.mrb[0].mxu0 %v2179
    %v2253 = vpop.f32.mrb[0].mxu0
    %v2254 = vadd.f32 0.0, %v2253
    %v2255 = vpop.f32.mrb[0].mxu0
    %2256 = vmatprep.mubr.f32.mxu0 0.0
    %2257 = vmatmul.mubr.f32.gmra.mrb[0].mxu0 %v2182
    %v2258 = vpop.f32.mrb[0].mxu0
    %v2259 = vadd.f32 0.0, %v2258
    %v2260 = vpop.f32.mrb[0].mxu0
    %2261 = vmatprep.mubr.f32.mxu0 0.0
    %2262 = vmatmul.mubr.f32.gmra.mrb[0].mxu0 %v2185
    %v2263 = vpop.f32.mrb[0].mxu0
    %v2264 = vadd.f32 0.0, %v2263
    %v2265 = vpop.f32.mrb[0].mxu0
    %2266 = vdwg.mxu0
    %2270 = vrot.lane.b32.xlu0 %v2254, 16
    %v2271 = vpop.permute.xlu0 %2270
    %2272 = vrot.lane.b32.xlu0 %v2259, 16
    %v2273 = vpop.permute.xlu0 %2272
    %2274 = vrot.lane.b32.xlu0 %v2264, 16
    %v2275 = vpop.permute.xlu0 %2274
    %2279 = vst.msk [vmem:[#allocation3 + $0x18] sm:$0xff] %vm1268, %v2271
    %2280 = vst.msk [vmem:[#allocation3 + $0x20] sm:$0xff] %vm1268, %v2273
    %2281 = vst.msk [vmem:[#allocation3 + $0x28] sm:$0xff] %vm1268, %v2275
    %2282 = vrot.lane.b32.xlu0 %v503, 104
    %v2283 = vpop.permute.xlu0 %2282
    %2284 = vrot.lane.b32.xlu0 %v508, 104
    %v2285 = vpop.permute.xlu0 %2284
    %2286 = vrot.lane.b32.xlu0 %v513, 104
    %v2287 = vpop.permute.xlu0 %2286
    %2288 = vrot.lane.b32.xlu0 %v503, 72
    %v2289 = vpop.permute.xlu0 %2288
    %2290 = vrot.lane.b32.xlu0 %v508, 72
    %v2291 = vpop.permute.xlu0 %2290
    %2292 = vrot.lane.b32.xlu0 %v513, 72
    %v2293 = vpop.permute.xlu0 %2292
    %v2294 = vsel %vm160, %v2283, 0
    %v2296 = vsel %vm160, %v2285, 0
    %v2298 = vsel %vm160, %v2287, 0
    %v2300 = vsel %vm160, %v2289, 0
    %v2302 = vsel %vm160, %v2291, 0
    %v2304 = vsel %vm160, %v2293, 0
    %2306 = vmatprep.subr.mxu0 0.0
    %2307 = vmatpush1.xpose.msra.mxu0 %v2300
    %2308 = vmatprep.subr.mxu0 0.0
    %2309 = vmatpush1.xpose.msra.mxu0 %v2302
    %2310 = vmatprep.subr.mxu0 0.0
    %2311 = vmatpush1.xpose.msra.mxu0 %v2304
    %2312 = vmatprep.subr.mxu0 0.0
    %2313 = vmatpush1.xpose.msra.mxu0 0.0
    %2314 = vmatprep.subr.mxu0 0.0
    %2315 = vmatpush1.xpose.msra.mxu0 0.0
    %2316 = vmatprep.subr.mxu0 0.0
    %2317 = vmatpush1.xpose.msra.mxu0 0.0
    %2318 = vmatprep.subr.mxu0 0.0
    %2319 = vmatpush1.xpose.msra.mxu0 0.0
    %2320 = vmatprep.subr.mxu0 0.0
    %2321 = vmatpush1.xpose.msra.mxu0 0.0
    %2322 = vmatprep.subr.mxu0 0.0
    %2323 = vmatpush1.xpose.msra.mxu0 0.0
    %2324 = vmatprep.subr.mxu0 0.0
    %2325 = vmatpush1.xpose.msra.mxu0 0.0
    %2326 = vmatprep.subr.mxu0 0.0
    %2327 = vmatpush1.xpose.msra.mxu0 0.0
    %2328 = vmatprep.subr.mxu0 0.0
    %2329 = vmatpush1.xpose.msra.mxu0 0.0
    %2330 = vmatprep.subr.mxu0 0.0
    %2331 = vmatpush1.xpose.msra.mxu0 0.0
    %2332 = vmatprep.subr.mxu0 0.0
    %2333 = vmatpush1.xpose.msra.mxu0 0.0
    %2334 = vmatprep.subr.mxu0 0.0
    %2335 = vmatpush1.xpose.msra.mxu0 0.0
    %2336 = vmatprep.subr.mxu0 0.0
    %2337 = vmatpush1.xpose.msra.mxu0 0.0
    %2338 = vmatprep.subr.mxu0 0.0
    %2339 = vmatpush1.xpose.msra.mxu0 0.0
    %2340 = vmatprep.subr.mxu0 0.0
    %2341 = vmatpush1.xpose.msra.mxu0 0.0
    %2342 = vmatprep.subr.mxu0 0.0
    %2343 = vmatpush1.xpose.msra.mxu0 0.0
    %2344 = vmatprep.subr.mxu0 0.0
    %2345 = vmatpush1.xpose.msra.mxu0 0.0
    %2346 = vmatprep.subr.mxu0 0.0
    %2347 = vmatpush1.xpose.msra.mxu0 0.0
    %2348 = vmatprep.subr.mxu0 0.0
    %2349 = vmatpush1.xpose.msra.mxu0 0.0
    %2350 = vmatprep.subr.mxu0 0.0
    %2351 = vmatpush1.xpose.msra.mxu0 0.0
    %2352 = vmatprep.subr.mxu0 0.0
    %2353 = vmatpush1.xpose.msra.mxu0 0.0
    %2354 = vmatprep.subr.mxu0 0.0
    %2355 = vmatpush1.xpose.msra.mxu0 0.0
    %2356 = vmatprep.subr.mxu0 0.0
    %2357 = vmatpush1.xpose.msra.mxu0 0.0
    %2358 = vmatprep.subr.mxu0 0.0
    %2359 = vmatpush1.xpose.msra.mxu0 0.0
    %2360 = vmatprep.subr.mxu0 0.0
    %2361 = vmatpush1.xpose.msra.mxu0 0.0
    %2362 = vmatprep.subr.mxu0 0.0
    %2363 = vmatpush1.xpose.msra.mxu0 0.0
    %2364 = vmatprep.subr.mxu0 0.0
    %2365 = vmatpush1.xpose.msra.mxu0 0.0
    %2366 = vmatprep.subr.mxu0 0.0
    %2367 = vmatpush1.xpose.msra.mxu0 0.0
    %2368 = vmatprep.subr.mxu0 0.0
    %2369 = vmatpush1.xpose.msra.mxu0 0.0
    %2370 = vmatprep.mubr.f32.mxu0 0.0
    %2371 = vmatmul.mubr.f32.gmra.mrb[0].mxu0 %v2294
    %v2372 = vpop.f32.mrb[0].mxu0
    %v2373 = vadd.f32 0.0, %v2372
    %v2374 = vpop.f32.mrb[0].mxu0
    %2375 = vmatprep.mubr.f32.mxu0 0.0
    %2376 = vmatmul.mubr.f32.gmra.mrb[0].mxu0 %v2296
    %v2377 = vpop.f32.mrb[0].mxu0
    %v2378 = vadd.f32 0.0, %v2377
    %v2379 = vpop.f32.mrb[0].mxu0
    %2380 = vmatprep.mubr.f32.mxu0 0.0
    %2381 = vmatmul.mubr.f32.gmra.mrb[0].mxu0 %v2298
    %v2382 = vpop.f32.mrb[0].mxu0
    %v2383 = vadd.f32 0.0, %v2382
    %v2384 = vpop.f32.mrb[0].mxu0
    %2385 = vdwg.mxu0
    %v2386 = vmul.f32 %v2373, 0.35355338
    %v2387 = vmul.f32 %v2378, 0.35355338
    %v2388 = vmul.f32 %v2383, 0.35355338
    %v2389 = vadd.f32 %v2386, %v143
    %v2390 = vadd.f32 %v2387, %v143
    %v2391 = vadd.f32 %v2388, %v143
    %v2392 = vsel %vm623, %v2389, -inf
    %2393 = vmax.xlane.f32.xlu0 %v2392
    %v2394 = vpop.xlane.xlu0 %2393
    %v2395 = vsel %vm623, %v2390, -inf
    %2396 = vmax.xlane.f32.xlu0 %v2395
    %v2397 = vpop.xlane.xlu0 %2396
    %v2398 = vsel %vm623, %v2391, -inf
    %2399 = vmax.xlane.f32.xlu0 %v2398
    %v2400 = vpop.xlane.xlu0 %2399
    %v2401 = vsub.f32 %v2389, %v2394
    %v2402 = vsub.f32 %v2390, %v2397
    %v2403 = vsub.f32 %v2391, %v2400
    %v2404 = vmul.f32 %v2401, 1.442695
    %v2405 = vpow.pop %v2404
    %v2406 = vmul.f32 %v2402, 1.442695
    %v2407 = vpow.pop %v2406
    %v2408 = vmul.f32 %v2403, 1.442695
    %v2409 = vpow.pop %v2408
    %v2410 = vsel %vm623, %v2405, 0.0
    %2411 = vadd.xlane.f32.xlu0 %v2410
    %v2412 = vpop.xlane.xlu0 %2411
    %v2413 = vsel %vm623, %v2407, 0.0
    %2414 = vadd.xlane.f32.xlu0 %v2413
    %v2415 = vpop.xlane.xlu0 %2414
    %v2416 = vsel %vm623, %v2409, 0.0
    %2417 = vadd.xlane.f32.xlu0 %v2416
    %v2418 = vpop.xlane.xlu0 %2417
    %v2419 = vrcp.pop %v2412
    %v2420 = vrcp.pop %v2415
    %v2421 = vrcp.pop %v2418
    %v2422 = vmul.f32 %v2405, %v2419
    %v2423 = vmul.f32 %v2407, %v2420
    %v2424 = vmul.f32 %v2409, %v2421
    %2425 = vrot.lane.b32.xlu0 %v503, 40
    %v2426 = vpop.permute.xlu0 %2425
    %2427 = vrot.lane.b32.xlu0 %v508, 40
    %v2428 = vpop.permute.xlu0 %2427
    %2429 = vrot.lane.b32.xlu0 %v513, 40
    %v2430 = vpop.permute.xlu0 %2429
    %v2435 = vsel %vm623, %v2422, 0
    %v2438 = vsel %vm623, %v2423, 0
    %v2441 = vsel %vm623, %v2424, 0
    %2443 = vmatprep.subr.mxu0 0.0
    %2444 = vmatpush1.msra.mxu0 %v2426
    %2445 = vmatprep.subr.mxu0 0.0
    %2446 = vmatpush1.msra.mxu0 %v2428
    %2447 = vmatprep.subr.mxu0 0.0
    %2448 = vmatpush1.msra.mxu0 %v2430
    %2449 = vmatprep.subr.mxu0 0.0
    %2450 = vmatpush1.msra.mxu0 0.0
    %2451 = vmatprep.subr.mxu0 0.0
    %2452 = vmatpush1.msra.mxu0 0.0
    %2453 = vmatprep.subr.mxu0 0.0
    %2454 = vmatpush1.msra.mxu0 0.0
    %2455 = vmatprep.subr.mxu0 0.0
    %2456 = vmatpush1.msra.mxu0 0.0
    %2457 = vmatprep.subr.mxu0 0.0
    %2458 = vmatpush1.msra.mxu0 0.0
    %2459 = vmatprep.subr.mxu0 0.0
    %2460 = vmatpush1.msra.mxu0 0.0
    %2461 = vmatprep.subr.mxu0 0.0
    %2462 = vmatpush1.msra.mxu0 0.0
    %2463 = vmatprep.subr.mxu0 0.0
    %2464 = vmatpush1.msra.mxu0 0.0
    %2465 = vmatprep.subr.mxu0 0.0
    %2466 = vmatpush1.msra.mxu0 0.0
    %2467 = vmatprep.subr.mxu0 0.0
    %2468 = vmatpush1.msra.mxu0 0.0
    %2469 = vmatprep.subr.mxu0 0.0
    %2470 = vmatpush1.msra.mxu0 0.0
    %2471 = vmatprep.subr.mxu0 0.0
    %2472 = vmatpush1.msra.mxu0 0.0
    %2473 = vmatprep.subr.mxu0 0.0
    %2474 = vmatpush1.msra.mxu0 0.0
    %2475 = vmatprep.subr.mxu0 0.0
    %2476 = vmatpush1.msra.mxu0 0.0
    %2477 = vmatprep.subr.mxu0 0.0
    %2478 = vmatpush1.msra.mxu0 0.0
    %2479 = vmatprep.subr.mxu0 0.0
    %2480 = vmatpush1.msra.mxu0 0.0
    %2481 = vmatprep.subr.mxu0 0.0
    %2482 = vmatpush1.msra.mxu0 0.0
    %2483 = vmatprep.subr.mxu0 0.0
    %2484 = vmatpush1.msra.mxu0 0.0
    %2485 = vmatprep.subr.mxu0 0.0
    %2486 = vmatpush1.msra.mxu0 0.0
    %2487 = vmatprep.subr.mxu0 0.0
    %2488 = vmatpush1.msra.mxu0 0.0
    %2489 = vmatprep.subr.mxu0 0.0
    %2490 = vmatpush1.msra.mxu0 0.0
    %2491 = vmatprep.subr.mxu0 0.0
    %2492 = vmatpush1.msra.mxu0 0.0
    %2493 = vmatprep.subr.mxu0 0.0
    %2494 = vmatpush1.msra.mxu0 0.0
    %2495 = vmatprep.subr.mxu0 0.0
    %2496 = vmatpush1.msra.mxu0 0.0
    %2497 = vmatprep.subr.mxu0 0.0
    %2498 = vmatpush1.msra.mxu0 0.0
    %2499 = vmatprep.subr.mxu0 0.0
    %2500 = vmatpush1.msra.mxu0 0.0
    %2501 = vmatprep.subr.mxu0 0.0
    %2502 = vmatpush1.msra.mxu0 0.0
    %2503 = vmatprep.subr.mxu0 0.0
    %2504 = vmatpush1.msra.mxu0 0.0
    %2505 = vmatprep.subr.mxu0 0.0
    %2506 = vmatpush1.msra.mxu0 0.0
    %2507 = vmatprep.mubr.f32.mxu0 0.0
    %2508 = vmatmul.mubr.f32.gmra.mrb[0].mxu0 %v2435
    %v2509 = vpop.f32.mrb[0].mxu0
    %v2510 = vadd.f32 0.0, %v2509
    %v2511 = vpop.f32.mrb[0].mxu0
    %2512 = vmatprep.mubr.f32.mxu0 0.0
    %2513 = vmatmul.mubr.f32.gmra.mrb[0].mxu0 %v2438
    %v2514 = vpop.f32.mrb[0].mxu0
    %v2515 = vadd.f32 0.0, %v2514
    %v2516 = vpop.f32.mrb[0].mxu0
    %2517 = vmatprep.mubr.f32.mxu0 0.0
    %2518 = vmatmul.mubr.f32.gmra.mrb[0].mxu0 %v2441
    %v2519 = vpop.f32.mrb[0].mxu0
    %v2520 = vadd.f32 0.0, %v2519
    %v2521 = vpop.f32.mrb[0].mxu0
    %2522 = vdwg.mxu0
    %2526 = vrot.lane.b32.xlu0 %v2510, 24
    %v2527 = vpop.permute.xlu0 %2526
    %2528 = vrot.lane.b32.xlu0 %v2515, 24
    %v2529 = vpop.permute.xlu0 %2528
    %2530 = vrot.lane.b32.xlu0 %v2520, 24
    %v2531 = vpop.permute.xlu0 %2530
    %2535 = vst.msk [vmem:[#allocation3 + $0x18] sm:$0xff] %vm1525, %v2527
    %2536 = vst.msk [vmem:[#allocation3 + $0x20] sm:$0xff] %vm1525, %v2529
    %2537 = vst.msk [vmem:[#allocation3 + $0x28] sm:$0xff] %vm1525, %v2531
    %v2538 = vld [vmem:[#allocation3] sm:$0xff]
    %v2539 = vld [vmem:[#allocation3 + $0x8] sm:$0xff]
    %v2540 = vld [vmem:[#allocation3 + $0x10] sm:$0xff]
    %v2541 = vld [vmem:[#allocation3 + $0x18] sm:$0xff]
    %v2542 = vld [vmem:[#allocation3 + $0x20] sm:$0xff]
    %v2543 = vld [vmem:[#allocation3 + $0x28] sm:$0xff]
    %v2544 = vld [vmem:[#allocation12] sm:$0xff]
    %v2545 = vld [vmem:[#allocation12 + $0x8] sm:$0xff]
    %v2546 = vld [vmem:[#allocation12 + $0x10] sm:$0xff]
    %v2547 = vld [vmem:[#allocation12 + $0x18] sm:$0xff]
    %v2548 = vlaneseq
    %v2549 = vshrl.u32 %v2548, 7
    %v2550 = vsub.s32 4, %v2549
    %v2551 = vrot.slane %v292, %v2550
    %v2553 = vsel %vm269, %v2538, 0
    %v2556 = vsel %vm269, %v2539, 0
    %v2559 = vsel %vm269, %v2540, 0
    %v2562 = vsel %vm269, %v2541, 0
    %v2565 = vsel %vm269, %v2542, 0
    %v2568 = vsel %vm269, %v2543, 0
    %2570 = vmatprep.subr.mxu0 0.0
    %2571 = vmatpush1.msra.mxu0 %v2544
    %2572 = vmatprep.subr.mxu0 0.0
    %2573 = vmatpush1.msra.mxu0 %v2545
    %2574 = vmatprep.subr.mxu0 0.0
    %2575 = vmatpush1.msra.mxu0 %v2546
    %2576 = vmatprep.subr.mxu0 0.0
    %2577 = vmatpush1.msra.mxu0 %v2547
    %2578 = vmatprep.subr.mxu0 0.0
    %2579 = vmatpush1.msra.mxu0 0.0
    %2580 = vmatprep.subr.mxu0 0.0
    %2581 = vmatpush1.msra.mxu0 0.0
    %2582 = vmatprep.subr.mxu0 0.0
    %2583 = vmatpush1.msra.mxu0 0.0
    %2584 = vmatprep.subr.mxu0 0.0
    %2585 = vmatpush1.msra.mxu0 0.0
    %2586 = vmatprep.subr.mxu0 0.0
    %2587 = vmatpush1.msra.mxu0 0.0
    %2588 = vmatprep.subr.mxu0 0.0
    %2589 = vmatpush1.msra.mxu0 0.0
    %2590 = vmatprep.subr.mxu0 0.0
    %2591 = vmatpush1.msra.mxu0 0.0
    %2592 = vmatprep.subr.mxu0 0.0
    %2593 = vmatpush1.msra.mxu0 0.0
    %2594 = vmatprep.subr.mxu0 0.0
    %2595 = vmatpush1.msra.mxu0 0.0
    %2596 = vmatprep.subr.mxu0 0.0
    %2597 = vmatpush1.msra.mxu0 0.0
    %2598 = vmatprep.subr.mxu0 0.0
    %2599 = vmatpush1.msra.mxu0 0.0
    %2600 = vmatprep.subr.mxu0 0.0
    %2601 = vmatpush1.msra.mxu0 0.0
    %2602 = vmatprep.subr.mxu0 0.0
    %2603 = vmatpush1.msra.mxu0 0.0
    %2604 = vmatprep.subr.mxu0 0.0
    %2605 = vmatpush1.msra.mxu0 0.0
    %2606 = vmatprep.subr.mxu0 0.0
    %2607 = vmatpush1.msra.mxu0 0.0
    %2608 = vmatprep.subr.mxu0 0.0
    %2609 = vmatpush1.msra.mxu0 0.0
    %2610 = vmatprep.subr.mxu0 0.0
    %2611 = vmatpush1.msra.mxu0 0.0
    %2612 = vmatprep.subr.mxu0 0.0
    %2613 = vmatpush1.msra.mxu0 0.0
    %2614 = vmatprep.subr.mxu0 0.0
    %2615 = vmatpush1.msra.mxu0 0.0
    %2616 = vmatprep.subr.mxu0 0.0
    %2617 = vmatpush1.msra.mxu0 0.0
    %2618 = vmatprep.subr.mxu0 0.0
    %2619 = vmatpush1.msra.mxu0 0.0
    %2620 = vmatprep.subr.mxu0 0.0
    %2621 = vmatpush1.msra.mxu0 0.0
    %2622 = vmatprep.subr.mxu0 0.0
    %2623 = vmatpush1.msra.mxu0 0.0
    %2624 = vmatprep.subr.mxu0 0.0
    %2625 = vmatpush1.msra.mxu0 0.0
    %2626 = vmatprep.subr.mxu0 0.0
    %2627 = vmatpush1.msra.mxu0 0.0
    %2628 = vmatprep.subr.mxu0 0.0
    %2629 = vmatpush1.msra.mxu0 0.0
    %2630 = vmatprep.subr.mxu0 0.0
    %2631 = vmatpush1.msra.mxu0 0.0
    %2632 = vmatprep.subr.mxu0 0.0
    %2633 = vmatpush1.msra.mxu0 0.0
    %2634 = vmatprep.mubr.f32.mxu0 0.0
    %2635 = vmatmul.mubr.f32.gmra.mrb[0].mxu0 %v2553
    %v2636 = vpop.f32.mrb[0].mxu0
    %v2637 = vadd.f32 %v2551, %v2636
    %v2638 = vpop.f32.mrb[0].mxu0
    %2639 = vmatprep.mubr.f32.mxu0 0.0
    %2640 = vmatmul.mubr.f32.gmra.mrb[0].mxu0 %v2556
    %v2641 = vpop.f32.mrb[0].mxu0
    %v2642 = vadd.f32 %v2551, %v2641
    %v2643 = vpop.f32.mrb[0].mxu0
    %2644 = vmatprep.mubr.f32.mxu0 0.0
    %2645 = vmatmul.mubr.f32.gmra.mrb[0].mxu0 %v2559
    %v2646 = vpop.f32.mrb[0].mxu0
    %v2647 = vadd.f32 %v2551, %v2646
    %v2648 = vpop.f32.mrb[0].mxu0
    %2649 = vmatprep.mubr.f32.mxu0 0.0
    %2650 = vmatmul.mubr.f32.gmra.mrb[0].mxu0 %v2562
    %v2651 = vpop.f32.mrb[0].mxu0
    %v2652 = vadd.f32 %v2551, %v2651
    %v2653 = vpop.f32.mrb[0].mxu0
    %2654 = vmatprep.mubr.f32.mxu0 0.0
    %2655 = vmatmul.mubr.f32.gmra.mrb[0].mxu0 %v2565
    %v2656 = vpop.f32.mrb[0].mxu0
    %v2657 = vadd.f32 %v2551, %v2656
    %v2658 = vpop.f32.mrb[0].mxu0
    %2659 = vmatprep.mubr.f32.mxu0 0.0
    %2660 = vmatmul.mubr.f32.gmra.mrb[0].mxu0 %v2568
    %v2661 = vpop.f32.mrb[0].mxu0
    %v2662 = vadd.f32 %v2551, %v2661
    %v2663 = vpop.f32.mrb[0].mxu0
    %2664 = vdwg.mxu0
    %v2665 = vadd.f32 %v286, %v2637
    %v2666 = vadd.f32 %v287, %v2642
    %v2667 = vadd.f32 %v288, %v2647
    %v2668 = vadd.f32 %v289, %v2652
    %v2669 = vadd.f32 %v290, %v2657
    %v2670 = vadd.f32 %v291, %v2662
    %v2671 = vsel %vm269, %v2665, 0.0
    %2672 = vadd.xlane.f32.xlu0 %v2671
    %v2673 = vpop.xlane.xlu0 %2672
    %v2674 = vsel %vm269, %v2666, 0.0
    %2675 = vadd.xlane.f32.xlu0 %v2674
    %v2676 = vpop.xlane.xlu0 %2675
    %v2677 = vsel %vm269, %v2667, 0.0
    %2678 = vadd.xlane.f32.xlu0 %v2677
    %v2679 = vpop.xlane.xlu0 %2678
    %v2680 = vsel %vm269, %v2668, 0.0
    %2681 = vadd.xlane.f32.xlu0 %v2680
    %v2682 = vpop.xlane.xlu0 %2681
    %v2683 = vsel %vm269, %v2669, 0.0
    %2684 = vadd.xlane.f32.xlu0 %v2683
    %v2685 = vpop.xlane.xlu0 %2684
    %v2686 = vsel %vm269, %v2670, 0.0
    %2687 = vadd.xlane.f32.xlu0 %v2686
    %v2688 = vpop.xlane.xlu0 %2687
    %v2689 = vmul.f32 %v2673, %v311
    %v2690 = vmul.f32 %v2676, %v311
    %v2691 = vmul.f32 %v2679, %v311
    %v2692 = vmul.f32 %v2682, %v311
    %v2693 = vmul.f32 %v2685, %v311
    %v2694 = vmul.f32 %v2688, %v311
    %v2695 = vsub.f32 %v2665, %v2689
    %v2696 = vsub.f32 %v2666, %v2690
    %v2697 = vsub.f32 %v2667, %v2691
    %v2698 = vsub.f32 %v2668, %v2692
    %v2699 = vsub.f32 %v2669, %v2693
    %v2700 = vsub.f32 %v2670, %v2694
    %v2701 = vmul.f32 %v2695, %v2695
    %v2702 = vmul.f32 %v2696, %v2696
    %v2703 = vmul.f32 %v2697, %v2697
    %v2704 = vmul.f32 %v2698, %v2698
    %v2705 = vmul.f32 %v2699, %v2699
    %v2706 = vmul.f32 %v2700, %v2700
    %v2707 = vsel %vm269, %v2701, 0.0
    %2708 = vadd.xlane.f32.xlu0 %v2707
    %v2709 = vpop.xlane.xlu0 %2708
    %v2710 = vsel %vm269, %v2702, 0.0
    %2711 = vadd.xlane.f32.xlu0 %v2710
    %v2712 = vpop.xlane.xlu0 %2711
    %v2713 = vsel %vm269, %v2703, 0.0
    %2714 = vadd.xlane.f32.xlu0 %v2713
    %v2715 = vpop.xlane.xlu0 %2714
    %v2716 = vsel %vm269, %v2704, 0.0
    %2717 = vadd.xlane.f32.xlu0 %v2716
    %v2718 = vpop.xlane.xlu0 %2717
    %v2719 = vsel %vm269, %v2705, 0.0
    %2720 = vadd.xlane.f32.xlu0 %v2719
    %v2721 = vpop.xlane.xlu0 %2720
    %v2722 = vsel %vm269, %v2706, 0.0
    %2723 = vadd.xlane.f32.xlu0 %v2722
    %v2724 = vpop.xlane.xlu0 %2723
    %v2725 = vmul.f32 %v2709, %v311
    %v2726 = vmul.f32 %v2712, %v311
    %v2727 = vmul.f32 %v2715, %v311
    %v2728 = vmul.f32 %v2718, %v311
    %v2729 = vmul.f32 %v2721, %v311
    %v2730 = vmul.f32 %v2724, %v311
    %v2731 = vadd.f32 %v2725, 1e-06
    %v2732 = vadd.f32 %v2726, 1e-06
    %v2733 = vadd.f32 %v2727, 1e-06
    %v2734 = vadd.f32 %v2728, 1e-06
    %v2735 = vadd.f32 %v2729, 1e-06
    %v2736 = vadd.f32 %v2730, 1e-06
    %v2737 = vrsqrt.pop %v2731
    %v2738 = vrsqrt.pop %v2732
    %v2739 = vrsqrt.pop %v2733
    %v2740 = vrsqrt.pop %v2734
    %v2741 = vrsqrt.pop %v2735
    %v2742 = vrsqrt.pop %v2736
    %v2743 = vmul.f32 %v2695, %v2737
    %v2744 = vmul.f32 %v2696, %v2738
    %v2745 = vmul.f32 %v2697, %v2739
    %v2746 = vmul.f32 %v2698, %v2740
    %v2747 = vmul.f32 %v2699, %v2741
    %v2748 = vmul.f32 %v2700, %v2742
    %v2749 = vlaneseq
    %v2750 = vshrl.u32 %v2749, 7
    %v2751 = vsub.s32 2, %v2750
    %v2752 = vrot.slane %v292, %v2751
    %v2753 = vmul.f32 %v2743, %v2752
    %v2754 = vmul.f32 %v2744, %v2752
    %v2755 = vmul.f32 %v2745, %v2752
    %v2756 = vmul.f32 %v2746, %v2752
    %v2757 = vmul.f32 %v2747, %v2752
    %v2758 = vmul.f32 %v2748, %v2752
    %v2759 = vlaneseq
    %v2760 = vshrl.u32 %v2759, 7
    %v2761 = vsub.s32 3, %v2760
    %v2762 = vrot.slane %v292, %v2761
    %v2763 = vadd.f32 %v2753, %v2762
    %v2764 = vadd.f32 %v2754, %v2762
    %v2765 = vadd.f32 %v2755, %v2762
    %v2766 = vadd.f32 %v2756, %v2762
    %v2767 = vadd.f32 %v2757, %v2762
    %v2768 = vadd.f32 %v2758, %v2762
    %v2769 = vld [vmem:[#allocation13] sm:$0xff]
    %v2770 = vld [vmem:[#allocation13 + $0x8] sm:$0xff]
    %v2771 = vld [vmem:[#allocation13 + $0x10] sm:$0xff]
    %v2772 = vld [vmem:[#allocation13 + $0x18] sm:$0xff]
    %v2773 = vld [vmem:[%s9] sm:$0x1]
    %v2775 = vlaneseq
    %v2776 = vshrl.u32 %v2775, 7
    %v2777 = vsub.s32 0, %v2776
    %v2778 = vrot.slane %v2773, %v2777
    %v2781 = vsel %vm269, %v2763, 0
    %v2784 = vsel %vm269, %v2764, 0
    %v2787 = vsel %vm269, %v2765, 0
    %v2790 = vsel %vm269, %v2766, 0
    %v2793 = vsel %vm269, %v2767, 0
    %v2796 = vsel %vm269, %v2768, 0
    %2798 = vmatprep.subr.mxu0 0.0
    %2799 = vmatpush1.msra.mxu0 %v2769
    %2800 = vmatprep.subr.mxu0 0.0
    %2801 = vmatpush1.msra.mxu0 %v2770
    %2802 = vmatprep.subr.mxu0 0.0
    %2803 = vmatpush1.msra.mxu0 %v2771
    %2804 = vmatprep.subr.mxu0 0.0
    %2805 = vmatpush1.msra.mxu0 %v2772
    %2806 = vmatprep.subr.mxu0 0.0
    %2807 = vmatpush1.msra.mxu0 0.0
    %2808 = vmatprep.subr.mxu0 0.0
    %2809 = vmatpush1.msra.mxu0 0.0
    %2810 = vmatprep.subr.mxu0 0.0
    %2811 = vmatpush1.msra.mxu0 0.0
    %2812 = vmatprep.subr.mxu0 0.0
    %2813 = vmatpush1.msra.mxu0 0.0
    %2814 = vmatprep.subr.mxu0 0.0
    %2815 = vmatpush1.msra.mxu0 0.0
    %2816 = vmatprep.subr.mxu0 0.0
    %2817 = vmatpush1.msra.mxu0 0.0
    %2818 = vmatprep.subr.mxu0 0.0
    %2819 = vmatpush1.msra.mxu0 0.0
    %2820 = vmatprep.subr.mxu0 0.0
    %2821 = vmatpush1.msra.mxu0 0.0
    %2822 = vmatprep.subr.mxu0 0.0
    %2823 = vmatpush1.msra.mxu0 0.0
    %2824 = vmatprep.subr.mxu0 0.0
    %2825 = vmatpush1.msra.mxu0 0.0
    %2826 = vmatprep.subr.mxu0 0.0
    %2827 = vmatpush1.msra.mxu0 0.0
    %2828 = vmatprep.subr.mxu0 0.0
    %2829 = vmatpush1.msra.mxu0 0.0
    %2830 = vmatprep.subr.mxu0 0.0
    %2831 = vmatpush1.msra.mxu0 0.0
    %2832 = vmatprep.subr.mxu0 0.0
    %2833 = vmatpush1.msra.mxu0 0.0
    %2834 = vmatprep.subr.mxu0 0.0
    %2835 = vmatpush1.msra.mxu0 0.0
    %2836 = vmatprep.subr.mxu0 0.0
    %2837 = vmatpush1.msra.mxu0 0.0
    %2838 = vmatprep.subr.mxu0 0.0
    %2839 = vmatpush1.msra.mxu0 0.0
    %2840 = vmatprep.subr.mxu0 0.0
    %2841 = vmatpush1.msra.mxu0 0.0
    %2842 = vmatprep.subr.mxu0 0.0
    %2843 = vmatpush1.msra.mxu0 0.0
    %2844 = vmatprep.subr.mxu0 0.0
    %2845 = vmatpush1.msra.mxu0 0.0
    %2846 = vmatprep.subr.mxu0 0.0
    %2847 = vmatpush1.msra.mxu0 0.0
    %2848 = vmatprep.subr.mxu0 0.0
    %2849 = vmatpush1.msra.mxu0 0.0
    %2850 = vmatprep.subr.mxu0 0.0
    %2851 = vmatpush1.msra.mxu0 0.0
    %2852 = vmatprep.subr.mxu0 0.0
    %2853 = vmatpush1.msra.mxu0 0.0
    %2854 = vmatprep.subr.mxu0 0.0
    %2855 = vmatpush1.msra.mxu0 0.0
    %2856 = vmatprep.subr.mxu0 0.0
    %2857 = vmatpush1.msra.mxu0 0.0
    %2858 = vmatprep.subr.mxu0 0.0
    %2859 = vmatpush1.msra.mxu0 0.0
    %2860 = vmatprep.subr.mxu0 0.0
    %2861 = vmatpush1.msra.mxu0 0.0
    %2862 = vmatprep.mubr.f32.mxu0 0.0
    %2863 = vmatmul.mubr.f32.gmra.mrb[0].mxu0 %v2781
    %v2864 = vpop.f32.mrb[0].mxu0
    %v2865 = vadd.f32 %v2778, %v2864
    %v2866 = vpop.f32.mrb[0].mxu0
    %2867 = vmatprep.mubr.f32.mxu0 0.0
    %2868 = vmatmul.mubr.f32.gmra.mrb[0].mxu0 %v2784
    %v2869 = vpop.f32.mrb[0].mxu0
    %v2870 = vadd.f32 %v2778, %v2869
    %v2871 = vpop.f32.mrb[0].mxu0
    %2872 = vmatprep.mubr.f32.mxu0 0.0
    %2873 = vmatmul.mubr.f32.gmra.mrb[0].mxu0 %v2787
    %v2874 = vpop.f32.mrb[0].mxu0
    %v2875 = vadd.f32 %v2778, %v2874
    %v2876 = vpop.f32.mrb[0].mxu0
    %2877 = vmatprep.mubr.f32.mxu0 0.0
    %2878 = vmatmul.mubr.f32.gmra.mrb[0].mxu0 %v2790
    %v2879 = vpop.f32.mrb[0].mxu0
    %v2880 = vadd.f32 %v2778, %v2879
    %v2881 = vpop.f32.mrb[0].mxu0
    %2882 = vmatprep.mubr.f32.mxu0 0.0
    %2883 = vmatmul.mubr.f32.gmra.mrb[0].mxu0 %v2793
    %v2884 = vpop.f32.mrb[0].mxu0
    %v2885 = vadd.f32 %v2778, %v2884
    %v2886 = vpop.f32.mrb[0].mxu0
    %2887 = vmatprep.mubr.f32.mxu0 0.0
    %2888 = vmatmul.mubr.f32.gmra.mrb[0].mxu0 %v2796
    %v2889 = vpop.f32.mrb[0].mxu0
    %v2890 = vadd.f32 %v2778, %v2889
    %v2891 = vpop.f32.mrb[0].mxu0
    %2892 = vdwg.mxu0
    %v2893 = vmul.f32 %v2865, 0.5
    %v2894 = vmul.f32 %v2870, 0.5
    %v2895 = vmul.f32 %v2875, 0.5
    %v2896 = vmul.f32 %v2880, 0.5
    %v2897 = vmul.f32 %v2885, 0.5
    %v2898 = vmul.f32 %v2890, 0.5
    %v2899 = vmul.f32 %v2865, 0.70710677
    %v2900 = vmul.f32 %v2870, 0.70710677
    %v2901 = vmul.f32 %v2875, 0.70710677
    %v2902 = vmul.f32 %v2880, 0.70710677
    %v2903 = vmul.f32 %v2885, 0.70710677
    %v2904 = vmul.f32 %v2890, 0.70710677
    %v2905 = verf.f32.pop %v2899
    %v2906 = verf.f32.pop %v2900
    %v2907 = verf.f32.pop %v2901
    %v2908 = verf.f32.pop %v2902
    %v2909 = verf.f32.pop %v2903
    %v2910 = verf.f32.pop %v2904
    %v2911 = vadd.f32 %v2905, 1.0
    %v2912 = vadd.f32 %v2906, 1.0
    %v2913 = vadd.f32 %v2907, 1.0
    %v2914 = vadd.f32 %v2908, 1.0
    %v2915 = vadd.f32 %v2909, 1.0
    %v2916 = vadd.f32 %v2910, 1.0
    %v2917 = vmul.f32 %v2893, %v2911
    %v2918 = vmul.f32 %v2894, %v2912
    %v2919 = vmul.f32 %v2895, %v2913
    %v2920 = vmul.f32 %v2896, %v2914
    %v2921 = vmul.f32 %v2897, %v2915
    %v2922 = vmul.f32 %v2898, %v2916
    %v2923 = vld [vmem:[#allocation15] sm:$0xff]
    %v2924 = vld [vmem:[#allocation15 + $0x8] sm:$0xff]
    %v2925 = vld [vmem:[#allocation15 + $0x10] sm:$0xff]
    %v2926 = vld [vmem:[#allocation15 + $0x18] sm:$0xff]
    %v2927 = vld [vmem:[#allocation15 + $0x20] sm:$0xff]
    %v2928 = vld [vmem:[#allocation15 + $0x28] sm:$0xff]
    %v2929 = vld [vmem:[#allocation15 + $0x30] sm:$0xff]
    %v2930 = vld [vmem:[#allocation15 + $0x38] sm:$0xff]
    %v2931 = vlaneseq
    %v2932 = vshrl.u32 %v2931, 7
    %v2933 = vsub.s32 5, %v2932
    %v2934 = vrot.slane %v292, %v2933
    %vm2935 = vcmask 523264
    %v2937 = vsel %vm2935, %v2917, 0
    %v2940 = vsel %vm2935, %v2918, 0
    %v2943 = vsel %vm2935, %v2919, 0
    %v2946 = vsel %vm2935, %v2920, 0
    %v2949 = vsel %vm2935, %v2921, 0
    %v2952 = vsel %vm2935, %v2922, 0
    %2954 = vmatprep.subr.mxu0 0.0
    %2955 = vmatpush1.msra.mxu0 %v2923
    %2956 = vmatprep.subr.mxu0 0.0
    %2957 = vmatpush1.msra.mxu0 %v2924
    %2958 = vmatprep.subr.mxu0 0.0
    %2959 = vmatpush1.msra.mxu0 %v2925
    %2960 = vmatprep.subr.mxu0 0.0
    %2961 = vmatpush1.msra.mxu0 %v2926
    %2962 = vmatprep.subr.mxu0 0.0
    %2963 = vmatpush1.msra.mxu0 %v2927
    %2964 = vmatprep.subr.mxu0 0.0
    %2965 = vmatpush1.msra.mxu0 %v2928
    %2966 = vmatprep.subr.mxu0 0.0
    %2967 = vmatpush1.msra.mxu0 %v2929
    %2968 = vmatprep.subr.mxu0 0.0
    %2969 = vmatpush1.msra.mxu0 %v2930
    %2970 = vmatprep.subr.mxu0 0.0
    %2971 = vmatpush1.msra.mxu0 0.0
    %2972 = vmatprep.subr.mxu0 0.0
    %2973 = vmatpush1.msra.mxu0 0.0
    %2974 = vmatprep.subr.mxu0 0.0
    %2975 = vmatpush1.msra.mxu0 0.0
    %2976 = vmatprep.subr.mxu0 0.0
    %2977 = vmatpush1.msra.mxu0 0.0
    %2978 = vmatprep.subr.mxu0 0.0
    %2979 = vmatpush1.msra.mxu0 0.0
    %2980 = vmatprep.subr.mxu0 0.0
    %2981 = vmatpush1.msra.mxu0 0.0
    %2982 = vmatprep.subr.mxu0 0.0
    %2983 = vmatpush1.msra.mxu0 0.0
    %2984 = vmatprep.subr.mxu0 0.0
    %2985 = vmatpush1.msra.mxu0 0.0
    %2986 = vmatprep.subr.mxu0 0.0
    %2987 = vmatpush1.msra.mxu0 0.0
    %2988 = vmatprep.subr.mxu0 0.0
    %2989 = vmatpush1.msra.mxu0 0.0
    %2990 = vmatprep.subr.mxu0 0.0
    %2991 = vmatpush1.msra.mxu0 0.0
    %2992 = vmatprep.subr.mxu0 0.0
    %2993 = vmatpush1.msra.mxu0 0.0
    %2994 = vmatprep.subr.mxu0 0.0
    %2995 = vmatpush1.msra.mxu0 0.0
    %2996 = vmatprep.subr.mxu0 0.0
    %2997 = vmatpush1.msra.mxu0 0.0
    %2998 = vmatprep.subr.mxu0 0.0
    %2999 = vmatpush1.msra.mxu0 0.0
    %3000 = vmatprep.subr.mxu0 0.0
    %3001 = vmatpush1.msra.mxu0 0.0
    %3002 = vmatprep.subr.mxu0 0.0
    %3003 = vmatpush1.msra.mxu0 0.0
    %3004 = vmatprep.subr.mxu0 0.0
    %3005 = vmatpush1.msra.mxu0 0.0
    %3006 = vmatprep.subr.mxu0 0.0
    %3007 = vmatpush1.msra.mxu0 0.0
    %3008 = vmatprep.subr.mxu0 0.0
    %3009 = vmatpush1.msra.mxu0 0.0
    %3010 = vmatprep.subr.mxu0 0.0
    %3011 = vmatpush1.msra.mxu0 0.0
    %3012 = vmatprep.subr.mxu0 0.0
    %3013 = vmatpush1.msra.mxu0 0.0
    %3014 = vmatprep.subr.mxu0 0.0
    %3015 = vmatpush1.msra.mxu0 0.0
    %3016 = vmatprep.subr.mxu0 0.0
    %3017 = vmatpush1.msra.mxu0 0.0
    %3018 = vmatprep.mubr.f32.mxu0 0.0
    %3019 = vmatmul.mubr.f32.gmra.mrb[0].mxu0 %v2937
    %v3020 = vpop.f32.mrb[0].mxu0
    %v3021 = vadd.f32 %v2934, %v3020
    %v3022 = vpop.f32.mrb[0].mxu0
    %3023 = vmatprep.mubr.f32.mxu0 0.0
    %3024 = vmatmul.mubr.f32.gmra.mrb[0].mxu0 %v2940
    %v3025 = vpop.f32.mrb[0].mxu0
    %v3026 = vadd.f32 %v2934, %v3025
    %v3027 = vpop.f32.mrb[0].mxu0
    %3028 = vmatprep.mubr.f32.mxu0 0.0
    %3029 = vmatmul.mubr.f32.gmra.mrb[0].mxu0 %v2943
    %v3030 = vpop.f32.mrb[0].mxu0
    %v3031 = vadd.f32 %v2934, %v3030
    %v3032 = vpop.f32.mrb[0].mxu0
    %3033 = vmatprep.mubr.f32.mxu0 0.0
    %3034 = vmatmul.mubr.f32.gmra.mrb[0].mxu0 %v2946
    %v3035 = vpop.f32.mrb[0].mxu0
    %v3036 = vadd.f32 %v2934, %v3035
    %v3037 = vpop.f32.mrb[0].mxu0
    %3038 = vmatprep.mubr.f32.mxu0 0.0
    %3039 = vmatmul.mubr.f32.gmra.mrb[0].mxu0 %v2949
    %v3040 = vpop.f32.mrb[0].mxu0
    %v3041 = vadd.f32 %v2934, %v3040
    %v3042 = vpop.f32.mrb[0].mxu0
    %3043 = vmatprep.mubr.f32.mxu0 0.0
    %3044 = vmatmul.mubr.f32.gmra.mrb[0].mxu0 %v2952
    %v3045 = vpop.f32.mrb[0].mxu0
    %v3046 = vadd.f32 %v2934, %v3045
    %v3047 = vpop.f32.mrb[0].mxu0
    %3048 = vdwg.mxu0
    %v3049 = vadd.f32 %v2665, %v3021
    %v3050 = vadd.f32 %v2666, %v3026
    %v3051 = vadd.f32 %v2667, %v3031
    %v3052 = vadd.f32 %v2668, %v3036
    %v3053 = vadd.f32 %v2669, %v3041
    %v3054 = vadd.f32 %v2670, %v3046
    %s3055 = scalar_lea.vmem %s4, 8
    %v3056 = vld [vmem:[%s3055] sm:$0xff]
    %v3057 = vsel %vm269, %v3049, 0.0
    %3058 = vadd.xlane.f32.xlu0 %v3057
    %v3059 = vpop.xlane.xlu0 %3058
    %v3060 = vsel %vm269, %v3050, 0.0
    %3061 = vadd.xlane.f32.xlu0 %v3060
    %v3062 = vpop.xlane.xlu0 %3061
    %v3063 = vsel %vm269, %v3051, 0.0
    %3064 = vadd.xlane.f32.xlu0 %v3063
    %v3065 = vpop.xlane.xlu0 %3064
    %v3066 = vsel %vm269, %v3052, 0.0
    %3067 = vadd.xlane.f32.xlu0 %v3066
    %v3068 = vpop.xlane.xlu0 %3067
    %v3069 = vsel %vm269, %v3053, 0.0
    %3070 = vadd.xlane.f32.xlu0 %v3069
    %v3071 = vpop.xlane.xlu0 %3070
    %v3072 = vsel %vm269, %v3054, 0.0
    %3073 = vadd.xlane.f32.xlu0 %v3072
    %v3074 = vpop.xlane.xlu0 %3073
    %v3075 = vmul.f32 %v3059, %v311
    %v3076 = vmul.f32 %v3062, %v311
    %v3077 = vmul.f32 %v3065, %v311
    %v3078 = vmul.f32 %v3068, %v311
    %v3079 = vmul.f32 %v3071, %v311
    %v3080 = vmul.f32 %v3074, %v311
    %v3081 = vsub.f32 %v3049, %v3075
    %v3082 = vsub.f32 %v3050, %v3076
    %v3083 = vsub.f32 %v3051, %v3077
    %v3084 = vsub.f32 %v3052, %v3078
    %v3085 = vsub.f32 %v3053, %v3079
    %v3086 = vsub.f32 %v3054, %v3080
    %v3087 = vmul.f32 %v3081, %v3081
    %v3088 = vmul.f32 %v3082, %v3082
    %v3089 = vmul.f32 %v3083, %v3083
    %v3090 = vmul.f32 %v3084, %v3084
    %v3091 = vmul.f32 %v3085, %v3085
    %v3092 = vmul.f32 %v3086, %v3086
    %v3093 = vsel %vm269, %v3087, 0.0
    %3094 = vadd.xlane.f32.xlu0 %v3093
    %v3095 = vpop.xlane.xlu0 %3094
    %v3096 = vsel %vm269, %v3088, 0.0
    %3097 = vadd.xlane.f32.xlu0 %v3096
    %v3098 = vpop.xlane.xlu0 %3097
    %v3099 = vsel %vm269, %v3089, 0.0
    %3100 = vadd.xlane.f32.xlu0 %v3099
    %v3101 = vpop.xlane.xlu0 %3100
    %v3102 = vsel %vm269, %v3090, 0.0
    %3103 = vadd.xlane.f32.xlu0 %v3102
    %v3104 = vpop.xlane.xlu0 %3103
    %v3105 = vsel %vm269, %v3091, 0.0
    %3106 = vadd.xlane.f32.xlu0 %v3105
    %v3107 = vpop.xlane.xlu0 %3106
    %v3108 = vsel %vm269, %v3092, 0.0
    %3109 = vadd.xlane.f32.xlu0 %v3108
    %v3110 = vpop.xlane.xlu0 %3109
    %v3111 = vmul.f32 %v3095, %v311
    %v3112 = vmul.f32 %v3098, %v311
    %v3113 = vmul.f32 %v3101, %v311
    %v3114 = vmul.f32 %v3104, %v311
    %v3115 = vmul.f32 %v3107, %v311
    %v3116 = vmul.f32 %v3110, %v311
    %v3117 = vadd.f32 %v3111, 1e-06
    %v3118 = vadd.f32 %v3112, 1e-06
    %v3119 = vadd.f32 %v3113, 1e-06
    %v3120 = vadd.f32 %v3114, 1e-06
    %v3121 = vadd.f32 %v3115, 1e-06
    %v3122 = vadd.f32 %v3116, 1e-06
    %v3123 = vrsqrt.pop %v3117
    %v3124 = vrsqrt.pop %v3118
    %v3125 = vrsqrt.pop %v3119
    %v3126 = vrsqrt.pop %v3120
    %v3127 = vrsqrt.pop %v3121
    %v3128 = vrsqrt.pop %v3122
    %v3129 = vmul.f32 %v3081, %v3123
    %v3130 = vmul.f32 %v3082, %v3124
    %v3131 = vmul.f32 %v3083, %v3125
    %v3132 = vmul.f32 %v3084, %v3126
    %v3133 = vmul.f32 %v3085, %v3127
    %v3134 = vmul.f32 %v3086, %v3128
    %v3135 = vlaneseq
    %v3136 = vshrl.u32 %v3135, 7
    %v3137 = vsub.s32 0, %v3136
    %v3138 = vrot.slane %v3056, %v3137
    %v3139 = vmul.f32 %v3129, %v3138
    %v3140 = vmul.f32 %v3130, %v3138
    %v3141 = vmul.f32 %v3131, %v3138
    %v3142 = vmul.f32 %v3132, %v3138
    %v3143 = vmul.f32 %v3133, %v3138
    %v3144 = vmul.f32 %v3134, %v3138
    %v3145 = vlaneseq
    %v3146 = vshrl.u32 %v3145, 7
    %v3147 = vsub.s32 1, %v3146
    %v3148 = vrot.slane %v3056, %v3147
    %v3149 = vadd.f32 %v3139, %v3148
    %v3150 = vadd.f32 %v3140, %v3148
    %v3151 = vadd.f32 %v3141, %v3148
    %v3152 = vadd.f32 %v3142, %v3148
    %v3153 = vadd.f32 %v3143, %v3148
    %v3154 = vadd.f32 %v3144, %v3148
    %s3155 = scalar_lea.vmem [#allocation10], 32
    %v3156 = vld [vmem:[%s3155] sm:$0xff]
    %v3157 = vld [vmem:[%s3155 + $0x8] sm:$0xff]
    %v3158 = vld [vmem:[%s3155 + $0x10] sm:$0xff]
    %v3159 = vld [vmem:[%s3155 + $0x18] sm:$0xff]
    %s3160 = scalar_lea.vmem %s6, 1
    %v3161 = vld [vmem:[%s3160] sm:$0x1]
    %v3163 = vlaneseq
    %v3164 = vshrl.u32 %v3163, 7
    %v3165 = vsub.s32 0, %v3164
    %v3166 = vrot.slane %v3161, %v3165
    %v3169 = vsel %vm269, %v3149, 0
    %v3172 = vsel %vm269, %v3150, 0
    %v3175 = vsel %vm269, %v3151, 0
    %v3178 = vsel %vm269, %v3152, 0
    %v3181 = vsel %vm269, %v3153, 0
    %v3184 = vsel %vm269, %v3154, 0
    %3186 = vmatprep.subr.mxu0 0.0
    %3187 = vmatpush1.msra.mxu0 %v3156
    %3188 = vmatprep.subr.mxu0 0.0
    %3189 = vmatpush1.msra.mxu0 %v3157
    %3190 = vmatprep.subr.mxu0 0.0
    %3191 = vmatpush1.msra.mxu0 %v3158
    %3192 = vmatprep.subr.mxu0 0.0
    %3193 = vmatpush1.msra.mxu0 %v3159
    %3194 = vmatprep.subr.mxu0 0.0
    %3195 = vmatpush1.msra.mxu0 0.0
    %3196 = vmatprep.subr.mxu0 0.0
    %3197 = vmatpush1.msra.mxu0 0.0
    %3198 = vmatprep.subr.mxu0 0.0
    %3199 = vmatpush1.msra.mxu0 0.0
    %3200 = vmatprep.subr.mxu0 0.0
    %3201 = vmatpush1.msra.mxu0 0.0
    %3202 = vmatprep.subr.mxu0 0.0
    %3203 = vmatpush1.msra.mxu0 0.0
    %3204 = vmatprep.subr.mxu0 0.0
    %3205 = vmatpush1.msra.mxu0 0.0
    %3206 = vmatprep.subr.mxu0 0.0
    %3207 = vmatpush1.msra.mxu0 0.0
    %3208 = vmatprep.subr.mxu0 0.0
    %3209 = vmatpush1.msra.mxu0 0.0
    %3210 = vmatprep.subr.mxu0 0.0
    %3211 = vmatpush1.msra.mxu0 0.0
    %3212 = vmatprep.subr.mxu0 0.0
    %3213 = vmatpush1.msra.mxu0 0.0
    %3214 = vmatprep.subr.mxu0 0.0
    %3215 = vmatpush1.msra.mxu0 0.0
    %3216 = vmatprep.subr.mxu0 0.0
    %3217 = vmatpush1.msra.mxu0 0.0
    %3218 = vmatprep.subr.mxu0 0.0
    %3219 = vmatpush1.msra.mxu0 0.0
    %3220 = vmatprep.subr.mxu0 0.0
    %3221 = vmatpush1.msra.mxu0 0.0
    %3222 = vmatprep.subr.mxu0 0.0
    %3223 = vmatpush1.msra.mxu0 0.0
    %3224 = vmatprep.subr.mxu0 0.0
    %3225 = vmatpush1.msra.mxu0 0.0
    %3226 = vmatprep.subr.mxu0 0.0
    %3227 = vmatpush1.msra.mxu0 0.0
    %3228 = vmatprep.subr.mxu0 0.0
    %3229 = vmatpush1.msra.mxu0 0.0
    %3230 = vmatprep.subr.mxu0 0.0
    %3231 = vmatpush1.msra.mxu0 0.0
    %3232 = vmatprep.subr.mxu0 0.0
    %3233 = vmatpush1.msra.mxu0 0.0
    %3234 = vmatprep.subr.mxu0 0.0
    %3235 = vmatpush1.msra.mxu0 0.0
    %3236 = vmatprep.subr.mxu0 0.0
    %3237 = vmatpush1.msra.mxu0 0.0
    %3238 = vmatprep.subr.mxu0 0.0
    %3239 = vmatpush1.msra.mxu0 0.0
    %3240 = vmatprep.subr.mxu0 0.0
    %3241 = vmatpush1.msra.mxu0 0.0
    %3242 = vmatprep.subr.mxu0 0.0
    %3243 = vmatpush1.msra.mxu0 0.0
    %3244 = vmatprep.subr.mxu0 0.0
    %3245 = vmatpush1.msra.mxu0 0.0
    %3246 = vmatprep.subr.mxu0 0.0
    %3247 = vmatpush1.msra.mxu0 0.0
    %3248 = vmatprep.subr.mxu0 0.0
    %3249 = vmatpush1.msra.mxu0 0.0
    %3250 = vmatprep.mubr.f32.mxu0 0.0
    %3251 = vmatmul.mubr.f32.gmra.mrb[0].mxu0 %v3169
    %v3252 = vpop.f32.mrb[0].mxu0
    %v3253 = vadd.f32 %v3166, %v3252
    %v3254 = vpop.f32.mrb[0].mxu0
    %3255 = vmatprep.mubr.f32.mxu0 0.0
    %3256 = vmatmul.mubr.f32.gmra.mrb[0].mxu0 %v3172
    %v3257 = vpop.f32.mrb[0].mxu0
    %v3258 = vadd.f32 %v3166, %v3257
    %v3259 = vpop.f32.mrb[0].mxu0
    %3260 = vmatprep.mubr.f32.mxu0 0.0
    %3261 = vmatmul.mubr.f32.gmra.mrb[0].mxu0 %v3175
    %v3262 = vpop.f32.mrb[0].mxu0
    %v3263 = vadd.f32 %v3166, %v3262
    %v3264 = vpop.f32.mrb[0].mxu0
    %3265 = vmatprep.mubr.f32.mxu0 0.0
    %3266 = vmatmul.mubr.f32.gmra.mrb[0].mxu0 %v3178
    %v3267 = vpop.f32.mrb[0].mxu0
    %v3268 = vadd.f32 %v3166, %v3267
    %v3269 = vpop.f32.mrb[0].mxu0
    %3270 = vmatprep.mubr.f32.mxu0 0.0
    %3271 = vmatmul.mubr.f32.gmra.mrb[0].mxu0 %v3181
    %v3272 = vpop.f32.mrb[0].mxu0
    %v3273 = vadd.f32 %v3166, %v3272
    %v3274 = vpop.f32.mrb[0].mxu0
    %3275 = vmatprep.mubr.f32.mxu0 0.0
    %3276 = vmatmul.mubr.f32.gmra.mrb[0].mxu0 %v3184
    %v3277 = vpop.f32.mrb[0].mxu0
    %v3278 = vadd.f32 %v3166, %v3277
    %v3279 = vpop.f32.mrb[0].mxu0
    %3280 = vdwg.mxu0
    %3284 = vrot.lane.b32.xlu0 %v3253, 96
    %v3285 = vpop.permute.xlu0 %3284
    %3286 = vrot.lane.b32.xlu0 %v3258, 96
    %v3287 = vpop.permute.xlu0 %3286
    %3288 = vrot.lane.b32.xlu0 %v3263, 96
    %v3289 = vpop.permute.xlu0 %3288
    %v3290 = vsel %vm160, %v3253, 0
    %v3292 = vsel %vm160, %v3258, 0
    %v3294 = vsel %vm160, %v3263, 0
    %v3296 = vsel %vm160, %v3285, 0
    %v3298 = vsel %vm160, %v3287, 0
    %v3300 = vsel %vm160, %v3289, 0
    %3302 = vmatprep.subr.mxu0 0.0
    %3303 = vmatpush1.xpose.msra.mxu0 %v3296
    %3304 = vmatprep.subr.mxu0 0.0
    %3305 = vmatpush1.xpose.msra.mxu0 %v3298
    %3306 = vmatprep.subr.mxu0 0.0
    %3307 = vmatpush1.xpose.msra.mxu0 %v3300
    %3308 = vmatprep.subr.mxu0 0.0
    %3309 = vmatpush1.xpose.msra.mxu0 0.0
    %3310 = vmatprep.subr.mxu0 0.0
    %3311 = vmatpush1.xpose.msra.mxu0 0.0
    %3312 = vmatprep.subr.mxu0 0.0
    %3313 = vmatpush1.xpose.msra.mxu0 0.0
    %3314 = vmatprep.subr.mxu0 0.0
    %3315 = vmatpush1.xpose.msra.mxu0 0.0
    %3316 = vmatprep.subr.mxu0 0.0
    %3317 = vmatpush1.xpose.msra.mxu0 0.0
    %3318 = vmatprep.subr.mxu0 0.0
    %3319 = vmatpush1.xpose.msra.mxu0 0.0
    %3320 = vmatprep.subr.mxu0 0.0
    %3321 = vmatpush1.xpose.msra.mxu0 0.0
    %3322 = vmatprep.subr.mxu0 0.0
    %3323 = vmatpush1.xpose.msra.mxu0 0.0
    %3324 = vmatprep.subr.mxu0 0.0
    %3325 = vmatpush1.xpose.msra.mxu0 0.0
    %3326 = vmatprep.subr.mxu0 0.0
    %3327 = vmatpush1.xpose.msra.mxu0 0.0
    %3328 = vmatprep.subr.mxu0 0.0
    %3329 = vmatpush1.xpose.msra.mxu0 0.0
    %3330 = vmatprep.subr.mxu0 0.0
    %3331 = vmatpush1.xpose.msra.mxu0 0.0
    %3332 = vmatprep.subr.mxu0 0.0
    %3333 = vmatpush1.xpose.msra.mxu0 0.0
    %3334 = vmatprep.subr.mxu0 0.0
    %3335 = vmatpush1.xpose.msra.mxu0 0.0
    %3336 = vmatprep.subr.mxu0 0.0
    %3337 = vmatpush1.xpose.msra.mxu0 0.0
    %3338 = vmatprep.subr.mxu0 0.0
    %3339 = vmatpush1.xpose.msra.mxu0 0.0
    %3340 = vmatprep.subr.mxu0 0.0
    %3341 = vmatpush1.xpose.msra.mxu0 0.0
    %3342 = vmatprep.subr.mxu0 0.0
    %3343 = vmatpush1.xpose.msra.mxu0 0.0
    %3344 = vmatprep.subr.mxu0 0.0
    %3345 = vmatpush1.xpose.msra.mxu0 0.0
    %3346 = vmatprep.subr.mxu0 0.0
    %3347 = vmatpush1.xpose.msra.mxu0 0.0
    %3348 = vmatprep.subr.mxu0 0.0
    %3349 = vmatpush1.xpose.msra.mxu0 0.0
    %3350 = vmatprep.subr.mxu0 0.0
    %3351 = vmatpush1.xpose.msra.mxu0 0.0
    %3352 = vmatprep.subr.mxu0 0.0
    %3353 = vmatpush1.xpose.msra.mxu0 0.0
    %3354 = vmatprep.subr.mxu0 0.0
    %3355 = vmatpush1.xpose.msra.mxu0 0.0
    %3356 = vmatprep.subr.mxu0 0.0
    %3357 = vmatpush1.xpose.msra.mxu0 0.0
    %3358 = vmatprep.subr.mxu0 0.0
    %3359 = vmatpush1.xpose.msra.mxu0 0.0
    %3360 = vmatprep.subr.mxu0 0.0
    %3361 = vmatpush1.xpose.msra.mxu0 0.0
    %3362 = vmatprep.subr.mxu0 0.0
    %3363 = vmatpush1.xpose.msra.mxu0 0.0
    %3364 = vmatprep.subr.mxu0 0.0
    %3365 = vmatpush1.xpose.msra.mxu0 0.0
    %3366 = vmatprep.mubr.f32.mxu0 0.0
    %3367 = vmatmul.mubr.f32.gmra.mrb[0].mxu0 %v3290
    %v3368 = vpop.f32.mrb[0].mxu0
    %v3369 = vadd.f32 0.0, %v3368
    %v3370 = vpop.f32.mrb[0].mxu0
    %3371 = vmatprep.mubr.f32.mxu0 0.0
    %3372 = vmatmul.mubr.f32.gmra.mrb[0].mxu0 %v3292
    %v3373 = vpop.f32.mrb[0].mxu0
    %v3374 = vadd.f32 0.0, %v3373
    %v3375 = vpop.f32.mrb[0].mxu0
    %3376 = vmatprep.mubr.f32.mxu0 0.0
    %3377 = vmatmul.mubr.f32.gmra.mrb[0].mxu0 %v3294
    %v3378 = vpop.f32.mrb[0].mxu0
    %v3379 = vadd.f32 0.0, %v3378
    %v3380 = vpop.f32.mrb[0].mxu0
    %3381 = vdwg.mxu0
    %v3382 = vmul.f32 %v3369, 0.35355338
    %v3383 = vmul.f32 %v3374, 0.35355338
    %v3384 = vmul.f32 %v3379, 0.35355338
    %v3385 = vadd.f32 %v3382, %v143
    %v3386 = vadd.f32 %v3383, %v143
    %v3387 = vadd.f32 %v3384, %v143
    %v3388 = vsel %vm623, %v3385, -inf
    %3389 = vmax.xlane.f32.xlu0 %v3388
    %v3390 = vpop.xlane.xlu0 %3389
    %v3391 = vsel %vm623, %v3386, -inf
    %3392 = vmax.xlane.f32.xlu0 %v3391
    %v3393 = vpop.xlane.xlu0 %3392
    %v3394 = vsel %vm623, %v3387, -inf
    %3395 = vmax.xlane.f32.xlu0 %v3394
    %v3396 = vpop.xlane.xlu0 %3395
    %v3397 = vsub.f32 %v3385, %v3390
    %v3398 = vsub.f32 %v3386, %v3393
    %v3399 = vsub.f32 %v3387, %v3396
    %v3400 = vmul.f32 %v3397, 1.442695
    %v3401 = vpow.pop %v3400
    %v3402 = vmul.f32 %v3398, 1.442695
    %v3403 = vpow.pop %v3402
    %v3404 = vmul.f32 %v3399, 1.442695
    %v3405 = vpow.pop %v3404
    %v3406 = vsel %vm623, %v3401, 0.0
    %3407 = vadd.xlane.f32.xlu0 %v3406
    %v3408 = vpop.xlane.xlu0 %3407
    %v3409 = vsel %vm623, %v3403, 0.0
    %3410 = vadd.xlane.f32.xlu0 %v3409
    %v3411 = vpop.xlane.xlu0 %3410
    %v3412 = vsel %vm623, %v3405, 0.0
    %3413 = vadd.xlane.f32.xlu0 %v3412
    %v3414 = vpop.xlane.xlu0 %3413
    %v3415 = vrcp.pop %v3408
    %v3416 = vrcp.pop %v3411
    %v3417 = vrcp.pop %v3414
    %v3418 = vmul.f32 %v3401, %v3415
    %v3419 = vmul.f32 %v3403, %v3416
    %v3420 = vmul.f32 %v3405, %v3417
    %3421 = vrot.lane.b32.xlu0 %v3253, 64
    %v3422 = vpop.permute.xlu0 %3421
    %3423 = vrot.lane.b32.xlu0 %v3258, 64
    %v3424 = vpop.permute.xlu0 %3423
    %3425 = vrot.lane.b32.xlu0 %v3263, 64
    %v3426 = vpop.permute.xlu0 %3425
    %v3431 = vsel %vm623, %v3418, 0
    %v3434 = vsel %vm623, %v3419, 0
    %v3437 = vsel %vm623, %v3420, 0
    %3439 = vmatprep.subr.mxu0 0.0
    %3440 = vmatpush1.msra.mxu0 %v3422
    %3441 = vmatprep.subr.mxu0 0.0
    %3442 = vmatpush1.msra.mxu0 %v3424
    %3443 = vmatprep.subr.mxu0 0.0
    %3444 = vmatpush1.msra.mxu0 %v3426
    %3445 = vmatprep.subr.mxu0 0.0
    %3446 = vmatpush1.msra.mxu0 0.0
    %3447 = vmatprep.subr.mxu0 0.0
    %3448 = vmatpush1.msra.mxu0 0.0
    %3449 = vmatprep.subr.mxu0 0.0
    %3450 = vmatpush1.msra.mxu0 0.0
    %3451 = vmatprep.subr.mxu0 0.0
    %3452 = vmatpush1.msra.mxu0 0.0
    %3453 = vmatprep.subr.mxu0 0.0
    %3454 = vmatpush1.msra.mxu0 0.0
    %3455 = vmatprep.subr.mxu0 0.0
    %3456 = vmatpush1.msra.mxu0 0.0
    %3457 = vmatprep.subr.mxu0 0.0
    %3458 = vmatpush1.msra.mxu0 0.0
    %3459 = vmatprep.subr.mxu0 0.0
    %3460 = vmatpush1.msra.mxu0 0.0
    %3461 = vmatprep.subr.mxu0 0.0
    %3462 = vmatpush1.msra.mxu0 0.0
    %3463 = vmatprep.subr.mxu0 0.0
    %3464 = vmatpush1.msra.mxu0 0.0
    %3465 = vmatprep.subr.mxu0 0.0
    %3466 = vmatpush1.msra.mxu0 0.0
    %3467 = vmatprep.subr.mxu0 0.0
    %3468 = vmatpush1.msra.mxu0 0.0
    %3469 = vmatprep.subr.mxu0 0.0
    %3470 = vmatpush1.msra.mxu0 0.0
    %3471 = vmatprep.subr.mxu0 0.0
    %3472 = vmatpush1.msra.mxu0 0.0
    %3473 = vmatprep.subr.mxu0 0.0
    %3474 = vmatpush1.msra.mxu0 0.0
    %3475 = vmatprep.subr.mxu0 0.0
    %3476 = vmatpush1.msra.mxu0 0.0
    %3477 = vmatprep.subr.mxu0 0.0
    %3478 = vmatpush1.msra.mxu0 0.0
    %3479 = vmatprep.subr.mxu0 0.0
    %3480 = vmatpush1.msra.mxu0 0.0
    %3481 = vmatprep.subr.mxu0 0.0
    %3482 = vmatpush1.msra.mxu0 0.0
    %3483 = vmatprep.subr.mxu0 0.0
    %3484 = vmatpush1.msra.mxu0 0.0
    %3485 = vmatprep.subr.mxu0 0.0
    %3486 = vmatpush1.msra.mxu0 0.0
    %3487 = vmatprep.subr.mxu0 0.0
    %3488 = vmatpush1.msra.mxu0 0.0
    %3489 = vmatprep.subr.mxu0 0.0
    %3490 = vmatpush1.msra.mxu0 0.0
    %3491 = vmatprep.subr.mxu0 0.0
    %3492 = vmatpush1.msra.mxu0 0.0
    %3493 = vmatprep.subr.mxu0 0.0
    %3494 = vmatpush1.msra.mxu0 0.0
    %3495 = vmatprep.subr.mxu0 0.0
    %3496 = vmatpush1.msra.mxu0 0.0
    %3497 = vmatprep.subr.mxu0 0.0
    %3498 = vmatpush1.msra.mxu0 0.0
    %3499 = vmatprep.subr.mxu0 0.0
    %3500 = vmatpush1.msra.mxu0 0.0
    %3501 = vmatprep.subr.mxu0 0.0
    %3502 = vmatpush1.msra.mxu0 0.0
    %3503 = vmatprep.mubr.f32.mxu0 0.0
    %3504 = vmatmul.mubr.f32.gmra.mrb[0].mxu0 %v3431
    %v3505 = vpop.f32.mrb[0].mxu0
    %v3506 = vadd.f32 0.0, %v3505
    %v3507 = vpop.f32.mrb[0].mxu0
    %3508 = vmatprep.mubr.f32.mxu0 0.0
    %3509 = vmatmul.mubr.f32.gmra.mrb[0].mxu0 %v3434
    %v3510 = vpop.f32.mrb[0].mxu0
    %v3511 = vadd.f32 0.0, %v3510
    %v3512 = vpop.f32.mrb[0].mxu0
    %3513 = vmatprep.mubr.f32.mxu0 0.0
    %3514 = vmatmul.mubr.f32.gmra.mrb[0].mxu0 %v3437
    %v3515 = vpop.f32.mrb[0].mxu0
    %v3516 = vadd.f32 0.0, %v3515
    %v3517 = vpop.f32.mrb[0].mxu0
    %3518 = vdwg.mxu0
    %3519 = vst.msk [vmem:[#allocation3] sm:$0xff] %vm160, %v3506
    %3520 = vst.msk [vmem:[#allocation3 + $0x8] sm:$0xff] %vm160, %v3511
    %3521 = vst.msk [vmem:[#allocation3 + $0x10] sm:$0xff] %vm160, %v3516
    %3522 = vrot.lane.b32.xlu0 %v3253, 120
    %v3523 = vpop.permute.xlu0 %3522
    %3524 = vrot.lane.b32.xlu0 %v3258, 120
    %v3525 = vpop.permute.xlu0 %3524
    %3526 = vrot.lane.b32.xlu0 %v3263, 120
    %v3527 = vpop.permute.xlu0 %3526
    %3528 = vrot.lane.b32.xlu0 %v3253, 88
    %v3529 = vpop.permute.xlu0 %3528
    %3530 = vrot.lane.b32.xlu0 %v3258, 88
    %v3531 = vpop.permute.xlu0 %3530
    %3532 = vrot.lane.b32.xlu0 %v3263, 88
    %v3533 = vpop.permute.xlu0 %3532
    %v3534 = vsel %vm160, %v3523, 0
    %v3536 = vsel %vm160, %v3525, 0
    %v3538 = vsel %vm160, %v3527, 0
    %v3540 = vsel %vm160, %v3529, 0
    %v3542 = vsel %vm160, %v3531, 0
    %v3544 = vsel %vm160, %v3533, 0
    %3546 = vmatprep.subr.mxu0 0.0
    %3547 = vmatpush1.xpose.msra.mxu0 %v3540
    %3548 = vmatprep.subr.mxu0 0.0
    %3549 = vmatpush1.xpose.msra.mxu0 %v3542
    %3550 = vmatprep.subr.mxu0 0.0
    %3551 = vmatpush1.xpose.msra.mxu0 %v3544
    %3552 = vmatprep.subr.mxu0 0.0
    %3553 = vmatpush1.xpose.msra.mxu0 0.0
    %3554 = vmatprep.subr.mxu0 0.0
    %3555 = vmatpush1.xpose.msra.mxu0 0.0
    %3556 = vmatprep.subr.mxu0 0.0
    %3557 = vmatpush1.xpose.msra.mxu0 0.0
    %3558 = vmatprep.subr.mxu0 0.0
    %3559 = vmatpush1.xpose.msra.mxu0 0.0
    %3560 = vmatprep.subr.mxu0 0.0
    %3561 = vmatpush1.xpose.msra.mxu0 0.0
    %3562 = vmatprep.subr.mxu0 0.0
    %3563 = vmatpush1.xpose.msra.mxu0 0.0
    %3564 = vmatprep.subr.mxu0 0.0
    %3565 = vmatpush1.xpose.msra.mxu0 0.0
    %3566 = vmatprep.subr.mxu0 0.0
    %3567 = vmatpush1.xpose.msra.mxu0 0.0
    %3568 = vmatprep.subr.mxu0 0.0
    %3569 = vmatpush1.xpose.msra.mxu0 0.0
    %3570 = vmatprep.subr.mxu0 0.0
    %3571 = vmatpush1.xpose.msra.mxu0 0.0
    %3572 = vmatprep.subr.mxu0 0.0
    %3573 = vmatpush1.xpose.msra.mxu0 0.0
    %3574 = vmatprep.subr.mxu0 0.0
    %3575 = vmatpush1.xpose.msra.mxu0 0.0
    %3576 = vmatprep.subr.mxu0 0.0
    %3577 = vmatpush1.xpose.msra.mxu0 0.0
    %3578 = vmatprep.subr.mxu0 0.0
    %3579 = vmatpush1.xpose.msra.mxu0 0.0
    %3580 = vmatprep.subr.mxu0 0.0
    %3581 = vmatpush1.xpose.msra.mxu0 0.0
    %3582 = vmatprep.subr.mxu0 0.0
    %3583 = vmatpush1.xpose.msra.mxu0 0.0
    %3584 = vmatprep.subr.mxu0 0.0
    %3585 = vmatpush1.xpose.msra.mxu0 0.0
    %3586 = vmatprep.subr.mxu0 0.0
    %3587 = vmatpush1.xpose.msra.mxu0 0.0
    %3588 = vmatprep.subr.mxu0 0.0
    %3589 = vmatpush1.xpose.msra.mxu0 0.0
    %3590 = vmatprep.subr.mxu0 0.0
    %3591 = vmatpush1.xpose.msra.mxu0 0.0
    %3592 = vmatprep.subr.mxu0 0.0
    %3593 = vmatpush1.xpose.msra.mxu0 0.0
    %3594 = vmatprep.subr.mxu0 0.0
    %3595 = vmatpush1.xpose.msra.mxu0 0.0
    %3596 = vmatprep.subr.mxu0 0.0
    %3597 = vmatpush1.xpose.msra.mxu0 0.0
    %3598 = vmatprep.subr.mxu0 0.0
    %3599 = vmatpush1.xpose.msra.mxu0 0.0
    %3600 = vmatprep.subr.mxu0 0.0
    %3601 = vmatpush1.xpose.msra.mxu0 0.0
    %3602 = vmatprep.subr.mxu0 0.0
    %3603 = vmatpush1.xpose.msra.mxu0 0.0
    %3604 = vmatprep.subr.mxu0 0.0
    %3605 = vmatpush1.xpose.msra.mxu0 0.0
    %3606 = vmatprep.subr.mxu0 0.0
    %3607 = vmatpush1.xpose.msra.mxu0 0.0
    %3608 = vmatprep.subr.mxu0 0.0
    %3609 = vmatpush1.xpose.msra.mxu0 0.0
    %3610 = vmatprep.mubr.f32.mxu0 0.0
    %3611 = vmatmul.mubr.f32.gmra.mrb[0].mxu0 %v3534
    %v3612 = vpop.f32.mrb[0].mxu0
    %v3613 = vadd.f32 0.0, %v3612
    %v3614 = vpop.f32.mrb[0].mxu0
    %3615 = vmatprep.mubr.f32.mxu0 0.0
    %3616 = vmatmul.mubr.f32.gmra.mrb[0].mxu0 %v3536
    %v3617 = vpop.f32.mrb[0].mxu0
    %v3618 = vadd.f32 0.0, %v3617
    %v3619 = vpop.f32.mrb[0].mxu0
    %3620 = vmatprep.mubr.f32.mxu0 0.0
    %3621 = vmatmul.mubr.f32.gmra.mrb[0].mxu0 %v3538
    %v3622 = vpop.f32.mrb[0].mxu0
    %v3623 = vadd.f32 0.0, %v3622
    %v3624 = vpop.f32.mrb[0].mxu0
    %3625 = vdwg.mxu0
    %v3626 = vmul.f32 %v3613, 0.35355338
    %v3627 = vmul.f32 %v3618, 0.35355338
    %v3628 = vmul.f32 %v3623, 0.35355338
    %v3629 = vadd.f32 %v3626, %v143
    %v3630 = vadd.f32 %v3627, %v143
    %v3631 = vadd.f32 %v3628, %v143
    %v3632 = vsel %vm623, %v3629, -inf
    %3633 = vmax.xlane.f32.xlu0 %v3632
    %v3634 = vpop.xlane.xlu0 %3633
    %v3635 = vsel %vm623, %v3630, -inf
    %3636 = vmax.xlane.f32.xlu0 %v3635
    %v3637 = vpop.xlane.xlu0 %3636
    %v3638 = vsel %vm623, %v3631, -inf
    %3639 = vmax.xlane.f32.xlu0 %v3638
    %v3640 = vpop.xlane.xlu0 %3639
    %v3641 = vsub.f32 %v3629, %v3634
    %v3642 = vsub.f32 %v3630, %v3637
    %v3643 = vsub.f32 %v3631, %v3640
    %v3644 = vmul.f32 %v3641, 1.442695
    %v3645 = vpow.pop %v3644
    %v3646 = vmul.f32 %v3642, 1.442695
    %v3647 = vpow.pop %v3646
    %v3648 = vmul.f32 %v3643, 1.442695
    %v3649 = vpow.pop %v3648
    %v3650 = vsel %vm623, %v3645, 0.0
    %3651 = vadd.xlane.f32.xlu0 %v3650
    %v3652 = vpop.xlane.xlu0 %3651
    %v3653 = vsel %vm623, %v3647, 0.0
    %3654 = vadd.xlane.f32.xlu0 %v3653
    %v3655 = vpop.xlane.xlu0 %3654
    %v3656 = vsel %vm623, %v3649, 0.0
    %3657 = vadd.xlane.f32.xlu0 %v3656
    %v3658 = vpop.xlane.xlu0 %3657
    %v3659 = vrcp.pop %v3652
    %v3660 = vrcp.pop %v3655
    %v3661 = vrcp.pop %v3658
    %v3662 = vmul.f32 %v3645, %v3659
    %v3663 = vmul.f32 %v3647, %v3660
    %v3664 = vmul.f32 %v3649, %v3661
    %3665 = vrot.lane.b32.xlu0 %v3253, 56
    %v3666 = vpop.permute.xlu0 %3665
    %3667 = vrot.lane.b32.xlu0 %v3258, 56
    %v3668 = vpop.permute.xlu0 %3667
    %3669 = vrot.lane.b32.xlu0 %v3263, 56
    %v3670 = vpop.permute.xlu0 %3669
    %v3675 = vsel %vm623, %v3662, 0
    %v3678 = vsel %vm623, %v3663, 0
    %v3681 = vsel %vm623, %v3664, 0
    %3683 = vmatprep.subr.mxu0 0.0
    %3684 = vmatpush1.msra.mxu0 %v3666
    %3685 = vmatprep.subr.mxu0 0.0
    %3686 = vmatpush1.msra.mxu0 %v3668
    %3687 = vmatprep.subr.mxu0 0.0
    %3688 = vmatpush1.msra.mxu0 %v3670
    %3689 = vmatprep.subr.mxu0 0.0
    %3690 = vmatpush1.msra.mxu0 0.0
    %3691 = vmatprep.subr.mxu0 0.0
    %3692 = vmatpush1.msra.mxu0 0.0
    %3693 = vmatprep.subr.mxu0 0.0
    %3694 = vmatpush1.msra.mxu0 0.0
    %3695 = vmatprep.subr.mxu0 0.0
    %3696 = vmatpush1.msra.mxu0 0.0
    %3697 = vmatprep.subr.mxu0 0.0
    %3698 = vmatpush1.msra.mxu0 0.0
    %3699 = vmatprep.subr.mxu0 0.0
    %3700 = vmatpush1.msra.mxu0 0.0
    %3701 = vmatprep.subr.mxu0 0.0
    %3702 = vmatpush1.msra.mxu0 0.0
    %3703 = vmatprep.subr.mxu0 0.0
    %3704 = vmatpush1.msra.mxu0 0.0
    %3705 = vmatprep.subr.mxu0 0.0
    %3706 = vmatpush1.msra.mxu0 0.0
    %3707 = vmatprep.subr.mxu0 0.0
    %3708 = vmatpush1.msra.mxu0 0.0
    %3709 = vmatprep.subr.mxu0 0.0
    %3710 = vmatpush1.msra.mxu0 0.0
    %3711 = vmatprep.subr.mxu0 0.0
    %3712 = vmatpush1.msra.mxu0 0.0
    %3713 = vmatprep.subr.mxu0 0.0
    %3714 = vmatpush1.msra.mxu0 0.0
    %3715 = vmatprep.subr.mxu0 0.0
    %3716 = vmatpush1.msra.mxu0 0.0
    %3717 = vmatprep.subr.mxu0 0.0
    %3718 = vmatpush1.msra.mxu0 0.0
    %3719 = vmatprep.subr.mxu0 0.0
    %3720 = vmatpush1.msra.mxu0 0.0
    %3721 = vmatprep.subr.mxu0 0.0
    %3722 = vmatpush1.msra.mxu0 0.0
    %3723 = vmatprep.subr.mxu0 0.0
    %3724 = vmatpush1.msra.mxu0 0.0
    %3725 = vmatprep.subr.mxu0 0.0
    %3726 = vmatpush1.msra.mxu0 0.0
    %3727 = vmatprep.subr.mxu0 0.0
    %3728 = vmatpush1.msra.mxu0 0.0
    %3729 = vmatprep.subr.mxu0 0.0
    %3730 = vmatpush1.msra.mxu0 0.0
    %3731 = vmatprep.subr.mxu0 0.0
    %3732 = vmatpush1.msra.mxu0 0.0
    %3733 = vmatprep.subr.mxu0 0.0
    %3734 = vmatpush1.msra.mxu0 0.0
    %3735 = vmatprep.subr.mxu0 0.0
    %3736 = vmatpush1.msra.mxu0 0.0
    %3737 = vmatprep.subr.mxu0 0.0
    %3738 = vmatpush1.msra.mxu0 0.0
    %3739 = vmatprep.subr.mxu0 0.0
    %3740 = vmatpush1.msra.mxu0 0.0
    %3741 = vmatprep.subr.mxu0 0.0
    %3742 = vmatpush1.msra.mxu0 0.0
    %3743 = vmatprep.subr.mxu0 0.0
    %3744 = vmatpush1.msra.mxu0 0.0
    %3745 = vmatprep.subr.mxu0 0.0
    %3746 = vmatpush1.msra.mxu0 0.0
    %3747 = vmatprep.mubr.f32.mxu0 0.0
    %3748 = vmatmul.mubr.f32.gmra.mrb[0].mxu0 %v3675
    %v3749 = vpop.f32.mrb[0].mxu0
    %v3750 = vadd.f32 0.0, %v3749
    %v3751 = vpop.f32.mrb[0].mxu0
    %3752 = vmatprep.mubr.f32.mxu0 0.0
    %3753 = vmatmul.mubr.f32.gmra.mrb[0].mxu0 %v3678
    %v3754 = vpop.f32.mrb[0].mxu0
    %v3755 = vadd.f32 0.0, %v3754
    %v3756 = vpop.f32.mrb[0].mxu0
    %3757 = vmatprep.mubr.f32.mxu0 0.0
    %3758 = vmatmul.mubr.f32.gmra.mrb[0].mxu0 %v3681
    %v3759 = vpop.f32.mrb[0].mxu0
    %v3760 = vadd.f32 0.0, %v3759
    %v3761 = vpop.f32.mrb[0].mxu0
    %3762 = vdwg.mxu0
    %3766 = vrot.lane.b32.xlu0 %v3750, 8
    %v3767 = vpop.permute.xlu0 %3766
    %3768 = vrot.lane.b32.xlu0 %v3755, 8
    %v3769 = vpop.permute.xlu0 %3768
    %3770 = vrot.lane.b32.xlu0 %v3760, 8
    %v3771 = vpop.permute.xlu0 %3770
    %3775 = vst.msk [vmem:[#allocation3] sm:$0xff] %vm1011, %v3767
    %3776 = vst.msk [vmem:[#allocation3 + $0x8] sm:$0xff] %vm1011, %v3769
    %3777 = vst.msk [vmem:[#allocation3 + $0x10] sm:$0xff] %vm1011, %v3771
    %3778 = vrot.lane.b32.xlu0 %v3253, 112
    %v3779 = vpop.permute.xlu0 %3778
    %3780 = vrot.lane.b32.xlu0 %v3258, 112
    %v3781 = vpop.permute.xlu0 %3780
    %3782 = vrot.lane.b32.xlu0 %v3263, 112
    %v3783 = vpop.permute.xlu0 %3782
    %3784 = vrot.lane.b32.xlu0 %v3253, 80
    %v3785 = vpop.permute.xlu0 %3784
    %3786 = vrot.lane.b32.xlu0 %v3258, 80
    %v3787 = vpop.permute.xlu0 %3786
    %3788 = vrot.lane.b32.xlu0 %v3263, 80
    %v3789 = vpop.permute.xlu0 %3788
    %v3790 = vsel %vm160, %v3779, 0
    %v3792 = vsel %vm160, %v3781, 0
    %v3794 = vsel %vm160, %v3783, 0
    %v3796 = vsel %vm160, %v3785, 0
    %v3798 = vsel %vm160, %v3787, 0
    %v3800 = vsel %vm160, %v3789, 0
    %3802 = vmatprep.subr.mxu0 0.0
    %3803 = vmatpush1.xpose.msra.mxu0 %v3796
    %3804 = vmatprep.subr.mxu0 0.0
    %3805 = vmatpush1.xpose.msra.mxu0 %v3798
    %3806 = vmatprep.subr.mxu0 0.0
    %3807 = vmatpush1.xpose.msra.mxu0 %v3800
    %3808 = vmatprep.subr.mxu0 0.0
    %3809 = vmatpush1.xpose.msra.mxu0 0.0
    %3810 = vmatprep.subr.mxu0 0.0
    %3811 = vmatpush1.xpose.msra.mxu0 0.0
    %3812 = vmatprep.subr.mxu0 0.0
    %3813 = vmatpush1.xpose.msra.mxu0 0.0
    %3814 = vmatprep.subr.mxu0 0.0
    %3815 = vmatpush1.xpose.msra.mxu0 0.0
    %3816 = vmatprep.subr.mxu0 0.0
    %3817 = vmatpush1.xpose.msra.mxu0 0.0
    %3818 = vmatprep.subr.mxu0 0.0
    %3819 = vmatpush1.xpose.msra.mxu0 0.0
    %3820 = vmatprep.subr.mxu0 0.0
    %3821 = vmatpush1.xpose.msra.mxu0 0.0
    %3822 = vmatprep.subr.mxu0 0.0
    %3823 = vmatpush1.xpose.msra.mxu0 0.0
    %3824 = vmatprep.subr.mxu0 0.0
    %3825 = vmatpush1.xpose.msra.mxu0 0.0
    %3826 = vmatprep.subr.mxu0 0.0
    %3827 = vmatpush1.xpose.msra.mxu0 0.0
    %3828 = vmatprep.subr.mxu0 0.0
    %3829 = vmatpush1.xpose.msra.mxu0 0.0
    %3830 = vmatprep.subr.mxu0 0.0
    %3831 = vmatpush1.xpose.msra.mxu0 0.0
    %3832 = vmatprep.subr.mxu0 0.0
    %3833 = vmatpush1.xpose.msra.mxu0 0.0
    %3834 = vmatprep.subr.mxu0 0.0
    %3835 = vmatpush1.xpose.msra.mxu0 0.0
    %3836 = vmatprep.subr.mxu0 0.0
    %3837 = vmatpush1.xpose.msra.mxu0 0.0
    %3838 = vmatprep.subr.mxu0 0.0
    %3839 = vmatpush1.xpose.msra.mxu0 0.0
    %3840 = vmatprep.subr.mxu0 0.0
    %3841 = vmatpush1.xpose.msra.mxu0 0.0
    %3842 = vmatprep.subr.mxu0 0.0
    %3843 = vmatpush1.xpose.msra.mxu0 0.0
    %3844 = vmatprep.subr.mxu0 0.0
    %3845 = vmatpush1.xpose.msra.mxu0 0.0
    %3846 = vmatprep.subr.mxu0 0.0
    %3847 = vmatpush1.xpose.msra.mxu0 0.0
    %3848 = vmatprep.subr.mxu0 0.0
    %3849 = vmatpush1.xpose.msra.mxu0 0.0
    %3850 = vmatprep.subr.mxu0 0.0
    %3851 = vmatpush1.xpose.msra.mxu0 0.0
    %3852 = vmatprep.subr.mxu0 0.0
    %3853 = vmatpush1.xpose.msra.mxu0 0.0
    %3854 = vmatprep.subr.mxu0 0.0
    %3855 = vmatpush1.xpose.msra.mxu0 0.0
    %3856 = vmatprep.subr.mxu0 0.0
    %3857 = vmatpush1.xpose.msra.mxu0 0.0
    %3858 = vmatprep.subr.mxu0 0.0
    %3859 = vmatpush1.xpose.msra.mxu0 0.0
    %3860 = vmatprep.subr.mxu0 0.0
    %3861 = vmatpush1.xpose.msra.mxu0 0.0
    %3862 = vmatprep.subr.mxu0 0.0
    %3863 = vmatpush1.xpose.msra.mxu0 0.0
    %3864 = vmatprep.subr.mxu0 0.0
    %3865 = vmatpush1.xpose.msra.mxu0 0.0
    %3866 = vmatprep.mubr.f32.mxu0 0.0
    %3867 = vmatmul.mubr.f32.gmra.mrb[0].mxu0 %v3790
    %v3868 = vpop.f32.mrb[0].mxu0
    %v3869 = vadd.f32 0.0, %v3868
    %v3870 = vpop.f32.mrb[0].mxu0
    %3871 = vmatprep.mubr.f32.mxu0 0.0
    %3872 = vmatmul.mubr.f32.gmra.mrb[0].mxu0 %v3792
    %v3873 = vpop.f32.mrb[0].mxu0
    %v3874 = vadd.f32 0.0, %v3873
    %v3875 = vpop.f32.mrb[0].mxu0
    %3876 = vmatprep.mubr.f32.mxu0 0.0
    %3877 = vmatmul.mubr.f32.gmra.mrb[0].mxu0 %v3794
    %v3878 = vpop.f32.mrb[0].mxu0
    %v3879 = vadd.f32 0.0, %v3878
    %v3880 = vpop.f32.mrb[0].mxu0
    %3881 = vdwg.mxu0
    %v3882 = vmul.f32 %v3869, 0.35355338
    %v3883 = vmul.f32 %v3874, 0.35355338
    %v3884 = vmul.f32 %v3879, 0.35355338
    %v3885 = vadd.f32 %v3882, %v143
    %v3886 = vadd.f32 %v3883, %v143
    %v3887 = vadd.f32 %v3884, %v143
    %v3888 = vsel %vm623, %v3885, -inf
    %3889 = vmax.xlane.f32.xlu0 %v3888
    %v3890 = vpop.xlane.xlu0 %3889
    %v3891 = vsel %vm623, %v3886, -inf
    %3892 = vmax.xlane.f32.xlu0 %v3891
    %v3893 = vpop.xlane.xlu0 %3892
    %v3894 = vsel %vm623, %v3887, -inf
    %3895 = vmax.xlane.f32.xlu0 %v3894
    %v3896 = vpop.xlane.xlu0 %3895
    %v3897 = vsub.f32 %v3885, %v3890
    %v3898 = vsub.f32 %v3886, %v3893
    %v3899 = vsub.f32 %v3887, %v3896
    %v3900 = vmul.f32 %v3897, 1.442695
    %v3901 = vpow.pop %v3900
    %v3902 = vmul.f32 %v3898, 1.442695
    %v3903 = vpow.pop %v3902
    %v3904 = vmul.f32 %v3899, 1.442695
    %v3905 = vpow.pop %v3904
    %v3906 = vsel %vm623, %v3901, 0.0
    %3907 = vadd.xlane.f32.xlu0 %v3906
    %v3908 = vpop.xlane.xlu0 %3907
    %v3909 = vsel %vm623, %v3903, 0.0
    %3910 = vadd.xlane.f32.xlu0 %v3909
    %v3911 = vpop.xlane.xlu0 %3910
    %v3912 = vsel %vm623, %v3905, 0.0
    %3913 = vadd.xlane.f32.xlu0 %v3912
    %v3914 = vpop.xlane.xlu0 %3913
    %v3915 = vrcp.pop %v3908
    %v3916 = vrcp.pop %v3911
    %v3917 = vrcp.pop %v3914
    %v3918 = vmul.f32 %v3901, %v3915
    %v3919 = vmul.f32 %v3903, %v3916
    %v3920 = vmul.f32 %v3905, %v3917
    %3921 = vrot.lane.b32.xlu0 %v3253, 48
    %v3922 = vpop.permute.xlu0 %3921
    %3923 = vrot.lane.b32.xlu0 %v3258, 48
    %v3924 = vpop.permute.xlu0 %3923
    %3925 = vrot.lane.b32.xlu0 %v3263, 48
    %v3926 = vpop.permute.xlu0 %3925
    %v3931 = vsel %vm623, %v3918, 0
    %v3934 = vsel %vm623, %v3919, 0
    %v3937 = vsel %vm623, %v3920, 0
    %3939 = vmatprep.subr.mxu0 0.0
    %3940 = vmatpush1.msra.mxu0 %v3922
    %3941 = vmatprep.subr.mxu0 0.0
    %3942 = vmatpush1.msra.mxu0 %v3924
    %3943 = vmatprep.subr.mxu0 0.0
    %3944 = vmatpush1.msra.mxu0 %v3926
    %3945 = vmatprep.subr.mxu0 0.0
    %3946 = vmatpush1.msra.mxu0 0.0
    %3947 = vmatprep.subr.mxu0 0.0
    %3948 = vmatpush1.msra.mxu0 0.0
    %3949 = vmatprep.subr.mxu0 0.0
    %3950 = vmatpush1.msra.mxu0 0.0
    %3951 = vmatprep.subr.mxu0 0.0
    %3952 = vmatpush1.msra.mxu0 0.0
    %3953 = vmatprep.subr.mxu0 0.0
    %3954 = vmatpush1.msra.mxu0 0.0
    %3955 = vmatprep.subr.mxu0 0.0
    %3956 = vmatpush1.msra.mxu0 0.0
    %3957 = vmatprep.subr.mxu0 0.0
    %3958 = vmatpush1.msra.mxu0 0.0
    %3959 = vmatprep.subr.mxu0 0.0
    %3960 = vmatpush1.msra.mxu0 0.0
    %3961 = vmatprep.subr.mxu0 0.0
    %3962 = vmatpush1.msra.mxu0 0.0
    %3963 = vmatprep.subr.mxu0 0.0
    %3964 = vmatpush1.msra.mxu0 0.0
    %3965 = vmatprep.subr.mxu0 0.0
    %3966 = vmatpush1.msra.mxu0 0.0
    %3967 = vmatprep.subr.mxu0 0.0
    %3968 = vmatpush1.msra.mxu0 0.0
    %3969 = vmatprep.subr.mxu0 0.0
    %3970 = vmatpush1.msra.mxu0 0.0
    %3971 = vmatprep.subr.mxu0 0.0
    %3972 = vmatpush1.msra.mxu0 0.0
    %3973 = vmatprep.subr.mxu0 0.0
    %3974 = vmatpush1.msra.mxu0 0.0
    %3975 = vmatprep.subr.mxu0 0.0
    %3976 = vmatpush1.msra.mxu0 0.0
    %3977 = vmatprep.subr.mxu0 0.0
    %3978 = vmatpush1.msra.mxu0 0.0
    %3979 = vmatprep.subr.mxu0 0.0
    %3980 = vmatpush1.msra.mxu0 0.0
    %3981 = vmatprep.subr.mxu0 0.0
    %3982 = vmatpush1.msra.mxu0 0.0
    %3983 = vmatprep.subr.mxu0 0.0
    %3984 = vmatpush1.msra.mxu0 0.0
    %3985 = vmatprep.subr.mxu0 0.0
    %3986 = vmatpush1.msra.mxu0 0.0
    %3987 = vmatprep.subr.mxu0 0.0
    %3988 = vmatpush1.msra.mxu0 0.0
    %3989 = vmatprep.subr.mxu0 0.0
    %3990 = vmatpush1.msra.mxu0 0.0
    %3991 = vmatprep.subr.mxu0 0.0
    %3992 = vmatpush1.msra.mxu0 0.0
    %3993 = vmatprep.subr.mxu0 0.0
    %3994 = vmatpush1.msra.mxu0 0.0
    %3995 = vmatprep.subr.mxu0 0.0
    %3996 = vmatpush1.msra.mxu0 0.0
    %3997 = vmatprep.subr.mxu0 0.0
    %3998 = vmatpush1.msra.mxu0 0.0
    %3999 = vmatprep.subr.mxu0 0.0
    %4000 = vmatpush1.msra.mxu0 0.0
    %4001 = vmatprep.subr.mxu0 0.0
    %4002 = vmatpush1.msra.mxu0 0.0
    %4003 = vmatprep.mubr.f32.mxu0 0.0
    %4004 = vmatmul.mubr.f32.gmra.mrb[0].mxu0 %v3931
    %v4005 = vpop.f32.mrb[0].mxu0
    %v4006 = vadd.f32 0.0, %v4005
    %v4007 = vpop.f32.mrb[0].mxu0
    %4008 = vmatprep.mubr.f32.mxu0 0.0
    %4009 = vmatmul.mubr.f32.gmra.mrb[0].mxu0 %v3934
    %v4010 = vpop.f32.mrb[0].mxu0
    %v4011 = vadd.f32 0.0, %v4010
    %v4012 = vpop.f32.mrb[0].mxu0
    %4013 = vmatprep.mubr.f32.mxu0 0.0
    %4014 = vmatmul.mubr.f32.gmra.mrb[0].mxu0 %v3937
    %v4015 = vpop.f32.mrb[0].mxu0
    %v4016 = vadd.f32 0.0, %v4015
    %v4017 = vpop.f32.mrb[0].mxu0
    %4018 = vdwg.mxu0
    %4022 = vrot.lane.b32.xlu0 %v4006, 16
    %v4023 = vpop.permute.xlu0 %4022
    %4024 = vrot.lane.b32.xlu0 %v4011, 16
    %v4025 = vpop.permute.xlu0 %4024
    %4026 = vrot.lane.b32.xlu0 %v4016, 16
    %v4027 = vpop.permute.xlu0 %4026
    %4031 = vst.msk [vmem:[#allocation3] sm:$0xff] %vm1268, %v4023
    %4032 = vst.msk [vmem:[#allocation3 + $0x8] sm:$0xff] %vm1268, %v4025
    %4033 = vst.msk [vmem:[#allocation3 + $0x10] sm:$0xff] %vm1268, %v4027
    %4034 = vrot.lane.b32.xlu0 %v3253, 104
    %v4035 = vpop.permute.xlu0 %4034
    %4036 = vrot.lane.b32.xlu0 %v3258, 104
    %v4037 = vpop.permute.xlu0 %4036
    %4038 = vrot.lane.b32.xlu0 %v3263, 104
    %v4039 = vpop.permute.xlu0 %4038
    %4040 = vrot.lane.b32.xlu0 %v3253, 72
    %v4041 = vpop.permute.xlu0 %4040
    %4042 = vrot.lane.b32.xlu0 %v3258, 72
    %v4043 = vpop.permute.xlu0 %4042
    %4044 = vrot.lane.b32.xlu0 %v3263, 72
    %v4045 = vpop.permute.xlu0 %4044
    %v4046 = vsel %vm160, %v4035, 0
    %v4048 = vsel %vm160, %v4037, 0
    %v4050 = vsel %vm160, %v4039, 0
    %v4052 = vsel %vm160, %v4041, 0
    %v4054 = vsel %vm160, %v4043, 0
    %v4056 = vsel %vm160, %v4045, 0
    %4058 = vmatprep.subr.mxu0 0.0
    %4059 = vmatpush1.xpose.msra.mxu0 %v4052
    %4060 = vmatprep.subr.mxu0 0.0
    %4061 = vmatpush1.xpose.msra.mxu0 %v4054
    %4062 = vmatprep.subr.mxu0 0.0
    %4063 = vmatpush1.xpose.msra.mxu0 %v4056
    %4064 = vmatprep.subr.mxu0 0.0
    %4065 = vmatpush1.xpose.msra.mxu0 0.0
    %4066 = vmatprep.subr.mxu0 0.0
    %4067 = vmatpush1.xpose.msra.mxu0 0.0
    %4068 = vmatprep.subr.mxu0 0.0
    %4069 = vmatpush1.xpose.msra.mxu0 0.0
    %4070 = vmatprep.subr.mxu0 0.0
    %4071 = vmatpush1.xpose.msra.mxu0 0.0
    %4072 = vmatprep.subr.mxu0 0.0
    %4073 = vmatpush1.xpose.msra.mxu0 0.0
    %4074 = vmatprep.subr.mxu0 0.0
    %4075 = vmatpush1.xpose.msra.mxu0 0.0
    %4076 = vmatprep.subr.mxu0 0.0
    %4077 = vmatpush1.xpose.msra.mxu0 0.0
    %4078 = vmatprep.subr.mxu0 0.0
    %4079 = vmatpush1.xpose.msra.mxu0 0.0
    %4080 = vmatprep.subr.mxu0 0.0
    %4081 = vmatpush1.xpose.msra.mxu0 0.0
    %4082 = vmatprep.subr.mxu0 0.0
    %4083 = vmatpush1.xpose.msra.mxu0 0.0
    %4084 = vmatprep.subr.mxu0 0.0
    %4085 = vmatpush1.xpose.msra.mxu0 0.0
    %4086 = vmatprep.subr.mxu0 0.0
    %4087 = vmatpush1.xpose.msra.mxu0 0.0
    %4088 = vmatprep.subr.mxu0 0.0
    %4089 = vmatpush1.xpose.msra.mxu0 0.0
    %4090 = vmatprep.subr.mxu0 0.0
    %4091 = vmatpush1.xpose.msra.mxu0 0.0
    %4092 = vmatprep.subr.mxu0 0.0
    %4093 = vmatpush1.xpose.msra.mxu0 0.0
    %4094 = vmatprep.subr.mxu0 0.0
    %4095 = vmatpush1.xpose.msra.mxu0 0.0
    %4096 = vmatprep.subr.mxu0 0.0
    %4097 = vmatpush1.xpose.msra.mxu0 0.0
    %4098 = vmatprep.subr.mxu0 0.0
    %4099 = vmatpush1.xpose.msra.mxu0 0.0
    %4100 = vmatprep.subr.mxu0 0.0
    %4101 = vmatpush1.xpose.msra.mxu0 0.0
    %4102 = vmatprep.subr.mxu0 0.0
    %4103 = vmatpush1.xpose.msra.mxu0 0.0
    %4104 = vmatprep.subr.mxu0 0.0
    %4105 = vmatpush1.xpose.msra.mxu0 0.0
    %4106 = vmatprep.subr.mxu0 0.0
    %4107 = vmatpush1.xpose.msra.mxu0 0.0
    %4108 = vmatprep.subr.mxu0 0.0
    %4109 = vmatpush1.xpose.msra.mxu0 0.0
    %4110 = vmatprep.subr.mxu0 0.0
    %4111 = vmatpush1.xpose.msra.mxu0 0.0
    %4112 = vmatprep.subr.mxu0 0.0
    %4113 = vmatpush1.xpose.msra.mxu0 0.0
    %4114 = vmatprep.subr.mxu0 0.0
    %4115 = vmatpush1.xpose.msra.mxu0 0.0
    %4116 = vmatprep.subr.mxu0 0.0
    %4117 = vmatpush1.xpose.msra.mxu0 0.0
    %4118 = vmatprep.subr.mxu0 0.0
    %4119 = vmatpush1.xpose.msra.mxu0 0.0
    %4120 = vmatprep.subr.mxu0 0.0
    %4121 = vmatpush1.xpose.msra.mxu0 0.0
    %4122 = vmatprep.mubr.f32.mxu0 0.0
    %4123 = vmatmul.mubr.f32.gmra.mrb[0].mxu0 %v4046
    %v4124 = vpop.f32.mrb[0].mxu0
    %v4125 = vadd.f32 0.0, %v4124
    %v4126 = vpop.f32.mrb[0].mxu0
    %4127 = vmatprep.mubr.f32.mxu0 0.0
    %4128 = vmatmul.mubr.f32.gmra.mrb[0].mxu0 %v4048
    %v4129 = vpop.f32.mrb[0].mxu0
    %v4130 = vadd.f32 0.0, %v4129
    %v4131 = vpop.f32.mrb[0].mxu0
    %4132 = vmatprep.mubr.f32.mxu0 0.0
    %4133 = vmatmul.mubr.f32.gmra.mrb[0].mxu0 %v4050
    %v4134 = vpop.f32.mrb[0].mxu0
    %v4135 = vadd.f32 0.0, %v4134
    %v4136 = vpop.f32.mrb[0].mxu0
    %4137 = vdwg.mxu0
    %v4138 = vmul.f32 %v4125, 0.35355338
    %v4139 = vmul.f32 %v4130, 0.35355338
    %v4140 = vmul.f32 %v4135, 0.35355338
    %v4141 = vadd.f32 %v4138, %v143
    %v4142 = vadd.f32 %v4139, %v143
    %v4143 = vadd.f32 %v4140, %v143
    %v4144 = vsel %vm623, %v4141, -inf
    %4145 = vmax.xlane.f32.xlu0 %v4144
    %v4146 = vpop.xlane.xlu0 %4145
    %v4147 = vsel %vm623, %v4142, -inf
    %4148 = vmax.xlane.f32.xlu0 %v4147
    %v4149 = vpop.xlane.xlu0 %4148
    %v4150 = vsel %vm623, %v4143, -inf
    %4151 = vmax.xlane.f32.xlu0 %v4150
    %v4152 = vpop.xlane.xlu0 %4151
    %v4153 = vsub.f32 %v4141, %v4146
    %v4154 = vsub.f32 %v4142, %v4149
    %v4155 = vsub.f32 %v4143, %v4152
    %v4156 = vmul.f32 %v4153, 1.442695
    %v4157 = vpow.pop %v4156
    %v4158 = vmul.f32 %v4154, 1.442695
    %v4159 = vpow.pop %v4158
    %v4160 = vmul.f32 %v4155, 1.442695
    %v4161 = vpow.pop %v4160
    %v4162 = vsel %vm623, %v4157, 0.0
    %4163 = vadd.xlane.f32.xlu0 %v4162
    %v4164 = vpop.xlane.xlu0 %4163
    %v4165 = vsel %vm623, %v4159, 0.0
    %4166 = vadd.xlane.f32.xlu0 %v4165
    %v4167 = vpop.xlane.xlu0 %4166
    %v4168 = vsel %vm623, %v4161, 0.0
    %4169 = vadd.xlane.f32.xlu0 %v4168
    %v4170 = vpop.xlane.xlu0 %4169
    %v4171 = vrcp.pop %v4164
    %v4172 = vrcp.pop %v4167
    %v4173 = vrcp.pop %v4170
    %v4174 = vmul.f32 %v4157, %v4171
    %v4175 = vmul.f32 %v4159, %v4172
    %v4176 = vmul.f32 %v4161, %v4173
    %4177 = vrot.lane.b32.xlu0 %v3253, 40
    %v4178 = vpop.permute.xlu0 %4177
    %4179 = vrot.lane.b32.xlu0 %v3258, 40
    %v4180 = vpop.permute.xlu0 %4179
    %4181 = vrot.lane.b32.xlu0 %v3263, 40
    %v4182 = vpop.permute.xlu0 %4181
    %v4187 = vsel %vm623, %v4174, 0
    %v4190 = vsel %vm623, %v4175, 0
    %v4193 = vsel %vm623, %v4176, 0
    %4195 = vmatprep.subr.mxu0 0.0
    %4196 = vmatpush1.msra.mxu0 %v4178
    %4197 = vmatprep.subr.mxu0 0.0
    %4198 = vmatpush1.msra.mxu0 %v4180
    %4199 = vmatprep.subr.mxu0 0.0
    %4200 = vmatpush1.msra.mxu0 %v4182
    %4201 = vmatprep.subr.mxu0 0.0
    %4202 = vmatpush1.msra.mxu0 0.0
    %4203 = vmatprep.subr.mxu0 0.0
    %4204 = vmatpush1.msra.mxu0 0.0
    %4205 = vmatprep.subr.mxu0 0.0
    %4206 = vmatpush1.msra.mxu0 0.0
    %4207 = vmatprep.subr.mxu0 0.0
    %4208 = vmatpush1.msra.mxu0 0.0
    %4209 = vmatprep.subr.mxu0 0.0
    %4210 = vmatpush1.msra.mxu0 0.0
    %4211 = vmatprep.subr.mxu0 0.0
    %4212 = vmatpush1.msra.mxu0 0.0
    %4213 = vmatprep.subr.mxu0 0.0
    %4214 = vmatpush1.msra.mxu0 0.0
    %4215 = vmatprep.subr.mxu0 0.0
    %4216 = vmatpush1.msra.mxu0 0.0
    %4217 = vmatprep.subr.mxu0 0.0
    %4218 = vmatpush1.msra.mxu0 0.0
    %4219 = vmatprep.subr.mxu0 0.0
    %4220 = vmatpush1.msra.mxu0 0.0
    %4221 = vmatprep.subr.mxu0 0.0
    %4222 = vmatpush1.msra.mxu0 0.0
    %4223 = vmatprep.subr.mxu0 0.0
    %4224 = vmatpush1.msra.mxu0 0.0
    %4225 = vmatprep.subr.mxu0 0.0
    %4226 = vmatpush1.msra.mxu0 0.0
    %4227 = vmatprep.subr.mxu0 0.0
    %4228 = vmatpush1.msra.mxu0 0.0
    %4229 = vmatprep.subr.mxu0 0.0
    %4230 = vmatpush1.msra.mxu0 0.0
    %4231 = vmatprep.subr.mxu0 0.0
    %4232 = vmatpush1.msra.mxu0 0.0
    %4233 = vmatprep.subr.mxu0 0.0
    %4234 = vmatpush1.msra.mxu0 0.0
    %4235 = vmatprep.subr.mxu0 0.0
    %4236 = vmatpush1.msra.mxu0 0.0
    %4237 = vmatprep.subr.mxu0 0.0
    %4238 = vmatpush1.msra.mxu0 0.0
    %4239 = vmatprep.subr.mxu0 0.0
    %4240 = vmatpush1.msra.mxu0 0.0
    %4241 = vmatprep.subr.mxu0 0.0
    %4242 = vmatpush1.msra.mxu0 0.0
    %4243 = vmatprep.subr.mxu0 0.0
    %4244 = vmatpush1.msra.mxu0 0.0
    %4245 = vmatprep.subr.mxu0 0.0
    %4246 = vmatpush1.msra.mxu0 0.0
    %4247 = vmatprep.subr.mxu0 0.0
    %4248 = vmatpush1.msra.mxu0 0.0
    %4249 = vmatprep.subr.mxu0 0.0
    %4250 = vmatpush1.msra.mxu0 0.0
    %4251 = vmatprep.subr.mxu0 0.0
    %4252 = vmatpush1.msra.mxu0 0.0
    %4253 = vmatprep.subr.mxu0 0.0
    %4254 = vmatpush1.msra.mxu0 0.0
    %4255 = vmatprep.subr.mxu0 0.0
    %4256 = vmatpush1.msra.mxu0 0.0
    %4257 = vmatprep.subr.mxu0 0.0
    %4258 = vmatpush1.msra.mxu0 0.0
    %4259 = vmatprep.mubr.f32.mxu0 0.0
    %4260 = vmatmul.mubr.f32.gmra.mrb[0].mxu0 %v4187
    %v4261 = vpop.f32.mrb[0].mxu0
    %v4262 = vadd.f32 0.0, %v4261
    %v4263 = vpop.f32.mrb[0].mxu0
    %4264 = vmatprep.mubr.f32.mxu0 0.0
    %4265 = vmatmul.mubr.f32.gmra.mrb[0].mxu0 %v4190
    %v4266 = vpop.f32.mrb[0].mxu0
    %v4267 = vadd.f32 0.0, %v4266
    %v4268 = vpop.f32.mrb[0].mxu0
    %4269 = vmatprep.mubr.f32.mxu0 0.0
    %4270 = vmatmul.mubr.f32.gmra.mrb[0].mxu0 %v4193
    %v4271 = vpop.f32.mrb[0].mxu0
    %v4272 = vadd.f32 0.0, %v4271
    %v4273 = vpop.f32.mrb[0].mxu0
    %4274 = vdwg.mxu0
    %4278 = vrot.lane.b32.xlu0 %v4262, 24
    %v4279 = vpop.permute.xlu0 %4278
    %4280 = vrot.lane.b32.xlu0 %v4267, 24
    %v4281 = vpop.permute.xlu0 %4280
    %4282 = vrot.lane.b32.xlu0 %v4272, 24
    %v4283 = vpop.permute.xlu0 %4282
    %4287 = vst.msk [vmem:[#allocation3] sm:$0xff] %vm1525, %v4279
    %4288 = vst.msk [vmem:[#allocation3 + $0x8] sm:$0xff] %vm1525, %v4281
    %4289 = vst.msk [vmem:[#allocation3 + $0x10] sm:$0xff] %vm1525, %v4283
    %4293 = vrot.lane.b32.xlu0 %v3268, 96
    %v4294 = vpop.permute.xlu0 %4293
    %4295 = vrot.lane.b32.xlu0 %v3273, 96
    %v4296 = vpop.permute.xlu0 %4295
    %4297 = vrot.lane.b32.xlu0 %v3278, 96
    %v4298 = vpop.permute.xlu0 %4297
    %v4299 = vsel %vm160, %v3268, 0
    %v4301 = vsel %vm160, %v3273, 0
    %v4303 = vsel %vm160, %v3278, 0
    %v4305 = vsel %vm160, %v4294, 0
    %v4307 = vsel %vm160, %v4296, 0
    %v4309 = vsel %vm160, %v4298, 0
    %4311 = vmatprep.subr.mxu0 0.0
    %4312 = vmatpush1.xpose.msra.mxu0 %v4305
    %4313 = vmatprep.subr.mxu0 0.0
    %4314 = vmatpush1.xpose.msra.mxu0 %v4307
    %4315 = vmatprep.subr.mxu0 0.0
    %4316 = vmatpush1.xpose.msra.mxu0 %v4309
    %4317 = vmatprep.subr.mxu0 0.0
    %4318 = vmatpush1.xpose.msra.mxu0 0.0
    %4319 = vmatprep.subr.mxu0 0.0
    %4320 = vmatpush1.xpose.msra.mxu0 0.0
    %4321 = vmatprep.subr.mxu0 0.0
    %4322 = vmatpush1.xpose.msra.mxu0 0.0
    %4323 = vmatprep.subr.mxu0 0.0
    %4324 = vmatpush1.xpose.msra.mxu0 0.0
    %4325 = vmatprep.subr.mxu0 0.0
    %4326 = vmatpush1.xpose.msra.mxu0 0.0
    %4327 = vmatprep.subr.mxu0 0.0
    %4328 = vmatpush1.xpose.msra.mxu0 0.0
    %4329 = vmatprep.subr.mxu0 0.0
    %4330 = vmatpush1.xpose.msra.mxu0 0.0
    %4331 = vmatprep.subr.mxu0 0.0
    %4332 = vmatpush1.xpose.msra.mxu0 0.0
    %4333 = vmatprep.subr.mxu0 0.0
    %4334 = vmatpush1.xpose.msra.mxu0 0.0
    %4335 = vmatprep.subr.mxu0 0.0
    %4336 = vmatpush1.xpose.msra.mxu0 0.0
    %4337 = vmatprep.subr.mxu0 0.0
    %4338 = vmatpush1.xpose.msra.mxu0 0.0
    %4339 = vmatprep.subr.mxu0 0.0
    %4340 = vmatpush1.xpose.msra.mxu0 0.0
    %4341 = vmatprep.subr.mxu0 0.0
    %4342 = vmatpush1.xpose.msra.mxu0 0.0
    %4343 = vmatprep.subr.mxu0 0.0
    %4344 = vmatpush1.xpose.msra.mxu0 0.0
    %4345 = vmatprep.subr.mxu0 0.0
    %4346 = vmatpush1.xpose.msra.mxu0 0.0
    %4347 = vmatprep.subr.mxu0 0.0
    %4348 = vmatpush1.xpose.msra.mxu0 0.0
    %4349 = vmatprep.subr.mxu0 0.0
    %4350 = vmatpush1.xpose.msra.mxu0 0.0
    %4351 = vmatprep.subr.mxu0 0.0
    %4352 = vmatpush1.xpose.msra.mxu0 0.0
    %4353 = vmatprep.subr.mxu0 0.0
    %4354 = vmatpush1.xpose.msra.mxu0 0.0
    %4355 = vmatprep.subr.mxu0 0.0
    %4356 = vmatpush1.xpose.msra.mxu0 0.0
    %4357 = vmatprep.subr.mxu0 0.0
    %4358 = vmatpush1.xpose.msra.mxu0 0.0
    %4359 = vmatprep.subr.mxu0 0.0
    %4360 = vmatpush1.xpose.msra.mxu0 0.0
    %4361 = vmatprep.subr.mxu0 0.0
    %4362 = vmatpush1.xpose.msra.mxu0 0.0
    %4363 = vmatprep.subr.mxu0 0.0
    %4364 = vmatpush1.xpose.msra.mxu0 0.0
    %4365 = vmatprep.subr.mxu0 0.0
    %4366 = vmatpush1.xpose.msra.mxu0 0.0
    %4367 = vmatprep.subr.mxu0 0.0
    %4368 = vmatpush1.xpose.msra.mxu0 0.0
    %4369 = vmatprep.subr.mxu0 0.0
    %4370 = vmatpush1.xpose.msra.mxu0 0.0
    %4371 = vmatprep.subr.mxu0 0.0
    %4372 = vmatpush1.xpose.msra.mxu0 0.0
    %4373 = vmatprep.subr.mxu0 0.0
    %4374 = vmatpush1.xpose.msra.mxu0 0.0
    %4375 = vmatprep.mubr.f32.mxu0 0.0
    %4376 = vmatmul.mubr.f32.gmra.mrb[0].mxu0 %v4299
    %v4377 = vpop.f32.mrb[0].mxu0
    %v4378 = vadd.f32 0.0, %v4377
    %v4379 = vpop.f32.mrb[0].mxu0
    %4380 = vmatprep.mubr.f32.mxu0 0.0
    %4381 = vmatmul.mubr.f32.gmra.mrb[0].mxu0 %v4301
    %v4382 = vpop.f32.mrb[0].mxu0
    %v4383 = vadd.f32 0.0, %v4382
    %v4384 = vpop.f32.mrb[0].mxu0
    %4385 = vmatprep.mubr.f32.mxu0 0.0
    %4386 = vmatmul.mubr.f32.gmra.mrb[0].mxu0 %v4303
    %v4387 = vpop.f32.mrb[0].mxu0
    %v4388 = vadd.f32 0.0, %v4387
    %v4389 = vpop.f32.mrb[0].mxu0
    %4390 = vdwg.mxu0
    %v4391 = vmul.f32 %v4378, 0.35355338
    %v4392 = vmul.f32 %v4383, 0.35355338
    %v4393 = vmul.f32 %v4388, 0.35355338
    %v4394 = vadd.f32 %v4391, %v143
    %v4395 = vadd.f32 %v4392, %v143
    %v4396 = vadd.f32 %v4393, %v143
    %v4397 = vsel %vm623, %v4394, -inf
    %4398 = vmax.xlane.f32.xlu0 %v4397
    %v4399 = vpop.xlane.xlu0 %4398
    %v4400 = vsel %vm623, %v4395, -inf
    %4401 = vmax.xlane.f32.xlu0 %v4400
    %v4402 = vpop.xlane.xlu0 %4401
    %v4403 = vsel %vm623, %v4396, -inf
    %4404 = vmax.xlane.f32.xlu0 %v4403
    %v4405 = vpop.xlane.xlu0 %4404
    %v4406 = vsub.f32 %v4394, %v4399
    %v4407 = vsub.f32 %v4395, %v4402
    %v4408 = vsub.f32 %v4396, %v4405
    %v4409 = vmul.f32 %v4406, 1.442695
    %v4410 = vpow.pop %v4409
    %v4411 = vmul.f32 %v4407, 1.442695
    %v4412 = vpow.pop %v4411
    %v4413 = vmul.f32 %v4408, 1.442695
    %v4414 = vpow.pop %v4413
    %v4415 = vsel %vm623, %v4410, 0.0
    %4416 = vadd.xlane.f32.xlu0 %v4415
    %v4417 = vpop.xlane.xlu0 %4416
    %v4418 = vsel %vm623, %v4412, 0.0
    %4419 = vadd.xlane.f32.xlu0 %v4418
    %v4420 = vpop.xlane.xlu0 %4419
    %v4421 = vsel %vm623, %v4414, 0.0
    %4422 = vadd.xlane.f32.xlu0 %v4421
    %v4423 = vpop.xlane.xlu0 %4422
    %v4424 = vrcp.pop %v4417
    %v4425 = vrcp.pop %v4420
    %v4426 = vrcp.pop %v4423
    %v4427 = vmul.f32 %v4410, %v4424
    %v4428 = vmul.f32 %v4412, %v4425
    %v4429 = vmul.f32 %v4414, %v4426
    %4430 = vrot.lane.b32.xlu0 %v3268, 64
    %v4431 = vpop.permute.xlu0 %4430
    %4432 = vrot.lane.b32.xlu0 %v3273, 64
    %v4433 = vpop.permute.xlu0 %4432
    %4434 = vrot.lane.b32.xlu0 %v3278, 64
    %v4435 = vpop.permute.xlu0 %4434
    %v4440 = vsel %vm623, %v4427, 0
    %v4443 = vsel %vm623, %v4428, 0
    %v4446 = vsel %vm623, %v4429, 0
    %4448 = vmatprep.subr.mxu0 0.0
    %4449 = vmatpush1.msra.mxu0 %v4431
    %4450 = vmatprep.subr.mxu0 0.0
    %4451 = vmatpush1.msra.mxu0 %v4433
    %4452 = vmatprep.subr.mxu0 0.0
    %4453 = vmatpush1.msra.mxu0 %v4435
    %4454 = vmatprep.subr.mxu0 0.0
    %4455 = vmatpush1.msra.mxu0 0.0
    %4456 = vmatprep.subr.mxu0 0.0
    %4457 = vmatpush1.msra.mxu0 0.0
    %4458 = vmatprep.subr.mxu0 0.0
    %4459 = vmatpush1.msra.mxu0 0.0
    %4460 = vmatprep.subr.mxu0 0.0
    %4461 = vmatpush1.msra.mxu0 0.0
    %4462 = vmatprep.subr.mxu0 0.0
    %4463 = vmatpush1.msra.mxu0 0.0
    %4464 = vmatprep.subr.mxu0 0.0
    %4465 = vmatpush1.msra.mxu0 0.0
    %4466 = vmatprep.subr.mxu0 0.0
    %4467 = vmatpush1.msra.mxu0 0.0
    %4468 = vmatprep.subr.mxu0 0.0
    %4469 = vmatpush1.msra.mxu0 0.0
    %4470 = vmatprep.subr.mxu0 0.0
    %4471 = vmatpush1.msra.mxu0 0.0
    %4472 = vmatprep.subr.mxu0 0.0
    %4473 = vmatpush1.msra.mxu0 0.0
    %4474 = vmatprep.subr.mxu0 0.0
    %4475 = vmatpush1.msra.mxu0 0.0
    %4476 = vmatprep.subr.mxu0 0.0
    %4477 = vmatpush1.msra.mxu0 0.0
    %4478 = vmatprep.subr.mxu0 0.0
    %4479 = vmatpush1.msra.mxu0 0.0
    %4480 = vmatprep.subr.mxu0 0.0
    %4481 = vmatpush1.msra.mxu0 0.0
    %4482 = vmatprep.subr.mxu0 0.0
    %4483 = vmatpush1.msra.mxu0 0.0
    %4484 = vmatprep.subr.mxu0 0.0
    %4485 = vmatpush1.msra.mxu0 0.0
    %4486 = vmatprep.subr.mxu0 0.0
    %4487 = vmatpush1.msra.mxu0 0.0
    %4488 = vmatprep.subr.mxu0 0.0
    %4489 = vmatpush1.msra.mxu0 0.0
    %4490 = vmatprep.subr.mxu0 0.0
    %4491 = vmatpush1.msra.mxu0 0.0
    %4492 = vmatprep.subr.mxu0 0.0
    %4493 = vmatpush1.msra.mxu0 0.0
    %4494 = vmatprep.subr.mxu0 0.0
    %4495 = vmatpush1.msra.mxu0 0.0
    %4496 = vmatprep.subr.mxu0 0.0
    %4497 = vmatpush1.msra.mxu0 0.0
    %4498 = vmatprep.subr.mxu0 0.0
    %4499 = vmatpush1.msra.mxu0 0.0
    %4500 = vmatprep.subr.mxu0 0.0
    %4501 = vmatpush1.msra.mxu0 0.0
    %4502 = vmatprep.subr.mxu0 0.0
    %4503 = vmatpush1.msra.mxu0 0.0
    %4504 = vmatprep.subr.mxu0 0.0
    %4505 = vmatpush1.msra.mxu0 0.0
    %4506 = vmatprep.subr.mxu0 0.0
    %4507 = vmatpush1.msra.mxu0 0.0
    %4508 = vmatprep.subr.mxu0 0.0
    %4509 = vmatpush1.msra.mxu0 0.0
    %4510 = vmatprep.subr.mxu0 0.0
    %4511 = vmatpush1.msra.mxu0 0.0
    %4512 = vmatprep.mubr.f32.mxu0 0.0
    %4513 = vmatmul.mubr.f32.gmra.mrb[0].mxu0 %v4440
    %v4514 = vpop.f32.mrb[0].mxu0
    %v4515 = vadd.f32 0.0, %v4514
    %v4516 = vpop.f32.mrb[0].mxu0
    %4517 = vmatprep.mubr.f32.mxu0 0.0
    %4518 = vmatmul.mubr.f32.gmra.mrb[0].mxu0 %v4443
    %v4519 = vpop.f32.mrb[0].mxu0
    %v4520 = vadd.f32 0.0, %v4519
    %v4521 = vpop.f32.mrb[0].mxu0
    %4522 = vmatprep.mubr.f32.mxu0 0.0
    %4523 = vmatmul.mubr.f32.gmra.mrb[0].mxu0 %v4446
    %v4524 = vpop.f32.mrb[0].mxu0
    %v4525 = vadd.f32 0.0, %v4524
    %v4526 = vpop.f32.mrb[0].mxu0
    %4527 = vdwg.mxu0
    %4528 = vst.msk [vmem:[#allocation3 + $0x18] sm:$0xff] %vm160, %v4515
    %4529 = vst.msk [vmem:[#allocation3 + $0x20] sm:$0xff] %vm160, %v4520
    %4530 = vst.msk [vmem:[#allocation3 + $0x28] sm:$0xff] %vm160, %v4525
    %4531 = vrot.lane.b32.xlu0 %v3268, 120
    %v4532 = vpop.permute.xlu0 %4531
    %4533 = vrot.lane.b32.xlu0 %v3273, 120
    %v4534 = vpop.permute.xlu0 %4533
    %4535 = vrot.lane.b32.xlu0 %v3278, 120
    %v4536 = vpop.permute.xlu0 %4535
    %4537 = vrot.lane.b32.xlu0 %v3268, 88
    %v4538 = vpop.permute.xlu0 %4537
    %4539 = vrot.lane.b32.xlu0 %v3273, 88
    %v4540 = vpop.permute.xlu0 %4539
    %4541 = vrot.lane.b32.xlu0 %v3278, 88
    %v4542 = vpop.permute.xlu0 %4541
    %v4543 = vsel %vm160, %v4532, 0
    %v4545 = vsel %vm160, %v4534, 0
    %v4547 = vsel %vm160, %v4536, 0
    %v4549 = vsel %vm160, %v4538, 0
    %v4551 = vsel %vm160, %v4540, 0
    %v4553 = vsel %vm160, %v4542, 0
    %4555 = vmatprep.subr.mxu0 0.0
    %4556 = vmatpush1.xpose.msra.mxu0 %v4549
    %4557 = vmatprep.subr.mxu0 0.0
    %4558 = vmatpush1.xpose.msra.mxu0 %v4551
    %4559 = vmatprep.subr.mxu0 0.0
    %4560 = vmatpush1.xpose.msra.mxu0 %v4553
    %4561 = vmatprep.subr.mxu0 0.0
    %4562 = vmatpush1.xpose.msra.mxu0 0.0
    %4563 = vmatprep.subr.mxu0 0.0
    %4564 = vmatpush1.xpose.msra.mxu0 0.0
    %4565 = vmatprep.subr.mxu0 0.0
    %4566 = vmatpush1.xpose.msra.mxu0 0.0
    %4567 = vmatprep.subr.mxu0 0.0
    %4568 = vmatpush1.xpose.msra.mxu0 0.0
    %4569 = vmatprep.subr.mxu0 0.0
    %4570 = vmatpush1.xpose.msra.mxu0 0.0
    %4571 = vmatprep.subr.mxu0 0.0
    %4572 = vmatpush1.xpose.msra.mxu0 0.0
    %4573 = vmatprep.subr.mxu0 0.0
    %4574 = vmatpush1.xpose.msra.mxu0 0.0
    %4575 = vmatprep.subr.mxu0 0.0
    %4576 = vmatpush1.xpose.msra.mxu0 0.0
    %4577 = vmatprep.subr.mxu0 0.0
    %4578 = vmatpush1.xpose.msra.mxu0 0.0
    %4579 = vmatprep.subr.mxu0 0.0
    %4580 = vmatpush1.xpose.msra.mxu0 0.0
    %4581 = vmatprep.subr.mxu0 0.0
    %4582 = vmatpush1.xpose.msra.mxu0 0.0
    %4583 = vmatprep.subr.mxu0 0.0
    %4584 = vmatpush1.xpose.msra.mxu0 0.0
    %4585 = vmatprep.subr.mxu0 0.0
    %4586 = vmatpush1.xpose.msra.mxu0 0.0
    %4587 = vmatprep.subr.mxu0 0.0
    %4588 = vmatpush1.xpose.msra.mxu0 0.0
    %4589 = vmatprep.subr.mxu0 0.0
    %4590 = vmatpush1.xpose.msra.mxu0 0.0
    %4591 = vmatprep.subr.mxu0 0.0
    %4592 = vmatpush1.xpose.msra.mxu0 0.0
    %4593 = vmatprep.subr.mxu0 0.0
    %4594 = vmatpush1.xpose.msra.mxu0 0.0
    %4595 = vmatprep.subr.mxu0 0.0
    %4596 = vmatpush1.xpose.msra.mxu0 0.0
    %4597 = vmatprep.subr.mxu0 0.0
    %4598 = vmatpush1.xpose.msra.mxu0 0.0
    %4599 = vmatprep.subr.mxu0 0.0
    %4600 = vmatpush1.xpose.msra.mxu0 0.0
    %4601 = vmatprep.subr.mxu0 0.0
    %4602 = vmatpush1.xpose.msra.mxu0 0.0
    %4603 = vmatprep.subr.mxu0 0.0
    %4604 = vmatpush1.xpose.msra.mxu0 0.0
    %4605 = vmatprep.subr.mxu0 0.0
    %4606 = vmatpush1.xpose.msra.mxu0 0.0
    %4607 = vmatprep.subr.mxu0 0.0
    %4608 = vmatpush1.xpose.msra.mxu0 0.0
    %4609 = vmatprep.subr.mxu0 0.0
    %4610 = vmatpush1.xpose.msra.mxu0 0.0
    %4611 = vmatprep.subr.mxu0 0.0
    %4612 = vmatpush1.xpose.msra.mxu0 0.0
    %4613 = vmatprep.subr.mxu0 0.0
    %4614 = vmatpush1.xpose.msra.mxu0 0.0
    %4615 = vmatprep.subr.mxu0 0.0
    %4616 = vmatpush1.xpose.msra.mxu0 0.0
    %4617 = vmatprep.subr.mxu0 0.0
    %4618 = vmatpush1.xpose.msra.mxu0 0.0
    %4619 = vmatprep.mubr.f32.mxu0 0.0
    %4620 = vmatmul.mubr.f32.gmra.mrb[0].mxu0 %v4543
    %v4621 = vpop.f32.mrb[0].mxu0
    %v4622 = vadd.f32 0.0, %v4621
    %v4623 = vpop.f32.mrb[0].mxu0
    %4624 = vmatprep.mubr.f32.mxu0 0.0
    %4625 = vmatmul.mubr.f32.gmra.mrb[0].mxu0 %v4545
    %v4626 = vpop.f32.mrb[0].mxu0
    %v4627 = vadd.f32 0.0, %v4626
    %v4628 = vpop.f32.mrb[0].mxu0
    %4629 = vmatprep.mubr.f32.mxu0 0.0
    %4630 = vmatmul.mubr.f32.gmra.mrb[0].mxu0 %v4547
    %v4631 = vpop.f32.mrb[0].mxu0
    %v4632 = vadd.f32 0.0, %v4631
    %v4633 = vpop.f32.mrb[0].mxu0
    %4634 = vdwg.mxu0
    %v4635 = vmul.f32 %v4622, 0.35355338
    %v4636 = vmul.f32 %v4627, 0.35355338
    %v4637 = vmul.f32 %v4632, 0.35355338
    %v4638 = vadd.f32 %v4635, %v143
    %v4639 = vadd.f32 %v4636, %v143
    %v4640 = vadd.f32 %v4637, %v143
    %v4641 = vsel %vm623, %v4638, -inf
    %4642 = vmax.xlane.f32.xlu0 %v4641
    %v4643 = vpop.xlane.xlu0 %4642
    %v4644 = vsel %vm623, %v4639, -inf
    %4645 = vmax.xlane.f32.xlu0 %v4644
    %v4646 = vpop.xlane.xlu0 %4645
    %v4647 = vsel %vm623, %v4640, -inf
    %4648 = vmax.xlane.f32.xlu0 %v4647
    %v4649 = vpop.xlane.xlu0 %4648
    %v4650 = vsub.f32 %v4638, %v4643
    %v4651 = vsub.f32 %v4639, %v4646
    %v4652 = vsub.f32 %v4640, %v4649
    %v4653 = vmul.f32 %v4650, 1.442695
    %v4654 = vpow.pop %v4653
    %v4655 = vmul.f32 %v4651, 1.442695
    %v4656 = vpow.pop %v4655
    %v4657 = vmul.f32 %v4652, 1.442695
    %v4658 = vpow.pop %v4657
    %v4659 = vsel %vm623, %v4654, 0.0
    %4660 = vadd.xlane.f32.xlu0 %v4659
    %v4661 = vpop.xlane.xlu0 %4660
    %v4662 = vsel %vm623, %v4656, 0.0
    %4663 = vadd.xlane.f32.xlu0 %v4662
    %v4664 = vpop.xlane.xlu0 %4663
    %v4665 = vsel %vm623, %v4658, 0.0
    %4666 = vadd.xlane.f32.xlu0 %v4665
    %v4667 = vpop.xlane.xlu0 %4666
    %v4668 = vrcp.pop %v4661
    %v4669 = vrcp.pop %v4664
    %v4670 = vrcp.pop %v4667
    %v4671 = vmul.f32 %v4654, %v4668
    %v4672 = vmul.f32 %v4656, %v4669
    %v4673 = vmul.f32 %v4658, %v4670
    %4674 = vrot.lane.b32.xlu0 %v3268, 56
    %v4675 = vpop.permute.xlu0 %4674
    %4676 = vrot.lane.b32.xlu0 %v3273, 56
    %v4677 = vpop.permute.xlu0 %4676
    %4678 = vrot.lane.b32.xlu0 %v3278, 56
    %v4679 = vpop.permute.xlu0 %4678
    %v4684 = vsel %vm623, %v4671, 0
    %v4687 = vsel %vm623, %v4672, 0
    %v4690 = vsel %vm623, %v4673, 0
    %4692 = vmatprep.subr.mxu0 0.0
    %4693 = vmatpush1.msra.mxu0 %v4675
    %4694 = vmatprep.subr.mxu0 0.0
    %4695 = vmatpush1.msra.mxu0 %v4677
    %4696 = vmatprep.subr.mxu0 0.0
    %4697 = vmatpush1.msra.mxu0 %v4679
    %4698 = vmatprep.subr.mxu0 0.0
    %4699 = vmatpush1.msra.mxu0 0.0
    %4700 = vmatprep.subr.mxu0 0.0
    %4701 = vmatpush1.msra.mxu0 0.0
    %4702 = vmatprep.subr.mxu0 0.0
    %4703 = vmatpush1.msra.mxu0 0.0
    %4704 = vmatprep.subr.mxu0 0.0
    %4705 = vmatpush1.msra.mxu0 0.0
    %4706 = vmatprep.subr.mxu0 0.0
    %4707 = vmatpush1.msra.mxu0 0.0
    %4708 = vmatprep.subr.mxu0 0.0
    %4709 = vmatpush1.msra.mxu0 0.0
    %4710 = vmatprep.subr.mxu0 0.0
    %4711 = vmatpush1.msra.mxu0 0.0
    %4712 = vmatprep.subr.mxu0 0.0
    %4713 = vmatpush1.msra.mxu0 0.0
    %4714 = vmatprep.subr.mxu0 0.0
    %4715 = vmatpush1.msra.mxu0 0.0
    %4716 = vmatprep.subr.mxu0 0.0
    %4717 = vmatpush1.msra.mxu0 0.0
    %4718 = vmatprep.subr.mxu0 0.0
    %4719 = vmatpush1.msra.mxu0 0.0
    %4720 = vmatprep.subr.mxu0 0.0
    %4721 = vmatpush1.msra.mxu0 0.0
    %4722 = vmatprep.subr.mxu0 0.0
    %4723 = vmatpush1.msra.mxu0 0.0
    %4724 = vmatprep.subr.mxu0 0.0
    %4725 = vmatpush1.msra.mxu0 0.0
    %4726 = vmatprep.subr.mxu0 0.0
    %4727 = vmatpush1.msra.mxu0 0.0
    %4728 = vmatprep.subr.mxu0 0.0
    %4729 = vmatpush1.msra.mxu0 0.0
    %4730 = vmatprep.subr.mxu0 0.0
    %4731 = vmatpush1.msra.mxu0 0.0
    %4732 = vmatprep.subr.mxu0 0.0
    %4733 = vmatpush1.msra.mxu0 0.0
    %4734 = vmatprep.subr.mxu0 0.0
    %4735 = vmatpush1.msra.mxu0 0.0
    %4736 = vmatprep.subr.mxu0 0.0
    %4737 = vmatpush1.msra.mxu0 0.0
    %4738 = vmatprep.subr.mxu0 0.0
    %4739 = vmatpush1.msra.mxu0 0.0
    %4740 = vmatprep.subr.mxu0 0.0
    %4741 = vmatpush1.msra.mxu0 0.0
    %4742 = vmatprep.subr.mxu0 0.0
    %4743 = vmatpush1.msra.mxu0 0.0
    %4744 = vmatprep.subr.mxu0 0.0
    %4745 = vmatpush1.msra.mxu0 0.0
    %4746 = vmatprep.subr.mxu0 0.0
    %4747 = vmatpush1.msra.mxu0 0.0
    %4748 = vmatprep.subr.mxu0 0.0
    %4749 = vmatpush1.msra.mxu0 0.0
    %4750 = vmatprep.subr.mxu0 0.0
    %4751 = vmatpush1.msra.mxu0 0.0
    %4752 = vmatprep.subr.mxu0 0.0
    %4753 = vmatpush1.msra.mxu0 0.0
    %4754 = vmatprep.subr.mxu0 0.0
    %4755 = vmatpush1.msra.mxu0 0.0
    %4756 = vmatprep.mubr.f32.mxu0 0.0
    %4757 = vmatmul.mubr.f32.gmra.mrb[0].mxu0 %v4684
    %v4758 = vpop.f32.mrb[0].mxu0
    %v4759 = vadd.f32 0.0, %v4758
    %v4760 = vpop.f32.mrb[0].mxu0
    %4761 = vmatprep.mubr.f32.mxu0 0.0
    %4762 = vmatmul.mubr.f32.gmra.mrb[0].mxu0 %v4687
    %v4763 = vpop.f32.mrb[0].mxu0
    %v4764 = vadd.f32 0.0, %v4763
    %v4765 = vpop.f32.mrb[0].mxu0
    %4766 = vmatprep.mubr.f32.mxu0 0.0
    %4767 = vmatmul.mubr.f32.gmra.mrb[0].mxu0 %v4690
    %v4768 = vpop.f32.mrb[0].mxu0
    %v4769 = vadd.f32 0.0, %v4768
    %v4770 = vpop.f32.mrb[0].mxu0
    %4771 = vdwg.mxu0
    %4775 = vrot.lane.b32.xlu0 %v4759, 8
    %v4776 = vpop.permute.xlu0 %4775
    %4777 = vrot.lane.b32.xlu0 %v4764, 8
    %v4778 = vpop.permute.xlu0 %4777
    %4779 = vrot.lane.b32.xlu0 %v4769, 8
    %v4780 = vpop.permute.xlu0 %4779
    %4784 = vst.msk [vmem:[#allocation3 + $0x18] sm:$0xff] %vm1011, %v4776
    %4785 = vst.msk [vmem:[#allocation3 + $0x20] sm:$0xff] %vm1011, %v4778
    %4786 = vst.msk [vmem:[#allocation3 + $0x28] sm:$0xff] %vm1011, %v4780
    %4787 = vrot.lane.b32.xlu0 %v3268, 112
    %v4788 = vpop.permute.xlu0 %4787
    %4789 = vrot.lane.b32.xlu0 %v3273, 112
    %v4790 = vpop.permute.xlu0 %4789
    %4791 = vrot.lane.b32.xlu0 %v3278, 112
    %v4792 = vpop.permute.xlu0 %4791
    %4793 = vrot.lane.b32.xlu0 %v3268, 80
    %v4794 = vpop.permute.xlu0 %4793
    %4795 = vrot.lane.b32.xlu0 %v3273, 80
    %v4796 = vpop.permute.xlu0 %4795
    %4797 = vrot.lane.b32.xlu0 %v3278, 80
    %v4798 = vpop.permute.xlu0 %4797
    %v4799 = vsel %vm160, %v4788, 0
    %v4801 = vsel %vm160, %v4790, 0
    %v4803 = vsel %vm160, %v4792, 0
    %v4805 = vsel %vm160, %v4794, 0
    %v4807 = vsel %vm160, %v4796, 0
    %v4809 = vsel %vm160, %v4798, 0
    %4811 = vmatprep.subr.mxu0 0.0
    %4812 = vmatpush1.xpose.msra.mxu0 %v4805
    %4813 = vmatprep.subr.mxu0 0.0
    %4814 = vmatpush1.xpose.msra.mxu0 %v4807
    %4815 = vmatprep.subr.mxu0 0.0
    %4816 = vmatpush1.xpose.msra.mxu0 %v4809
    %4817 = vmatprep.subr.mxu0 0.0
    %4818 = vmatpush1.xpose.msra.mxu0 0.0
    %4819 = vmatprep.subr.mxu0 0.0
    %4820 = vmatpush1.xpose.msra.mxu0 0.0
    %4821 = vmatprep.subr.mxu0 0.0
    %4822 = vmatpush1.xpose.msra.mxu0 0.0
    %4823 = vmatprep.subr.mxu0 0.0
    %4824 = vmatpush1.xpose.msra.mxu0 0.0
    %4825 = vmatprep.subr.mxu0 0.0
    %4826 = vmatpush1.xpose.msra.mxu0 0.0
    %4827 = vmatprep.subr.mxu0 0.0
    %4828 = vmatpush1.xpose.msra.mxu0 0.0
    %4829 = vmatprep.subr.mxu0 0.0
    %4830 = vmatpush1.xpose.msra.mxu0 0.0
    %4831 = vmatprep.subr.mxu0 0.0
    %4832 = vmatpush1.xpose.msra.mxu0 0.0
    %4833 = vmatprep.subr.mxu0 0.0
    %4834 = vmatpush1.xpose.msra.mxu0 0.0
    %4835 = vmatprep.subr.mxu0 0.0
    %4836 = vmatpush1.xpose.msra.mxu0 0.0
    %4837 = vmatprep.subr.mxu0 0.0
    %4838 = vmatpush1.xpose.msra.mxu0 0.0
    %4839 = vmatprep.subr.mxu0 0.0
    %4840 = vmatpush1.xpose.msra.mxu0 0.0
    %4841 = vmatprep.subr.mxu0 0.0
    %4842 = vmatpush1.xpose.msra.mxu0 0.0
    %4843 = vmatprep.subr.mxu0 0.0
    %4844 = vmatpush1.xpose.msra.mxu0 0.0
    %4845 = vmatprep.subr.mxu0 0.0
    %4846 = vmatpush1.xpose.msra.mxu0 0.0
    %4847 = vmatprep.subr.mxu0 0.0
    %4848 = vmatpush1.xpose.msra.mxu0 0.0
    %4849 = vmatprep.subr.mxu0 0.0
    %4850 = vmatpush1.xpose.msra.mxu0 0.0
    %4851 = vmatprep.subr.mxu0 0.0
    %4852 = vmatpush1.xpose.msra.mxu0 0.0
    %4853 = vmatprep.subr.mxu0 0.0
    %4854 = vmatpush1.xpose.msra.mxu0 0.0
    %4855 = vmatprep.subr.mxu0 0.0
    %4856 = vmatpush1.xpose.msra.mxu0 0.0
    %4857 = vmatprep.subr.mxu0 0.0
    %4858 = vmatpush1.xpose.msra.mxu0 0.0
    %4859 = vmatprep.subr.mxu0 0.0
    %4860 = vmatpush1.xpose.msra.mxu0 0.0
    %4861 = vmatprep.subr.mxu0 0.0
    %4862 = vmatpush1.xpose.msra.mxu0 0.0
    %4863 = vmatprep.subr.mxu0 0.0
    %4864 = vmatpush1.xpose.msra.mxu0 0.0
    %4865 = vmatprep.subr.mxu0 0.0
    %4866 = vmatpush1.xpose.msra.mxu0 0.0
    %4867 = vmatprep.subr.mxu0 0.0
    %4868 = vmatpush1.xpose.msra.mxu0 0.0
    %4869 = vmatprep.subr.mxu0 0.0
    %4870 = vmatpush1.xpose.msra.mxu0 0.0
    %4871 = vmatprep.subr.mxu0 0.0
    %4872 = vmatpush1.xpose.msra.mxu0 0.0
    %4873 = vmatprep.subr.mxu0 0.0
    %4874 = vmatpush1.xpose.msra.mxu0 0.0
    %4875 = vmatprep.mubr.f32.mxu0 0.0
    %4876 = vmatmul.mubr.f32.gmra.mrb[0].mxu0 %v4799
    %v4877 = vpop.f32.mrb[0].mxu0
    %v4878 = vadd.f32 0.0, %v4877
    %v4879 = vpop.f32.mrb[0].mxu0
    %4880 = vmatprep.mubr.f32.mxu0 0.0
    %4881 = vmatmul.mubr.f32.gmra.mrb[0].mxu0 %v4801
    %v4882 = vpop.f32.mrb[0].mxu0
    %v4883 = vadd.f32 0.0, %v4882
    %v4884 = vpop.f32.mrb[0].mxu0
    %4885 = vmatprep.mubr.f32.mxu0 0.0
    %4886 = vmatmul.mubr.f32.gmra.mrb[0].mxu0 %v4803
    %v4887 = vpop.f32.mrb[0].mxu0
    %v4888 = vadd.f32 0.0, %v4887
    %v4889 = vpop.f32.mrb[0].mxu0
    %4890 = vdwg.mxu0
    %v4891 = vmul.f32 %v4878, 0.35355338
    %v4892 = vmul.f32 %v4883, 0.35355338
    %v4893 = vmul.f32 %v4888, 0.35355338
    %v4894 = vadd.f32 %v4891, %v143
    %v4895 = vadd.f32 %v4892, %v143
    %v4896 = vadd.f32 %v4893, %v143
    %v4897 = vsel %vm623, %v4894, -inf
    %4898 = vmax.xlane.f32.xlu0 %v4897
    %v4899 = vpop.xlane.xlu0 %4898
    %v4900 = vsel %vm623, %v4895, -inf
    %4901 = vmax.xlane.f32.xlu0 %v4900
    %v4902 = vpop.xlane.xlu0 %4901
    %v4903 = vsel %vm623, %v4896, -inf
    %4904 = vmax.xlane.f32.xlu0 %v4903
    %v4905 = vpop.xlane.xlu0 %4904
    %v4906 = vsub.f32 %v4894, %v4899
    %v4907 = vsub.f32 %v4895, %v4902
    %v4908 = vsub.f32 %v4896, %v4905
    %v4909 = vmul.f32 %v4906, 1.442695
    %v4910 = vpow.pop %v4909
    %v4911 = vmul.f32 %v4907, 1.442695
    %v4912 = vpow.pop %v4911
    %v4913 = vmul.f32 %v4908, 1.442695
    %v4914 = vpow.pop %v4913
    %v4915 = vsel %vm623, %v4910, 0.0
    %4916 = vadd.xlane.f32.xlu0 %v4915
    %v4917 = vpop.xlane.xlu0 %4916
    %v4918 = vsel %vm623, %v4912, 0.0
    %4919 = vadd.xlane.f32.xlu0 %v4918
    %v4920 = vpop.xlane.xlu0 %4919
    %v4921 = vsel %vm623, %v4914, 0.0
    %4922 = vadd.xlane.f32.xlu0 %v4921
    %v4923 = vpop.xlane.xlu0 %4922
    %v4924 = vrcp.pop %v4917
    %v4925 = vrcp.pop %v4920
    %v4926 = vrcp.pop %v4923
    %v4927 = vmul.f32 %v4910, %v4924
    %v4928 = vmul.f32 %v4912, %v4925
    %v4929 = vmul.f32 %v4914, %v4926
    %4930 = vrot.lane.b32.xlu0 %v3268, 48
    %v4931 = vpop.permute.xlu0 %4930
    %4932 = vrot.lane.b32.xlu0 %v3273, 48
    %v4933 = vpop.permute.xlu0 %4932
    %4934 = vrot.lane.b32.xlu0 %v3278, 48
    %v4935 = vpop.permute.xlu0 %4934
    %v4940 = vsel %vm623, %v4927, 0
    %v4943 = vsel %vm623, %v4928, 0
    %v4946 = vsel %vm623, %v4929, 0
    %4948 = vmatprep.subr.mxu0 0.0
    %4949 = vmatpush1.msra.mxu0 %v4931
    %4950 = vmatprep.subr.mxu0 0.0
    %4951 = vmatpush1.msra.mxu0 %v4933
    %4952 = vmatprep.subr.mxu0 0.0
    %4953 = vmatpush1.msra.mxu0 %v4935
    %4954 = vmatprep.subr.mxu0 0.0
    %4955 = vmatpush1.msra.mxu0 0.0
    %4956 = vmatprep.subr.mxu0 0.0
    %4957 = vmatpush1.msra.mxu0 0.0
    %4958 = vmatprep.subr.mxu0 0.0
    %4959 = vmatpush1.msra.mxu0 0.0
    %4960 = vmatprep.subr.mxu0 0.0
    %4961 = vmatpush1.msra.mxu0 0.0
    %4962 = vmatprep.subr.mxu0 0.0
    %4963 = vmatpush1.msra.mxu0 0.0
    %4964 = vmatprep.subr.mxu0 0.0
    %4965 = vmatpush1.msra.mxu0 0.0
    %4966 = vmatprep.subr.mxu0 0.0
    %4967 = vmatpush1.msra.mxu0 0.0
    %4968 = vmatprep.subr.mxu0 0.0
    %4969 = vmatpush1.msra.mxu0 0.0
    %4970 = vmatprep.subr.mxu0 0.0
    %4971 = vmatpush1.msra.mxu0 0.0
    %4972 = vmatprep.subr.mxu0 0.0
    %4973 = vmatpush1.msra.mxu0 0.0
    %4974 = vmatprep.subr.mxu0 0.0
    %4975 = vmatpush1.msra.mxu0 0.0
    %4976 = vmatprep.subr.mxu0 0.0
    %4977 = vmatpush1.msra.mxu0 0.0
    %4978 = vmatprep.subr.mxu0 0.0
    %4979 = vmatpush1.msra.mxu0 0.0
    %4980 = vmatprep.subr.mxu0 0.0
    %4981 = vmatpush1.msra.mxu0 0.0
    %4982 = vmatprep.subr.mxu0 0.0
    %4983 = vmatpush1.msra.mxu0 0.0
    %4984 = vmatprep.subr.mxu0 0.0
    %4985 = vmatpush1.msra.mxu0 0.0
    %4986 = vmatprep.subr.mxu0 0.0
    %4987 = vmatpush1.msra.mxu0 0.0
    %4988 = vmatprep.subr.mxu0 0.0
    %4989 = vmatpush1.msra.mxu0 0.0
    %4990 = vmatprep.subr.mxu0 0.0
    %4991 = vmatpush1.msra.mxu0 0.0
    %4992 = vmatprep.subr.mxu0 0.0
    %4993 = vmatpush1.msra.mxu0 0.0
    %4994 = vmatprep.subr.mxu0 0.0
    %4995 = vmatpush1.msra.mxu0 0.0
    %4996 = vmatprep.subr.mxu0 0.0
    %4997 = vmatpush1.msra.mxu0 0.0
    %4998 = vmatprep.subr.mxu0 0.0
    %4999 = vmatpush1.msra.mxu0 0.0
    %5000 = vmatprep.subr.mxu0 0.0
    %5001 = vmatpush1.msra.mxu0 0.0
    %5002 = vmatprep.subr.mxu0 0.0
    %5003 = vmatpush1.msra.mxu0 0.0
    %5004 = vmatprep.subr.mxu0 0.0
    %5005 = vmatpush1.msra.mxu0 0.0
    %5006 = vmatprep.subr.mxu0 0.0
    %5007 = vmatpush1.msra.mxu0 0.0
    %5008 = vmatprep.subr.mxu0 0.0
    %5009 = vmatpush1.msra.mxu0 0.0
    %5010 = vmatprep.subr.mxu0 0.0
    %5011 = vmatpush1.msra.mxu0 0.0
    %5012 = vmatprep.mubr.f32.mxu0 0.0
    %5013 = vmatmul.mubr.f32.gmra.mrb[0].mxu0 %v4940
    %v5014 = vpop.f32.mrb[0].mxu0
    %v5015 = vadd.f32 0.0, %v5014
    %v5016 = vpop.f32.mrb[0].mxu0
    %5017 = vmatprep.mubr.f32.mxu0 0.0
    %5018 = vmatmul.mubr.f32.gmra.mrb[0].mxu0 %v4943
    %v5019 = vpop.f32.mrb[0].mxu0
    %v5020 = vadd.f32 0.0, %v5019
    %v5021 = vpop.f32.mrb[0].mxu0
    %5022 = vmatprep.mubr.f32.mxu0 0.0
    %5023 = vmatmul.mubr.f32.gmra.mrb[0].mxu0 %v4946
    %v5024 = vpop.f32.mrb[0].mxu0
    %v5025 = vadd.f32 0.0, %v5024
    %v5026 = vpop.f32.mrb[0].mxu0
    %5027 = vdwg.mxu0
    %5031 = vrot.lane.b32.xlu0 %v5015, 16
    %v5032 = vpop.permute.xlu0 %5031
    %5033 = vrot.lane.b32.xlu0 %v5020, 16
    %v5034 = vpop.permute.xlu0 %5033
    %5035 = vrot.lane.b32.xlu0 %v5025, 16
    %v5036 = vpop.permute.xlu0 %5035
    %5040 = vst.msk [vmem:[#allocation3 + $0x18] sm:$0xff] %vm1268, %v5032
    %5041 = vst.msk [vmem:[#allocation3 + $0x20] sm:$0xff] %vm1268, %v5034
    %5042 = vst.msk [vmem:[#allocation3 + $0x28] sm:$0xff] %vm1268, %v5036
    %5043 = vrot.lane.b32.xlu0 %v3268, 104
    %v5044 = vpop.permute.xlu0 %5043
    %5045 = vrot.lane.b32.xlu0 %v3273, 104
    %v5046 = vpop.permute.xlu0 %5045
    %5047 = vrot.lane.b32.xlu0 %v3278, 104
    %v5048 = vpop.permute.xlu0 %5047
    %5049 = vrot.lane.b32.xlu0 %v3268, 72
    %v5050 = vpop.permute.xlu0 %5049
    %5051 = vrot.lane.b32.xlu0 %v3273, 72
    %v5052 = vpop.permute.xlu0 %5051
    %5053 = vrot.lane.b32.xlu0 %v3278, 72
    %v5054 = vpop.permute.xlu0 %5053
    %v5055 = vsel %vm160, %v5044, 0
    %v5057 = vsel %vm160, %v5046, 0
    %v5059 = vsel %vm160, %v5048, 0
    %v5061 = vsel %vm160, %v5050, 0
    %v5063 = vsel %vm160, %v5052, 0
    %v5065 = vsel %vm160, %v5054, 0
    %5067 = vmatprep.subr.mxu0 0.0
    %5068 = vmatpush1.xpose.msra.mxu0 %v5061
    %5069 = vmatprep.subr.mxu0 0.0
    %5070 = vmatpush1.xpose.msra.mxu0 %v5063
    %5071 = vmatprep.subr.mxu0 0.0
    %5072 = vmatpush1.xpose.msra.mxu0 %v5065
    %5073 = vmatprep.subr.mxu0 0.0
    %5074 = vmatpush1.xpose.msra.mxu0 0.0
    %5075 = vmatprep.subr.mxu0 0.0
    %5076 = vmatpush1.xpose.msra.mxu0 0.0
    %5077 = vmatprep.subr.mxu0 0.0
    %5078 = vmatpush1.xpose.msra.mxu0 0.0
    %5079 = vmatprep.subr.mxu0 0.0
    %5080 = vmatpush1.xpose.msra.mxu0 0.0
    %5081 = vmatprep.subr.mxu0 0.0
    %5082 = vmatpush1.xpose.msra.mxu0 0.0
    %5083 = vmatprep.subr.mxu0 0.0
    %5084 = vmatpush1.xpose.msra.mxu0 0.0
    %5085 = vmatprep.subr.mxu0 0.0
    %5086 = vmatpush1.xpose.msra.mxu0 0.0
    %5087 = vmatprep.subr.mxu0 0.0
    %5088 = vmatpush1.xpose.msra.mxu0 0.0
    %5089 = vmatprep.subr.mxu0 0.0
    %5090 = vmatpush1.xpose.msra.mxu0 0.0
    %5091 = vmatprep.subr.mxu0 0.0
    %5092 = vmatpush1.xpose.msra.mxu0 0.0
    %5093 = vmatprep.subr.mxu0 0.0
    %5094 = vmatpush1.xpose.msra.mxu0 0.0
    %5095 = vmatprep.subr.mxu0 0.0
    %5096 = vmatpush1.xpose.msra.mxu0 0.0
    %5097 = vmatprep.subr.mxu0 0.0
    %5098 = vmatpush1.xpose.msra.mxu0 0.0
    %5099 = vmatprep.subr.mxu0 0.0
    %5100 = vmatpush1.xpose.msra.mxu0 0.0
    %5101 = vmatprep.subr.mxu0 0.0
    %5102 = vmatpush1.xpose.msra.mxu0 0.0
    %5103 = vmatprep.subr.mxu0 0.0
    %5104 = vmatpush1.xpose.msra.mxu0 0.0
    %5105 = vmatprep.subr.mxu0 0.0
    %5106 = vmatpush1.xpose.msra.mxu0 0.0
    %5107 = vmatprep.subr.mxu0 0.0
    %5108 = vmatpush1.xpose.msra.mxu0 0.0
    %5109 = vmatprep.subr.mxu0 0.0
    %5110 = vmatpush1.xpose.msra.mxu0 0.0
    %5111 = vmatprep.subr.mxu0 0.0
    %5112 = vmatpush1.xpose.msra.mxu0 0.0
    %5113 = vmatprep.subr.mxu0 0.0
    %5114 = vmatpush1.xpose.msra.mxu0 0.0
    %5115 = vmatprep.subr.mxu0 0.0
    %5116 = vmatpush1.xpose.msra.mxu0 0.0
    %5117 = vmatprep.subr.mxu0 0.0
    %5118 = vmatpush1.xpose.msra.mxu0 0.0
    %5119 = vmatprep.subr.mxu0 0.0
    %5120 = vmatpush1.xpose.msra.mxu0 0.0
    %5121 = vmatprep.subr.mxu0 0.0
    %5122 = vmatpush1.xpose.msra.mxu0 0.0
    %5123 = vmatprep.subr.mxu0 0.0
    %5124 = vmatpush1.xpose.msra.mxu0 0.0
    %5125 = vmatprep.subr.mxu0 0.0
    %5126 = vmatpush1.xpose.msra.mxu0 0.0
    %5127 = vmatprep.subr.mxu0 0.0
    %5128 = vmatpush1.xpose.msra.mxu0 0.0
    %5129 = vmatprep.subr.mxu0 0.0
    %5130 = vmatpush1.xpose.msra.mxu0 0.0
    %5131 = vmatprep.mubr.f32.mxu0 0.0
    %5132 = vmatmul.mubr.f32.gmra.mrb[0].mxu0 %v5055
    %v5133 = vpop.f32.mrb[0].mxu0
    %v5134 = vadd.f32 0.0, %v5133
    %v5135 = vpop.f32.mrb[0].mxu0
    %5136 = vmatprep.mubr.f32.mxu0 0.0
    %5137 = vmatmul.mubr.f32.gmra.mrb[0].mxu0 %v5057
    %v5138 = vpop.f32.mrb[0].mxu0
    %v5139 = vadd.f32 0.0, %v5138
    %v5140 = vpop.f32.mrb[0].mxu0
    %5141 = vmatprep.mubr.f32.mxu0 0.0
    %5142 = vmatmul.mubr.f32.gmra.mrb[0].mxu0 %v5059
    %v5143 = vpop.f32.mrb[0].mxu0
    %v5144 = vadd.f32 0.0, %v5143
    %v5145 = vpop.f32.mrb[0].mxu0
    %5146 = vdwg.mxu0
    %v5147 = vmul.f32 %v5134, 0.35355338
    %v5148 = vmul.f32 %v5139, 0.35355338
    %v5149 = vmul.f32 %v5144, 0.35355338
    %v5150 = vadd.f32 %v5147, %v143
    %v5151 = vadd.f32 %v5148, %v143
    %v5152 = vadd.f32 %v5149, %v143
    %v5153 = vsel %vm623, %v5150, -inf
    %5154 = vmax.xlane.f32.xlu0 %v5153
    %v5155 = vpop.xlane.xlu0 %5154
    %v5156 = vsel %vm623, %v5151, -inf
    %5157 = vmax.xlane.f32.xlu0 %v5156
    %v5158 = vpop.xlane.xlu0 %5157
    %v5159 = vsel %vm623, %v5152, -inf
    %5160 = vmax.xlane.f32.xlu0 %v5159
    %v5161 = vpop.xlane.xlu0 %5160
    %v5162 = vsub.f32 %v5150, %v5155
    %v5163 = vsub.f32 %v5151, %v5158
    %v5164 = vsub.f32 %v5152, %v5161
    %v5165 = vmul.f32 %v5162, 1.442695
    %v5166 = vpow.pop %v5165
    %v5167 = vmul.f32 %v5163, 1.442695
    %v5168 = vpow.pop %v5167
    %v5169 = vmul.f32 %v5164, 1.442695
    %v5170 = vpow.pop %v5169
    %v5171 = vsel %vm623, %v5166, 0.0
    %5172 = vadd.xlane.f32.xlu0 %v5171
    %v5173 = vpop.xlane.xlu0 %5172
    %v5174 = vsel %vm623, %v5168, 0.0
    %5175 = vadd.xlane.f32.xlu0 %v5174
    %v5176 = vpop.xlane.xlu0 %5175
    %v5177 = vsel %vm623, %v5170, 0.0
    %5178 = vadd.xlane.f32.xlu0 %v5177
    %v5179 = vpop.xlane.xlu0 %5178
    %v5180 = vrcp.pop %v5173
    %v5181 = vrcp.pop %v5176
    %v5182 = vrcp.pop %v5179
    %v5183 = vmul.f32 %v5166, %v5180
    %v5184 = vmul.f32 %v5168, %v5181
    %v5185 = vmul.f32 %v5170, %v5182
    %5186 = vrot.lane.b32.xlu0 %v3268, 40
    %v5187 = vpop.permute.xlu0 %5186
    %5188 = vrot.lane.b32.xlu0 %v3273, 40
    %v5189 = vpop.permute.xlu0 %5188
    %5190 = vrot.lane.b32.xlu0 %v3278, 40
    %v5191 = vpop.permute.xlu0 %5190
    %v5196 = vsel %vm623, %v5183, 0
    %v5199 = vsel %vm623, %v5184, 0
    %v5202 = vsel %vm623, %v5185, 0
    %5204 = vmatprep.subr.mxu0 0.0
    %5205 = vmatpush1.msra.mxu0 %v5187
    %5206 = vmatprep.subr.mxu0 0.0
    %5207 = vmatpush1.msra.mxu0 %v5189
    %5208 = vmatprep.subr.mxu0 0.0
    %5209 = vmatpush1.msra.mxu0 %v5191
    %5210 = vmatprep.subr.mxu0 0.0
    %5211 = vmatpush1.msra.mxu0 0.0
    %5212 = vmatprep.subr.mxu0 0.0
    %5213 = vmatpush1.msra.mxu0 0.0
    %5214 = vmatprep.subr.mxu0 0.0
    %5215 = vmatpush1.msra.mxu0 0.0
    %5216 = vmatprep.subr.mxu0 0.0
    %5217 = vmatpush1.msra.mxu0 0.0
    %5218 = vmatprep.subr.mxu0 0.0
    %5219 = vmatpush1.msra.mxu0 0.0
    %5220 = vmatprep.subr.mxu0 0.0
    %5221 = vmatpush1.msra.mxu0 0.0
    %5222 = vmatprep.subr.mxu0 0.0
    %5223 = vmatpush1.msra.mxu0 0.0
    %5224 = vmatprep.subr.mxu0 0.0
    %5225 = vmatpush1.msra.mxu0 0.0
    %5226 = vmatprep.subr.mxu0 0.0
    %5227 = vmatpush1.msra.mxu0 0.0
    %5228 = vmatprep.subr.mxu0 0.0
    %5229 = vmatpush1.msra.mxu0 0.0
    %5230 = vmatprep.subr.mxu0 0.0
    %5231 = vmatpush1.msra.mxu0 0.0
    %5232 = vmatprep.subr.mxu0 0.0
    %5233 = vmatpush1.msra.mxu0 0.0
    %5234 = vmatprep.subr.mxu0 0.0
    %5235 = vmatpush1.msra.mxu0 0.0
    %5236 = vmatprep.subr.mxu0 0.0
    %5237 = vmatpush1.msra.mxu0 0.0
    %5238 = vmatprep.subr.mxu0 0.0
    %5239 = vmatpush1.msra.mxu0 0.0
    %5240 = vmatprep.subr.mxu0 0.0
    %5241 = vmatpush1.msra.mxu0 0.0
    %5242 = vmatprep.subr.mxu0 0.0
    %5243 = vmatpush1.msra.mxu0 0.0
    %5244 = vmatprep.subr.mxu0 0.0
    %5245 = vmatpush1.msra.mxu0 0.0
    %5246 = vmatprep.subr.mxu0 0.0
    %5247 = vmatpush1.msra.mxu0 0.0
    %5248 = vmatprep.subr.mxu0 0.0
    %5249 = vmatpush1.msra.mxu0 0.0
    %5250 = vmatprep.subr.mxu0 0.0
    %5251 = vmatpush1.msra.mxu0 0.0
    %5252 = vmatprep.subr.mxu0 0.0
    %5253 = vmatpush1.msra.mxu0 0.0
    %5254 = vmatprep.subr.mxu0 0.0
    %5255 = vmatpush1.msra.mxu0 0.0
    %5256 = vmatprep.subr.mxu0 0.0
    %5257 = vmatpush1.msra.mxu0 0.0
    %5258 = vmatprep.subr.mxu0 0.0
    %5259 = vmatpush1.msra.mxu0 0.0
    %5260 = vmatprep.subr.mxu0 0.0
    %5261 = vmatpush1.msra.mxu0 0.0
    %5262 = vmatprep.subr.mxu0 0.0
    %5263 = vmatpush1.msra.mxu0 0.0
    %5264 = vmatprep.subr.mxu0 0.0
    %5265 = vmatpush1.msra.mxu0 0.0
    %5266 = vmatprep.subr.mxu0 0.0
    %5267 = vmatpush1.msra.mxu0 0.0
    %5268 = vmatprep.mubr.f32.mxu0 0.0
    %5269 = vmatmul.mubr.f32.gmra.mrb[0].mxu0 %v5196
    %v5270 = vpop.f32.mrb[0].mxu0
    %v5271 = vadd.f32 0.0, %v5270
    %v5272 = vpop.f32.mrb[0].mxu0
    %5273 = vmatprep.mubr.f32.mxu0 0.0
    %5274 = vmatmul.mubr.f32.gmra.mrb[0].mxu0 %v5199
    %v5275 = vpop.f32.mrb[0].mxu0
    %v5276 = vadd.f32 0.0, %v5275
    %v5277 = vpop.f32.mrb[0].mxu0
    %5278 = vmatprep.mubr.f32.mxu0 0.0
    %5279 = vmatmul.mubr.f32.gmra.mrb[0].mxu0 %v5202
    %v5280 = vpop.f32.mrb[0].mxu0
    %v5281 = vadd.f32 0.0, %v5280
    %v5282 = vpop.f32.mrb[0].mxu0
    %5283 = vdwg.mxu0
    %5287 = vrot.lane.b32.xlu0 %v5271, 24
    %v5288 = vpop.permute.xlu0 %5287
    %5289 = vrot.lane.b32.xlu0 %v5276, 24
    %v5290 = vpop.permute.xlu0 %5289
    %5291 = vrot.lane.b32.xlu0 %v5281, 24
    %v5292 = vpop.permute.xlu0 %5291
    %5296 = vst.msk [vmem:[#allocation3 + $0x18] sm:$0xff] %vm1525, %v5288
    %5297 = vst.msk [vmem:[#allocation3 + $0x20] sm:$0xff] %vm1525, %v5290
    %5298 = vst.msk [vmem:[#allocation3 + $0x28] sm:$0xff] %vm1525, %v5292
    %v5299 = vld [vmem:[#allocation3] sm:$0xff]
    %v5300 = vld [vmem:[#allocation3 + $0x8] sm:$0xff]
    %v5301 = vld [vmem:[#allocation3 + $0x10] sm:$0xff]
    %v5302 = vld [vmem:[#allocation3 + $0x18] sm:$0xff]
    %v5303 = vld [vmem:[#allocation3 + $0x20] sm:$0xff]
    %v5304 = vld [vmem:[#allocation3 + $0x28] sm:$0xff]
    %s5305 = scalar_lea.vmem [#allocation12], 32
    %v5306 = vld [vmem:[%s5305] sm:$0xff]
    %v5307 = vld [vmem:[%s5305 + $0x8] sm:$0xff]
    %v5308 = vld [vmem:[%s5305 + $0x10] sm:$0xff]
    %v5309 = vld [vmem:[%s5305 + $0x18] sm:$0xff]
    %v5310 = vlaneseq
    %v5311 = vshrl.u32 %v5310, 7
    %v5312 = vsub.s32 4, %v5311
    %v5313 = vrot.slane %v3056, %v5312
    %v5315 = vsel %vm269, %v5299, 0
    %v5318 = vsel %vm269, %v5300, 0
    %v5321 = vsel %vm269, %v5301, 0
    %v5324 = vsel %vm269, %v5302, 0
    %v5327 = vsel %vm269, %v5303, 0
    %v5330 = vsel %vm269, %v5304, 0
    %5332 = vmatprep.subr.mxu0 0.0
    %5333 = vmatpush1.msra.mxu0 %v5306
    %5334 = vmatprep.subr.mxu0 0.0
    %5335 = vmatpush1.msra.mxu0 %v5307
    %5336 = vmatprep.subr.mxu0 0.0
    %5337 = vmatpush1.msra.mxu0 %v5308
    %5338 = vmatprep.subr.mxu0 0.0
    %5339 = vmatpush1.msra.mxu0 %v5309
    %5340 = vmatprep.subr.mxu0 0.0
    %5341 = vmatpush1.msra.mxu0 0.0
    %5342 = vmatprep.subr.mxu0 0.0
    %5343 = vmatpush1.msra.mxu0 0.0
    %5344 = vmatprep.subr.mxu0 0.0
    %5345 = vmatpush1.msra.mxu0 0.0
    %5346 = vmatprep.subr.mxu0 0.0
    %5347 = vmatpush1.msra.mxu0 0.0
    %5348 = vmatprep.subr.mxu0 0.0
    %5349 = vmatpush1.msra.mxu0 0.0
    %5350 = vmatprep.subr.mxu0 0.0
    %5351 = vmatpush1.msra.mxu0 0.0
    %5352 = vmatprep.subr.mxu0 0.0
    %5353 = vmatpush1.msra.mxu0 0.0
    %5354 = vmatprep.subr.mxu0 0.0
    %5355 = vmatpush1.msra.mxu0 0.0
    %5356 = vmatprep.subr.mxu0 0.0
    %5357 = vmatpush1.msra.mxu0 0.0
    %5358 = vmatprep.subr.mxu0 0.0
    %5359 = vmatpush1.msra.mxu0 0.0
    %5360 = vmatprep.subr.mxu0 0.0
    %5361 = vmatpush1.msra.mxu0 0.0
    %5362 = vmatprep.subr.mxu0 0.0
    %5363 = vmatpush1.msra.mxu0 0.0
    %5364 = vmatprep.subr.mxu0 0.0
    %5365 = vmatpush1.msra.mxu0 0.0
    %5366 = vmatprep.subr.mxu0 0.0
    %5367 = vmatpush1.msra.mxu0 0.0
    %5368 = vmatprep.subr.mxu0 0.0
    %5369 = vmatpush1.msra.mxu0 0.0
    %5370 = vmatprep.subr.mxu0 0.0
    %5371 = vmatpush1.msra.mxu0 0.0
    %5372 = vmatprep.subr.mxu0 0.0
    %5373 = vmatpush1.msra.mxu0 0.0
    %5374 = vmatprep.subr.mxu0 0.0
    %5375 = vmatpush1.msra.mxu0 0.0
    %5376 = vmatprep.subr.mxu0 0.0
    %5377 = vmatpush1.msra.mxu0 0.0
    %5378 = vmatprep.subr.mxu0 0.0
    %5379 = vmatpush1.msra.mxu0 0.0
    %5380 = vmatprep.subr.mxu0 0.0
    %5381 = vmatpush1.msra.mxu0 0.0
    %5382 = vmatprep.subr.mxu0 0.0
    %5383 = vmatpush1.msra.mxu0 0.0
    %5384 = vmatprep.subr.mxu0 0.0
    %5385 = vmatpush1.msra.mxu0 0.0
    %5386 = vmatprep.subr.mxu0 0.0
    %5387 = vmatpush1.msra.mxu0 0.0
    %5388 = vmatprep.subr.mxu0 0.0
    %5389 = vmatpush1.msra.mxu0 0.0
    %5390 = vmatprep.subr.mxu0 0.0
    %5391 = vmatpush1.msra.mxu0 0.0
    %5392 = vmatprep.subr.mxu0 0.0
    %5393 = vmatpush1.msra.mxu0 0.0
    %5394 = vmatprep.subr.mxu0 0.0
    %5395 = vmatpush1.msra.mxu0 0.0
    %5396 = vmatprep.mubr.f32.mxu0 0.0
    %5397 = vmatmul.mubr.f32.gmra.mrb[0].mxu0 %v5315
    %v5398 = vpop.f32.mrb[0].mxu0
    %v5399 = vadd.f32 %v5313, %v5398
    %v5400 = vpop.f32.mrb[0].mxu0
    %5401 = vmatprep.mubr.f32.mxu0 0.0
    %5402 = vmatmul.mubr.f32.gmra.mrb[0].mxu0 %v5318
    %v5403 = vpop.f32.mrb[0].mxu0
    %v5404 = vadd.f32 %v5313, %v5403
    %v5405 = vpop.f32.mrb[0].mxu0
    %5406 = vmatprep.mubr.f32.mxu0 0.0
    %5407 = vmatmul.mubr.f32.gmra.mrb[0].mxu0 %v5321
    %v5408 = vpop.f32.mrb[0].mxu0
    %v5409 = vadd.f32 %v5313, %v5408
    %v5410 = vpop.f32.mrb[0].mxu0
    %5411 = vmatprep.mubr.f32.mxu0 0.0
    %5412 = vmatmul.mubr.f32.gmra.mrb[0].mxu0 %v5324
    %v5413 = vpop.f32.mrb[0].mxu0
    %v5414 = vadd.f32 %v5313, %v5413
    %v5415 = vpop.f32.mrb[0].mxu0
    %5416 = vmatprep.mubr.f32.mxu0 0.0
    %5417 = vmatmul.mubr.f32.gmra.mrb[0].mxu0 %v5327
    %v5418 = vpop.f32.mrb[0].mxu0
    %v5419 = vadd.f32 %v5313, %v5418
    %v5420 = vpop.f32.mrb[0].mxu0
    %5421 = vmatprep.mubr.f32.mxu0 0.0
    %5422 = vmatmul.mubr.f32.gmra.mrb[0].mxu0 %v5330
    %v5423 = vpop.f32.mrb[0].mxu0
    %v5424 = vadd.f32 %v5313, %v5423
    %v5425 = vpop.f32.mrb[0].mxu0
    %5426 = vdwg.mxu0
    %v5427 = vadd.f32 %v3049, %v5399
    %v5428 = vadd.f32 %v3050, %v5404
    %v5429 = vadd.f32 %v3051, %v5409
    %v5430 = vadd.f32 %v3052, %v5414
    %v5431 = vadd.f32 %v3053, %v5419
    %v5432 = vadd.f32 %v3054, %v5424
    %v5433 = vsel %vm269, %v5427, 0.0
    %5434 = vadd.xlane.f32.xlu0 %v5433
    %v5435 = vpop.xlane.xlu0 %5434
    %v5436 = vsel %vm269, %v5428, 0.0
    %5437 = vadd.xlane.f32.xlu0 %v5436
    %v5438 = vpop.xlane.xlu0 %5437
    %v5439 = vsel %vm269, %v5429, 0.0
    %5440 = vadd.xlane.f32.xlu0 %v5439
    %v5441 = vpop.xlane.xlu0 %5440
    %v5442 = vsel %vm269, %v5430, 0.0
    %5443 = vadd.xlane.f32.xlu0 %v5442
    %v5444 = vpop.xlane.xlu0 %5443
    %v5445 = vsel %vm269, %v5431, 0.0
    %5446 = vadd.xlane.f32.xlu0 %v5445
    %v5447 = vpop.xlane.xlu0 %5446
    %v5448 = vsel %vm269, %v5432, 0.0
    %5449 = vadd.xlane.f32.xlu0 %v5448
    %v5450 = vpop.xlane.xlu0 %5449
    %v5451 = vmul.f32 %v5435, %v311
    %v5452 = vmul.f32 %v5438, %v311
    %v5453 = vmul.f32 %v5441, %v311
    %v5454 = vmul.f32 %v5444, %v311
    %v5455 = vmul.f32 %v5447, %v311
    %v5456 = vmul.f32 %v5450, %v311
    %v5457 = vsub.f32 %v5427, %v5451
    %v5458 = vsub.f32 %v5428, %v5452
    %v5459 = vsub.f32 %v5429, %v5453
    %v5460 = vsub.f32 %v5430, %v5454
    %v5461 = vsub.f32 %v5431, %v5455
    %v5462 = vsub.f32 %v5432, %v5456
    %v5463 = vmul.f32 %v5457, %v5457
    %v5464 = vmul.f32 %v5458, %v5458
    %v5465 = vmul.f32 %v5459, %v5459
    %v5466 = vmul.f32 %v5460, %v5460
    %v5467 = vmul.f32 %v5461, %v5461
    %v5468 = vmul.f32 %v5462, %v5462
    %v5469 = vsel %vm269, %v5463, 0.0
    %5470 = vadd.xlane.f32.xlu0 %v5469
    %v5471 = vpop.xlane.xlu0 %5470
    %v5472 = vsel %vm269, %v5464, 0.0
    %5473 = vadd.xlane.f32.xlu0 %v5472
    %v5474 = vpop.xlane.xlu0 %5473
    %v5475 = vsel %vm269, %v5465, 0.0
    %5476 = vadd.xlane.f32.xlu0 %v5475
    %v5477 = vpop.xlane.xlu0 %5476
    %v5478 = vsel %vm269, %v5466, 0.0
    %5479 = vadd.xlane.f32.xlu0 %v5478
    %v5480 = vpop.xlane.xlu0 %5479
    %v5481 = vsel %vm269, %v5467, 0.0
    %5482 = vadd.xlane.f32.xlu0 %v5481
    %v5483 = vpop.xlane.xlu0 %5482
    %v5484 = vsel %vm269, %v5468, 0.0
    %5485 = vadd.xlane.f32.xlu0 %v5484
    %v5486 = vpop.xlane.xlu0 %5485
    %v5487 = vmul.f32 %v5471, %v311
    %v5488 = vmul.f32 %v5474, %v311
    %v5489 = vmul.f32 %v5477, %v311
    %v5490 = vmul.f32 %v5480, %v311
    %v5491 = vmul.f32 %v5483, %v311
    %v5492 = vmul.f32 %v5486, %v311
    %v5493 = vadd.f32 %v5487, 1e-06
    %v5494 = vadd.f32 %v5488, 1e-06
    %v5495 = vadd.f32 %v5489, 1e-06
    %v5496 = vadd.f32 %v5490, 1e-06
    %v5497 = vadd.f32 %v5491, 1e-06
    %v5498 = vadd.f32 %v5492, 1e-06
    %v5499 = vrsqrt.pop %v5493
    %v5500 = vrsqrt.pop %v5494
    %v5501 = vrsqrt.pop %v5495
    %v5502 = vrsqrt.pop %v5496
    %v5503 = vrsqrt.pop %v5497
    %v5504 = vrsqrt.pop %v5498
    %v5505 = vmul.f32 %v5457, %v5499
    %v5506 = vmul.f32 %v5458, %v5500
    %v5507 = vmul.f32 %v5459, %v5501
    %v5508 = vmul.f32 %v5460, %v5502
    %v5509 = vmul.f32 %v5461, %v5503
    %v5510 = vmul.f32 %v5462, %v5504
    %v5511 = vlaneseq
    %v5512 = vshrl.u32 %v5511, 7
    %v5513 = vsub.s32 2, %v5512
    %v5514 = vrot.slane %v3056, %v5513
    %v5515 = vmul.f32 %v5505, %v5514
    %v5516 = vmul.f32 %v5506, %v5514
    %v5517 = vmul.f32 %v5507, %v5514
    %v5518 = vmul.f32 %v5508, %v5514
    %v5519 = vmul.f32 %v5509, %v5514
    %v5520 = vmul.f32 %v5510, %v5514
    %v5521 = vlaneseq
    %v5522 = vshrl.u32 %v5521, 7
    %v5523 = vsub.s32 3, %v5522
    %v5524 = vrot.slane %v3056, %v5523
    %v5525 = vadd.f32 %v5515, %v5524
    %v5526 = vadd.f32 %v5516, %v5524
    %v5527 = vadd.f32 %v5517, %v5524
    %v5528 = vadd.f32 %v5518, %v5524
    %v5529 = vadd.f32 %v5519, %v5524
    %v5530 = vadd.f32 %v5520, %v5524
    %s5531 = scalar_lea.vmem [#allocation13], 32
    %v5532 = vld [vmem:[%s5531] sm:$0xff]
    %v5533 = vld [vmem:[%s5531 + $0x8] sm:$0xff]
    %v5534 = vld [vmem:[%s5531 + $0x10] sm:$0xff]
    %v5535 = vld [vmem:[%s5531 + $0x18] sm:$0xff]
    %s5536 = scalar_lea.vmem %s9, 1
    %v5537 = vld [vmem:[%s5536] sm:$0x1]
    %v5539 = vlaneseq
    %v5540 = vshrl.u32 %v5539, 7
    %v5541 = vsub.s32 0, %v5540
    %v5542 = vrot.slane %v5537, %v5541
    %v5545 = vsel %vm269, %v5525, 0
    %v5548 = vsel %vm269, %v5526, 0
    %v5551 = vsel %vm269, %v5527, 0
    %v5554 = vsel %vm269, %v5528, 0
    %v5557 = vsel %vm269, %v5529, 0
    %v5560 = vsel %vm269, %v5530, 0
    %5562 = vmatprep.subr.mxu0 0.0
    %5563 = vmatpush1.msra.mxu0 %v5532
    %5564 = vmatprep.subr.mxu0 0.0
    %5565 = vmatpush1.msra.mxu0 %v5533
    %5566 = vmatprep.subr.mxu0 0.0
    %5567 = vmatpush1.msra.mxu0 %v5534
    %5568 = vmatprep.subr.mxu0 0.0
    %5569 = vmatpush1.msra.mxu0 %v5535
    %5570 = vmatprep.subr.mxu0 0.0
    %5571 = vmatpush1.msra.mxu0 0.0
    %5572 = vmatprep.subr.mxu0 0.0
    %5573 = vmatpush1.msra.mxu0 0.0
    %5574 = vmatprep.subr.mxu0 0.0
    %5575 = vmatpush1.msra.mxu0 0.0
    %5576 = vmatprep.subr.mxu0 0.0
    %5577 = vmatpush1.msra.mxu0 0.0
    %5578 = vmatprep.subr.mxu0 0.0
    %5579 = vmatpush1.msra.mxu0 0.0
    %5580 = vmatprep.subr.mxu0 0.0
    %5581 = vmatpush1.msra.mxu0 0.0
    %5582 = vmatprep.subr.mxu0 0.0
    %5583 = vmatpush1.msra.mxu0 0.0
    %5584 = vmatprep.subr.mxu0 0.0
    %5585 = vmatpush1.msra.mxu0 0.0
    %5586 = vmatprep.subr.mxu0 0.0
    %5587 = vmatpush1.msra.mxu0 0.0
    %5588 = vmatprep.subr.mxu0 0.0
    %5589 = vmatpush1.msra.mxu0 0.0
    %5590 = vmatprep.subr.mxu0 0.0
    %5591 = vmatpush1.msra.mxu0 0.0
    %5592 = vmatprep.subr.mxu0 0.0
    %5593 = vmatpush1.msra.mxu0 0.0
    %5594 = vmatprep.subr.mxu0 0.0
    %5595 = vmatpush1.msra.mxu0 0.0
    %5596 = vmatprep.subr.mxu0 0.0
    %5597 = vmatpush1.msra.mxu0 0.0
    %5598 = vmatprep.subr.mxu0 0.0
    %5599 = vmatpush1.msra.mxu0 0.0
    %5600 = vmatprep.subr.mxu0 0.0
    %5601 = vmatpush1.msra.mxu0 0.0
    %5602 = vmatprep.subr.mxu0 0.0
    %5603 = vmatpush1.msra.mxu0 0.0
    %5604 = vmatprep.subr.mxu0 0.0
    %5605 = vmatpush1.msra.mxu0 0.0
    %5606 = vmatprep.subr.mxu0 0.0
    %5607 = vmatpush1.msra.mxu0 0.0
    %5608 = vmatprep.subr.mxu0 0.0
    %5609 = vmatpush1.msra.mxu0 0.0
    %5610 = vmatprep.subr.mxu0 0.0
    %5611 = vmatpush1.msra.mxu0 0.0
    %5612 = vmatprep.subr.mxu0 0.0
    %5613 = vmatpush1.msra.mxu0 0.0
    %5614 = vmatprep.subr.mxu0 0.0
    %5615 = vmatpush1.msra.mxu0 0.0
    %5616 = vmatprep.subr.mxu0 0.0
    %5617 = vmatpush1.msra.mxu0 0.0
    %5618 = vmatprep.subr.mxu0 0.0
    %5619 = vmatpush1.msra.mxu0 0.0
    %5620 = vmatprep.subr.mxu0 0.0
    %5621 = vmatpush1.msra.mxu0 0.0
    %5622 = vmatprep.subr.mxu0 0.0
    %5623 = vmatpush1.msra.mxu0 0.0
    %5624 = vmatprep.subr.mxu0 0.0
    %5625 = vmatpush1.msra.mxu0 0.0
    %5626 = vmatprep.mubr.f32.mxu0 0.0
    %5627 = vmatmul.mubr.f32.gmra.mrb[0].mxu0 %v5545
    %v5628 = vpop.f32.mrb[0].mxu0
    %v5629 = vadd.f32 %v5542, %v5628
    %v5630 = vpop.f32.mrb[0].mxu0
    %5631 = vmatprep.mubr.f32.mxu0 0.0
    %5632 = vmatmul.mubr.f32.gmra.mrb[0].mxu0 %v5548
    %v5633 = vpop.f32.mrb[0].mxu0
    %v5634 = vadd.f32 %v5542, %v5633
    %v5635 = vpop.f32.mrb[0].mxu0
    %5636 = vmatprep.mubr.f32.mxu0 0.0
    %5637 = vmatmul.mubr.f32.gmra.mrb[0].mxu0 %v5551
    %v5638 = vpop.f32.mrb[0].mxu0
    %v5639 = vadd.f32 %v5542, %v5638
    %v5640 = vpop.f32.mrb[0].mxu0
    %5641 = vmatprep.mubr.f32.mxu0 0.0
    %5642 = vmatmul.mubr.f32.gmra.mrb[0].mxu0 %v5554
    %v5643 = vpop.f32.mrb[0].mxu0
    %v5644 = vadd.f32 %v5542, %v5643
    %v5645 = vpop.f32.mrb[0].mxu0
    %5646 = vmatprep.mubr.f32.mxu0 0.0
    %5647 = vmatmul.mubr.f32.gmra.mrb[0].mxu0 %v5557
    %v5648 = vpop.f32.mrb[0].mxu0
    %v5649 = vadd.f32 %v5542, %v5648
    %v5650 = vpop.f32.mrb[0].mxu0
    %5651 = vmatprep.mubr.f32.mxu0 0.0
    %5652 = vmatmul.mubr.f32.gmra.mrb[0].mxu0 %v5560
    %v5653 = vpop.f32.mrb[0].mxu0
    %v5654 = vadd.f32 %v5542, %v5653
    %v5655 = vpop.f32.mrb[0].mxu0
    %5656 = vdwg.mxu0
    %v5657 = vmul.f32 %v5629, 0.5
    %v5658 = vmul.f32 %v5634, 0.5
    %v5659 = vmul.f32 %v5639, 0.5
    %v5660 = vmul.f32 %v5644, 0.5
    %v5661 = vmul.f32 %v5649, 0.5
    %v5662 = vmul.f32 %v5654, 0.5
    %v5663 = vmul.f32 %v5629, 0.70710677
    %v5664 = vmul.f32 %v5634, 0.70710677
    %v5665 = vmul.f32 %v5639, 0.70710677
    %v5666 = vmul.f32 %v5644, 0.70710677
    %v5667 = vmul.f32 %v5649, 0.70710677
    %v5668 = vmul.f32 %v5654, 0.70710677
    %v5669 = verf.f32.pop %v5663
    %v5670 = verf.f32.pop %v5664
    %v5671 = verf.f32.pop %v5665
    %v5672 = verf.f32.pop %v5666
    %v5673 = verf.f32.pop %v5667
    %v5674 = verf.f32.pop %v5668
    %v5675 = vadd.f32 %v5669, 1.0
    %v5676 = vadd.f32 %v5670, 1.0
    %v5677 = vadd.f32 %v5671, 1.0
    %v5678 = vadd.f32 %v5672, 1.0
    %v5679 = vadd.f32 %v5673, 1.0
    %v5680 = vadd.f32 %v5674, 1.0
    %v5681 = vmul.f32 %v5657, %v5675
    %v5682 = vmul.f32 %v5658, %v5676
    %v5683 = vmul.f32 %v5659, %v5677
    %v5684 = vmul.f32 %v5660, %v5678
    %v5685 = vmul.f32 %v5661, %v5679
    %v5686 = vmul.f32 %v5662, %v5680
    %s5687 = scalar_lea.vmem [#allocation15], 64
    %v5688 = vld [vmem:[%s5687] sm:$0xff]
    %v5689 = vld [vmem:[%s5687 + $0x8] sm:$0xff]
    %v5690 = vld [vmem:[%s5687 + $0x10] sm:$0xff]
    %v5691 = vld [vmem:[%s5687 + $0x18] sm:$0xff]
    %v5692 = vld [vmem:[%s5687 + $0x20] sm:$0xff]
    %v5693 = vld [vmem:[%s5687 + $0x28] sm:$0xff]
    %v5694 = vld [vmem:[%s5687 + $0x30] sm:$0xff]
    %v5695 = vld [vmem:[%s5687 + $0x38] sm:$0xff]
    %v5696 = vlaneseq
    %v5697 = vshrl.u32 %v5696, 7
    %v5698 = vsub.s32 5, %v5697
    %v5699 = vrot.slane %v3056, %v5698
    %v5701 = vsel %vm2935, %v5681, 0
    %v5704 = vsel %vm2935, %v5682, 0
    %v5707 = vsel %vm2935, %v5683, 0
    %v5710 = vsel %vm2935, %v5684, 0
    %v5713 = vsel %vm2935, %v5685, 0
    %v5716 = vsel %vm2935, %v5686, 0
    %5718 = vmatprep.subr.mxu0 0.0
    %5719 = vmatpush1.msra.mxu0 %v5688
    %5720 = vmatprep.subr.mxu0 0.0
    %5721 = vmatpush1.msra.mxu0 %v5689
    %5722 = vmatprep.subr.mxu0 0.0
    %5723 = vmatpush1.msra.mxu0 %v5690
    %5724 = vmatprep.subr.mxu0 0.0
    %5725 = vmatpush1.msra.mxu0 %v5691
    %5726 = vmatprep.subr.mxu0 0.0
    %5727 = vmatpush1.msra.mxu0 %v5692
    %5728 = vmatprep.subr.mxu0 0.0
    %5729 = vmatpush1.msra.mxu0 %v5693
    %5730 = vmatprep.subr.mxu0 0.0
    %5731 = vmatpush1.msra.mxu0 %v5694
    %5732 = vmatprep.subr.mxu0 0.0
    %5733 = vmatpush1.msra.mxu0 %v5695
    %5734 = vmatprep.subr.mxu0 0.0
    %5735 = vmatpush1.msra.mxu0 0.0
    %5736 = vmatprep.subr.mxu0 0.0
    %5737 = vmatpush1.msra.mxu0 0.0
    %5738 = vmatprep.subr.mxu0 0.0
    %5739 = vmatpush1.msra.mxu0 0.0
    %5740 = vmatprep.subr.mxu0 0.0
    %5741 = vmatpush1.msra.mxu0 0.0
    %5742 = vmatprep.subr.mxu0 0.0
    %5743 = vmatpush1.msra.mxu0 0.0
    %5744 = vmatprep.subr.mxu0 0.0
    %5745 = vmatpush1.msra.mxu0 0.0
    %5746 = vmatprep.subr.mxu0 0.0
    %5747 = vmatpush1.msra.mxu0 0.0
    %5748 = vmatprep.subr.mxu0 0.0
    %5749 = vmatpush1.msra.mxu0 0.0
    %5750 = vmatprep.subr.mxu0 0.0
    %5751 = vmatpush1.msra.mxu0 0.0
    %5752 = vmatprep.subr.mxu0 0.0
    %5753 = vmatpush1.msra.mxu0 0.0
    %5754 = vmatprep.subr.mxu0 0.0
    %5755 = vmatpush1.msra.mxu0 0.0
    %5756 = vmatprep.subr.mxu0 0.0
    %5757 = vmatpush1.msra.mxu0 0.0
    %5758 = vmatprep.subr.mxu0 0.0
    %5759 = vmatpush1.msra.mxu0 0.0
    %5760 = vmatprep.subr.mxu0 0.0
    %5761 = vmatpush1.msra.mxu0 0.0
    %5762 = vmatprep.subr.mxu0 0.0
    %5763 = vmatpush1.msra.mxu0 0.0
    %5764 = vmatprep.subr.mxu0 0.0
    %5765 = vmatpush1.msra.mxu0 0.0
    %5766 = vmatprep.subr.mxu0 0.0
    %5767 = vmatpush1.msra.mxu0 0.0
    %5768 = vmatprep.subr.mxu0 0.0
    %5769 = vmatpush1.msra.mxu0 0.0
    %5770 = vmatprep.subr.mxu0 0.0
    %5771 = vmatpush1.msra.mxu0 0.0
    %5772 = vmatprep.subr.mxu0 0.0
    %5773 = vmatpush1.msra.mxu0 0.0
    %5774 = vmatprep.subr.mxu0 0.0
    %5775 = vmatpush1.msra.mxu0 0.0
    %5776 = vmatprep.subr.mxu0 0.0
    %5777 = vmatpush1.msra.mxu0 0.0
    %5778 = vmatprep.subr.mxu0 0.0
    %5779 = vmatpush1.msra.mxu0 0.0
    %5780 = vmatprep.subr.mxu0 0.0
    %5781 = vmatpush1.msra.mxu0 0.0
    %5782 = vmatprep.mubr.f32.mxu0 0.0
    %5783 = vmatmul.mubr.f32.gmra.mrb[0].mxu0 %v5701
    %v5784 = vpop.f32.mrb[0].mxu0
    %v5785 = vadd.f32 %v5699, %v5784
    %v5786 = vpop.f32.mrb[0].mxu0
    %5787 = vmatprep.mubr.f32.mxu0 0.0
    %5788 = vmatmul.mubr.f32.gmra.mrb[0].mxu0 %v5704
    %v5789 = vpop.f32.mrb[0].mxu0
    %v5790 = vadd.f32 %v5699, %v5789
    %v5791 = vpop.f32.mrb[0].mxu0
    %5792 = vmatprep.mubr.f32.mxu0 0.0
    %5793 = vmatmul.mubr.f32.gmra.mrb[0].mxu0 %v5707
    %v5794 = vpop.f32.mrb[0].mxu0
    %v5795 = vadd.f32 %v5699, %v5794
    %v5796 = vpop.f32.mrb[0].mxu0
    %5797 = vmatprep.mubr.f32.mxu0 0.0
    %5798 = vmatmul.mubr.f32.gmra.mrb[0].mxu0 %v5710
    %v5799 = vpop.f32.mrb[0].mxu0
    %v5800 = vadd.f32 %v5699, %v5799
    %v5801 = vpop.f32.mrb[0].mxu0
    %5802 = vmatprep.mubr.f32.mxu0 0.0
    %5803 = vmatmul.mubr.f32.gmra.mrb[0].mxu0 %v5713
    %v5804 = vpop.f32.mrb[0].mxu0
    %v5805 = vadd.f32 %v5699, %v5804
    %v5806 = vpop.f32.mrb[0].mxu0
    %5807 = vmatprep.mubr.f32.mxu0 0.0
    %5808 = vmatmul.mubr.f32.gmra.mrb[0].mxu0 %v5716
    %v5809 = vpop.f32.mrb[0].mxu0
    %v5810 = vadd.f32 %v5699, %v5809
    %v5811 = vpop.f32.mrb[0].mxu0
    %5812 = vdwg.mxu0
    %v5813 = vadd.f32 %v5427, %v5785
    %v5814 = vadd.f32 %v5428, %v5790
    %v5815 = vadd.f32 %v5429, %v5795
    %v5816 = vadd.f32 %v5430, %v5800
    %v5817 = vadd.f32 %v5431, %v5805
    %v5818 = vadd.f32 %v5432, %v5810
    %5819 = vst.msk [vmem:[#allocation2] sm:$0xff] %vm269, %v5813
    %5820 = vst.msk [vmem:[#allocation2 + $0x8] sm:$0xff] %vm269, %v5814
    %5821 = vst.msk [vmem:[#allocation2 + $0x10] sm:$0xff] %vm269, %v5815
    %5822 = vst.msk [vmem:[#allocation2 + $0x18] sm:$0xff] %vm269, %v5816
    %5823 = vst.msk [vmem:[#allocation2 + $0x20] sm:$0xff] %vm269, %v5817
    %5824 = vst.msk [vmem:[#allocation2 + $0x28] sm:$0xff] %vm269, %v5818
    %v5825 = vld [vmem:[#allocation2] ss:$24 sm:$0x3]
    %v5826 = vld [vmem:[%s11] sm:$0x1]
    %v5827 = vld [vmem:[%s11 + $0x1] sm:$0x1]
    %vm5828 = vcmask 254976
    %v5829 = vsel %vm5828, %v5825, 0.0
    %5830 = vadd.xlane.f32.xlu0 %v5829
    %v5831 = vpop.xlane.xlu0 %5830
    %v5832 = vmul.f32 %v5831, %v311
    %v5833 = vsub.f32 %v5825, %v5832
    %v5834 = vmul.f32 %v5833, %v5833
    %v5835 = vsel %vm5828, %v5834, 0.0
    %5836 = vadd.xlane.f32.xlu0 %v5835
    %v5837 = vpop.xlane.xlu0 %5836
    %v5838 = vmul.f32 %v5837, %v311
    %v5839 = vadd.f32 %v5838, 1e-06
    %v5840 = vrsqrt.pop %v5839
    %v5841 = vmul.f32 %v5833, %v5840
    %v5842 = vlaneseq
    %v5843 = vshrl.u32 %v5842, 7
    %v5844 = vsub.s32 0, %v5843
    %v5845 = vrot.slane %v5826, %v5844
    %v5846 = vmul.f32 %v5841, %v5845
    %v5847 = vlaneseq
    %v5848 = vshrl.u32 %v5847, 7
    %v5849 = vsub.s32 0, %v5848
    %v5850 = vrot.slane %v5827, %v5849
    %v5851 = vadd.f32 %v5846, %v5850
    %v5852 = vld [vmem:[%s12] sm:$0xff]
    %v5853 = vld [vmem:[%s12 + $0x8] sm:$0xff]
    %v5854 = vld [vmem:[%s12 + $0x10] sm:$0xff]
    %v5855 = vld [vmem:[%s12 + $0x18] sm:$0xff]
    %v5856 = vld [vmem:[#allocation4] sm:$0x1]
    %v5858 = vlaneseq
    %v5859 = vshrl.u32 %v5858, 7
    %v5860 = vsub.s32 0, %v5859
    %v5861 = vrot.slane %v5856, %v5860
    %v5864 = vsel %vm269, %v5851, 0
    %5866 = vmatprep.subr.mxu0 0.0
    %5867 = vmatpush1.msra.mxu0 %v5852
    %5868 = vmatprep.subr.mxu0 0.0
    %5869 = vmatpush1.msra.mxu0 %v5853
    %5870 = vmatprep.subr.mxu0 0.0
    %5871 = vmatpush1.msra.mxu0 %v5854
    %5872 = vmatprep.subr.mxu0 0.0
    %5873 = vmatpush1.msra.mxu0 %v5855
    %5874 = vmatprep.subr.mxu0 0.0
    %5875 = vmatpush1.msra.mxu0 0.0
    %5876 = vmatprep.subr.mxu0 0.0
    %5877 = vmatpush1.msra.mxu0 0.0
    %5878 = vmatprep.subr.mxu0 0.0
    %5879 = vmatpush1.msra.mxu0 0.0
    %5880 = vmatprep.subr.mxu0 0.0
    %5881 = vmatpush1.msra.mxu0 0.0
    %5882 = vmatprep.subr.mxu0 0.0
    %5883 = vmatpush1.msra.mxu0 0.0
    %5884 = vmatprep.subr.mxu0 0.0
    %5885 = vmatpush1.msra.mxu0 0.0
    %5886 = vmatprep.subr.mxu0 0.0
    %5887 = vmatpush1.msra.mxu0 0.0
    %5888 = vmatprep.subr.mxu0 0.0
    %5889 = vmatpush1.msra.mxu0 0.0
    %5890 = vmatprep.subr.mxu0 0.0
    %5891 = vmatpush1.msra.mxu0 0.0
    %5892 = vmatprep.subr.mxu0 0.0
    %5893 = vmatpush1.msra.mxu0 0.0
    %5894 = vmatprep.subr.mxu0 0.0
    %5895 = vmatpush1.msra.mxu0 0.0
    %5896 = vmatprep.subr.mxu0 0.0
    %5897 = vmatpush1.msra.mxu0 0.0
    %5898 = vmatprep.subr.mxu0 0.0
    %5899 = vmatpush1.msra.mxu0 0.0
    %5900 = vmatprep.subr.mxu0 0.0
    %5901 = vmatpush1.msra.mxu0 0.0
    %5902 = vmatprep.subr.mxu0 0.0
    %5903 = vmatpush1.msra.mxu0 0.0
    %5904 = vmatprep.subr.mxu0 0.0
    %5905 = vmatpush1.msra.mxu0 0.0
    %5906 = vmatprep.subr.mxu0 0.0
    %5907 = vmatpush1.msra.mxu0 0.0
    %5908 = vmatprep.subr.mxu0 0.0
    %5909 = vmatpush1.msra.mxu0 0.0
    %5910 = vmatprep.subr.mxu0 0.0
    %5911 = vmatpush1.msra.mxu0 0.0
    %5912 = vmatprep.subr.mxu0 0.0
    %5913 = vmatpush1.msra.mxu0 0.0
    %5914 = vmatprep.subr.mxu0 0.0
    %5915 = vmatpush1.msra.mxu0 0.0
    %5916 = vmatprep.subr.mxu0 0.0
    %5917 = vmatpush1.msra.mxu0 0.0
    %5918 = vmatprep.subr.mxu0 0.0
    %5919 = vmatpush1.msra.mxu0 0.0
    %5920 = vmatprep.subr.mxu0 0.0
    %5921 = vmatpush1.msra.mxu0 0.0
    %5922 = vmatprep.subr.mxu0 0.0
    %5923 = vmatpush1.msra.mxu0 0.0
    %5924 = vmatprep.subr.mxu0 0.0
    %5925 = vmatpush1.msra.mxu0 0.0
    %5926 = vmatprep.subr.mxu0 0.0
    %5927 = vmatpush1.msra.mxu0 0.0
    %5928 = vmatprep.subr.mxu0 0.0
    %5929 = vmatpush1.msra.mxu0 0.0
    %5930 = vmatprep.mubr.f32.mxu0 0.0
    %5931 = vmatmul.mubr.f32.gmra.mrb[0].mxu0 %v5864
    %v5932 = vpop.f32.mrb[0].mxu0
    %v5933 = vadd.f32 %v5861, %v5932
    %v5934 = vpop.f32.mrb[0].mxu0
    %5935 = vdwg.mxu0
    %vm5936 = vcmask 1024
    %5937 = vst.msk [vmem:[%s14] sm:$0x3] %vm5936, %v5933
    // Predicated region
    $region86: #{_lambda_.1} parent=1 // pred_check
      _
    $region87: #{_lambda_.1} parent=1 // pred_check_branch
      %5939 = sbr.rel (0) target = $region89
    $region88: #{_lambda_.1} parent=1 // pred_region
      _
    $region89: #{_lambda_.1} parent=1 // pred_fallthru
      _
    // Predicated region
    $region90: #{_lambda_.1} parent=1 // pred_check
      _
    $region91: #{_lambda_.1} parent=1 // pred_check_branch
      %5941 = sbr.rel (0) target = $region93
    $region92: #{_lambda_.1} parent=1 // pred_region
      _
    $region93: #{_lambda_.1} parent=1 // pred_fallthru
      _
    %5942 = vsyncpa [#allocation6], 1
    %5943 = vsyncpa [#allocation8], 1
    %5944 = vsyncpa [#allocation11], 1
    %5945 = vsyncpa [#allocation14], 1

</llo_original>
